<compile_context>
chip_gen: v7x
topology: tpu7x:2x2x1
jax: 0.10.0
libtpu: 0.0.40
codegen_flags: <defaults>
</compile_context>

<pallas_src>
import jax
import jax.numpy as jnp
from jax.experimental import pallas as pl
from jax.experimental.pallas import tpu as pltpu

_LANES = 128


def _round_up(x, m):
    return (x + m - 1) // m * m


def _basic_block_kernel(x_ref, w_ref, sb_ref, o_ref, pad1_ref, pad2_ref, col_ref):
    # x_ref   : (1, H, W, Cp)     f32   full image (resident across row tiles)
    # w_ref   : (2, 9*Cp, Cp)     bf16  [conv1, conv2] weights, tap-major rows
    # sb_ref  : (4, Cp)           f32   [scale1, bias1, scale2, bias2]
    # o_ref   : (1, TH, W, Cp)    f32   TH output rows of this tile
    # pad1_ref: (TH+4, Wp2, Cp)   bf16  x rows [r0-2, r0+TH+2) + 1-col halo
    # pad2_ref: (TH+2, Wp2, Cp)   bf16  out1 rows [r0-1, r0+TH+1) + 1-col halo
    # col_ref : ((TH+2)*W, 9*Cp)  bf16  per-tile im2col slab
    H = x_ref.shape[1]
    _, TH, W, Cp = o_ref.shape
    bf16 = pad1_ref.dtype

    j = pl.program_id(1)
    r0 = pl.multiple_of(j * TH, TH)          # first output row of this tile

    # ---- stage-1 input: x rows [r0-2, r0+TH+2), zeros outside the image ----
    pad1_ref[:, 0:1, :] = jnp.zeros((TH + 4, 1, Cp), bf16)            # left halo col
    pad1_ref[:, W + 1:W + 2, :] = jnp.zeros((TH + 4, 1, Cp), bf16)    # right halo col
    # the TH interior rows are always inside the image
    pad1_ref[2:TH + 2, 1:W + 1, :] = x_ref[0, pl.ds(r0, TH), :, :].astype(bf16)

    def halo_row(i, g):
        # local row i of pad1 holds global x row g (zero when outside image)
        pad1_ref[i:i + 1, 1:W + 1, :] = jnp.zeros((1, W, Cp), bf16)

        @pl.when(jnp.logical_and(g >= 0, g < H))
        def _():
            gc = jnp.clip(g, 0, H - 1)
            pad1_ref[i:i + 1, 1:W + 1, :] = x_ref[0, pl.ds(gc, 1), :, :].astype(bf16)

    halo_row(0, r0 - 2)
    halo_row(1, r0 - 1)
    halo_row(TH + 2, r0 + TH)
    halo_row(TH + 3, r0 + TH + 1)

    def conv_bn(pad_ref, rows, widx):
        # im2col: 9 shifted (rows, W, Cp) windows laid side by side on the lane
        # axis (static 128-aligned offsets), then ONE fused MXU matmul, K=9*Cp,
        # bf16 operands with f32 accumulation.
        m = rows * W
        for k in range(9):
            dy, dx = divmod(k, 3)
            col_ref[0:m, k * Cp:(k + 1) * Cp] = (
                pad_ref[dy:dy + rows, dx:dx + W, :].reshape(m, Cp))
        acc = jnp.dot(col_ref[0:m, :], w_ref[widx],
                      preferred_element_type=jnp.float32)             # (m, Cp)
        scale = sb_ref[2 * widx:2 * widx + 1, :]                      # (1, Cp)
        bias = sb_ref[2 * widx + 1:2 * widx + 2, :]                   # (1, Cp)
        return (acc * scale + bias).reshape(rows, W, Cp)

    # conv1 -> bn1 -> relu on out1 rows [r0-1, r0+TH+1)
    out1 = jnp.maximum(conv_bn(pad1_ref, TH + 2, 0), 0.0)             # f32

    # ---- stage-2 input: out1 + 1-px zero halo; out-of-image rows are conv2
    # spatial padding and must be zero.
    pad2_ref[:, 0:1, :] = jnp.zeros((TH + 2, 1, Cp), bf16)
    pad2_ref[:, W + 1:W + 2, :] = jnp.zeros((TH + 2, 1, Cp), bf16)
    pad2_ref[:, 1:W + 1, :] = out1.astype(bf16)

    @pl.when(r0 == 0)
    def _():
        pad2_ref[0:1, 1:W + 1, :] = jnp.zeros((1, W, Cp), bf16)

    @pl.when(r0 + TH == H)
    def _():
        pad2_ref[TH + 1:TH + 2, 1:W + 1, :] = jnp.zeros((1, W, Cp), bf16)

    # conv2 -> bn2, residual add (f32), relu, lane-dense store
    out2 = conv_bn(pad2_ref, TH, 1)                                   # (TH, W, Cp)
    resid = x_ref[0, pl.ds(r0, TH), :, :]                             # f32
    o_ref[0] = jnp.maximum(out2 + resid, 0.0).astype(o_ref.dtype)


def basic_block_pallas(x_nchw, w1, w2, bn1, bn2, eps=1e-5):
    """x_nchw: (B, C, H, W).  w*: torch-layout conv weights (Cout, Cin, 3, 3).
    bn* = (gamma, beta, running_mean, running_var)  (eval-mode BatchNorm)."""
    B, C, H, W = x_nchw.shape
    Cp = _round_up(C, _LANES)                # lane-dense channel count

    # Row-tile height: must divide H; 8-16 rows keeps scratch small and gives
    # the pipeline / megacore enough steps even for small batch.
    if H % 16 == 0 and H > 16:
        TH = 16
    elif H % 8 == 0 and H > 8:
        TH = 8
    else:
        TH = H
    nH = H // TH
    Wp2 = _round_up(W + 2, 8)                # sublane-aligned pad-buffer width

    # NCHW -> NHWC (interface glue for the PyTorch layout) + pad channels to a
    # multiple of 128.  When chaining BasicBlocks, keep activations in this
    # layout between calls instead of converting per block.
    x = jnp.transpose(x_nchw, (0, 2, 3, 1)).astype(jnp.float32)
    x = jnp.pad(x, ((0, 0), (0, 0), (0, 0), (0, Cp - C)))

    def to_taps(w):
        # (Cout, Cin, 3, 3) -> (3, 3, Cin, Cout) -> zero-pad -> (9*Cp, Cp)
        t = jnp.transpose(w, (2, 3, 1, 0)).astype(jnp.float32)
        t = jnp.pad(t, ((0, 0), (0, 0), (0, Cp - C), (0, Cp - C)))
        return t.reshape(9 * Cp, Cp)

    w_stack = jnp.stack([to_taps(w1), to_taps(w2)]).astype(jnp.bfloat16)

    def fold_bn(bn):
        gamma, beta, mean, var = bn
        scale = gamma / jnp.sqrt(var + eps)
        bias = beta - mean * scale
        return jnp.pad(scale, (0, Cp - C)), jnp.pad(bias, (0, Cp - C))

    s1, b1 = fold_bn(bn1)
    s2, b2 = fold_bn(bn2)
    sb = jnp.stack([s1, b1, s2, b2]).astype(jnp.float32)              # (4, Cp)

    # VMEM budget: double-buffered blocks + scratch, derived per shape and
    # clamped to this generation's physical VMEM (v5e/v6e 128 MiB, v7x 64 MiB).
    block_bytes = (H * W * Cp * 4            # x image block (f32)
                   + TH * W * Cp * 4         # output tile (f32)
                   + 2 * 9 * Cp * Cp * 2     # stacked weights (bf16)
                   + 4 * Cp * 4)             # folded BN vectors
    scratch_bytes = ((TH + 4) * Wp2 * Cp * 2
                     + (TH + 2) * Wp2 * Cp * 2
                     + (TH + 2) * W * 9 * Cp * 2)
    need = 2 * block_bytes + scratch_bytes
    try:
        phys = int(pltpu.get_tpu_info().vmem_capacity_bytes)
    except Exception:
        phys = 64 * 1024 * 1024              # conservative (v7x per-core)
    vmem_limit = int(min(max(need + need // 2 + (4 << 20), 32 << 20),
                         max(phys - (8 << 20), 32 << 20)))

    out_nhwc = pl.pallas_call(
        _basic_block_kernel,
        out_shape=jax.ShapeDtypeStruct((B, H, W, Cp), jnp.float32),
        grid_spec=pltpu.PrefetchScalarGridSpec(
            num_scalar_prefetch=0,
            grid=(B, nH),
            in_specs=[
                # whole image, resident across the row-tile axis (halo source
                # and residual); re-fetched from HBM only when b changes
                pl.BlockSpec((1, H, W, Cp), lambda b, j: (b, 0, 0, 0)),
                pl.BlockSpec((2, 9 * Cp, Cp), lambda b, j: (0, 0, 0)),
                pl.BlockSpec((4, Cp), lambda b, j: (0, 0)),
            ],
            out_specs=pl.BlockSpec((1, TH, W, Cp), lambda b, j: (b, j, 0, 0)),
            scratch_shapes=[
                pltpu.VMEM((TH + 4, Wp2, Cp), jnp.bfloat16),       # x halo buf
                pltpu.VMEM((TH + 2, Wp2, Cp), jnp.bfloat16),       # out1 halo buf
                pltpu.VMEM(((TH + 2) * W, 9 * Cp), jnp.bfloat16),  # im2col slab
            ],
        ),
        compiler_params=pltpu.CompilerParams(
            dimension_semantics=("parallel", "parallel"),
            vmem_limit_bytes=vmem_limit,
        ),
    )(x, w_stack, sb)

    # Strip channel padding, NHWC -> NCHW to match the PyTorch module.
    return jnp.transpose(out_nhwc[..., :C], (0, 3, 1, 2))


def _reference(x_nchw, w1, w2, bn1, bn2, eps=1e-5):
    """Pure-JAX reference (lax conv, f32) for correctness checking."""
    x = jnp.transpose(x_nchw, (0, 2, 3, 1)).astype(jnp.float32)

    def conv(inp, w):
        w_hwio = jnp.transpose(w, (2, 3, 1, 0)).astype(jnp.float32)
        return jax.lax.conv_general_dilated(
            inp, w_hwio, window_strides=(1, 1), padding=((1, 1), (1, 1)),
            dimension_numbers=("NHWC", "HWIO", "NHWC"))

    def bn(inp, p):
        gamma, beta, mean, var = p
        return (inp - mean) / jnp.sqrt(var + eps) * gamma + beta

    out = jax.nn.relu(bn(conv(x, w1), bn1))
    out = bn(conv(out, w2), bn2)
    out = jax.nn.relu(out + x)
    return jnp.transpose(out, (0, 3, 1, 2))


if __name__ == "__main__":
    B, C, H, W = 2, 4, 16, 16  # inplanes = planes = 4, stride = 1, no downsample
    key = jax.random.PRNGKey(0)
    kx, kw1, kw2, kg1, kb1, kg2, kb2, km1, kv1, km2, kv2 = jax.random.split(key, 11)

    x = jax.random.normal(kx, (B, C, H, W), jnp.float32)
    w1 = jax.random.normal(kw1, (C, C, 3, 3), jnp.float32) * 0.1
    w2 = jax.random.normal(kw2, (C, C, 3, 3), jnp.float32) * 0.1
    bn1 = (1.0 + 0.1 * jax.random.normal(kg1, (C,)), 0.1 * jax.random.normal(kb1, (C,)),
           0.1 * jax.random.normal(km1, (C,)), 1.0 + 0.1 * jax.nn.softplus(jax.random.normal(kv1, (C,))))
    bn2 = (1.0 + 0.1 * jax.random.normal(kg2, (C,)), 0.1 * jax.random.normal(kb2, (C,)),
           0.1 * jax.random.normal(km2, (C,)), 1.0 + 0.1 * jax.nn.softplus(jax.random.normal(kv2, (C,))))

    out = basic_block_pallas(x, w1, w2, bn1, bn2)
    out = jax.block_until_ready(out)

    ref = _reference(x, w1, w2, bn1, bn2)
    assert out.shape == (B, C, H, W)
    # bf16 matmul operands (f32 accumulation) -> slightly looser tolerance.
    max_err = jnp.max(jnp.abs(out - ref))
    assert jnp.allclose(out, ref, atol=3e-2, rtol=3e-2), f"max abs err {max_err}"
    print("KERNEL_OK")
</pallas_src>

<mosaic_0001>
module attributes {stable_mosaic.version = 11 : i64} {
  func.func @_basic_block_kernel(%arg0: i32, %arg1: i32, %arg2: memref<1x16x16x128xf32, #tpu.memory_space<vmem>>, %arg3: memref<2x1152x128xbf16, #tpu.memory_space<vmem>>, %arg4: memref<4x128xf32, #tpu.memory_space<vmem>>, %arg5: memref<1x8x16x128xf32, #tpu.memory_space<vmem>>, %arg6: memref<12x24x128xbf16, #tpu.memory_space<vmem>>, %arg7: memref<10x24x128xbf16, #tpu.memory_space<vmem>>, %arg8: memref<160x1152xbf16, #tpu.memory_space<vmem>>) attributes {dimension_semantics = [#tpu.dimension_semantics<parallel>, #tpu.dimension_semantics<parallel>], iteration_bounds = array<i64: 2, 2>, scalar_prefetch = 0 : i64, scratch_operands = 3 : i64, tpu.core_type = #tpu.core_type<tc>, window_params = [{transform_indices = @transform_0, window_bounds = array<i64: 1, 16, 16, 128>}, {pipeline_mode = #tpu.pipeline_mode<synchronous>, transform_indices = @transform_1, window_bounds = array<i64: 2, 1152, 128>}, {pipeline_mode = #tpu.pipeline_mode<synchronous>, transform_indices = @transform_2, window_bounds = array<i64: 4, 128>}, {transform_indices = @transform_3, window_bounds = array<i64: 1, 8, 16, 128>}]} {
    %c8_i32 = arith.constant 8 : i32
    %0 = arith.muli %arg1, %c8_i32 : i32
    %1 = tpu.assume_multiple %0, 8 : i32
    %cst = arith.constant 0.000000e+00 : bf16
    %2 = vector.broadcast %cst : bf16 to vector<12x1x128xbf16>
    %c0 = arith.constant 0 : index
    %c0_0 = arith.constant 0 : index
    %c0_1 = arith.constant 0 : index
    %3 = vector.load %arg6[%c0, %c0_0, %c0_1] : memref<12x24x128xbf16, #tpu.memory_space<vmem>>, vector<12x1x128xbf16>
    tpu.vector_store %arg6[%c0, %c0_0, %c0_1], %2 {strides = array<i32>} : memref<12x24x128xbf16, #tpu.memory_space<vmem>>, vector<12x1x128xbf16>,
    %cst_2 = arith.constant 0.000000e+00 : bf16
    %4 = vector.broadcast %cst_2 : bf16 to vector<12x1x128xbf16>
    %c0_3 = arith.constant 0 : index
    %c17 = arith.constant 17 : index
    %c0_4 = arith.constant 0 : index
    %5 = vector.load %arg6[%c0_3, %c17, %c0_4] : memref<12x24x128xbf16, #tpu.memory_space<vmem>>, vector<12x1x128xbf16>
    tpu.vector_store %arg6[%c0_3, %c17, %c0_4], %4 {strides = array<i32>} : memref<12x24x128xbf16, #tpu.memory_space<vmem>>, vector<12x1x128xbf16>,
    %c0_5 = arith.constant 0 : index
    %6 = arith.index_cast %1 : i32 to index
    %c0_6 = arith.constant 0 : index
    %c0_7 = arith.constant 0 : index
    %7 = vector.load %arg2[%c0_5, %6, %c0_6, %c0_7] : memref<1x16x16x128xf32, #tpu.memory_space<vmem>>, vector<1x8x16x128xf32>
    %8 = vector.shape_cast %7 : vector<1x8x16x128xf32> to vector<8x16x128xf32>
    %9 = arith.truncf %8 : vector<8x16x128xf32> to vector<8x16x128xbf16>
    %c2 = arith.constant 2 : index
    %c1 = arith.constant 1 : index
    %c0_8 = arith.constant 0 : index
    %10 = vector.load %arg6[%c2, %c1, %c0_8] : memref<12x24x128xbf16, #tpu.memory_space<vmem>>, vector<8x16x128xbf16>
    tpu.vector_store %arg6[%c2, %c1, %c0_8], %9 {strides = array<i32>} : memref<12x24x128xbf16, #tpu.memory_space<vmem>>, vector<8x16x128xbf16>,
    %c2_i32 = arith.constant 2 : i32
    %11 = arith.subi %1, %c2_i32 : i32
    %cst_9 = arith.constant 0.000000e+00 : bf16
    %12 = vector.broadcast %cst_9 : bf16 to vector<1x16x128xbf16>
    %c0_10 = arith.constant 0 : index
    %c1_11 = arith.constant 1 : index
    %c0_12 = arith.constant 0 : index
    %13 = vector.load %arg6[%c0_10, %c1_11, %c0_12] : memref<12x24x128xbf16, #tpu.memory_space<vmem>>, vector<1x16x128xbf16>
    tpu.vector_store %arg6[%c0_10, %c1_11, %c0_12], %12 {strides = array<i32>} : memref<12x24x128xbf16, #tpu.memory_space<vmem>>, vector<1x16x128xbf16>,
    %c0_i32 = arith.constant 0 : i32
    %14 = arith.cmpi sge, %11, %c0_i32 : i32
    %c16_i32 = arith.constant 16 : i32
    %15 = arith.cmpi slt, %11, %c16_i32 : i32
    %16 = arith.andi %14, %15 : i1
    %17 = arith.extui %16 : i1 to i32
    %c0_i32_13 = arith.constant 0 : i32
    %18 = arith.cmpi ne, %17, %c0_i32_13 : i32
    scf.if %18 {
      %c0_i32_162 = arith.constant 0 : i32
      %c15_i32 = arith.constant 15 : i32
      %144 = arith.maxsi %c0_i32_162, %11 : i32
      %145 = arith.minsi %c15_i32, %144 : i32
      %c0_163 = arith.constant 0 : index
      %146 = arith.index_cast %145 : i32 to index
      %c0_164 = arith.constant 0 : index
      %c0_165 = arith.constant 0 : index
      %147 = vector.load %arg2[%c0_163, %146, %c0_164, %c0_165] : memref<1x16x16x128xf32, #tpu.memory_space<vmem>>, vector<1x1x16x128xf32>
      %148 = vector.shape_cast %147 : vector<1x1x16x128xf32> to vector<1x16x128xf32>
      %149 = arith.truncf %148 : vector<1x16x128xf32> to vector<1x16x128xbf16>
      %c0_166 = arith.constant 0 : index
      %c1_167 = arith.constant 1 : index
      %c0_168 = arith.constant 0 : index
      %150 = vector.load %arg6[%c0_166, %c1_167, %c0_168] : memref<12x24x128xbf16, #tpu.memory_space<vmem>>, vector<1x16x128xbf16>
      tpu.vector_store %arg6[%c0_166, %c1_167, %c0_168], %149 {strides = array<i32>} : memref<12x24x128xbf16, #tpu.memory_space<vmem>>, vector<1x16x128xbf16>,
    } else {
    }
    %c1_i32 = arith.constant 1 : i32
    %19 = arith.subi %1, %c1_i32 : i32
    %cst_14 = arith.constant 0.000000e+00 : bf16
    %20 = vector.broadcast %cst_14 : bf16 to vector<1x16x128xbf16>
    %c1_15 = arith.constant 1 : index
    %c1_16 = arith.constant 1 : index
    %c0_17 = arith.constant 0 : index
    %21 = vector.load %arg6[%c1_15, %c1_16, %c0_17] : memref<12x24x128xbf16, #tpu.memory_space<vmem>>, vector<1x16x128xbf16>
    tpu.vector_store %arg6[%c1_15, %c1_16, %c0_17], %20 {strides = array<i32>} : memref<12x24x128xbf16, #tpu.memory_space<vmem>>, vector<1x16x128xbf16>,
    %c0_i32_18 = arith.constant 0 : i32
    %22 = arith.cmpi sge, %19, %c0_i32_18 : i32
    %c16_i32_19 = arith.constant 16 : i32
    %23 = arith.cmpi slt, %19, %c16_i32_19 : i32
    %24 = arith.andi %22, %23 : i1
    %25 = arith.extui %24 : i1 to i32
    %c0_i32_20 = arith.constant 0 : i32
    %26 = arith.cmpi ne, %25, %c0_i32_20 : i32
    scf.if %26 {
      %c0_i32_162 = arith.constant 0 : i32
      %c15_i32 = arith.constant 15 : i32
      %144 = arith.maxsi %c0_i32_162, %19 : i32
      %145 = arith.minsi %c15_i32, %144 : i32
      %c0_163 = arith.constant 0 : index
      %146 = arith.index_cast %145 : i32 to index
      %c0_164 = arith.constant 0 : index
      %c0_165 = arith.constant 0 : index
      %147 = vector.load %arg2[%c0_163, %146, %c0_164, %c0_165] : memref<1x16x16x128xf32, #tpu.memory_space<vmem>>, vector<1x1x16x128xf32>
      %148 = vector.shape_cast %147 : vector<1x1x16x128xf32> to vector<1x16x128xf32>
      %149 = arith.truncf %148 : vector<1x16x128xf32> to vector<1x16x128xbf16>
      %c1_166 = arith.constant 1 : index
      %c1_167 = arith.constant 1 : index
      %c0_168 = arith.constant 0 : index
      %150 = vector.load %arg6[%c1_166, %c1_167, %c0_168] : memref<12x24x128xbf16, #tpu.memory_space<vmem>>, vector<1x16x128xbf16>
      tpu.vector_store %arg6[%c1_166, %c1_167, %c0_168], %149 {strides = array<i32>} : memref<12x24x128xbf16, #tpu.memory_space<vmem>>, vector<1x16x128xbf16>,
    } else {
    }
    %c8_i32_21 = arith.constant 8 : i32
    %27 = arith.addi %1, %c8_i32_21 : i32
    %cst_22 = arith.constant 0.000000e+00 : bf16
    %28 = vector.broadcast %cst_22 : bf16 to vector<1x16x128xbf16>
    %c10 = arith.constant 10 : index
    %c1_23 = arith.constant 1 : index
    %c0_24 = arith.constant 0 : index
    %29 = vector.load %arg6[%c10, %c1_23, %c0_24] : memref<12x24x128xbf16, #tpu.memory_space<vmem>>, vector<1x16x128xbf16>
    tpu.vector_store %arg6[%c10, %c1_23, %c0_24], %28 {strides = array<i32>} : memref<12x24x128xbf16, #tpu.memory_space<vmem>>, vector<1x16x128xbf16>,
    %c0_i32_25 = arith.constant 0 : i32
    %30 = arith.cmpi sge, %27, %c0_i32_25 : i32
    %c16_i32_26 = arith.constant 16 : i32
    %31 = arith.cmpi slt, %27, %c16_i32_26 : i32
    %32 = arith.andi %30, %31 : i1
    %33 = arith.extui %32 : i1 to i32
    %c0_i32_27 = arith.constant 0 : i32
    %34 = arith.cmpi ne, %33, %c0_i32_27 : i32
    scf.if %34 {
      %c0_i32_162 = arith.constant 0 : i32
      %c15_i32 = arith.constant 15 : i32
      %144 = arith.maxsi %c0_i32_162, %27 : i32
      %145 = arith.minsi %c15_i32, %144 : i32
      %c0_163 = arith.constant 0 : index
      %146 = arith.index_cast %145 : i32 to index
      %c0_164 = arith.constant 0 : index
      %c0_165 = arith.constant 0 : index
      %147 = vector.load %arg2[%c0_163, %146, %c0_164, %c0_165] : memref<1x16x16x128xf32, #tpu.memory_space<vmem>>, vector<1x1x16x128xf32>
      %148 = vector.shape_cast %147 : vector<1x1x16x128xf32> to vector<1x16x128xf32>
      %149 = arith.truncf %148 : vector<1x16x128xf32> to vector<1x16x128xbf16>
      %c10_166 = arith.constant 10 : index
      %c1_167 = arith.constant 1 : index
      %c0_168 = arith.constant 0 : index
      %150 = vector.load %arg6[%c10_166, %c1_167, %c0_168] : memref<12x24x128xbf16, #tpu.memory_space<vmem>>, vector<1x16x128xbf16>
      tpu.vector_store %arg6[%c10_166, %c1_167, %c0_168], %149 {strides = array<i32>} : memref<12x24x128xbf16, #tpu.memory_space<vmem>>, vector<1x16x128xbf16>,
    } else {
    }
    %c8_i32_28 = arith.constant 8 : i32
    %35 = arith.addi %1, %c8_i32_28 : i32
    %c1_i32_29 = arith.constant 1 : i32
    %36 = arith.addi %35, %c1_i32_29 : i32
    %cst_30 = arith.constant 0.000000e+00 : bf16
    %37 = vector.broadcast %cst_30 : bf16 to vector<1x16x128xbf16>
    %c11 = arith.constant 11 : index
    %c1_31 = arith.constant 1 : index
    %c0_32 = arith.constant 0 : index
    %38 = vector.load %arg6[%c11, %c1_31, %c0_32] : memref<12x24x128xbf16, #tpu.memory_space<vmem>>, vector<1x16x128xbf16>
    tpu.vector_store %arg6[%c11, %c1_31, %c0_32], %37 {strides = array<i32>} : memref<12x24x128xbf16, #tpu.memory_space<vmem>>, vector<1x16x128xbf16>,
    %c0_i32_33 = arith.constant 0 : i32
    %39 = arith.cmpi sge, %36, %c0_i32_33 : i32
    %c16_i32_34 = arith.constant 16 : i32
    %40 = arith.cmpi slt, %36, %c16_i32_34 : i32
    %41 = arith.andi %39, %40 : i1
    %42 = arith.extui %41 : i1 to i32
    %c0_i32_35 = arith.constant 0 : i32
    %43 = arith.cmpi ne, %42, %c0_i32_35 : i32
    scf.if %43 {
      %c0_i32_162 = arith.constant 0 : i32
      %c15_i32 = arith.constant 15 : i32
      %144 = arith.maxsi %c0_i32_162, %36 : i32
      %145 = arith.minsi %c15_i32, %144 : i32
      %c0_163 = arith.constant 0 : index
      %146 = arith.index_cast %145 : i32 to index
      %c0_164 = arith.constant 0 : index
      %c0_165 = arith.constant 0 : index
      %147 = vector.load %arg2[%c0_163, %146, %c0_164, %c0_165] : memref<1x16x16x128xf32, #tpu.memory_space<vmem>>, vector<1x1x16x128xf32>
      %148 = vector.shape_cast %147 : vector<1x1x16x128xf32> to vector<1x16x128xf32>
      %149 = arith.truncf %148 : vector<1x16x128xf32> to vector<1x16x128xbf16>
      %c11_166 = arith.constant 11 : index
      %c1_167 = arith.constant 1 : index
      %c0_168 = arith.constant 0 : index
      %150 = vector.load %arg6[%c11_166, %c1_167, %c0_168] : memref<12x24x128xbf16, #tpu.memory_space<vmem>>, vector<1x16x128xbf16>
      tpu.vector_store %arg6[%c11_166, %c1_167, %c0_168], %149 {strides = array<i32>} : memref<12x24x128xbf16, #tpu.memory_space<vmem>>, vector<1x16x128xbf16>,
    } else {
    }
    %c0_36 = arith.constant 0 : index
    %c0_37 = arith.constant 0 : index
    %c0_38 = arith.constant 0 : index
    %44 = vector.load %arg6[%c0_36, %c0_37, %c0_38] : memref<12x24x128xbf16, #tpu.memory_space<vmem>>, vector<10x16x128xbf16>
    %45 = vector.shape_cast %44 : vector<10x16x128xbf16> to vector<160x128xbf16>
    %c0_39 = arith.constant 0 : index
    %c0_40 = arith.constant 0 : index
    %46 = vector.load %arg8[%c0_39, %c0_40] : memref<160x1152xbf16, #tpu.memory_space<vmem>>, vector<160x128xbf16>
    tpu.vector_store %arg8[%c0_39, %c0_40], %45 {strides = array<i32>} : memref<160x1152xbf16, #tpu.memory_space<vmem>>, vector<160x128xbf16>,
    %c0_41 = arith.constant 0 : index
    %c1_42 = arith.constant 1 : index
    %c0_43 = arith.constant 0 : index
    %47 = vector.load %arg6[%c0_41, %c1_42, %c0_43] : memref<12x24x128xbf16, #tpu.memory_space<vmem>>, vector<10x16x128xbf16>
    %48 = vector.shape_cast %47 : vector<10x16x128xbf16> to vector<160x128xbf16>
    %c0_44 = arith.constant 0 : index
    %c128 = arith.constant 128 : index
    %49 = vector.load %arg8[%c0_44, %c128] : memref<160x1152xbf16, #tpu.memory_space<vmem>>, vector<160x128xbf16>
    tpu.vector_store %arg8[%c0_44, %c128], %48 {strides = array<i32>} : memref<160x1152xbf16, #tpu.memory_space<vmem>>, vector<160x128xbf16>,
    %c0_45 = arith.constant 0 : index
    %c2_46 = arith.constant 2 : index
    %c0_47 = arith.constant 0 : index
    %50 = vector.load %arg6[%c0_45, %c2_46, %c0_47] : memref<12x24x128xbf16, #tpu.memory_space<vmem>>, vector<10x16x128xbf16>
    %51 = vector.shape_cast %50 : vector<10x16x128xbf16> to vector<160x128xbf16>
    %c0_48 = arith.constant 0 : index
    %c256 = arith.constant 256 : index
    %52 = vector.load %arg8[%c0_48, %c256] : memref<160x1152xbf16, #tpu.memory_space<vmem>>, vector<160x128xbf16>
    tpu.vector_store %arg8[%c0_48, %c256], %51 {strides = array<i32>} : memref<160x1152xbf16, #tpu.memory_space<vmem>>, vector<160x128xbf16>,
    %c1_49 = arith.constant 1 : index
    %c0_50 = arith.constant 0 : index
    %c0_51 = arith.constant 0 : index
    %53 = vector.load %arg6[%c1_49, %c0_50, %c0_51] : memref<12x24x128xbf16, #tpu.memory_space<vmem>>, vector<10x16x128xbf16>
    %54 = vector.shape_cast %53 : vector<10x16x128xbf16> to vector<160x128xbf16>
    %c0_52 = arith.constant 0 : index
    %c384 = arith.constant 384 : index
    %55 = vector.load %arg8[%c0_52, %c384] : memref<160x1152xbf16, #tpu.memory_space<vmem>>, vector<160x128xbf16>
    tpu.vector_store %arg8[%c0_52, %c384], %54 {strides = array<i32>} : memref<160x1152xbf16, #tpu.memory_space<vmem>>, vector<160x128xbf16>,
    %c1_53 = arith.constant 1 : index
    %c1_54 = arith.constant 1 : index
    %c0_55 = arith.constant 0 : index
    %56 = vector.load %arg6[%c1_53, %c1_54, %c0_55] : memref<12x24x128xbf16, #tpu.memory_space<vmem>>, vector<10x16x128xbf16>
    %57 = vector.shape_cast %56 : vector<10x16x128xbf16> to vector<160x128xbf16>
    %c0_56 = arith.constant 0 : index
    %c512 = arith.constant 512 : index
    %58 = vector.load %arg8[%c0_56, %c512] : memref<160x1152xbf16, #tpu.memory_space<vmem>>, vector<160x128xbf16>
    tpu.vector_store %arg8[%c0_56, %c512], %57 {strides = array<i32>} : memref<160x1152xbf16, #tpu.memory_space<vmem>>, vector<160x128xbf16>,
    %c1_57 = arith.constant 1 : index
    %c2_58 = arith.constant 2 : index
    %c0_59 = arith.constant 0 : index
    %59 = vector.load %arg6[%c1_57, %c2_58, %c0_59] : memref<12x24x128xbf16, #tpu.memory_space<vmem>>, vector<10x16x128xbf16>
    %60 = vector.shape_cast %59 : vector<10x16x128xbf16> to vector<160x128xbf16>
    %c0_60 = arith.constant 0 : index
    %c640 = arith.constant 640 : index
    %61 = vector.load %arg8[%c0_60, %c640] : memref<160x1152xbf16, #tpu.memory_space<vmem>>, vector<160x128xbf16>
    tpu.vector_store %arg8[%c0_60, %c640], %60 {strides = array<i32>} : memref<160x1152xbf16, #tpu.memory_space<vmem>>, vector<160x128xbf16>,
    %c2_61 = arith.constant 2 : index
    %c0_62 = arith.constant 0 : index
    %c0_63 = arith.constant 0 : index
    %62 = vector.load %arg6[%c2_61, %c0_62, %c0_63] : memref<12x24x128xbf16, #tpu.memory_space<vmem>>, vector<10x16x128xbf16>
    %63 = vector.shape_cast %62 : vector<10x16x128xbf16> to vector<160x128xbf16>
    %c0_64 = arith.constant 0 : index
    %c768 = arith.constant 768 : index
    %64 = vector.load %arg8[%c0_64, %c768] : memref<160x1152xbf16, #tpu.memory_space<vmem>>, vector<160x128xbf16>
    tpu.vector_store %arg8[%c0_64, %c768], %63 {strides = array<i32>} : memref<160x1152xbf16, #tpu.memory_space<vmem>>, vector<160x128xbf16>,
    %c2_65 = arith.constant 2 : index
    %c1_66 = arith.constant 1 : index
    %c0_67 = arith.constant 0 : index
    %65 = vector.load %arg6[%c2_65, %c1_66, %c0_67] : memref<12x24x128xbf16, #tpu.memory_space<vmem>>, vector<10x16x128xbf16>
    %66 = vector.shape_cast %65 : vector<10x16x128xbf16> to vector<160x128xbf16>
    %c0_68 = arith.constant 0 : index
    %c896 = arith.constant 896 : index
    %67 = vector.load %arg8[%c0_68, %c896] : memref<160x1152xbf16, #tpu.memory_space<vmem>>, vector<160x128xbf16>
    tpu.vector_store %arg8[%c0_68, %c896], %66 {strides = array<i32>} : memref<160x1152xbf16, #tpu.memory_space<vmem>>, vector<160x128xbf16>,
    %c2_69 = arith.constant 2 : index
    %c2_70 = arith.constant 2 : index
    %c0_71 = arith.constant 0 : index
    %68 = vector.load %arg6[%c2_69, %c2_70, %c0_71] : memref<12x24x128xbf16, #tpu.memory_space<vmem>>, vector<10x16x128xbf16>
    %69 = vector.shape_cast %68 : vector<10x16x128xbf16> to vector<160x128xbf16>
    %c0_72 = arith.constant 0 : index
    %c1024 = arith.constant 1024 : index
    %70 = vector.load %arg8[%c0_72, %c1024] : memref<160x1152xbf16, #tpu.memory_space<vmem>>, vector<160x128xbf16>
    tpu.vector_store %arg8[%c0_72, %c1024], %69 {strides = array<i32>} : memref<160x1152xbf16, #tpu.memory_space<vmem>>, vector<160x128xbf16>,
    %c0_73 = arith.constant 0 : index
    %c0_74 = arith.constant 0 : index
    %71 = vector.load %arg8[%c0_73, %c0_74] : memref<160x1152xbf16, #tpu.memory_space<vmem>>, vector<160x1152xbf16>
    %c0_75 = arith.constant 0 : index
    %c0_76 = arith.constant 0 : index
    %c0_77 = arith.constant 0 : index
    %72 = vector.load %arg3[%c0_75, %c0_76, %c0_77] : memref<2x1152x128xbf16, #tpu.memory_space<vmem>>, vector<1x1152x128xbf16>
    %73 = vector.shape_cast %72 : vector<1x1152x128xbf16> to vector<1152x128xbf16>
    %cst_78 = arith.constant dense<0.000000e+00> : vector<160x128xf32>
    %74 = tpu.matmul %71, %73, %cst_78 {dimension_numbers = #tpu.dot_dimension_numbers<[1], [0], [0], [1], [0, 0, 1, 1], [], []>} : vector<160x1152xbf16>, vector<1152x128xbf16>, vector<160x128xf32> -> vector<160x128xf32>
    %c0_79 = arith.constant 0 : index
    %c0_80 = arith.constant 0 : index
    %75 = vector.load %arg4[%c0_79, %c0_80] : memref<4x128xf32, #tpu.memory_space<vmem>>, vector<1x128xf32>
    %c1_81 = arith.constant 1 : index
    %c0_82 = arith.constant 0 : index
    %76 = vector.load %arg4[%c1_81, %c0_82] : memref<4x128xf32, #tpu.memory_space<vmem>>, vector<1x128xf32>
    %77 = vector.broadcast %75 : vector<1x128xf32> to vector<160x128xf32>
    %78 = arith.mulf %74, %77 : vector<160x128xf32>
    %79 = vector.broadcast %76 : vector<1x128xf32> to vector<160x128xf32>
    %80 = arith.addf %78, %79 : vector<160x128xf32>
    %81 = vector.shape_cast %80 : vector<160x128xf32> to vector<10x16x128xf32>
    %cst_83 = arith.constant 0.000000e+00 : f32
    %82 = vector.broadcast %cst_83 : f32 to vector<10x16x128xf32>
    %83 = arith.maximumf %81, %82 : vector<10x16x128xf32>
    %cst_84 = arith.constant 0.000000e+00 : bf16
    %84 = vector.broadcast %cst_84 : bf16 to vector<10x1x128xbf16>
    %c0_85 = arith.constant 0 : index
    %c0_86 = arith.constant 0 : index
    %c0_87 = arith.constant 0 : index
    %85 = vector.load %arg7[%c0_85, %c0_86, %c0_87] : memref<10x24x128xbf16, #tpu.memory_space<vmem>>, vector<10x1x128xbf16>
    tpu.vector_store %arg7[%c0_85, %c0_86, %c0_87], %84 {strides = array<i32>} : memref<10x24x128xbf16, #tpu.memory_space<vmem>>, vector<10x1x128xbf16>,
    %cst_88 = arith.constant 0.000000e+00 : bf16
    %86 = vector.broadcast %cst_88 : bf16 to vector<10x1x128xbf16>
    %c0_89 = arith.constant 0 : index
    %c17_90 = arith.constant 17 : index
    %c0_91 = arith.constant 0 : index
    %87 = vector.load %arg7[%c0_89, %c17_90, %c0_91] : memref<10x24x128xbf16, #tpu.memory_space<vmem>>, vector<10x1x128xbf16>
    tpu.vector_store %arg7[%c0_89, %c17_90, %c0_91], %86 {strides = array<i32>} : memref<10x24x128xbf16, #tpu.memory_space<vmem>>, vector<10x1x128xbf16>,
    %88 = arith.truncf %83 : vector<10x16x128xf32> to vector<10x16x128xbf16>
    %c0_92 = arith.constant 0 : index
    %c1_93 = arith.constant 1 : index
    %c0_94 = arith.constant 0 : index
    %89 = vector.load %arg7[%c0_92, %c1_93, %c0_94] : memref<10x24x128xbf16, #tpu.memory_space<vmem>>, vector<10x16x128xbf16>
    tpu.vector_store %arg7[%c0_92, %c1_93, %c0_94], %88 {strides = array<i32>} : memref<10x24x128xbf16, #tpu.memory_space<vmem>>, vector<10x16x128xbf16>,
    %c0_i32_95 = arith.constant 0 : i32
    %90 = arith.cmpi eq, %1, %c0_i32_95 : i32
    %91 = arith.extui %90 : i1 to i32
    %c0_i32_96 = arith.constant 0 : i32
    %92 = arith.cmpi ne, %91, %c0_i32_96 : i32
    scf.if %92 {
      %cst_162 = arith.constant 0.000000e+00 : bf16
      %144 = vector.broadcast %cst_162 : bf16 to vector<1x16x128xbf16>
      %c0_163 = arith.constant 0 : index
      %c1_164 = arith.constant 1 : index
      %c0_165 = arith.constant 0 : index
      %145 = vector.load %arg7[%c0_163, %c1_164, %c0_165] : memref<10x24x128xbf16, #tpu.memory_space<vmem>>, vector<1x16x128xbf16>
      tpu.vector_store %arg7[%c0_163, %c1_164, %c0_165], %144 {strides = array<i32>} : memref<10x24x128xbf16, #tpu.memory_space<vmem>>, vector<1x16x128xbf16>,
    } else {
    }
    %c8_i32_97 = arith.constant 8 : i32
    %93 = arith.addi %1, %c8_i32_97 : i32
    %c16_i32_98 = arith.constant 16 : i32
    %94 = arith.cmpi eq, %93, %c16_i32_98 : i32
    %95 = arith.extui %94 : i1 to i32
    %c0_i32_99 = arith.constant 0 : i32
    %96 = arith.cmpi ne, %95, %c0_i32_99 : i32
    scf.if %96 {
      %cst_162 = arith.constant 0.000000e+00 : bf16
      %144 = vector.broadcast %cst_162 : bf16 to vector<1x16x128xbf16>
      %c9 = arith.constant 9 : index
      %c1_163 = arith.constant 1 : index
      %c0_164 = arith.constant 0 : index
      %145 = vector.load %arg7[%c9, %c1_163, %c0_164] : memref<10x24x128xbf16, #tpu.memory_space<vmem>>, vector<1x16x128xbf16>
      tpu.vector_store %arg7[%c9, %c1_163, %c0_164], %144 {strides = array<i32>} : memref<10x24x128xbf16, #tpu.memory_space<vmem>>, vector<1x16x128xbf16>,
    } else {
    }
    %c0_100 = arith.constant 0 : index
    %c0_101 = arith.constant 0 : index
    %c0_102 = arith.constant 0 : index
    %97 = vector.load %arg7[%c0_100, %c0_101, %c0_102] : memref<10x24x128xbf16, #tpu.memory_space<vmem>>, vector<8x16x128xbf16>
    %98 = vector.shape_cast %97 : vector<8x16x128xbf16> to vector<128x128xbf16>
    %c0_103 = arith.constant 0 : index
    %c0_104 = arith.constant 0 : index
    %99 = vector.load %arg8[%c0_103, %c0_104] : memref<160x1152xbf16, #tpu.memory_space<vmem>>, vector<128x128xbf16>
    tpu.vector_store %arg8[%c0_103, %c0_104], %98 {strides = array<i32>} : memref<160x1152xbf16, #tpu.memory_space<vmem>>, vector<128x128xbf16>,
    %c0_105 = arith.constant 0 : index
    %c1_106 = arith.constant 1 : index
    %c0_107 = arith.constant 0 : index
    %100 = vector.load %arg7[%c0_105, %c1_106, %c0_107] : memref<10x24x128xbf16, #tpu.memory_space<vmem>>, vector<8x16x128xbf16>
    %101 = vector.shape_cast %100 : vector<8x16x128xbf16> to vector<128x128xbf16>
    %c0_108 = arith.constant 0 : index
    %c128_109 = arith.constant 128 : index
    %102 = vector.load %arg8[%c0_108, %c128_109] : memref<160x1152xbf16, #tpu.memory_space<vmem>>, vector<128x128xbf16>
    tpu.vector_store %arg8[%c0_108, %c128_109], %101 {strides = array<i32>} : memref<160x1152xbf16, #tpu.memory_space<vmem>>, vector<128x128xbf16>,
    %c0_110 = arith.constant 0 : index
    %c2_111 = arith.constant 2 : index
    %c0_112 = arith.constant 0 : index
    %103 = vector.load %arg7[%c0_110, %c2_111, %c0_112] : memref<10x24x128xbf16, #tpu.memory_space<vmem>>, vector<8x16x128xbf16>
    %104 = vector.shape_cast %103 : vector<8x16x128xbf16> to vector<128x128xbf16>
    %c0_113 = arith.constant 0 : index
    %c256_114 = arith.constant 256 : index
    %105 = vector.load %arg8[%c0_113, %c256_114] : memref<160x1152xbf16, #tpu.memory_space<vmem>>, vector<128x128xbf16>
    tpu.vector_store %arg8[%c0_113, %c256_114], %104 {strides = array<i32>} : memref<160x1152xbf16, #tpu.memory_space<vmem>>, vector<128x128xbf16>,
    %c1_115 = arith.constant 1 : index
    %c0_116 = arith.constant 0 : index
    %c0_117 = arith.constant 0 : index
    %106 = vector.load %arg7[%c1_115, %c0_116, %c0_117] : memref<10x24x128xbf16, #tpu.memory_space<vmem>>, vector<8x16x128xbf16>
    %107 = vector.shape_cast %106 : vector<8x16x128xbf16> to vector<128x128xbf16>
    %c0_118 = arith.constant 0 : index
    %c384_119 = arith.constant 384 : index
    %108 = vector.load %arg8[%c0_118, %c384_119] : memref<160x1152xbf16, #tpu.memory_space<vmem>>, vector<128x128xbf16>
    tpu.vector_store %arg8[%c0_118, %c384_119], %107 {strides = array<i32>} : memref<160x1152xbf16, #tpu.memory_space<vmem>>, vector<128x128xbf16>,
    %c1_120 = arith.constant 1 : index
    %c1_121 = arith.constant 1 : index
    %c0_122 = arith.constant 0 : index
    %109 = vector.load %arg7[%c1_120, %c1_121, %c0_122] : memref<10x24x128xbf16, #tpu.memory_space<vmem>>, vector<8x16x128xbf16>
    %110 = vector.shape_cast %109 : vector<8x16x128xbf16> to vector<128x128xbf16>
    %c0_123 = arith.constant 0 : index
    %c512_124 = arith.constant 512 : index
    %111 = vector.load %arg8[%c0_123, %c512_124] : memref<160x1152xbf16, #tpu.memory_space<vmem>>, vector<128x128xbf16>
    tpu.vector_store %arg8[%c0_123, %c512_124], %110 {strides = array<i32>} : memref<160x1152xbf16, #tpu.memory_space<vmem>>, vector<128x128xbf16>,
    %c1_125 = arith.constant 1 : index
    %c2_126 = arith.constant 2 : index
    %c0_127 = arith.constant 0 : index
    %112 = vector.load %arg7[%c1_125, %c2_126, %c0_127] : memref<10x24x128xbf16, #tpu.memory_space<vmem>>, vector<8x16x128xbf16>
    %113 = vector.shape_cast %112 : vector<8x16x128xbf16> to vector<128x128xbf16>
    %c0_128 = arith.constant 0 : index
    %c640_129 = arith.constant 640 : index
    %114 = vector.load %arg8[%c0_128, %c640_129] : memref<160x1152xbf16, #tpu.memory_space<vmem>>, vector<128x128xbf16>
    tpu.vector_store %arg8[%c0_128, %c640_129], %113 {strides = array<i32>} : memref<160x1152xbf16, #tpu.memory_space<vmem>>, vector<128x128xbf16>,
    %c2_130 = arith.constant 2 : index
    %c0_131 = arith.constant 0 : index
    %c0_132 = arith.constant 0 : index
    %115 = vector.load %arg7[%c2_130, %c0_131, %c0_132] : memref<10x24x128xbf16, #tpu.memory_space<vmem>>, vector<8x16x128xbf16>
    %116 = vector.shape_cast %115 : vector<8x16x128xbf16> to vector<128x128xbf16>
    %c0_133 = arith.constant 0 : index
    %c768_134 = arith.constant 768 : index
    %117 = vector.load %arg8[%c0_133, %c768_134] : memref<160x1152xbf16, #tpu.memory_space<vmem>>, vector<128x128xbf16>
    tpu.vector_store %arg8[%c0_133, %c768_134], %116 {strides = array<i32>} : memref<160x1152xbf16, #tpu.memory_space<vmem>>, vector<128x128xbf16>,
    %c2_135 = arith.constant 2 : index
    %c1_136 = arith.constant 1 : index
    %c0_137 = arith.constant 0 : index
    %118 = vector.load %arg7[%c2_135, %c1_136, %c0_137] : memref<10x24x128xbf16, #tpu.memory_space<vmem>>, vector<8x16x128xbf16>
    %119 = vector.shape_cast %118 : vector<8x16x128xbf16> to vector<128x128xbf16>
    %c0_138 = arith.constant 0 : index
    %c896_139 = arith.constant 896 : index
    %120 = vector.load %arg8[%c0_138, %c896_139] : memref<160x1152xbf16, #tpu.memory_space<vmem>>, vector<128x128xbf16>
    tpu.vector_store %arg8[%c0_138, %c896_139], %119 {strides = array<i32>} : memref<160x1152xbf16, #tpu.memory_space<vmem>>, vector<128x128xbf16>,
    %c2_140 = arith.constant 2 : index
    %c2_141 = arith.constant 2 : index
    %c0_142 = arith.constant 0 : index
    %121 = vector.load %arg7[%c2_140, %c2_141, %c0_142] : memref<10x24x128xbf16, #tpu.memory_space<vmem>>, vector<8x16x128xbf16>
    %122 = vector.shape_cast %121 : vector<8x16x128xbf16> to vector<128x128xbf16>
    %c0_143 = arith.constant 0 : index
    %c1024_144 = arith.constant 1024 : index
    %123 = vector.load %arg8[%c0_143, %c1024_144] : memref<160x1152xbf16, #tpu.memory_space<vmem>>, vector<128x128xbf16>
    tpu.vector_store %arg8[%c0_143, %c1024_144], %122 {strides = array<i32>} : memref<160x1152xbf16, #tpu.memory_space<vmem>>, vector<128x128xbf16>,
    %c0_145 = arith.constant 0 : index
    %c0_146 = arith.constant 0 : index
    %124 = vector.load %arg8[%c0_145, %c0_146] : memref<160x1152xbf16, #tpu.memory_space<vmem>>, vector<128x1152xbf16>
    %c1_147 = arith.constant 1 : index
    %c0_148 = arith.constant 0 : index
    %c0_149 = arith.constant 0 : index
    %125 = vector.load %arg3[%c1_147, %c0_148, %c0_149] : memref<2x1152x128xbf16, #tpu.memory_space<vmem>>, vector<1x1152x128xbf16>
    %126 = vector.shape_cast %125 : vector<1x1152x128xbf16> to vector<1152x128xbf16>
    %cst_150 = arith.constant dense<0.000000e+00> : vector<128x128xf32>
    %127 = tpu.matmul %124, %126, %cst_150 {dimension_numbers = #tpu.dot_dimension_numbers<[1], [0], [0], [1], [0, 0, 1, 1], [], []>} : vector<128x1152xbf16>, vector<1152x128xbf16>, vector<128x128xf32> -> vector<128x128xf32>
    %c2_151 = arith.constant 2 : index
    %c0_152 = arith.constant 0 : index
    %128 = vector.load %arg4[%c2_151, %c0_152] : memref<4x128xf32, #tpu.memory_space<vmem>>, vector<1x128xf32>
    %c3 = arith.constant 3 : index
    %c0_153 = arith.constant 0 : index
    %129 = vector.load %arg4[%c3, %c0_153] : memref<4x128xf32, #tpu.memory_space<vmem>>, vector<1x128xf32>
    %130 = vector.broadcast %128 : vector<1x128xf32> to vector<128x128xf32>
    %131 = arith.mulf %127, %130 : vector<128x128xf32>
    %132 = vector.broadcast %129 : vector<1x128xf32> to vector<128x128xf32>
    %133 = arith.addf %131, %132 : vector<128x128xf32>
    %134 = vector.shape_cast %133 : vector<128x128xf32> to vector<8x16x128xf32>
    %c0_154 = arith.constant 0 : index
    %135 = arith.index_cast %1 : i32 to index
    %c0_155 = arith.constant 0 : index
    %c0_156 = arith.constant 0 : index
    %136 = vector.load %arg2[%c0_154, %135, %c0_155, %c0_156] : memref<1x16x16x128xf32, #tpu.memory_space<vmem>>, vector<1x8x16x128xf32>
    %137 = vector.shape_cast %136 : vector<1x8x16x128xf32> to vector<8x16x128xf32>
    %138 = arith.addf %134, %137 : vector<8x16x128xf32>
    %cst_157 = arith.constant 0.000000e+00 : f32
    %139 = vector.broadcast %cst_157 : f32 to vector<8x16x128xf32>
    %140 = arith.maximumf %138, %139 : vector<8x16x128xf32>
    %c0_158 = arith.constant 0 : index
    %c0_159 = arith.constant 0 : index
    %c0_160 = arith.constant 0 : index
    %c0_161 = arith.constant 0 : index
    %141 = vector.load %arg5[%c0_158, %c0_159, %c0_160, %c0_161] : memref<1x8x16x128xf32, #tpu.memory_space<vmem>>, vector<1x8x16x128xf32>
    %142 = vector.shape_cast %141 : vector<1x8x16x128xf32> to vector<8x16x128xf32>
    %143 = vector.shape_cast %140 : vector<8x16x128xf32> to vector<1x8x16x128xf32>
    tpu.vector_store %arg5[%c0_158, %c0_159, %c0_160, %c0_161], %143 {strides = array<i32>} : memref<1x8x16x128xf32, #tpu.memory_space<vmem>>, vector<1x8x16x128xf32>,
    return
  }
  func.func @transform_0(%arg0: i32, %arg1: i32) -> (i32, i32, i32, i32) {
    %c0_i32 = arith.constant 0 : i32
    %c0_i32_0 = arith.constant 0 : i32
    %c0_i32_1 = arith.constant 0 : i32
    %c0_i32_2 = arith.constant 0 : i32
    return %arg0, %c0_i32, %c0_i32_0, %c0_i32_1 : i32, i32, i32, i32
  }
  func.func @transform_1(%arg0: i32, %arg1: i32) -> (i32, i32, i32) {
    %c0_i32 = arith.constant 0 : i32
    %c0_i32_0 = arith.constant 0 : i32
    %c0_i32_1 = arith.constant 0 : i32
    %c0_i32_2 = arith.constant 0 : i32
    return %c0_i32, %c0_i32_0, %c0_i32_1 : i32, i32, i32
  }
  func.func @transform_2(%arg0: i32, %arg1: i32) -> (i32, i32) {
    %c0_i32 = arith.constant 0 : i32
    %c0_i32_0 = arith.constant 0 : i32
    %c0_i32_1 = arith.constant 0 : i32
    return %c0_i32, %c0_i32_0 : i32, i32
  }
  func.func @transform_3(%arg0: i32, %arg1: i32) -> (i32, i32, i32, i32) {
    %c0_i32 = arith.constant 0 : i32
    %c0_i32_0 = arith.constant 0 : i32
    %c0_i32_1 = arith.constant 0 : i32
    return %arg0, %arg1, %c0_i32, %c0_i32_0 : i32, i32, i32, i32
  }
}

</mosaic_0001>

<llo_original>
// kernel: tpu_custom_call.1
$region0: #{tpu_custom_call.1}
  #allocation0 [shape = 'u32[]', space=smem, size = 0x4, offset = 0x4, fixed_abs, tag = 'smem constant byte address 0x4 - core index']
  #allocation1 [shape = 'u32[144,128]{1,0:T(1,128)}', space=vmem, size = 0x12000, scoped, tag = 'internal scratch']
  #allocation2 [shape = 'bf16[12,24,128]{2,1,0:T(8,128)(2,1)}', space=vmem, size = 0x12000, scoped, tag = 'scratch operand']
  #allocation3 [shape = 'bf16[10,24,128]{2,1,0:T(8,128)(2,1)}', space=vmem, size = 0xf000, scoped, tag = 'scratch operand']
  #allocation4 [shape = 'bf16[160,1152]{1,0:T(16,128)(2,1)}', space=vmem, size = 0x5a000, scoped, tag = 'scratch operand']
  %s0 = inlined_call_operand.hbm [shape: f32[2,16,16,128], index: 0, kind: input, shape index: {}]
  %s1 = inlined_call_operand.hbm [shape: bf16[2,1152,128], index: 1, kind: input, shape index: {}]
  %s2 = inlined_call_operand.vmem [shape: f32[4,128], index: 2, kind: input, shape index: {}]
  %s3 = inlined_call_operand.hbm [shape: f32[2,16,16,128], index: 3, kind: output, shape index: {}]
  %s4 = sld [smem:[#allocation0]]
  $region77: #{tpu_custom_call.1} parent=0
    _
  %s6 = ssub.s32 1, %s4
  %s7 = scalar_select 0, %s6, %s4
  $region1: #{tpu_custom_call.1} parent=0
    #allocation5 [shape = 'u8[262144]{0}', space=vmem, size = 0x40000, scoped, tag = 'input window, operand 0']
    #allocation6 [shape = 's32[2]{0}', space=sflag, size = 0x8, scoped, tag = 'scoped memory for tpu_custom_call.1']
    #allocation7 [shape = 's32[2]{0}', space=sflag, size = 0x8, scoped, tag = 'scoped memory for tpu_custom_call.1']
    #allocation8 [shape = 'u8[589824]{0}', space=vmem, size = 0x90000, scoped, tag = 'input window, operand 1, single buffered']
    #allocation9 [shape = 's32[1]{0}', space=sflag, size = 0x4, scoped, tag = 'scoped memory for tpu_custom_call.1']
    #allocation10 [shape = 'u8[131072]{0}', space=vmem, size = 0x20000, scoped, tag = 'output window, operand 0']
    %8 = vsyncpa [#allocation6], 0
    %s9 = scalar_lea.sflag [#allocation6], 1
    %10 = vsyncpa %s9, 0
    %11 = vsyncpa [#allocation9], 0
    %12 = vsyncpa [#allocation7], 0
    %s13 = scalar_lea.sflag [#allocation7], 1
    %14 = vsyncpa %s13, 0
    loop: start=0, step=1, limit=6
    $region2: #{tpu_custom_call.1} parent=1 // loop_pre_header
      _
    $region3: #{tpu_custom_call.1} parent=1 // loop_header
      %s16 = sphi 0, %s20
      %p17 = scmp.ge.s32.totalorder %s16, 6
      %s23 = sphi 0, %s35
      %s24 = sphi 0, %s31
      %s25 = sphi 0, %s23
      %s26 = sphi 0, %s24
      %s27 = sphi 0, %s25
      %s28 = sphi 0, %s26
      %s38 = sphi 0, %s40
      %s41 = sphi 0, %s38
      %s42 = sphi 0, %s41
      %s58 = sphi 0, %s42
      %s62 = sphi 0, %s62
      %s64 = sphi 0, %s62
      %s65 = sphi 0, %s64
      %s79 = sphi 0, %s65
      %s83 = sphi 0, %s83
      %s85 = sphi 0, %s83
      %s86 = sphi 0, %s85
      %s100 = sphi 0, %s86
      %s108 = sphi 0, %s110
      %s111 = sphi 0, %s108
      %s112 = sphi 0, %s111
      %s128 = sphi 0, %s112
    $region4: #{tpu_custom_call.1} parent=1 // loop_header_branch
      %19 = sbr.rel (%p17) target = $region8
    $region5: #{tpu_custom_call.1} parent=1 // loop_body
      %s21 = ssub.s32 %s16, 1
      %s22 = ssub.s32 %s16, 2
      %s29 = sadd.s32 1, %s24
      %p30 = scmp.ge.s32.totalorder %s29, 2
      %s31 = scalar_select %p30, 0, %s29
      %s32 = sadd.s32 1, %s23
      %s33 = scalar_select %p30, %s32, %s23
      %p34 = scmp.ge.s32.totalorder %s33, 2
      %s35 = scalar_select %p34, 0, %s33
      %s36 = ssub.s32 %s23, %s35
      %p37 = scmp.eq.s32.totalorder %s36, 0
      %s39 = sadd.s32 %s38, 1
      %s40 = scalar_select %p37, %s38, %s39
      %p43 = pneg %p37
      %p44 = scmp.eq.s32.totalorder %s16, 3
      %p45 = por %p43, %p44
      %p46 = scmp.ne.s32.totalorder %s38, %s41
      %p47 = scmp.eq.s32.totalorder %s16, 0
      %p48 = por %p46, %p47
      %p49 = scmp.ne.s32.totalorder %s38, %s41
      %p50 = scmp.eq.s32.totalorder %s21, 3
      %p51 = por %p49, %p50
      %p52 = scmp.ne.s32.totalorder %s41, %s42
      %p53 = scmp.eq.s32.totalorder %s21, 0
      %p54 = por %p52, %p53
      %p55 = scmp.ne.s32.totalorder %s41, %s42
      %p56 = scmp.eq.s32.totalorder %s22, 3
      %p57 = por %p55, %p56
      %p59 = scmp.ne.s32.totalorder %s42, %s58
      %p60 = scmp.eq.s32.totalorder %s22, 0
      %p61 = por %p59, %p60
      %s63 = sadd.s32 %s62, 1
      %p66 = scmp.eq.s32.totalorder %s16, 3
      %p67 = scmp.ne.s32.totalorder %s62, %s64
      %p68 = scmp.eq.s32.totalorder %s16, 0
      %p69 = por %p67, %p68
      %p70 = scmp.ne.s32.totalorder %s62, %s64
      %p71 = scmp.eq.s32.totalorder %s21, 3
      %p72 = por %p70, %p71
      %p73 = scmp.ne.s32.totalorder %s64, %s65
      %p74 = scmp.eq.s32.totalorder %s21, 0
      %p75 = por %p73, %p74
      %p76 = scmp.ne.s32.totalorder %s64, %s65
      %p77 = scmp.eq.s32.totalorder %s22, 3
      %p78 = por %p76, %p77
      %p80 = scmp.ne.s32.totalorder %s65, %s79
      %p81 = scmp.eq.s32.totalorder %s22, 0
      %p82 = por %p80, %p81
      %s84 = sadd.s32 %s83, 1
      %p87 = scmp.eq.s32.totalorder %s16, 3
      %p88 = scmp.ne.s32.totalorder %s83, %s85
      %p89 = scmp.eq.s32.totalorder %s16, 0
      %p90 = por %p88, %p89
      %p91 = scmp.ne.s32.totalorder %s83, %s85
      %p92 = scmp.eq.s32.totalorder %s21, 3
      %p93 = por %p91, %p92
      %p94 = scmp.ne.s32.totalorder %s85, %s86
      %p95 = scmp.eq.s32.totalorder %s21, 0
      %p96 = por %p94, %p95
      %p97 = scmp.ne.s32.totalorder %s85, %s86
      %p98 = scmp.eq.s32.totalorder %s22, 3
      %p99 = por %p97, %p98
      %p101 = scmp.ne.s32.totalorder %s86, %s100
      %p102 = scmp.eq.s32.totalorder %s22, 0
      %p103 = por %p101, %p102
      %s104 = ssub.s32 %s23, %s35
      %s105 = ssub.s32 %s24, %s31
      %s106 = sor.u32 %s104, %s105
      %p107 = scmp.eq.s32.totalorder %s106, 0
      %s109 = sadd.s32 %s108, 1
      %s110 = scalar_select %p107, %s108, %s109
      %p113 = pneg %p107
      %p114 = scmp.eq.s32.totalorder %s16, 3
      %p115 = por %p113, %p114
      %p116 = scmp.ne.s32.totalorder %s108, %s111
      %p117 = scmp.eq.s32.totalorder %s16, 0
      %p118 = por %p116, %p117
      %p119 = scmp.ne.s32.totalorder %s108, %s111
      %p120 = scmp.eq.s32.totalorder %s21, 3
      %p121 = por %p119, %p120
      %p122 = scmp.ne.s32.totalorder %s111, %s112
      %p123 = scmp.eq.s32.totalorder %s21, 0
      %p124 = por %p122, %p123
      %p125 = scmp.ne.s32.totalorder %s111, %s112
      %p126 = scmp.eq.s32.totalorder %s22, 3
      %p127 = por %p125, %p126
      %p129 = scmp.ne.s32.totalorder %s112, %s128
      %p130 = scmp.eq.s32.totalorder %s22, 0
      %p131 = por %p129, %p130
      %p132 = scmp.le.s32.totalorder 1, %s16
      %p133 = scmp.lt.s32.totalorder %s16, 5
      %p134 = pnand %p132, %p133
      %p135 = pneg %p134
      // Predicated region
      $region9: #{tpu_custom_call.1} parent=5 // pred_check
        _
      $region10: #{tpu_custom_call.1} parent=5 // pred_check_branch
        %137 = sbr.rel (%p134) target = $region12
      $region11: #{tpu_custom_call.1} parent=5 // pred_region
        %s138 = ssub.s32 %s16, 1
        // Predicated region
        $region13: #{tpu_custom_call.1} parent=11 // pred_check
          %p139 = pneg %p75
        $region14: #{tpu_custom_call.1} parent=11 // pred_check_branch
          %141 = sbr.rel (%p139) target = $region16
        $region15: #{tpu_custom_call.1} parent=11 // pred_region
          %s143 = ssub.s32 18432, 18432
          %144 = vsyncadd [#allocation9], %s143
          %s145 = sshll.u32 [#allocation8], 4
          %s146 = int_to_ptr.vmem [resolvable:$true] %s145
          %151 = dma.hbm_to_vmem [thread:$0]  %s1, 18432, %s146, [#allocation9], 64, 64, 4
        $region16: #{tpu_custom_call.1} parent=11 // pred_fallthru
          _
        // Predicated region
        $region17: #{tpu_custom_call.1} parent=11 // pred_check
          %p152 = pneg %p96
        $region18: #{tpu_custom_call.1} parent=11 // pred_check_branch
          %154 = sbr.rel (%p152) target = $region20
        $region19: #{tpu_custom_call.1} parent=11 // pred_region
          _
        $region20: #{tpu_custom_call.1} parent=11 // pred_fallthru
          _
      $region12: #{tpu_custom_call.1} parent=5 // pred_fallthru
        _
      %p155 = scmp.lt.s32.totalorder %s16, 4
      // Predicated region
      $region21: #{tpu_custom_call.1} parent=5 // pred_check
        %p156 = pneg %p155
      $region22: #{tpu_custom_call.1} parent=5 // pred_check_branch
        %158 = sbr.rel (%p156) target = $region24
      $region23: #{tpu_custom_call.1} parent=5 // pred_region
        // Predicated region
        $region25: #{tpu_custom_call.1} parent=23 // pred_check
          %p159 = pneg %p48
        $region26: #{tpu_custom_call.1} parent=23 // pred_check_branch
          %161 = sbr.rel (%p159) target = $region28
        $region27: #{tpu_custom_call.1} parent=23 // pred_region
          %s162 = sand.u32 %s38, 1
          %s163 = scalar_lea.sflag [#allocation6], %s162
          %s164 = sand.u32 %s38, 1
          %s165 = smul.addr %s164, 256
          %s166 = scalar_lea.vmem [#allocation5], %s165
          %s168 = ssub.s32 4096, 4096
          %169 = vsyncadd %s163, %s168
          %s170 = smul.addr %s23, 32
          %s171 = smul.addr %s170, 128
          %s172 = scalar_lea.hbm %s0, %s171
          %s173 = sshll.u32 %s166, 4
          %s174 = int_to_ptr.vmem [resolvable:$true] %s173
          %179 = dma.hbm_to_vmem [thread:$0]  %s172, 4096, %s174, %s163, 128, 128, 8
        $region28: #{tpu_custom_call.1} parent=23 // pred_fallthru
          _
      $region24: #{tpu_custom_call.1} parent=5 // pred_fallthru
        _
      %p180 = scmp.le.s32.totalorder 1, %s16
      %p181 = scmp.lt.s32.totalorder %s16, 5
      %p182 = pnand %p180, %p181
      %p183 = pneg %p182
      // Predicated region
      $region29: #{tpu_custom_call.1} parent=5 // pred_check
        _
      $region30: #{tpu_custom_call.1} parent=5 // pred_check_branch
        %185 = sbr.rel (%p182) target = $region32
      $region31: #{tpu_custom_call.1} parent=5 // pred_region
        %s186 = ssub.s32 %s16, 1
        %s187 = sand.u32 %s41, 1
        %s188 = scalar_lea.sflag [#allocation6], %s187
        %s189 = sand.u32 %s41, 1
        %s190 = smul.addr %s189, 256
        %s191 = scalar_lea.vmem [#allocation5], %s190
        // Predicated region
        $region33: #{tpu_custom_call.1} parent=31 // pred_check
          %p192 = pneg %p54
        $region34: #{tpu_custom_call.1} parent=31 // pred_check_branch
          %194 = sbr.rel (%p192) target = $region36
        $region35: #{tpu_custom_call.1} parent=31 // pred_region
          %195 = dma.done %s188, 4096
        $region36: #{tpu_custom_call.1} parent=31 // pred_fallthru
          _
        // Predicated region
        $region37: #{tpu_custom_call.1} parent=31 // pred_check
          %p196 = pneg %p75
        $region38: #{tpu_custom_call.1} parent=31 // pred_check_branch
          %198 = sbr.rel (%p196) target = $region40
        $region39: #{tpu_custom_call.1} parent=31 // pred_region
          %199 = dma.done [#allocation9], 18432
        $region40: #{tpu_custom_call.1} parent=31 // pred_fallthru
          _
        %s200 = sand.u32 %s41, 1
        %s201 = scalar_lea.sflag [#allocation6], %s200
        %s202 = sand.u32 %s41, 1
        %s203 = smul.addr %s202, 256
        %s204 = scalar_lea.vmem [#allocation5], %s203
        %p205 = pneg %p54
        %p206 = pneg %p51
        %p207 = pneg %p75
        %p208 = pneg %p72
        %p209 = pneg %p96
        %p210 = pneg %p93
        %p211 = pneg %p124
        %p212 = pneg %p121
        %s213 = sand.u32 %s111, 1
        %s214 = scalar_lea.sflag [#allocation7], %s213
        %s215 = sand.u32 %s111, 1
        %s216 = smul.addr %s215, 128
        %s217 = scalar_lea.vmem [#allocation10], %s216
        %s218 = smul.u32 8, %s26
        %s220 = smul.u32 %s26, 8
        %vm221 = vcmask 1040384
        %vm222 = vsmask.f32 256
        %vm223 = vmand %vm221, %vm222
        %v224 = vld [vmem:[#allocation2] sm:$0x1]
        %v225 = vsel %vm223, 0, %v224
        %226 = vst [vmem:[#allocation2] sm:$0x1] %v225
        %v227 = vld [vmem:[#allocation2 + $0xc] sm:$0x1]
        %v228 = vsel %vm223, 0, %v227
        %229 = vst [vmem:[#allocation2 + $0xc] sm:$0x1] %v228
        %v230 = vld [vmem:[#allocation2 + $0x18] sm:$0x1]
        %v231 = vsel %vm223, 0, %v230
        %232 = vst [vmem:[#allocation2 + $0x18] sm:$0x1] %v231
        %v233 = vld [vmem:[#allocation2 + $0x24] sm:$0x1]
        %v234 = vsel %vm223, 0, %v233
        %235 = vst [vmem:[#allocation2 + $0x24] sm:$0x1] %v234
        %v236 = vld [vmem:[#allocation2 + $0x30] sm:$0x1]
        %v237 = vsel %vm223, 0, %v236
        %238 = vst [vmem:[#allocation2 + $0x30] sm:$0x1] %v237
        %v239 = vld [vmem:[#allocation2 + $0x3c] sm:$0x1]
        %v240 = vsel %vm223, 0, %v239
        %241 = vst [vmem:[#allocation2 + $0x3c] sm:$0x1] %v240
        %v242 = vld [vmem:[#allocation2 + $0x48] sm:$0x1]
        %v243 = vsel %vm223, 0, %v242
        %244 = vst [vmem:[#allocation2 + $0x48] sm:$0x1] %v243
        %v245 = vld [vmem:[#allocation2 + $0x54] sm:$0x1]
        %v246 = vsel %vm223, 0, %v245
        %247 = vst [vmem:[#allocation2 + $0x54] sm:$0x1] %v246
        %v248 = vld [vmem:[#allocation2 + $0x60] sm:$0x1]
        %v249 = vsel %vm223, 0, %v248
        %250 = vst [vmem:[#allocation2 + $0x60] sm:$0x1] %v249
        %v251 = vld [vmem:[#allocation2 + $0x6c] sm:$0x1]
        %v252 = vsel %vm223, 0, %v251
        %253 = vst [vmem:[#allocation2 + $0x6c] sm:$0x1] %v252
        %v254 = vld [vmem:[#allocation2 + $0x78] sm:$0x1]
        %v255 = vsel %vm223, 0, %v254
        %256 = vst [vmem:[#allocation2 + $0x78] sm:$0x1] %v255
        %v257 = vld [vmem:[#allocation2 + $0x84] sm:$0x1]
        %v258 = vsel %vm223, 0, %v257
        %259 = vst [vmem:[#allocation2 + $0x84] sm:$0x1] %v258
        %vm260 = vsmask.f32 7938
        %vm261 = vmand %vm221, %vm260
        %v262 = vld [vmem:[#allocation2 + $0x8] sm:$0x1]
        %v263 = vsel %vm261, 0, %v262
        %264 = vst [vmem:[#allocation2 + $0x8] sm:$0x1] %v263
        %v265 = vld [vmem:[#allocation2 + $0x14] sm:$0x1]
        %v266 = vsel %vm261, 0, %v265
        %267 = vst [vmem:[#allocation2 + $0x14] sm:$0x1] %v266
        %v268 = vld [vmem:[#allocation2 + $0x20] sm:$0x1]
        %v269 = vsel %vm261, 0, %v268
        %270 = vst [vmem:[#allocation2 + $0x20] sm:$0x1] %v269
        %v271 = vld [vmem:[#allocation2 + $0x2c] sm:$0x1]
        %v272 = vsel %vm261, 0, %v271
        %273 = vst [vmem:[#allocation2 + $0x2c] sm:$0x1] %v272
        %v274 = vld [vmem:[#allocation2 + $0x38] sm:$0x1]
        %v275 = vsel %vm261, 0, %v274
        %276 = vst [vmem:[#allocation2 + $0x38] sm:$0x1] %v275
        %v277 = vld [vmem:[#allocation2 + $0x44] sm:$0x1]
        %v278 = vsel %vm261, 0, %v277
        %279 = vst [vmem:[#allocation2 + $0x44] sm:$0x1] %v278
        %v280 = vld [vmem:[#allocation2 + $0x50] sm:$0x1]
        %v281 = vsel %vm261, 0, %v280
        %282 = vst [vmem:[#allocation2 + $0x50] sm:$0x1] %v281
        %v283 = vld [vmem:[#allocation2 + $0x5c] sm:$0x1]
        %v284 = vsel %vm261, 0, %v283
        %285 = vst [vmem:[#allocation2 + $0x5c] sm:$0x1] %v284
        %v286 = vld [vmem:[#allocation2 + $0x68] sm:$0x1]
        %v287 = vsel %vm261, 0, %v286
        %288 = vst [vmem:[#allocation2 + $0x68] sm:$0x1] %v287
        %v289 = vld [vmem:[#allocation2 + $0x74] sm:$0x1]
        %v290 = vsel %vm261, 0, %v289
        %291 = vst [vmem:[#allocation2 + $0x74] sm:$0x1] %v290
        %v292 = vld [vmem:[#allocation2 + $0x80] sm:$0x1]
        %v293 = vsel %vm261, 0, %v292
        %294 = vst [vmem:[#allocation2 + $0x80] sm:$0x1] %v293
        %v295 = vld [vmem:[#allocation2 + $0x8c] sm:$0x1]
        %v296 = vsel %vm261, 0, %v295
        %297 = vst [vmem:[#allocation2 + $0x8c] sm:$0x1] %v296
        %s298 = smul.u32 %s220, 16
        %s299 = scalar_lea.vmem %s191, %s298 [#allocation5]
        %v300 = vld [vmem:[%s299] sm:$0xff]
        %v301 = vld [vmem:[%s299 + $0x8] sm:$0xff]
        %v302 = vld [vmem:[%s299 + $0x10] sm:$0xff]
        %v303 = vld [vmem:[%s299 + $0x18] sm:$0xff]
        %v304 = vld [vmem:[%s299 + $0x20] sm:$0xff]
        %v305 = vld [vmem:[%s299 + $0x28] sm:$0xff]
        %v306 = vld [vmem:[%s299 + $0x30] sm:$0xff]
        %v307 = vld [vmem:[%s299 + $0x38] sm:$0xff]
        %v308 = vld [vmem:[%s299 + $0x40] sm:$0xff]
        %v309 = vld [vmem:[%s299 + $0x48] sm:$0xff]
        %v310 = vld [vmem:[%s299 + $0x50] sm:$0xff]
        %v311 = vld [vmem:[%s299 + $0x58] sm:$0xff]
        %v312 = vld [vmem:[%s299 + $0x60] sm:$0xff]
        %v313 = vld [vmem:[%s299 + $0x68] sm:$0xff]
        %v314 = vld [vmem:[%s299 + $0x70] sm:$0xff]
        %v315 = vld [vmem:[%s299 + $0x78] sm:$0xff]
        %v316 = vpack.c.bf16 %v301, %v300
        %v317 = vpack.c.bf16 %v303, %v302
        %v318 = vpack.c.bf16 %v305, %v304
        %v319 = vpack.c.bf16 %v307, %v306
        %v320 = vpack.c.bf16 %v309, %v308
        %v321 = vpack.c.bf16 %v311, %v310
        %v322 = vpack.c.bf16 %v313, %v312
        %v323 = vpack.c.bf16 %v315, %v314
        %v332 = vunpack.c.l.b16 %v316
        %v333 = vunpack.c.h.b16 %v316
        %v334 = vunpack.c.l.b16 %v317
        %v335 = vunpack.c.h.b16 %v317
        %v336 = vunpack.c.l.b16 %v318
        %v337 = vunpack.c.h.b16 %v318
        %v338 = vunpack.c.l.b16 %v319
        %v339 = vunpack.c.h.b16 %v319
        %v340 = vunpack.c.l.b16 %v320
        %v341 = vunpack.c.h.b16 %v320
        %v342 = vunpack.c.l.b16 %v321
        %v343 = vunpack.c.h.b16 %v321
        %v344 = vunpack.c.l.b16 %v322
        %v345 = vunpack.c.h.b16 %v322
        %v346 = vunpack.c.l.b16 %v323
        %v347 = vunpack.c.h.b16 %v323
        %v348 = vpack.c.b16 %v332, %v332
        %v349 = vpack.c.b16 %v333, %v333
        %v350 = vpack.c.b16 %v334, %v334
        %v351 = vpack.c.b16 %v335, %v335
        %v352 = vpack.c.b16 %v336, %v336
        %v353 = vpack.c.b16 %v337, %v337
        %v354 = vpack.c.b16 %v338, %v338
        %v355 = vpack.c.b16 %v339, %v339
        %v356 = vpack.c.b16 %v340, %v340
        %v357 = vpack.c.b16 %v341, %v341
        %v358 = vpack.c.b16 %v342, %v342
        %v359 = vpack.c.b16 %v343, %v343
        %v360 = vpack.c.b16 %v344, %v344
        %v361 = vpack.c.b16 %v345, %v345
        %v362 = vpack.c.b16 %v346, %v346
        %v363 = vpack.c.b16 %v347, %v347
        %vm364 = vsmask.f32 4368
        %vm365 = vmor %vm222, %vm364
        %v367 = vshrl.u32 %v348, 16
        %v369 = vrot.slane %v367, 7
        %v370 = vshll.u32 %v348, 16
        %v372 = vor.u32 %v369, %v370
        %v373 = vrot.slane %v369, 4
        %v375 = vshrl.u32 %v349, 16
        %v377 = vrot.slane %v375, 7
        %v378 = vshll.u32 %v349, 16
        %v380 = vor.u32 %v377, %v378
        %v381 = vsel %vm365, %v373, %v380
        %v382 = vrot.slane %v377, 4
        %v384 = vshrl.u32 %v350, 16
        %v386 = vrot.slane %v384, 7
        %v387 = vshll.u32 %v350, 16
        %v389 = vor.u32 %v386, %v387
        %v390 = vrot.slane %v386, 4
        %v392 = vshrl.u32 %v351, 16
        %v394 = vrot.slane %v392, 7
        %v395 = vshll.u32 %v351, 16
        %v397 = vor.u32 %v394, %v395
        %v398 = vsel %vm365, %v390, %v397
        %v399 = vrot.slane %v394, 4
        %v401 = vshrl.u32 %v352, 16
        %v403 = vrot.slane %v401, 7
        %v404 = vshll.u32 %v352, 16
        %v406 = vor.u32 %v403, %v404
        %v407 = vrot.slane %v403, 4
        %v409 = vshrl.u32 %v353, 16
        %v411 = vrot.slane %v409, 7
        %v412 = vshll.u32 %v353, 16
        %v414 = vor.u32 %v411, %v412
        %v415 = vsel %vm365, %v407, %v414
        %v416 = vrot.slane %v411, 4
        %v418 = vshrl.u32 %v354, 16
        %v420 = vrot.slane %v418, 7
        %v421 = vshll.u32 %v354, 16
        %v423 = vor.u32 %v420, %v421
        %v424 = vrot.slane %v420, 4
        %v426 = vshrl.u32 %v355, 16
        %v428 = vrot.slane %v426, 7
        %v429 = vshll.u32 %v355, 16
        %v431 = vor.u32 %v428, %v429
        %v432 = vsel %vm365, %v424, %v431
        %v433 = vrot.slane %v428, 4
        %v435 = vshrl.u32 %v356, 16
        %v437 = vrot.slane %v435, 7
        %v438 = vshll.u32 %v356, 16
        %v440 = vor.u32 %v437, %v438
        %v441 = vrot.slane %v437, 4
        %v443 = vshrl.u32 %v357, 16
        %v445 = vrot.slane %v443, 7
        %v446 = vshll.u32 %v357, 16
        %v448 = vor.u32 %v445, %v446
        %v449 = vsel %vm365, %v441, %v448
        %v450 = vrot.slane %v445, 4
        %v452 = vshrl.u32 %v358, 16
        %v454 = vrot.slane %v452, 7
        %v455 = vshll.u32 %v358, 16
        %v457 = vor.u32 %v454, %v455
        %v458 = vrot.slane %v454, 4
        %v460 = vshrl.u32 %v359, 16
        %v462 = vrot.slane %v460, 7
        %v463 = vshll.u32 %v359, 16
        %v465 = vor.u32 %v462, %v463
        %v466 = vsel %vm365, %v458, %v465
        %v467 = vrot.slane %v462, 4
        %v469 = vshrl.u32 %v360, 16
        %v471 = vrot.slane %v469, 7
        %v472 = vshll.u32 %v360, 16
        %v474 = vor.u32 %v471, %v472
        %v475 = vrot.slane %v471, 4
        %v477 = vshrl.u32 %v361, 16
        %v479 = vrot.slane %v477, 7
        %v480 = vshll.u32 %v361, 16
        %v482 = vor.u32 %v479, %v480
        %v483 = vsel %vm365, %v475, %v482
        %v484 = vrot.slane %v479, 4
        %v486 = vshrl.u32 %v362, 16
        %v488 = vrot.slane %v486, 7
        %v489 = vshll.u32 %v362, 16
        %v491 = vor.u32 %v488, %v489
        %v492 = vrot.slane %v488, 4
        %v494 = vshrl.u32 %v363, 16
        %v496 = vrot.slane %v494, 7
        %v497 = vshll.u32 %v363, 16
        %v499 = vor.u32 %v496, %v497
        %v500 = vsel %vm365, %v492, %v499
        %v501 = vrot.slane %v496, 4
        %s526 = scalar_lea.vmem [#allocation2], 24
        %vm527 = vcmask 1043456
        %vm528 = vmand %vm527, %vm260
        %v529 = vld [vmem:[%s526] sm:$0xf]
        %v530 = vsel %vm528, %v372, %v529
        %531 = vst [vmem:[%s526] sm:$0xf] %v530
        %532 = vst [vmem:[%s526 + $0x4] sm:$0xf] %v381
        %v533 = vld [vmem:[%s526 + $0x8] sm:$0x1]
        %v534 = vsel %vm223, %v382, %v533
        %535 = vst [vmem:[%s526 + $0x8] sm:$0x1] %v534
        %v536 = vld [vmem:[%s526 + $0xc] sm:$0xf]
        %v537 = vsel %vm528, %v389, %v536
        %538 = vst [vmem:[%s526 + $0xc] sm:$0xf] %v537
        %539 = vst [vmem:[%s526 + $0x10] sm:$0xf] %v398
        %v540 = vld [vmem:[%s526 + $0x14] sm:$0x1]
        %v541 = vsel %vm223, %v399, %v540
        %542 = vst [vmem:[%s526 + $0x14] sm:$0x1] %v541
        %v543 = vld [vmem:[%s526 + $0x18] sm:$0xf]
        %v544 = vsel %vm528, %v406, %v543
        %545 = vst [vmem:[%s526 + $0x18] sm:$0xf] %v544
        %546 = vst [vmem:[%s526 + $0x1c] sm:$0xf] %v415
        %v547 = vld [vmem:[%s526 + $0x20] sm:$0x1]
        %v548 = vsel %vm223, %v416, %v547
        %549 = vst [vmem:[%s526 + $0x20] sm:$0x1] %v548
        %v550 = vld [vmem:[%s526 + $0x24] sm:$0xf]
        %v551 = vsel %vm528, %v423, %v550
        %552 = vst [vmem:[%s526 + $0x24] sm:$0xf] %v551
        %553 = vst [vmem:[%s526 + $0x28] sm:$0xf] %v432
        %v554 = vld [vmem:[%s526 + $0x2c] sm:$0x1]
        %v555 = vsel %vm223, %v433, %v554
        %556 = vst [vmem:[%s526 + $0x2c] sm:$0x1] %v555
        %v557 = vld [vmem:[%s526 + $0x30] sm:$0xf]
        %v558 = vsel %vm528, %v440, %v557
        %559 = vst [vmem:[%s526 + $0x30] sm:$0xf] %v558
        %560 = vst [vmem:[%s526 + $0x34] sm:$0xf] %v449
        %v561 = vld [vmem:[%s526 + $0x38] sm:$0x1]
        %v562 = vsel %vm223, %v450, %v561
        %563 = vst [vmem:[%s526 + $0x38] sm:$0x1] %v562
        %v564 = vld [vmem:[%s526 + $0x3c] sm:$0xf]
        %v565 = vsel %vm528, %v457, %v564
        %566 = vst [vmem:[%s526 + $0x3c] sm:$0xf] %v565
        %567 = vst [vmem:[%s526 + $0x40] sm:$0xf] %v466
        %v568 = vld [vmem:[%s526 + $0x44] sm:$0x1]
        %v569 = vsel %vm223, %v467, %v568
        %570 = vst [vmem:[%s526 + $0x44] sm:$0x1] %v569
        %v571 = vld [vmem:[%s526 + $0x48] sm:$0xf]
        %v572 = vsel %vm528, %v474, %v571
        %573 = vst [vmem:[%s526 + $0x48] sm:$0xf] %v572
        %574 = vst [vmem:[%s526 + $0x4c] sm:$0xf] %v483
        %v575 = vld [vmem:[%s526 + $0x50] sm:$0x1]
        %v576 = vsel %vm223, %v484, %v575
        %577 = vst [vmem:[%s526 + $0x50] sm:$0x1] %v576
        %v578 = vld [vmem:[%s526 + $0x54] sm:$0xf]
        %v579 = vsel %vm528, %v491, %v578
        %580 = vst [vmem:[%s526 + $0x54] sm:$0xf] %v579
        %581 = vst [vmem:[%s526 + $0x58] sm:$0xf] %v500
        %v582 = vld [vmem:[%s526 + $0x5c] sm:$0x1]
        %v583 = vsel %vm223, %v501, %v582
        %584 = vst [vmem:[%s526 + $0x5c] sm:$0x1] %v583
        %s585 = ssub.s32 %s220, 2
        %v586 = vld [vmem:[#allocation2] sm:$0xf]
        %v587 = vsel %vm528, 0, %v586
        %588 = vst [vmem:[#allocation2] sm:$0xf] %v587
        %589 = vst [vmem:[#allocation2 + $0x4] sm:$0xf] 0
        %v590 = vld [vmem:[#allocation2 + $0x8] sm:$0x1]
        %v591 = vsel %vm223, 0, %v590
        %592 = vst [vmem:[#allocation2 + $0x8] sm:$0x1] %v591
        %p593 = scmp.ge.s32.totalorder %s585, 0
        %p594 = scmp.lt.s32.totalorder %s585, 16
        %p595 = pnand %p593, %p594
        %p596 = pneg %p595
        // Predicated region
        $region41: #{tpu_custom_call.1} parent=31 // pred_check
          _
        $region42: #{tpu_custom_call.1} parent=31 // pred_check_branch
          %598 = sbr.rel (%p595) target = $region44
        $region43: #{tpu_custom_call.1} parent=31 // pred_region
          %p599 = scmp.gt.s32.totalorder %s585, 0
          %s600 = scalar_select %p599, %s585, 0
          %p601 = scmp.lt.s32.totalorder %s600, 15
          %s602 = scalar_select %p601, %s600, 15
          %s603 = smul.u32 %s602, 16
          %s604 = scalar_lea.vmem %s191, %s603 [#allocation5]
          %v605 = vld [vmem:[%s604] sm:$0xff]
          %v606 = vld [vmem:[%s604 + $0x8] sm:$0xff]
          %v607 = vpack.c.bf16 %v606, %v605
          %v609 = vunpack.c.l.b16 %v607
          %v610 = vunpack.c.h.b16 %v607
          %v611 = vpack.c.b16 %v609, %v609
          %v612 = vpack.c.b16 %v610, %v610
          %v614 = vshrl.u32 %v611, 16
          %v616 = vrot.slane %v614, 7
          %v617 = vshll.u32 %v611, 16
          %v619 = vor.u32 %v616, %v617
          %v620 = vrot.slane %v616, 4
          %v622 = vshrl.u32 %v612, 16
          %v624 = vrot.slane %v622, 7
          %v625 = vshll.u32 %v612, 16
          %v627 = vor.u32 %v624, %v625
          %v628 = vsel %vm365, %v620, %v627
          %v629 = vrot.slane %v624, 4
          %v633 = vld [vmem:[#allocation2] sm:$0xf]
          %v634 = vsel %vm528, %v619, %v633
          %635 = vst [vmem:[#allocation2] sm:$0xf] %v634
          %636 = vst [vmem:[#allocation2 + $0x4] sm:$0xf] %v628
          %v637 = vld [vmem:[#allocation2 + $0x8] sm:$0x1]
          %v638 = vsel %vm223, %v629, %v637
          %639 = vst [vmem:[#allocation2 + $0x8] sm:$0x1] %v638
        $region44: #{tpu_custom_call.1} parent=31 // pred_fallthru
          _
        %s640 = ssub.s32 %s220, 1
        %s641 = scalar_lea.vmem [#allocation2], 12
        %v642 = vld [vmem:[%s641] sm:$0xf]
        %v643 = vsel %vm528, 0, %v642
        %644 = vst [vmem:[%s641] sm:$0xf] %v643
        %645 = vst [vmem:[%s641 + $0x4] sm:$0xf] 0
        %v646 = vld [vmem:[%s641 + $0x8] sm:$0x1]
        %v647 = vsel %vm223, 0, %v646
        %648 = vst [vmem:[%s641 + $0x8] sm:$0x1] %v647
        %p649 = scmp.ge.s32.totalorder %s640, 0
        %p650 = scmp.lt.s32.totalorder %s640, 16
        %p651 = pnand %p649, %p650
        %p652 = pneg %p651
        // Predicated region
        $region45: #{tpu_custom_call.1} parent=31 // pred_check
          _
        $region46: #{tpu_custom_call.1} parent=31 // pred_check_branch
          %654 = sbr.rel (%p651) target = $region48
        $region47: #{tpu_custom_call.1} parent=31 // pred_region
          %p655 = scmp.gt.s32.totalorder %s640, 0
          %s656 = scalar_select %p655, %s640, 0
          %p657 = scmp.lt.s32.totalorder %s656, 15
          %s658 = scalar_select %p657, %s656, 15
          %s659 = smul.u32 %s658, 16
          %s660 = scalar_lea.vmem %s191, %s659 [#allocation5]
          %v661 = vld [vmem:[%s660] sm:$0xff]
          %v662 = vld [vmem:[%s660 + $0x8] sm:$0xff]
          %v663 = vpack.c.bf16 %v662, %v661
          %v665 = vunpack.c.l.b16 %v663
          %v666 = vunpack.c.h.b16 %v663
          %v667 = vpack.c.b16 %v665, %v665
          %v668 = vpack.c.b16 %v666, %v666
          %v670 = vshrl.u32 %v667, 16
          %v672 = vrot.slane %v670, 7
          %v673 = vshll.u32 %v667, 16
          %v675 = vor.u32 %v672, %v673
          %v676 = vrot.slane %v672, 4
          %v678 = vshrl.u32 %v668, 16
          %v680 = vrot.slane %v678, 7
          %v681 = vshll.u32 %v668, 16
          %v683 = vor.u32 %v680, %v681
          %v684 = vsel %vm365, %v676, %v683
          %v685 = vrot.slane %v680, 4
          %v689 = vld [vmem:[%s641] sm:$0xf]
          %v690 = vsel %vm528, %v675, %v689
          %691 = vst [vmem:[%s641] sm:$0xf] %v690
          %692 = vst [vmem:[%s641 + $0x4] sm:$0xf] %v684
          %v693 = vld [vmem:[%s641 + $0x8] sm:$0x1]
          %v694 = vsel %vm223, %v685, %v693
          %695 = vst [vmem:[%s641 + $0x8] sm:$0x1] %v694
        $region48: #{tpu_custom_call.1} parent=31 // pred_fallthru
          _
        %s696 = sadd.s32 %s220, 8
        %s697 = scalar_lea.vmem [#allocation2], 120
        %v698 = vld [vmem:[%s697] sm:$0xf]
        %v699 = vsel %vm528, 0, %v698
        %700 = vst [vmem:[%s697] sm:$0xf] %v699
        %701 = vst [vmem:[%s697 + $0x4] sm:$0xf] 0
        %v702 = vld [vmem:[%s697 + $0x8] sm:$0x1]
        %v703 = vsel %vm223, 0, %v702
        %704 = vst [vmem:[%s697 + $0x8] sm:$0x1] %v703
        %p705 = scmp.ge.s32.totalorder %s696, 0
        %p706 = scmp.lt.s32.totalorder %s696, 16
        %p707 = pnand %p705, %p706
        %p708 = pneg %p707
        // Predicated region
        $region49: #{tpu_custom_call.1} parent=31 // pred_check
          _
        $region50: #{tpu_custom_call.1} parent=31 // pred_check_branch
          %710 = sbr.rel (%p707) target = $region52
        $region51: #{tpu_custom_call.1} parent=31 // pred_region
          %p711 = scmp.gt.s32.totalorder %s696, 0
          %s712 = scalar_select %p711, %s696, 0
          %p713 = scmp.lt.s32.totalorder %s712, 15
          %s714 = scalar_select %p713, %s712, 15
          %s715 = smul.u32 %s714, 16
          %s716 = scalar_lea.vmem %s191, %s715 [#allocation5]
          %v717 = vld [vmem:[%s716] sm:$0xff]
          %v718 = vld [vmem:[%s716 + $0x8] sm:$0xff]
          %v719 = vpack.c.bf16 %v718, %v717
          %v721 = vunpack.c.l.b16 %v719
          %v722 = vunpack.c.h.b16 %v719
          %v723 = vpack.c.b16 %v721, %v721
          %v724 = vpack.c.b16 %v722, %v722
          %v726 = vshrl.u32 %v723, 16
          %v728 = vrot.slane %v726, 7
          %v729 = vshll.u32 %v723, 16
          %v731 = vor.u32 %v728, %v729
          %v732 = vrot.slane %v728, 4
          %v734 = vshrl.u32 %v724, 16
          %v736 = vrot.slane %v734, 7
          %v737 = vshll.u32 %v724, 16
          %v739 = vor.u32 %v736, %v737
          %v740 = vsel %vm365, %v732, %v739
          %v741 = vrot.slane %v736, 4
          %v745 = vld [vmem:[%s697] sm:$0xf]
          %v746 = vsel %vm528, %v731, %v745
          %747 = vst [vmem:[%s697] sm:$0xf] %v746
          %748 = vst [vmem:[%s697 + $0x4] sm:$0xf] %v740
          %v749 = vld [vmem:[%s697 + $0x8] sm:$0x1]
          %v750 = vsel %vm223, %v741, %v749
          %751 = vst [vmem:[%s697 + $0x8] sm:$0x1] %v750
        $region52: #{tpu_custom_call.1} parent=31 // pred_fallthru
          _
        %s752 = sadd.s32 %s220, 9
        %s753 = scalar_lea.vmem [#allocation2], 132
        %v754 = vld [vmem:[%s753] sm:$0xf]
        %v755 = vsel %vm528, 0, %v754
        %756 = vst [vmem:[%s753] sm:$0xf] %v755
        %757 = vst [vmem:[%s753 + $0x4] sm:$0xf] 0
        %v758 = vld [vmem:[%s753 + $0x8] sm:$0x1]
        %v759 = vsel %vm223, 0, %v758
        %760 = vst [vmem:[%s753 + $0x8] sm:$0x1] %v759
        %p761 = scmp.ge.s32.totalorder %s752, 0
        %p762 = scmp.lt.s32.totalorder %s752, 16
        %p763 = pnand %p761, %p762
        %p764 = pneg %p763
        // Predicated region
        $region53: #{tpu_custom_call.1} parent=31 // pred_check
          _
        $region54: #{tpu_custom_call.1} parent=31 // pred_check_branch
          %766 = sbr.rel (%p763) target = $region56
        $region55: #{tpu_custom_call.1} parent=31 // pred_region
          %p767 = scmp.gt.s32.totalorder %s752, 0
          %s768 = scalar_select %p767, %s752, 0
          %p769 = scmp.lt.s32.totalorder %s768, 15
          %s770 = scalar_select %p769, %s768, 15
          %s771 = smul.u32 %s770, 16
          %s772 = scalar_lea.vmem %s191, %s771 [#allocation5]
          %v773 = vld [vmem:[%s772] sm:$0xff]
          %v774 = vld [vmem:[%s772 + $0x8] sm:$0xff]
          %v775 = vpack.c.bf16 %v774, %v773
          %v777 = vunpack.c.l.b16 %v775
          %v778 = vunpack.c.h.b16 %v775
          %v779 = vpack.c.b16 %v777, %v777
          %v780 = vpack.c.b16 %v778, %v778
          %v782 = vshrl.u32 %v779, 16
          %v784 = vrot.slane %v782, 7
          %v785 = vshll.u32 %v779, 16
          %v787 = vor.u32 %v784, %v785
          %v788 = vrot.slane %v784, 4
          %v790 = vshrl.u32 %v780, 16
          %v792 = vrot.slane %v790, 7
          %v793 = vshll.u32 %v780, 16
          %v795 = vor.u32 %v792, %v793
          %v796 = vsel %vm365, %v788, %v795
          %v797 = vrot.slane %v792, 4
          %v801 = vld [vmem:[%s753] sm:$0xf]
          %v802 = vsel %vm528, %v787, %v801
          %803 = vst [vmem:[%s753] sm:$0xf] %v802
          %804 = vst [vmem:[%s753 + $0x4] sm:$0xf] %v796
          %v805 = vld [vmem:[%s753 + $0x8] sm:$0x1]
          %v806 = vsel %vm223, %v797, %v805
          %807 = vst [vmem:[%s753 + $0x8] sm:$0x1] %v806
        $region56: #{tpu_custom_call.1} parent=31 // pred_fallthru
          _
        %v808 = vld [vmem:[#allocation2] sm:$0xf]
        %v809 = vld [vmem:[#allocation2 + $0x4] sm:$0xf]
        %v810 = vld [vmem:[#allocation2 + $0xc] sm:$0xf]
        %v811 = vld [vmem:[#allocation2 + $0x10] sm:$0xf]
        %v812 = vld [vmem:[#allocation2 + $0x18] sm:$0xf]
        %v813 = vld [vmem:[#allocation2 + $0x1c] sm:$0xf]
        %v814 = vld [vmem:[#allocation2 + $0x24] sm:$0xf]
        %v815 = vld [vmem:[#allocation2 + $0x28] sm:$0xf]
        %v816 = vld [vmem:[#allocation2 + $0x30] sm:$0xf]
        %v817 = vld [vmem:[#allocation2 + $0x34] sm:$0xf]
        %v818 = vld [vmem:[#allocation2 + $0x3c] sm:$0xf]
        %v819 = vld [vmem:[#allocation2 + $0x40] sm:$0xf]
        %v820 = vld [vmem:[#allocation2 + $0x48] sm:$0xf]
        %v821 = vld [vmem:[#allocation2 + $0x4c] sm:$0xf]
        %v822 = vld [vmem:[#allocation2 + $0x54] sm:$0xf]
        %v823 = vld [vmem:[#allocation2 + $0x58] sm:$0xf]
        %v824 = vld [vmem:[#allocation2 + $0x60] sm:$0xf]
        %v825 = vld [vmem:[#allocation2 + $0x64] sm:$0xf]
        %v826 = vld [vmem:[#allocation2 + $0x6c] sm:$0xf]
        %v827 = vld [vmem:[#allocation2 + $0x70] sm:$0xf]
        %v848 = vunpack.c.l.b16 %v808
        %v849 = vunpack.c.l.b16 %v809
        %v850 = vunpack.c.l.b16 %v810
        %v851 = vunpack.c.l.b16 %v811
        %v852 = vunpack.c.l.b16 %v812
        %v853 = vunpack.c.l.b16 %v813
        %v854 = vunpack.c.l.b16 %v814
        %v855 = vunpack.c.l.b16 %v815
        %v856 = vunpack.c.l.b16 %v816
        %v857 = vunpack.c.l.b16 %v817
        %v858 = vunpack.c.l.b16 %v818
        %v859 = vunpack.c.l.b16 %v819
        %v860 = vunpack.c.l.b16 %v820
        %v861 = vunpack.c.l.b16 %v821
        %v862 = vunpack.c.l.b16 %v822
        %v863 = vunpack.c.l.b16 %v823
        %v864 = vunpack.c.l.b16 %v824
        %v865 = vunpack.c.l.b16 %v825
        %v866 = vunpack.c.l.b16 %v826
        %v867 = vunpack.c.l.b16 %v827
        %v868 = vpack.c.b16 %v849, %v848
        %v869 = vpack.c.b16 %v851, %v850
        %v870 = vpack.c.b16 %v853, %v852
        %v871 = vpack.c.b16 %v855, %v854
        %v872 = vpack.c.b16 %v857, %v856
        %v873 = vpack.c.b16 %v859, %v858
        %v874 = vpack.c.b16 %v861, %v860
        %v875 = vpack.c.b16 %v863, %v862
        %v876 = vpack.c.b16 %v865, %v864
        %v877 = vpack.c.b16 %v867, %v866
        %888 = vst [vmem:[#allocation4] sm:$0xff] %v868
        %889 = vst [vmem:[#allocation4 + $0x48] sm:$0xff] %v869
        %890 = vst [vmem:[#allocation4 + $0x90] sm:$0xff] %v870
        %891 = vst [vmem:[#allocation4 + $0xd8] sm:$0xff] %v871
        %892 = vst [vmem:[#allocation4 + $0x120] sm:$0xff] %v872
        %893 = vst [vmem:[#allocation4 + $0x168] sm:$0xff] %v873
        %894 = vst [vmem:[#allocation4 + $0x1b0] sm:$0xff] %v874
        %895 = vst [vmem:[#allocation4 + $0x1f8] sm:$0xff] %v875
        %896 = vst [vmem:[#allocation4 + $0x240] sm:$0xff] %v876
        %897 = vst [vmem:[#allocation4 + $0x288] sm:$0xff] %v877
        %v898 = vld [vmem:[#allocation2] sm:$0xf]
        %v899 = vld [vmem:[#allocation2 + $0x4] sm:$0xf]
        %v900 = vld [vmem:[#allocation2 + $0x8] sm:$0x1]
        %v901 = vld [vmem:[#allocation2 + $0xc] sm:$0xf]
        %v902 = vld [vmem:[#allocation2 + $0x10] sm:$0xf]
        %v903 = vld [vmem:[#allocation2 + $0x14] sm:$0x1]
        %v904 = vld [vmem:[#allocation2 + $0x18] sm:$0xf]
        %v905 = vld [vmem:[#allocation2 + $0x1c] sm:$0xf]
        %v906 = vld [vmem:[#allocation2 + $0x20] sm:$0x1]
        %v907 = vld [vmem:[#allocation2 + $0x24] sm:$0xf]
        %v908 = vld [vmem:[#allocation2 + $0x28] sm:$0xf]
        %v909 = vld [vmem:[#allocation2 + $0x2c] sm:$0x1]
        %v910 = vld [vmem:[#allocation2 + $0x30] sm:$0xf]
        %v911 = vld [vmem:[#allocation2 + $0x34] sm:$0xf]
        %v912 = vld [vmem:[#allocation2 + $0x38] sm:$0x1]
        %v913 = vld [vmem:[#allocation2 + $0x3c] sm:$0xf]
        %v914 = vld [vmem:[#allocation2 + $0x40] sm:$0xf]
        %v915 = vld [vmem:[#allocation2 + $0x44] sm:$0x1]
        %v916 = vld [vmem:[#allocation2 + $0x48] sm:$0xf]
        %v917 = vld [vmem:[#allocation2 + $0x4c] sm:$0xf]
        %v918 = vld [vmem:[#allocation2 + $0x50] sm:$0x1]
        %v919 = vld [vmem:[#allocation2 + $0x54] sm:$0xf]
        %v920 = vld [vmem:[#allocation2 + $0x58] sm:$0xf]
        %v921 = vld [vmem:[#allocation2 + $0x5c] sm:$0x1]
        %v922 = vld [vmem:[#allocation2 + $0x60] sm:$0xf]
        %v923 = vld [vmem:[#allocation2 + $0x64] sm:$0xf]
        %v924 = vld [vmem:[#allocation2 + $0x68] sm:$0x1]
        %v925 = vld [vmem:[#allocation2 + $0x6c] sm:$0xf]
        %v926 = vld [vmem:[#allocation2 + $0x70] sm:$0xf]
        %v927 = vld [vmem:[#allocation2 + $0x74] sm:$0x1]
        %vm928 = vsmask.f32 3328
        %vm929 = vsmask.f32 7440
        %vm930 = vmor %vm928, %vm929
        %v932 = vshrl.u32 %v898, 16
        %v934 = vrot.slane %v932, 4
        %v935 = vshll.u32 %v898, 16
        %v937 = vrot.slane %v935, 5
        %v938 = vor.u32 %v934, %v937
        %v939 = vrot.slane %v938, 4
        %v941 = vshll.u32 %v899, 16
        %v943 = vrot.slane %v941, 5
        %v944 = vsel %vm930, %v939, %v943
        %v945 = vshrl.u32 %v899, 16
        %v947 = vrot.slane %v945, 4
        %v948 = vor.u32 %v947, %v943
        %v949 = vrot.slane %v948, 4
        %v951 = vshll.u32 %v900, 16
        %v953 = vrot.slane %v951, 5
        %v954 = vsel %vm930, %v949, %v953
        %v956 = vshrl.u32 %v901, 16
        %v958 = vrot.slane %v956, 4
        %v959 = vshll.u32 %v901, 16
        %v961 = vrot.slane %v959, 5
        %v962 = vor.u32 %v958, %v961
        %v963 = vrot.slane %v962, 4
        %v965 = vshll.u32 %v902, 16
        %v967 = vrot.slane %v965, 5
        %v968 = vsel %vm930, %v963, %v967
        %v969 = vshrl.u32 %v902, 16
        %v971 = vrot.slane %v969, 4
        %v972 = vor.u32 %v971, %v967
        %v973 = vrot.slane %v972, 4
        %v975 = vshll.u32 %v903, 16
        %v977 = vrot.slane %v975, 5
        %v978 = vsel %vm930, %v973, %v977
        %v980 = vshrl.u32 %v904, 16
        %v982 = vrot.slane %v980, 4
        %v983 = vshll.u32 %v904, 16
        %v985 = vrot.slane %v983, 5
        %v986 = vor.u32 %v982, %v985
        %v987 = vrot.slane %v986, 4
        %v989 = vshll.u32 %v905, 16
        %v991 = vrot.slane %v989, 5
        %v992 = vsel %vm930, %v987, %v991
        %v993 = vshrl.u32 %v905, 16
        %v995 = vrot.slane %v993, 4
        %v996 = vor.u32 %v995, %v991
        %v997 = vrot.slane %v996, 4
        %v999 = vshll.u32 %v906, 16
        %v1001 = vrot.slane %v999, 5
        %v1002 = vsel %vm930, %v997, %v1001
        %v1004 = vshrl.u32 %v907, 16
        %v1006 = vrot.slane %v1004, 4
        %v1007 = vshll.u32 %v907, 16
        %v1009 = vrot.slane %v1007, 5
        %v1010 = vor.u32 %v1006, %v1009
        %v1011 = vrot.slane %v1010, 4
        %v1013 = vshll.u32 %v908, 16
        %v1015 = vrot.slane %v1013, 5
        %v1016 = vsel %vm930, %v1011, %v1015
        %v1017 = vshrl.u32 %v908, 16
        %v1019 = vrot.slane %v1017, 4
        %v1020 = vor.u32 %v1019, %v1015
        %v1021 = vrot.slane %v1020, 4
        %v1023 = vshll.u32 %v909, 16
        %v1025 = vrot.slane %v1023, 5
        %v1026 = vsel %vm930, %v1021, %v1025
        %v1028 = vshrl.u32 %v910, 16
        %v1030 = vrot.slane %v1028, 4
        %v1031 = vshll.u32 %v910, 16
        %v1033 = vrot.slane %v1031, 5
        %v1034 = vor.u32 %v1030, %v1033
        %v1035 = vrot.slane %v1034, 4
        %v1037 = vshll.u32 %v911, 16
        %v1039 = vrot.slane %v1037, 5
        %v1040 = vsel %vm930, %v1035, %v1039
        %v1041 = vshrl.u32 %v911, 16
        %v1043 = vrot.slane %v1041, 4
        %v1044 = vor.u32 %v1043, %v1039
        %v1045 = vrot.slane %v1044, 4
        %v1047 = vshll.u32 %v912, 16
        %v1049 = vrot.slane %v1047, 5
        %v1050 = vsel %vm930, %v1045, %v1049
        %v1052 = vshrl.u32 %v913, 16
        %v1054 = vrot.slane %v1052, 4
        %v1055 = vshll.u32 %v913, 16
        %v1057 = vrot.slane %v1055, 5
        %v1058 = vor.u32 %v1054, %v1057
        %v1059 = vrot.slane %v1058, 4
        %v1061 = vshll.u32 %v914, 16
        %v1063 = vrot.slane %v1061, 5
        %v1064 = vsel %vm930, %v1059, %v1063
        %v1065 = vshrl.u32 %v914, 16
        %v1067 = vrot.slane %v1065, 4
        %v1068 = vor.u32 %v1067, %v1063
        %v1069 = vrot.slane %v1068, 4
        %v1071 = vshll.u32 %v915, 16
        %v1073 = vrot.slane %v1071, 5
        %v1074 = vsel %vm930, %v1069, %v1073
        %v1076 = vshrl.u32 %v916, 16
        %v1078 = vrot.slane %v1076, 4
        %v1079 = vshll.u32 %v916, 16
        %v1081 = vrot.slane %v1079, 5
        %v1082 = vor.u32 %v1078, %v1081
        %v1083 = vrot.slane %v1082, 4
        %v1085 = vshll.u32 %v917, 16
        %v1087 = vrot.slane %v1085, 5
        %v1088 = vsel %vm930, %v1083, %v1087
        %v1089 = vshrl.u32 %v917, 16
        %v1091 = vrot.slane %v1089, 4
        %v1092 = vor.u32 %v1091, %v1087
        %v1093 = vrot.slane %v1092, 4
        %v1095 = vshll.u32 %v918, 16
        %v1097 = vrot.slane %v1095, 5
        %v1098 = vsel %vm930, %v1093, %v1097
        %v1100 = vshrl.u32 %v919, 16
        %v1102 = vrot.slane %v1100, 4
        %v1103 = vshll.u32 %v919, 16
        %v1105 = vrot.slane %v1103, 5
        %v1106 = vor.u32 %v1102, %v1105
        %v1107 = vrot.slane %v1106, 4
        %v1109 = vshll.u32 %v920, 16
        %v1111 = vrot.slane %v1109, 5
        %v1112 = vsel %vm930, %v1107, %v1111
        %v1113 = vshrl.u32 %v920, 16
        %v1115 = vrot.slane %v1113, 4
        %v1116 = vor.u32 %v1115, %v1111
        %v1117 = vrot.slane %v1116, 4
        %v1119 = vshll.u32 %v921, 16
        %v1121 = vrot.slane %v1119, 5
        %v1122 = vsel %vm930, %v1117, %v1121
        %v1124 = vshrl.u32 %v922, 16
        %v1126 = vrot.slane %v1124, 4
        %v1127 = vshll.u32 %v922, 16
        %v1129 = vrot.slane %v1127, 5
        %v1130 = vor.u32 %v1126, %v1129
        %v1131 = vrot.slane %v1130, 4
        %v1133 = vshll.u32 %v923, 16
        %v1135 = vrot.slane %v1133, 5
        %v1136 = vsel %vm930, %v1131, %v1135
        %v1137 = vshrl.u32 %v923, 16
        %v1139 = vrot.slane %v1137, 4
        %v1140 = vor.u32 %v1139, %v1135
        %v1141 = vrot.slane %v1140, 4
        %v1143 = vshll.u32 %v924, 16
        %v1145 = vrot.slane %v1143, 5
        %v1146 = vsel %vm930, %v1141, %v1145
        %v1148 = vshrl.u32 %v925, 16
        %v1150 = vrot.slane %v1148, 4
        %v1151 = vshll.u32 %v925, 16
        %v1153 = vrot.slane %v1151, 5
        %v1154 = vor.u32 %v1150, %v1153
        %v1155 = vrot.slane %v1154, 4
        %v1157 = vshll.u32 %v926, 16
        %v1159 = vrot.slane %v1157, 5
        %v1160 = vsel %vm930, %v1155, %v1159
        %v1161 = vshrl.u32 %v926, 16
        %v1163 = vrot.slane %v1161, 4
        %v1164 = vor.u32 %v1163, %v1159
        %v1165 = vrot.slane %v1164, 4
        %v1167 = vshll.u32 %v927, 16
        %v1169 = vrot.slane %v1167, 5
        %v1170 = vsel %vm930, %v1165, %v1169
        %v1171 = vunpack.c.l.b16 %v944
        %v1172 = vunpack.c.l.b16 %v954
        %v1173 = vunpack.c.l.b16 %v968
        %v1174 = vunpack.c.l.b16 %v978
        %v1175 = vunpack.c.l.b16 %v992
        %v1176 = vunpack.c.l.b16 %v1002
        %v1177 = vunpack.c.l.b16 %v1016
        %v1178 = vunpack.c.l.b16 %v1026
        %v1179 = vunpack.c.l.b16 %v1040
        %v1180 = vunpack.c.l.b16 %v1050
        %v1181 = vunpack.c.l.b16 %v1064
        %v1182 = vunpack.c.l.b16 %v1074
        %v1183 = vunpack.c.l.b16 %v1088
        %v1184 = vunpack.c.l.b16 %v1098
        %v1185 = vunpack.c.l.b16 %v1112
        %v1186 = vunpack.c.l.b16 %v1122
        %v1187 = vunpack.c.l.b16 %v1136
        %v1188 = vunpack.c.l.b16 %v1146
        %v1189 = vunpack.c.l.b16 %v1160
        %v1190 = vunpack.c.l.b16 %v1170
        %v1191 = vpack.c.b16 %v1172, %v1171
        %v1192 = vpack.c.b16 %v1174, %v1173
        %v1193 = vpack.c.b16 %v1176, %v1175
        %v1194 = vpack.c.b16 %v1178, %v1177
        %v1195 = vpack.c.b16 %v1180, %v1179
        %v1196 = vpack.c.b16 %v1182, %v1181
        %v1197 = vpack.c.b16 %v1184, %v1183
        %v1198 = vpack.c.b16 %v1186, %v1185
        %v1199 = vpack.c.b16 %v1188, %v1187
        %v1200 = vpack.c.b16 %v1190, %v1189
        %1211 = vst [vmem:[#allocation4 + $0x8] sm:$0xff] %v1191
        %1212 = vst [vmem:[#allocation4 + $0x50] sm:$0xff] %v1192
        %1213 = vst [vmem:[#allocation4 + $0x98] sm:$0xff] %v1193
        %1214 = vst [vmem:[#allocation4 + $0xe0] sm:$0xff] %v1194
        %1215 = vst [vmem:[#allocation4 + $0x128] sm:$0xff] %v1195
        %1216 = vst [vmem:[#allocation4 + $0x170] sm:$0xff] %v1196
        %1217 = vst [vmem:[#allocation4 + $0x1b8] sm:$0xff] %v1197
        %1218 = vst [vmem:[#allocation4 + $0x200] sm:$0xff] %v1198
        %1219 = vst [vmem:[#allocation4 + $0x248] sm:$0xff] %v1199
        %1220 = vst [vmem:[#allocation4 + $0x290] sm:$0xff] %v1200
        %v1221 = vld [vmem:[#allocation2] sm:$0xe]
        %v1222 = vld [vmem:[#allocation2 + $0x4] sm:$0xf]
        %v1223 = vld [vmem:[#allocation2 + $0x8] sm:$0x1]
        %v1224 = vld [vmem:[#allocation2 + $0xc] sm:$0xe]
        %v1225 = vld [vmem:[#allocation2 + $0x10] sm:$0xf]
        %v1226 = vld [vmem:[#allocation2 + $0x14] sm:$0x1]
        %v1227 = vld [vmem:[#allocation2 + $0x18] sm:$0xe]
        %v1228 = vld [vmem:[#allocation2 + $0x1c] sm:$0xf]
        %v1229 = vld [vmem:[#allocation2 + $0x20] sm:$0x1]
        %v1230 = vld [vmem:[#allocation2 + $0x24] sm:$0xe]
        %v1231 = vld [vmem:[#allocation2 + $0x28] sm:$0xf]
        %v1232 = vld [vmem:[#allocation2 + $0x2c] sm:$0x1]
        %v1233 = vld [vmem:[#allocation2 + $0x30] sm:$0xe]
        %v1234 = vld [vmem:[#allocation2 + $0x34] sm:$0xf]
        %v1235 = vld [vmem:[#allocation2 + $0x38] sm:$0x1]
        %v1236 = vld [vmem:[#allocation2 + $0x3c] sm:$0xe]
        %v1237 = vld [vmem:[#allocation2 + $0x40] sm:$0xf]
        %v1238 = vld [vmem:[#allocation2 + $0x44] sm:$0x1]
        %v1239 = vld [vmem:[#allocation2 + $0x48] sm:$0xe]
        %v1240 = vld [vmem:[#allocation2 + $0x4c] sm:$0xf]
        %v1241 = vld [vmem:[#allocation2 + $0x50] sm:$0x1]
        %v1242 = vld [vmem:[#allocation2 + $0x54] sm:$0xe]
        %v1243 = vld [vmem:[#allocation2 + $0x58] sm:$0xf]
        %v1244 = vld [vmem:[#allocation2 + $0x5c] sm:$0x1]
        %v1245 = vld [vmem:[#allocation2 + $0x60] sm:$0xe]
        %v1246 = vld [vmem:[#allocation2 + $0x64] sm:$0xf]
        %v1247 = vld [vmem:[#allocation2 + $0x68] sm:$0x1]
        %v1248 = vld [vmem:[#allocation2 + $0x6c] sm:$0xe]
        %v1249 = vld [vmem:[#allocation2 + $0x70] sm:$0xf]
        %v1250 = vld [vmem:[#allocation2 + $0x74] sm:$0x1]
        %vm1281 = vcmask 1042432
        %vm1282 = vcmask 1046532
        %vm1283 = vmor %vm1281, %vm1282
        %v1284 = vrot.slane %v1221, 5
        %v1285 = vrot.slane %v1284, 4
        %v1286 = vrot.slane %v1222, 5
        %v1287 = vsel %vm1283, %v1285, %v1286
        %v1288 = vrot.slane %v1286, 4
        %v1289 = vrot.slane %v1223, 5
        %v1290 = vsel %vm1283, %v1288, %v1289
        %v1291 = vrot.slane %v1224, 5
        %v1292 = vrot.slane %v1291, 4
        %v1293 = vrot.slane %v1225, 5
        %v1294 = vsel %vm1283, %v1292, %v1293
        %v1295 = vrot.slane %v1293, 4
        %v1296 = vrot.slane %v1226, 5
        %v1297 = vsel %vm1283, %v1295, %v1296
        %v1298 = vrot.slane %v1227, 5
        %v1299 = vrot.slane %v1298, 4
        %v1300 = vrot.slane %v1228, 5
        %v1301 = vsel %vm1283, %v1299, %v1300
        %v1302 = vrot.slane %v1300, 4
        %v1303 = vrot.slane %v1229, 5
        %v1304 = vsel %vm1283, %v1302, %v1303
        %v1305 = vrot.slane %v1230, 5
        %v1306 = vrot.slane %v1305, 4
        %v1307 = vrot.slane %v1231, 5
        %v1308 = vsel %vm1283, %v1306, %v1307
        %v1309 = vrot.slane %v1307, 4
        %v1310 = vrot.slane %v1232, 5
        %v1311 = vsel %vm1283, %v1309, %v1310
        %v1312 = vrot.slane %v1233, 5
        %v1313 = vrot.slane %v1312, 4
        %v1314 = vrot.slane %v1234, 5
        %v1315 = vsel %vm1283, %v1313, %v1314
        %v1316 = vrot.slane %v1314, 4
        %v1317 = vrot.slane %v1235, 5
        %v1318 = vsel %vm1283, %v1316, %v1317
        %v1319 = vrot.slane %v1236, 5
        %v1320 = vrot.slane %v1319, 4
        %v1321 = vrot.slane %v1237, 5
        %v1322 = vsel %vm1283, %v1320, %v1321
        %v1323 = vrot.slane %v1321, 4
        %v1324 = vrot.slane %v1238, 5
        %v1325 = vsel %vm1283, %v1323, %v1324
        %v1326 = vrot.slane %v1239, 5
        %v1327 = vrot.slane %v1326, 4
        %v1328 = vrot.slane %v1240, 5
        %v1329 = vsel %vm1283, %v1327, %v1328
        %v1330 = vrot.slane %v1328, 4
        %v1331 = vrot.slane %v1241, 5
        %v1332 = vsel %vm1283, %v1330, %v1331
        %v1333 = vrot.slane %v1242, 5
        %v1334 = vrot.slane %v1333, 4
        %v1335 = vrot.slane %v1243, 5
        %v1336 = vsel %vm1283, %v1334, %v1335
        %v1337 = vrot.slane %v1335, 4
        %v1338 = vrot.slane %v1244, 5
        %v1339 = vsel %vm1283, %v1337, %v1338
        %v1340 = vrot.slane %v1245, 5
        %v1341 = vrot.slane %v1340, 4
        %v1342 = vrot.slane %v1246, 5
        %v1343 = vsel %vm1283, %v1341, %v1342
        %v1344 = vrot.slane %v1342, 4
        %v1345 = vrot.slane %v1247, 5
        %v1346 = vsel %vm1283, %v1344, %v1345
        %v1347 = vrot.slane %v1248, 5
        %v1348 = vrot.slane %v1347, 4
        %v1349 = vrot.slane %v1249, 5
        %v1350 = vsel %vm1283, %v1348, %v1349
        %v1351 = vrot.slane %v1349, 4
        %v1352 = vrot.slane %v1250, 5
        %v1353 = vsel %vm1283, %v1351, %v1352
        %v1354 = vunpack.c.l.b16 %v1287
        %v1355 = vunpack.c.l.b16 %v1290
        %v1356 = vunpack.c.l.b16 %v1294
        %v1357 = vunpack.c.l.b16 %v1297
        %v1358 = vunpack.c.l.b16 %v1301
        %v1359 = vunpack.c.l.b16 %v1304
        %v1360 = vunpack.c.l.b16 %v1308
        %v1361 = vunpack.c.l.b16 %v1311
        %v1362 = vunpack.c.l.b16 %v1315
        %v1363 = vunpack.c.l.b16 %v1318
        %v1364 = vunpack.c.l.b16 %v1322
        %v1365 = vunpack.c.l.b16 %v1325
        %v1366 = vunpack.c.l.b16 %v1329
        %v1367 = vunpack.c.l.b16 %v1332
        %v1368 = vunpack.c.l.b16 %v1336
        %v1369 = vunpack.c.l.b16 %v1339
        %v1370 = vunpack.c.l.b16 %v1343
        %v1371 = vunpack.c.l.b16 %v1346
        %v1372 = vunpack.c.l.b16 %v1350
        %v1373 = vunpack.c.l.b16 %v1353
        %v1374 = vpack.c.b16 %v1355, %v1354
        %v1375 = vpack.c.b16 %v1357, %v1356
        %v1376 = vpack.c.b16 %v1359, %v1358
        %v1377 = vpack.c.b16 %v1361, %v1360
        %v1378 = vpack.c.b16 %v1363, %v1362
        %v1379 = vpack.c.b16 %v1365, %v1364
        %v1380 = vpack.c.b16 %v1367, %v1366
        %v1381 = vpack.c.b16 %v1369, %v1368
        %v1382 = vpack.c.b16 %v1371, %v1370
        %v1383 = vpack.c.b16 %v1373, %v1372
        %1394 = vst [vmem:[#allocation4 + $0x10] sm:$0xff] %v1374
        %1395 = vst [vmem:[#allocation4 + $0x58] sm:$0xff] %v1375
        %1396 = vst [vmem:[#allocation4 + $0xa0] sm:$0xff] %v1376
        %1397 = vst [vmem:[#allocation4 + $0xe8] sm:$0xff] %v1377
        %1398 = vst [vmem:[#allocation4 + $0x130] sm:$0xff] %v1378
        %1399 = vst [vmem:[#allocation4 + $0x178] sm:$0xff] %v1379
        %1400 = vst [vmem:[#allocation4 + $0x1c0] sm:$0xff] %v1380
        %1401 = vst [vmem:[#allocation4 + $0x208] sm:$0xff] %v1381
        %1402 = vst [vmem:[#allocation4 + $0x250] sm:$0xff] %v1382
        %1403 = vst [vmem:[#allocation4 + $0x298] sm:$0xff] %v1383
        %v1404 = vld [vmem:[%s641] sm:$0xf]
        %v1405 = vld [vmem:[%s641 + $0x4] sm:$0xf]
        %v1406 = vld [vmem:[%s641 + $0xc] sm:$0xf]
        %v1407 = vld [vmem:[%s641 + $0x10] sm:$0xf]
        %v1408 = vld [vmem:[%s641 + $0x18] sm:$0xf]
        %v1409 = vld [vmem:[%s641 + $0x1c] sm:$0xf]
        %v1410 = vld [vmem:[%s641 + $0x24] sm:$0xf]
        %v1411 = vld [vmem:[%s641 + $0x28] sm:$0xf]
        %v1412 = vld [vmem:[%s641 + $0x30] sm:$0xf]
        %v1413 = vld [vmem:[%s641 + $0x34] sm:$0xf]
        %v1414 = vld [vmem:[%s641 + $0x3c] sm:$0xf]
        %v1415 = vld [vmem:[%s641 + $0x40] sm:$0xf]
        %v1416 = vld [vmem:[%s641 + $0x48] sm:$0xf]
        %v1417 = vld [vmem:[%s641 + $0x4c] sm:$0xf]
        %v1418 = vld [vmem:[%s641 + $0x54] sm:$0xf]
        %v1419 = vld [vmem:[%s641 + $0x58] sm:$0xf]
        %v1420 = vld [vmem:[%s641 + $0x60] sm:$0xf]
        %v1421 = vld [vmem:[%s641 + $0x64] sm:$0xf]
        %v1422 = vld [vmem:[%s641 + $0x6c] sm:$0xf]
        %v1423 = vld [vmem:[%s641 + $0x70] sm:$0xf]
        %v1444 = vunpack.c.l.b16 %v1404
        %v1445 = vunpack.c.l.b16 %v1405
        %v1446 = vunpack.c.l.b16 %v1406
        %v1447 = vunpack.c.l.b16 %v1407
        %v1448 = vunpack.c.l.b16 %v1408
        %v1449 = vunpack.c.l.b16 %v1409
        %v1450 = vunpack.c.l.b16 %v1410
        %v1451 = vunpack.c.l.b16 %v1411
        %v1452 = vunpack.c.l.b16 %v1412
        %v1453 = vunpack.c.l.b16 %v1413
        %v1454 = vunpack.c.l.b16 %v1414
        %v1455 = vunpack.c.l.b16 %v1415
        %v1456 = vunpack.c.l.b16 %v1416
        %v1457 = vunpack.c.l.b16 %v1417
        %v1458 = vunpack.c.l.b16 %v1418
        %v1459 = vunpack.c.l.b16 %v1419
        %v1460 = vunpack.c.l.b16 %v1420
        %v1461 = vunpack.c.l.b16 %v1421
        %v1462 = vunpack.c.l.b16 %v1422
        %v1463 = vunpack.c.l.b16 %v1423
        %v1464 = vpack.c.b16 %v1445, %v1444
        %v1465 = vpack.c.b16 %v1447, %v1446
        %v1466 = vpack.c.b16 %v1449, %v1448
        %v1467 = vpack.c.b16 %v1451, %v1450
        %v1468 = vpack.c.b16 %v1453, %v1452
        %v1469 = vpack.c.b16 %v1455, %v1454
        %v1470 = vpack.c.b16 %v1457, %v1456
        %v1471 = vpack.c.b16 %v1459, %v1458
        %v1472 = vpack.c.b16 %v1461, %v1460
        %v1473 = vpack.c.b16 %v1463, %v1462
        %1484 = vst [vmem:[#allocation4 + $0x18] sm:$0xff] %v1464
        %1485 = vst [vmem:[#allocation4 + $0x60] sm:$0xff] %v1465
        %1486 = vst [vmem:[#allocation4 + $0xa8] sm:$0xff] %v1466
        %1487 = vst [vmem:[#allocation4 + $0xf0] sm:$0xff] %v1467
        %1488 = vst [vmem:[#allocation4 + $0x138] sm:$0xff] %v1468
        %1489 = vst [vmem:[#allocation4 + $0x180] sm:$0xff] %v1469
        %1490 = vst [vmem:[#allocation4 + $0x1c8] sm:$0xff] %v1470
        %1491 = vst [vmem:[#allocation4 + $0x210] sm:$0xff] %v1471
        %1492 = vst [vmem:[#allocation4 + $0x258] sm:$0xff] %v1472
        %1493 = vst [vmem:[#allocation4 + $0x2a0] sm:$0xff] %v1473
        %v1494 = vld [vmem:[%s641] sm:$0xf]
        %v1495 = vld [vmem:[%s641 + $0x4] sm:$0xf]
        %v1496 = vld [vmem:[%s641 + $0x8] sm:$0x1]
        %v1497 = vld [vmem:[%s641 + $0xc] sm:$0xf]
        %v1498 = vld [vmem:[%s641 + $0x10] sm:$0xf]
        %v1499 = vld [vmem:[%s641 + $0x14] sm:$0x1]
        %v1500 = vld [vmem:[%s641 + $0x18] sm:$0xf]
        %v1501 = vld [vmem:[%s641 + $0x1c] sm:$0xf]
        %v1502 = vld [vmem:[%s641 + $0x20] sm:$0x1]
        %v1503 = vld [vmem:[%s641 + $0x24] sm:$0xf]
        %v1504 = vld [vmem:[%s641 + $0x28] sm:$0xf]
        %v1505 = vld [vmem:[%s641 + $0x2c] sm:$0x1]
        %v1506 = vld [vmem:[%s641 + $0x30] sm:$0xf]
        %v1507 = vld [vmem:[%s641 + $0x34] sm:$0xf]
        %v1508 = vld [vmem:[%s641 + $0x38] sm:$0x1]
        %v1509 = vld [vmem:[%s641 + $0x3c] sm:$0xf]
        %v1510 = vld [vmem:[%s641 + $0x40] sm:$0xf]
        %v1511 = vld [vmem:[%s641 + $0x44] sm:$0x1]
        %v1512 = vld [vmem:[%s641 + $0x48] sm:$0xf]
        %v1513 = vld [vmem:[%s641 + $0x4c] sm:$0xf]
        %v1514 = vld [vmem:[%s641 + $0x50] sm:$0x1]
        %v1515 = vld [vmem:[%s641 + $0x54] sm:$0xf]
        %v1516 = vld [vmem:[%s641 + $0x58] sm:$0xf]
        %v1517 = vld [vmem:[%s641 + $0x5c] sm:$0x1]
        %v1518 = vld [vmem:[%s641 + $0x60] sm:$0xf]
        %v1519 = vld [vmem:[%s641 + $0x64] sm:$0xf]
        %v1520 = vld [vmem:[%s641 + $0x68] sm:$0x1]
        %v1521 = vld [vmem:[%s641 + $0x6c] sm:$0xf]
        %v1522 = vld [vmem:[%s641 + $0x70] sm:$0xf]
        %v1523 = vld [vmem:[%s641 + $0x74] sm:$0x1]
        %v1525 = vshrl.u32 %v1494, 16
        %v1527 = vrot.slane %v1525, 4
        %v1528 = vshll.u32 %v1494, 16
        %v1530 = vrot.slane %v1528, 5
        %v1531 = vor.u32 %v1527, %v1530
        %v1532 = vrot.slane %v1531, 4
        %v1534 = vshll.u32 %v1495, 16
        %v1536 = vrot.slane %v1534, 5
        %v1537 = vsel %vm930, %v1532, %v1536
        %v1538 = vshrl.u32 %v1495, 16
        %v1540 = vrot.slane %v1538, 4
        %v1541 = vor.u32 %v1540, %v1536
        %v1542 = vrot.slane %v1541, 4
        %v1544 = vshll.u32 %v1496, 16
        %v1546 = vrot.slane %v1544, 5
        %v1547 = vsel %vm930, %v1542, %v1546
        %v1549 = vshrl.u32 %v1497, 16
        %v1551 = vrot.slane %v1549, 4
        %v1552 = vshll.u32 %v1497, 16
        %v1554 = vrot.slane %v1552, 5
        %v1555 = vor.u32 %v1551, %v1554
        %v1556 = vrot.slane %v1555, 4
        %v1558 = vshll.u32 %v1498, 16
        %v1560 = vrot.slane %v1558, 5
        %v1561 = vsel %vm930, %v1556, %v1560
        %v1562 = vshrl.u32 %v1498, 16
        %v1564 = vrot.slane %v1562, 4
        %v1565 = vor.u32 %v1564, %v1560
        %v1566 = vrot.slane %v1565, 4
        %v1568 = vshll.u32 %v1499, 16
        %v1570 = vrot.slane %v1568, 5
        %v1571 = vsel %vm930, %v1566, %v1570
        %v1573 = vshrl.u32 %v1500, 16
        %v1575 = vrot.slane %v1573, 4
        %v1576 = vshll.u32 %v1500, 16
        %v1578 = vrot.slane %v1576, 5
        %v1579 = vor.u32 %v1575, %v1578
        %v1580 = vrot.slane %v1579, 4
        %v1582 = vshll.u32 %v1501, 16
        %v1584 = vrot.slane %v1582, 5
        %v1585 = vsel %vm930, %v1580, %v1584
        %v1586 = vshrl.u32 %v1501, 16
        %v1588 = vrot.slane %v1586, 4
        %v1589 = vor.u32 %v1588, %v1584
        %v1590 = vrot.slane %v1589, 4
        %v1592 = vshll.u32 %v1502, 16
        %v1594 = vrot.slane %v1592, 5
        %v1595 = vsel %vm930, %v1590, %v1594
        %v1597 = vshrl.u32 %v1503, 16
        %v1599 = vrot.slane %v1597, 4
        %v1600 = vshll.u32 %v1503, 16
        %v1602 = vrot.slane %v1600, 5
        %v1603 = vor.u32 %v1599, %v1602
        %v1604 = vrot.slane %v1603, 4
        %v1606 = vshll.u32 %v1504, 16
        %v1608 = vrot.slane %v1606, 5
        %v1609 = vsel %vm930, %v1604, %v1608
        %v1610 = vshrl.u32 %v1504, 16
        %v1612 = vrot.slane %v1610, 4
        %v1613 = vor.u32 %v1612, %v1608
        %v1614 = vrot.slane %v1613, 4
        %v1616 = vshll.u32 %v1505, 16
        %v1618 = vrot.slane %v1616, 5
        %v1619 = vsel %vm930, %v1614, %v1618
        %v1621 = vshrl.u32 %v1506, 16
        %v1623 = vrot.slane %v1621, 4
        %v1624 = vshll.u32 %v1506, 16
        %v1626 = vrot.slane %v1624, 5
        %v1627 = vor.u32 %v1623, %v1626
        %v1628 = vrot.slane %v1627, 4
        %v1630 = vshll.u32 %v1507, 16
        %v1632 = vrot.slane %v1630, 5
        %v1633 = vsel %vm930, %v1628, %v1632
        %v1634 = vshrl.u32 %v1507, 16
        %v1636 = vrot.slane %v1634, 4
        %v1637 = vor.u32 %v1636, %v1632
        %v1638 = vrot.slane %v1637, 4
        %v1640 = vshll.u32 %v1508, 16
        %v1642 = vrot.slane %v1640, 5
        %v1643 = vsel %vm930, %v1638, %v1642
        %v1645 = vshrl.u32 %v1509, 16
        %v1647 = vrot.slane %v1645, 4
        %v1648 = vshll.u32 %v1509, 16
        %v1650 = vrot.slane %v1648, 5
        %v1651 = vor.u32 %v1647, %v1650
        %v1652 = vrot.slane %v1651, 4
        %v1654 = vshll.u32 %v1510, 16
        %v1656 = vrot.slane %v1654, 5
        %v1657 = vsel %vm930, %v1652, %v1656
        %v1658 = vshrl.u32 %v1510, 16
        %v1660 = vrot.slane %v1658, 4
        %v1661 = vor.u32 %v1660, %v1656
        %v1662 = vrot.slane %v1661, 4
        %v1664 = vshll.u32 %v1511, 16
        %v1666 = vrot.slane %v1664, 5
        %v1667 = vsel %vm930, %v1662, %v1666
        %v1669 = vshrl.u32 %v1512, 16
        %v1671 = vrot.slane %v1669, 4
        %v1672 = vshll.u32 %v1512, 16
        %v1674 = vrot.slane %v1672, 5
        %v1675 = vor.u32 %v1671, %v1674
        %v1676 = vrot.slane %v1675, 4
        %v1678 = vshll.u32 %v1513, 16
        %v1680 = vrot.slane %v1678, 5
        %v1681 = vsel %vm930, %v1676, %v1680
        %v1682 = vshrl.u32 %v1513, 16
        %v1684 = vrot.slane %v1682, 4
        %v1685 = vor.u32 %v1684, %v1680
        %v1686 = vrot.slane %v1685, 4
        %v1688 = vshll.u32 %v1514, 16
        %v1690 = vrot.slane %v1688, 5
        %v1691 = vsel %vm930, %v1686, %v1690
        %v1693 = vshrl.u32 %v1515, 16
        %v1695 = vrot.slane %v1693, 4
        %v1696 = vshll.u32 %v1515, 16
        %v1698 = vrot.slane %v1696, 5
        %v1699 = vor.u32 %v1695, %v1698
        %v1700 = vrot.slane %v1699, 4
        %v1702 = vshll.u32 %v1516, 16
        %v1704 = vrot.slane %v1702, 5
        %v1705 = vsel %vm930, %v1700, %v1704
        %v1706 = vshrl.u32 %v1516, 16
        %v1708 = vrot.slane %v1706, 4
        %v1709 = vor.u32 %v1708, %v1704
        %v1710 = vrot.slane %v1709, 4
        %v1712 = vshll.u32 %v1517, 16
        %v1714 = vrot.slane %v1712, 5
        %v1715 = vsel %vm930, %v1710, %v1714
        %v1717 = vshrl.u32 %v1518, 16
        %v1719 = vrot.slane %v1717, 4
        %v1720 = vshll.u32 %v1518, 16
        %v1722 = vrot.slane %v1720, 5
        %v1723 = vor.u32 %v1719, %v1722
        %v1724 = vrot.slane %v1723, 4
        %v1726 = vshll.u32 %v1519, 16
        %v1728 = vrot.slane %v1726, 5
        %v1729 = vsel %vm930, %v1724, %v1728
        %v1730 = vshrl.u32 %v1519, 16
        %v1732 = vrot.slane %v1730, 4
        %v1733 = vor.u32 %v1732, %v1728
        %v1734 = vrot.slane %v1733, 4
        %v1736 = vshll.u32 %v1520, 16
        %v1738 = vrot.slane %v1736, 5
        %v1739 = vsel %vm930, %v1734, %v1738
        %v1741 = vshrl.u32 %v1521, 16
        %v1743 = vrot.slane %v1741, 4
        %v1744 = vshll.u32 %v1521, 16
        %v1746 = vrot.slane %v1744, 5
        %v1747 = vor.u32 %v1743, %v1746
        %v1748 = vrot.slane %v1747, 4
        %v1750 = vshll.u32 %v1522, 16
        %v1752 = vrot.slane %v1750, 5
        %v1753 = vsel %vm930, %v1748, %v1752
        %v1754 = vshrl.u32 %v1522, 16
        %v1756 = vrot.slane %v1754, 4
        %v1757 = vor.u32 %v1756, %v1752
        %v1758 = vrot.slane %v1757, 4
        %v1760 = vshll.u32 %v1523, 16
        %v1762 = vrot.slane %v1760, 5
        %v1763 = vsel %vm930, %v1758, %v1762
        %v1764 = vunpack.c.l.b16 %v1537
        %v1765 = vunpack.c.l.b16 %v1547
        %v1766 = vunpack.c.l.b16 %v1561
        %v1767 = vunpack.c.l.b16 %v1571
        %v1768 = vunpack.c.l.b16 %v1585
        %v1769 = vunpack.c.l.b16 %v1595
        %v1770 = vunpack.c.l.b16 %v1609
        %v1771 = vunpack.c.l.b16 %v1619
        %v1772 = vunpack.c.l.b16 %v1633
        %v1773 = vunpack.c.l.b16 %v1643
        %v1774 = vunpack.c.l.b16 %v1657
        %v1775 = vunpack.c.l.b16 %v1667
        %v1776 = vunpack.c.l.b16 %v1681
        %v1777 = vunpack.c.l.b16 %v1691
        %v1778 = vunpack.c.l.b16 %v1705
        %v1779 = vunpack.c.l.b16 %v1715
        %v1780 = vunpack.c.l.b16 %v1729
        %v1781 = vunpack.c.l.b16 %v1739
        %v1782 = vunpack.c.l.b16 %v1753
        %v1783 = vunpack.c.l.b16 %v1763
        %v1784 = vpack.c.b16 %v1765, %v1764
        %v1785 = vpack.c.b16 %v1767, %v1766
        %v1786 = vpack.c.b16 %v1769, %v1768
        %v1787 = vpack.c.b16 %v1771, %v1770
        %v1788 = vpack.c.b16 %v1773, %v1772
        %v1789 = vpack.c.b16 %v1775, %v1774
        %v1790 = vpack.c.b16 %v1777, %v1776
        %v1791 = vpack.c.b16 %v1779, %v1778
        %v1792 = vpack.c.b16 %v1781, %v1780
        %v1793 = vpack.c.b16 %v1783, %v1782
        %1804 = vst [vmem:[#allocation4 + $0x20] sm:$0xff] %v1784
        %1805 = vst [vmem:[#allocation4 + $0x68] sm:$0xff] %v1785
        %1806 = vst [vmem:[#allocation4 + $0xb0] sm:$0xff] %v1786
        %1807 = vst [vmem:[#allocation4 + $0xf8] sm:$0xff] %v1787
        %1808 = vst [vmem:[#allocation4 + $0x140] sm:$0xff] %v1788
        %1809 = vst [vmem:[#allocation4 + $0x188] sm:$0xff] %v1789
        %1810 = vst [vmem:[#allocation4 + $0x1d0] sm:$0xff] %v1790
        %1811 = vst [vmem:[#allocation4 + $0x218] sm:$0xff] %v1791
        %1812 = vst [vmem:[#allocation4 + $0x260] sm:$0xff] %v1792
        %1813 = vst [vmem:[#allocation4 + $0x2a8] sm:$0xff] %v1793
        %v1814 = vld [vmem:[%s641] sm:$0xe]
        %v1815 = vld [vmem:[%s641 + $0x4] sm:$0xf]
        %v1816 = vld [vmem:[%s641 + $0x8] sm:$0x1]
        %v1817 = vld [vmem:[%s641 + $0xc] sm:$0xe]
        %v1818 = vld [vmem:[%s641 + $0x10] sm:$0xf]
        %v1819 = vld [vmem:[%s641 + $0x14] sm:$0x1]
        %v1820 = vld [vmem:[%s641 + $0x18] sm:$0xe]
        %v1821 = vld [vmem:[%s641 + $0x1c] sm:$0xf]
        %v1822 = vld [vmem:[%s641 + $0x20] sm:$0x1]
        %v1823 = vld [vmem:[%s641 + $0x24] sm:$0xe]
        %v1824 = vld [vmem:[%s641 + $0x28] sm:$0xf]
        %v1825 = vld [vmem:[%s641 + $0x2c] sm:$0x1]
        %v1826 = vld [vmem:[%s641 + $0x30] sm:$0xe]
        %v1827 = vld [vmem:[%s641 + $0x34] sm:$0xf]
        %v1828 = vld [vmem:[%s641 + $0x38] sm:$0x1]
        %v1829 = vld [vmem:[%s641 + $0x3c] sm:$0xe]
        %v1830 = vld [vmem:[%s641 + $0x40] sm:$0xf]
        %v1831 = vld [vmem:[%s641 + $0x44] sm:$0x1]
        %v1832 = vld [vmem:[%s641 + $0x48] sm:$0xe]
        %v1833 = vld [vmem:[%s641 + $0x4c] sm:$0xf]
        %v1834 = vld [vmem:[%s641 + $0x50] sm:$0x1]
        %v1835 = vld [vmem:[%s641 + $0x54] sm:$0xe]
        %v1836 = vld [vmem:[%s641 + $0x58] sm:$0xf]
        %v1837 = vld [vmem:[%s641 + $0x5c] sm:$0x1]
        %v1838 = vld [vmem:[%s641 + $0x60] sm:$0xe]
        %v1839 = vld [vmem:[%s641 + $0x64] sm:$0xf]
        %v1840 = vld [vmem:[%s641 + $0x68] sm:$0x1]
        %v1841 = vld [vmem:[%s641 + $0x6c] sm:$0xe]
        %v1842 = vld [vmem:[%s641 + $0x70] sm:$0xf]
        %v1843 = vld [vmem:[%s641 + $0x74] sm:$0x1]
        %v1874 = vrot.slane %v1814, 5
        %v1875 = vrot.slane %v1874, 4
        %v1876 = vrot.slane %v1815, 5
        %v1877 = vsel %vm1283, %v1875, %v1876
        %v1878 = vrot.slane %v1876, 4
        %v1879 = vrot.slane %v1816, 5
        %v1880 = vsel %vm1283, %v1878, %v1879
        %v1881 = vrot.slane %v1817, 5
        %v1882 = vrot.slane %v1881, 4
        %v1883 = vrot.slane %v1818, 5
        %v1884 = vsel %vm1283, %v1882, %v1883
        %v1885 = vrot.slane %v1883, 4
        %v1886 = vrot.slane %v1819, 5
        %v1887 = vsel %vm1283, %v1885, %v1886
        %v1888 = vrot.slane %v1820, 5
        %v1889 = vrot.slane %v1888, 4
        %v1890 = vrot.slane %v1821, 5
        %v1891 = vsel %vm1283, %v1889, %v1890
        %v1892 = vrot.slane %v1890, 4
        %v1893 = vrot.slane %v1822, 5
        %v1894 = vsel %vm1283, %v1892, %v1893
        %v1895 = vrot.slane %v1823, 5
        %v1896 = vrot.slane %v1895, 4
        %v1897 = vrot.slane %v1824, 5
        %v1898 = vsel %vm1283, %v1896, %v1897
        %v1899 = vrot.slane %v1897, 4
        %v1900 = vrot.slane %v1825, 5
        %v1901 = vsel %vm1283, %v1899, %v1900
        %v1902 = vrot.slane %v1826, 5
        %v1903 = vrot.slane %v1902, 4
        %v1904 = vrot.slane %v1827, 5
        %v1905 = vsel %vm1283, %v1903, %v1904
        %v1906 = vrot.slane %v1904, 4
        %v1907 = vrot.slane %v1828, 5
        %v1908 = vsel %vm1283, %v1906, %v1907
        %v1909 = vrot.slane %v1829, 5
        %v1910 = vrot.slane %v1909, 4
        %v1911 = vrot.slane %v1830, 5
        %v1912 = vsel %vm1283, %v1910, %v1911
        %v1913 = vrot.slane %v1911, 4
        %v1914 = vrot.slane %v1831, 5
        %v1915 = vsel %vm1283, %v1913, %v1914
        %v1916 = vrot.slane %v1832, 5
        %v1917 = vrot.slane %v1916, 4
        %v1918 = vrot.slane %v1833, 5
        %v1919 = vsel %vm1283, %v1917, %v1918
        %v1920 = vrot.slane %v1918, 4
        %v1921 = vrot.slane %v1834, 5
        %v1922 = vsel %vm1283, %v1920, %v1921
        %v1923 = vrot.slane %v1835, 5
        %v1924 = vrot.slane %v1923, 4
        %v1925 = vrot.slane %v1836, 5
        %v1926 = vsel %vm1283, %v1924, %v1925
        %v1927 = vrot.slane %v1925, 4
        %v1928 = vrot.slane %v1837, 5
        %v1929 = vsel %vm1283, %v1927, %v1928
        %v1930 = vrot.slane %v1838, 5
        %v1931 = vrot.slane %v1930, 4
        %v1932 = vrot.slane %v1839, 5
        %v1933 = vsel %vm1283, %v1931, %v1932
        %v1934 = vrot.slane %v1932, 4
        %v1935 = vrot.slane %v1840, 5
        %v1936 = vsel %vm1283, %v1934, %v1935
        %v1937 = vrot.slane %v1841, 5
        %v1938 = vrot.slane %v1937, 4
        %v1939 = vrot.slane %v1842, 5
        %v1940 = vsel %vm1283, %v1938, %v1939
        %v1941 = vrot.slane %v1939, 4
        %v1942 = vrot.slane %v1843, 5
        %v1943 = vsel %vm1283, %v1941, %v1942
        %v1944 = vunpack.c.l.b16 %v1877
        %v1945 = vunpack.c.l.b16 %v1880
        %v1946 = vunpack.c.l.b16 %v1884
        %v1947 = vunpack.c.l.b16 %v1887
        %v1948 = vunpack.c.l.b16 %v1891
        %v1949 = vunpack.c.l.b16 %v1894
        %v1950 = vunpack.c.l.b16 %v1898
        %v1951 = vunpack.c.l.b16 %v1901
        %v1952 = vunpack.c.l.b16 %v1905
        %v1953 = vunpack.c.l.b16 %v1908
        %v1954 = vunpack.c.l.b16 %v1912
        %v1955 = vunpack.c.l.b16 %v1915
        %v1956 = vunpack.c.l.b16 %v1919
        %v1957 = vunpack.c.l.b16 %v1922
        %v1958 = vunpack.c.l.b16 %v1926
        %v1959 = vunpack.c.l.b16 %v1929
        %v1960 = vunpack.c.l.b16 %v1933
        %v1961 = vunpack.c.l.b16 %v1936
        %v1962 = vunpack.c.l.b16 %v1940
        %v1963 = vunpack.c.l.b16 %v1943
        %v1964 = vpack.c.b16 %v1945, %v1944
        %v1965 = vpack.c.b16 %v1947, %v1946
        %v1966 = vpack.c.b16 %v1949, %v1948
        %v1967 = vpack.c.b16 %v1951, %v1950
        %v1968 = vpack.c.b16 %v1953, %v1952
        %v1969 = vpack.c.b16 %v1955, %v1954
        %v1970 = vpack.c.b16 %v1957, %v1956
        %v1971 = vpack.c.b16 %v1959, %v1958
        %v1972 = vpack.c.b16 %v1961, %v1960
        %v1973 = vpack.c.b16 %v1963, %v1962
        %1984 = vst [vmem:[#allocation4 + $0x28] sm:$0xff] %v1964
        %1985 = vst [vmem:[#allocation4 + $0x70] sm:$0xff] %v1965
        %1986 = vst [vmem:[#allocation4 + $0xb8] sm:$0xff] %v1966
        %1987 = vst [vmem:[#allocation4 + $0x100] sm:$0xff] %v1967
        %1988 = vst [vmem:[#allocation4 + $0x148] sm:$0xff] %v1968
        %1989 = vst [vmem:[#allocation4 + $0x190] sm:$0xff] %v1969
        %1990 = vst [vmem:[#allocation4 + $0x1d8] sm:$0xff] %v1970
        %1991 = vst [vmem:[#allocation4 + $0x220] sm:$0xff] %v1971
        %1992 = vst [vmem:[#allocation4 + $0x268] sm:$0xff] %v1972
        %1993 = vst [vmem:[#allocation4 + $0x2b0] sm:$0xff] %v1973
        %v1994 = vld [vmem:[%s526] sm:$0xf]
        %v1995 = vld [vmem:[%s526 + $0x4] sm:$0xf]
        %v1996 = vld [vmem:[%s526 + $0xc] sm:$0xf]
        %v1997 = vld [vmem:[%s526 + $0x10] sm:$0xf]
        %v1998 = vld [vmem:[%s526 + $0x18] sm:$0xf]
        %v1999 = vld [vmem:[%s526 + $0x1c] sm:$0xf]
        %v2000 = vld [vmem:[%s526 + $0x24] sm:$0xf]
        %v2001 = vld [vmem:[%s526 + $0x28] sm:$0xf]
        %v2002 = vld [vmem:[%s526 + $0x30] sm:$0xf]
        %v2003 = vld [vmem:[%s526 + $0x34] sm:$0xf]
        %v2004 = vld [vmem:[%s526 + $0x3c] sm:$0xf]
        %v2005 = vld [vmem:[%s526 + $0x40] sm:$0xf]
        %v2006 = vld [vmem:[%s526 + $0x48] sm:$0xf]
        %v2007 = vld [vmem:[%s526 + $0x4c] sm:$0xf]
        %v2008 = vld [vmem:[%s526 + $0x54] sm:$0xf]
        %v2009 = vld [vmem:[%s526 + $0x58] sm:$0xf]
        %v2010 = vld [vmem:[%s526 + $0x60] sm:$0xf]
        %v2011 = vld [vmem:[%s526 + $0x64] sm:$0xf]
        %v2012 = vld [vmem:[%s526 + $0x6c] sm:$0xf]
        %v2013 = vld [vmem:[%s526 + $0x70] sm:$0xf]
        %v2034 = vunpack.c.l.b16 %v1994
        %v2035 = vunpack.c.l.b16 %v1995
        %v2036 = vunpack.c.l.b16 %v1996
        %v2037 = vunpack.c.l.b16 %v1997
        %v2038 = vunpack.c.l.b16 %v1998
        %v2039 = vunpack.c.l.b16 %v1999
        %v2040 = vunpack.c.l.b16 %v2000
        %v2041 = vunpack.c.l.b16 %v2001
        %v2042 = vunpack.c.l.b16 %v2002
        %v2043 = vunpack.c.l.b16 %v2003
        %v2044 = vunpack.c.l.b16 %v2004
        %v2045 = vunpack.c.l.b16 %v2005
        %v2046 = vunpack.c.l.b16 %v2006
        %v2047 = vunpack.c.l.b16 %v2007
        %v2048 = vunpack.c.l.b16 %v2008
        %v2049 = vunpack.c.l.b16 %v2009
        %v2050 = vunpack.c.l.b16 %v2010
        %v2051 = vunpack.c.l.b16 %v2011
        %v2052 = vunpack.c.l.b16 %v2012
        %v2053 = vunpack.c.l.b16 %v2013
        %v2054 = vpack.c.b16 %v2035, %v2034
        %v2055 = vpack.c.b16 %v2037, %v2036
        %v2056 = vpack.c.b16 %v2039, %v2038
        %v2057 = vpack.c.b16 %v2041, %v2040
        %v2058 = vpack.c.b16 %v2043, %v2042
        %v2059 = vpack.c.b16 %v2045, %v2044
        %v2060 = vpack.c.b16 %v2047, %v2046
        %v2061 = vpack.c.b16 %v2049, %v2048
        %v2062 = vpack.c.b16 %v2051, %v2050
        %v2063 = vpack.c.b16 %v2053, %v2052
        %2074 = vst [vmem:[#allocation4 + $0x30] sm:$0xff] %v2054
        %2075 = vst [vmem:[#allocation4 + $0x78] sm:$0xff] %v2055
        %2076 = vst [vmem:[#allocation4 + $0xc0] sm:$0xff] %v2056
        %2077 = vst [vmem:[#allocation4 + $0x108] sm:$0xff] %v2057
        %2078 = vst [vmem:[#allocation4 + $0x150] sm:$0xff] %v2058
        %2079 = vst [vmem:[#allocation4 + $0x198] sm:$0xff] %v2059
        %2080 = vst [vmem:[#allocation4 + $0x1e0] sm:$0xff] %v2060
        %2081 = vst [vmem:[#allocation4 + $0x228] sm:$0xff] %v2061
        %2082 = vst [vmem:[#allocation4 + $0x270] sm:$0xff] %v2062
        %2083 = vst [vmem:[#allocation4 + $0x2b8] sm:$0xff] %v2063
        %v2084 = vld [vmem:[%s526] sm:$0xf]
        %v2085 = vld [vmem:[%s526 + $0x4] sm:$0xf]
        %v2086 = vld [vmem:[%s526 + $0x8] sm:$0x1]
        %v2087 = vld [vmem:[%s526 + $0xc] sm:$0xf]
        %v2088 = vld [vmem:[%s526 + $0x10] sm:$0xf]
        %v2089 = vld [vmem:[%s526 + $0x14] sm:$0x1]
        %v2090 = vld [vmem:[%s526 + $0x18] sm:$0xf]
        %v2091 = vld [vmem:[%s526 + $0x1c] sm:$0xf]
        %v2092 = vld [vmem:[%s526 + $0x20] sm:$0x1]
        %v2093 = vld [vmem:[%s526 + $0x24] sm:$0xf]
        %v2094 = vld [vmem:[%s526 + $0x28] sm:$0xf]
        %v2095 = vld [vmem:[%s526 + $0x2c] sm:$0x1]
        %v2096 = vld [vmem:[%s526 + $0x30] sm:$0xf]
        %v2097 = vld [vmem:[%s526 + $0x34] sm:$0xf]
        %v2098 = vld [vmem:[%s526 + $0x38] sm:$0x1]
        %v2099 = vld [vmem:[%s526 + $0x3c] sm:$0xf]
        %v2100 = vld [vmem:[%s526 + $0x40] sm:$0xf]
        %v2101 = vld [vmem:[%s526 + $0x44] sm:$0x1]
        %v2102 = vld [vmem:[%s526 + $0x48] sm:$0xf]
        %v2103 = vld [vmem:[%s526 + $0x4c] sm:$0xf]
        %v2104 = vld [vmem:[%s526 + $0x50] sm:$0x1]
        %v2105 = vld [vmem:[%s526 + $0x54] sm:$0xf]
        %v2106 = vld [vmem:[%s526 + $0x58] sm:$0xf]
        %v2107 = vld [vmem:[%s526 + $0x5c] sm:$0x1]
        %v2108 = vld [vmem:[%s526 + $0x60] sm:$0xf]
        %v2109 = vld [vmem:[%s526 + $0x64] sm:$0xf]
        %v2110 = vld [vmem:[%s526 + $0x68] sm:$0x1]
        %v2111 = vld [vmem:[%s526 + $0x6c] sm:$0xf]
        %v2112 = vld [vmem:[%s526 + $0x70] sm:$0xf]
        %v2113 = vld [vmem:[%s526 + $0x74] sm:$0x1]
        %v2115 = vshrl.u32 %v2084, 16
        %v2117 = vrot.slane %v2115, 4
        %v2118 = vshll.u32 %v2084, 16
        %v2120 = vrot.slane %v2118, 5
        %v2121 = vor.u32 %v2117, %v2120
        %v2122 = vrot.slane %v2121, 4
        %v2124 = vshll.u32 %v2085, 16
        %v2126 = vrot.slane %v2124, 5
        %v2127 = vsel %vm930, %v2122, %v2126
        %v2128 = vshrl.u32 %v2085, 16
        %v2130 = vrot.slane %v2128, 4
        %v2131 = vor.u32 %v2130, %v2126
        %v2132 = vrot.slane %v2131, 4
        %v2134 = vshll.u32 %v2086, 16
        %v2136 = vrot.slane %v2134, 5
        %v2137 = vsel %vm930, %v2132, %v2136
        %v2139 = vshrl.u32 %v2087, 16
        %v2141 = vrot.slane %v2139, 4
        %v2142 = vshll.u32 %v2087, 16
        %v2144 = vrot.slane %v2142, 5
        %v2145 = vor.u32 %v2141, %v2144
        %v2146 = vrot.slane %v2145, 4
        %v2148 = vshll.u32 %v2088, 16
        %v2150 = vrot.slane %v2148, 5
        %v2151 = vsel %vm930, %v2146, %v2150
        %v2152 = vshrl.u32 %v2088, 16
        %v2154 = vrot.slane %v2152, 4
        %v2155 = vor.u32 %v2154, %v2150
        %v2156 = vrot.slane %v2155, 4
        %v2158 = vshll.u32 %v2089, 16
        %v2160 = vrot.slane %v2158, 5
        %v2161 = vsel %vm930, %v2156, %v2160
        %v2163 = vshrl.u32 %v2090, 16
        %v2165 = vrot.slane %v2163, 4
        %v2166 = vshll.u32 %v2090, 16
        %v2168 = vrot.slane %v2166, 5
        %v2169 = vor.u32 %v2165, %v2168
        %v2170 = vrot.slane %v2169, 4
        %v2172 = vshll.u32 %v2091, 16
        %v2174 = vrot.slane %v2172, 5
        %v2175 = vsel %vm930, %v2170, %v2174
        %v2176 = vshrl.u32 %v2091, 16
        %v2178 = vrot.slane %v2176, 4
        %v2179 = vor.u32 %v2178, %v2174
        %v2180 = vrot.slane %v2179, 4
        %v2182 = vshll.u32 %v2092, 16
        %v2184 = vrot.slane %v2182, 5
        %v2185 = vsel %vm930, %v2180, %v2184
        %v2187 = vshrl.u32 %v2093, 16
        %v2189 = vrot.slane %v2187, 4
        %v2190 = vshll.u32 %v2093, 16
        %v2192 = vrot.slane %v2190, 5
        %v2193 = vor.u32 %v2189, %v2192
        %v2194 = vrot.slane %v2193, 4
        %v2196 = vshll.u32 %v2094, 16
        %v2198 = vrot.slane %v2196, 5
        %v2199 = vsel %vm930, %v2194, %v2198
        %v2200 = vshrl.u32 %v2094, 16
        %v2202 = vrot.slane %v2200, 4
        %v2203 = vor.u32 %v2202, %v2198
        %v2204 = vrot.slane %v2203, 4
        %v2206 = vshll.u32 %v2095, 16
        %v2208 = vrot.slane %v2206, 5
        %v2209 = vsel %vm930, %v2204, %v2208
        %v2211 = vshrl.u32 %v2096, 16
        %v2213 = vrot.slane %v2211, 4
        %v2214 = vshll.u32 %v2096, 16
        %v2216 = vrot.slane %v2214, 5
        %v2217 = vor.u32 %v2213, %v2216
        %v2218 = vrot.slane %v2217, 4
        %v2220 = vshll.u32 %v2097, 16
        %v2222 = vrot.slane %v2220, 5
        %v2223 = vsel %vm930, %v2218, %v2222
        %v2224 = vshrl.u32 %v2097, 16
        %v2226 = vrot.slane %v2224, 4
        %v2227 = vor.u32 %v2226, %v2222
        %v2228 = vrot.slane %v2227, 4
        %v2230 = vshll.u32 %v2098, 16
        %v2232 = vrot.slane %v2230, 5
        %v2233 = vsel %vm930, %v2228, %v2232
        %v2235 = vshrl.u32 %v2099, 16
        %v2237 = vrot.slane %v2235, 4
        %v2238 = vshll.u32 %v2099, 16
        %v2240 = vrot.slane %v2238, 5
        %v2241 = vor.u32 %v2237, %v2240
        %v2242 = vrot.slane %v2241, 4
        %v2244 = vshll.u32 %v2100, 16
        %v2246 = vrot.slane %v2244, 5
        %v2247 = vsel %vm930, %v2242, %v2246
        %v2248 = vshrl.u32 %v2100, 16
        %v2250 = vrot.slane %v2248, 4
        %v2251 = vor.u32 %v2250, %v2246
        %v2252 = vrot.slane %v2251, 4
        %v2254 = vshll.u32 %v2101, 16
        %v2256 = vrot.slane %v2254, 5
        %v2257 = vsel %vm930, %v2252, %v2256
        %v2259 = vshrl.u32 %v2102, 16
        %v2261 = vrot.slane %v2259, 4
        %v2262 = vshll.u32 %v2102, 16
        %v2264 = vrot.slane %v2262, 5
        %v2265 = vor.u32 %v2261, %v2264
        %v2266 = vrot.slane %v2265, 4
        %v2268 = vshll.u32 %v2103, 16
        %v2270 = vrot.slane %v2268, 5
        %v2271 = vsel %vm930, %v2266, %v2270
        %v2272 = vshrl.u32 %v2103, 16
        %v2274 = vrot.slane %v2272, 4
        %v2275 = vor.u32 %v2274, %v2270
        %v2276 = vrot.slane %v2275, 4
        %v2278 = vshll.u32 %v2104, 16
        %v2280 = vrot.slane %v2278, 5
        %v2281 = vsel %vm930, %v2276, %v2280
        %v2283 = vshrl.u32 %v2105, 16
        %v2285 = vrot.slane %v2283, 4
        %v2286 = vshll.u32 %v2105, 16
        %v2288 = vrot.slane %v2286, 5
        %v2289 = vor.u32 %v2285, %v2288
        %v2290 = vrot.slane %v2289, 4
        %v2292 = vshll.u32 %v2106, 16
        %v2294 = vrot.slane %v2292, 5
        %v2295 = vsel %vm930, %v2290, %v2294
        %v2296 = vshrl.u32 %v2106, 16
        %v2298 = vrot.slane %v2296, 4
        %v2299 = vor.u32 %v2298, %v2294
        %v2300 = vrot.slane %v2299, 4
        %v2302 = vshll.u32 %v2107, 16
        %v2304 = vrot.slane %v2302, 5
        %v2305 = vsel %vm930, %v2300, %v2304
        %v2307 = vshrl.u32 %v2108, 16
        %v2309 = vrot.slane %v2307, 4
        %v2310 = vshll.u32 %v2108, 16
        %v2312 = vrot.slane %v2310, 5
        %v2313 = vor.u32 %v2309, %v2312
        %v2314 = vrot.slane %v2313, 4
        %v2316 = vshll.u32 %v2109, 16
        %v2318 = vrot.slane %v2316, 5
        %v2319 = vsel %vm930, %v2314, %v2318
        %v2320 = vshrl.u32 %v2109, 16
        %v2322 = vrot.slane %v2320, 4
        %v2323 = vor.u32 %v2322, %v2318
        %v2324 = vrot.slane %v2323, 4
        %v2326 = vshll.u32 %v2110, 16
        %v2328 = vrot.slane %v2326, 5
        %v2329 = vsel %vm930, %v2324, %v2328
        %v2331 = vshrl.u32 %v2111, 16
        %v2333 = vrot.slane %v2331, 4
        %v2334 = vshll.u32 %v2111, 16
        %v2336 = vrot.slane %v2334, 5
        %v2337 = vor.u32 %v2333, %v2336
        %v2338 = vrot.slane %v2337, 4
        %v2340 = vshll.u32 %v2112, 16
        %v2342 = vrot.slane %v2340, 5
        %v2343 = vsel %vm930, %v2338, %v2342
        %v2344 = vshrl.u32 %v2112, 16
        %v2346 = vrot.slane %v2344, 4
        %v2347 = vor.u32 %v2346, %v2342
        %v2348 = vrot.slane %v2347, 4
        %v2350 = vshll.u32 %v2113, 16
        %v2352 = vrot.slane %v2350, 5
        %v2353 = vsel %vm930, %v2348, %v2352
        %v2354 = vunpack.c.l.b16 %v2127
        %v2355 = vunpack.c.l.b16 %v2137
        %v2356 = vunpack.c.l.b16 %v2151
        %v2357 = vunpack.c.l.b16 %v2161
        %v2358 = vunpack.c.l.b16 %v2175
        %v2359 = vunpack.c.l.b16 %v2185
        %v2360 = vunpack.c.l.b16 %v2199
        %v2361 = vunpack.c.l.b16 %v2209
        %v2362 = vunpack.c.l.b16 %v2223
        %v2363 = vunpack.c.l.b16 %v2233
        %v2364 = vunpack.c.l.b16 %v2247
        %v2365 = vunpack.c.l.b16 %v2257
        %v2366 = vunpack.c.l.b16 %v2271
        %v2367 = vunpack.c.l.b16 %v2281
        %v2368 = vunpack.c.l.b16 %v2295
        %v2369 = vunpack.c.l.b16 %v2305
        %v2370 = vunpack.c.l.b16 %v2319
        %v2371 = vunpack.c.l.b16 %v2329
        %v2372 = vunpack.c.l.b16 %v2343
        %v2373 = vunpack.c.l.b16 %v2353
        %v2374 = vpack.c.b16 %v2355, %v2354
        %v2375 = vpack.c.b16 %v2357, %v2356
        %v2376 = vpack.c.b16 %v2359, %v2358
        %v2377 = vpack.c.b16 %v2361, %v2360
        %v2378 = vpack.c.b16 %v2363, %v2362
        %v2379 = vpack.c.b16 %v2365, %v2364
        %v2380 = vpack.c.b16 %v2367, %v2366
        %v2381 = vpack.c.b16 %v2369, %v2368
        %v2382 = vpack.c.b16 %v2371, %v2370
        %v2383 = vpack.c.b16 %v2373, %v2372
        %2394 = vst [vmem:[#allocation4 + $0x38] sm:$0xff] %v2374
        %2395 = vst [vmem:[#allocation4 + $0x80] sm:$0xff] %v2375
        %2396 = vst [vmem:[#allocation4 + $0xc8] sm:$0xff] %v2376
        %2397 = vst [vmem:[#allocation4 + $0x110] sm:$0xff] %v2377
        %2398 = vst [vmem:[#allocation4 + $0x158] sm:$0xff] %v2378
        %2399 = vst [vmem:[#allocation4 + $0x1a0] sm:$0xff] %v2379
        %2400 = vst [vmem:[#allocation4 + $0x1e8] sm:$0xff] %v2380
        %2401 = vst [vmem:[#allocation4 + $0x230] sm:$0xff] %v2381
        %2402 = vst [vmem:[#allocation4 + $0x278] sm:$0xff] %v2382
        %2403 = vst [vmem:[#allocation4 + $0x2c0] sm:$0xff] %v2383
        %v2404 = vld [vmem:[%s526] sm:$0xe]
        %v2405 = vld [vmem:[%s526 + $0x4] sm:$0xf]
        %v2406 = vld [vmem:[%s526 + $0x8] sm:$0x1]
        %v2407 = vld [vmem:[%s526 + $0xc] sm:$0xe]
        %v2408 = vld [vmem:[%s526 + $0x10] sm:$0xf]
        %v2409 = vld [vmem:[%s526 + $0x14] sm:$0x1]
        %v2410 = vld [vmem:[%s526 + $0x18] sm:$0xe]
        %v2411 = vld [vmem:[%s526 + $0x1c] sm:$0xf]
        %v2412 = vld [vmem:[%s526 + $0x20] sm:$0x1]
        %v2413 = vld [vmem:[%s526 + $0x24] sm:$0xe]
        %v2414 = vld [vmem:[%s526 + $0x28] sm:$0xf]
        %v2415 = vld [vmem:[%s526 + $0x2c] sm:$0x1]
        %v2416 = vld [vmem:[%s526 + $0x30] sm:$0xe]
        %v2417 = vld [vmem:[%s526 + $0x34] sm:$0xf]
        %v2418 = vld [vmem:[%s526 + $0x38] sm:$0x1]
        %v2419 = vld [vmem:[%s526 + $0x3c] sm:$0xe]
        %v2420 = vld [vmem:[%s526 + $0x40] sm:$0xf]
        %v2421 = vld [vmem:[%s526 + $0x44] sm:$0x1]
        %v2422 = vld [vmem:[%s526 + $0x48] sm:$0xe]
        %v2423 = vld [vmem:[%s526 + $0x4c] sm:$0xf]
        %v2424 = vld [vmem:[%s526 + $0x50] sm:$0x1]
        %v2425 = vld [vmem:[%s526 + $0x54] sm:$0xe]
        %v2426 = vld [vmem:[%s526 + $0x58] sm:$0xf]
        %v2427 = vld [vmem:[%s526 + $0x5c] sm:$0x1]
        %v2428 = vld [vmem:[%s526 + $0x60] sm:$0xe]
        %v2429 = vld [vmem:[%s526 + $0x64] sm:$0xf]
        %v2430 = vld [vmem:[%s526 + $0x68] sm:$0x1]
        %v2431 = vld [vmem:[%s526 + $0x6c] sm:$0xe]
        %v2432 = vld [vmem:[%s526 + $0x70] sm:$0xf]
        %v2433 = vld [vmem:[%s526 + $0x74] sm:$0x1]
        %v2464 = vrot.slane %v2404, 5
        %v2465 = vrot.slane %v2464, 4
        %v2466 = vrot.slane %v2405, 5
        %v2467 = vsel %vm1283, %v2465, %v2466
        %v2468 = vrot.slane %v2466, 4
        %v2469 = vrot.slane %v2406, 5
        %v2470 = vsel %vm1283, %v2468, %v2469
        %v2471 = vrot.slane %v2407, 5
        %v2472 = vrot.slane %v2471, 4
        %v2473 = vrot.slane %v2408, 5
        %v2474 = vsel %vm1283, %v2472, %v2473
        %v2475 = vrot.slane %v2473, 4
        %v2476 = vrot.slane %v2409, 5
        %v2477 = vsel %vm1283, %v2475, %v2476
        %v2478 = vrot.slane %v2410, 5
        %v2479 = vrot.slane %v2478, 4
        %v2480 = vrot.slane %v2411, 5
        %v2481 = vsel %vm1283, %v2479, %v2480
        %v2482 = vrot.slane %v2480, 4
        %v2483 = vrot.slane %v2412, 5
        %v2484 = vsel %vm1283, %v2482, %v2483
        %v2485 = vrot.slane %v2413, 5
        %v2486 = vrot.slane %v2485, 4
        %v2487 = vrot.slane %v2414, 5
        %v2488 = vsel %vm1283, %v2486, %v2487
        %v2489 = vrot.slane %v2487, 4
        %v2490 = vrot.slane %v2415, 5
        %v2491 = vsel %vm1283, %v2489, %v2490
        %v2492 = vrot.slane %v2416, 5
        %v2493 = vrot.slane %v2492, 4
        %v2494 = vrot.slane %v2417, 5
        %v2495 = vsel %vm1283, %v2493, %v2494
        %v2496 = vrot.slane %v2494, 4
        %v2497 = vrot.slane %v2418, 5
        %v2498 = vsel %vm1283, %v2496, %v2497
        %v2499 = vrot.slane %v2419, 5
        %v2500 = vrot.slane %v2499, 4
        %v2501 = vrot.slane %v2420, 5
        %v2502 = vsel %vm1283, %v2500, %v2501
        %v2503 = vrot.slane %v2501, 4
        %v2504 = vrot.slane %v2421, 5
        %v2505 = vsel %vm1283, %v2503, %v2504
        %v2506 = vrot.slane %v2422, 5
        %v2507 = vrot.slane %v2506, 4
        %v2508 = vrot.slane %v2423, 5
        %v2509 = vsel %vm1283, %v2507, %v2508
        %v2510 = vrot.slane %v2508, 4
        %v2511 = vrot.slane %v2424, 5
        %v2512 = vsel %vm1283, %v2510, %v2511
        %v2513 = vrot.slane %v2425, 5
        %v2514 = vrot.slane %v2513, 4
        %v2515 = vrot.slane %v2426, 5
        %v2516 = vsel %vm1283, %v2514, %v2515
        %v2517 = vrot.slane %v2515, 4
        %v2518 = vrot.slane %v2427, 5
        %v2519 = vsel %vm1283, %v2517, %v2518
        %v2520 = vrot.slane %v2428, 5
        %v2521 = vrot.slane %v2520, 4
        %v2522 = vrot.slane %v2429, 5
        %v2523 = vsel %vm1283, %v2521, %v2522
        %v2524 = vrot.slane %v2522, 4
        %v2525 = vrot.slane %v2430, 5
        %v2526 = vsel %vm1283, %v2524, %v2525
        %v2527 = vrot.slane %v2431, 5
        %v2528 = vrot.slane %v2527, 4
        %v2529 = vrot.slane %v2432, 5
        %v2530 = vsel %vm1283, %v2528, %v2529
        %v2531 = vrot.slane %v2529, 4
        %v2532 = vrot.slane %v2433, 5
        %v2533 = vsel %vm1283, %v2531, %v2532
        %v2534 = vunpack.c.l.b16 %v2467
        %v2535 = vunpack.c.l.b16 %v2470
        %v2536 = vunpack.c.l.b16 %v2474
        %v2537 = vunpack.c.l.b16 %v2477
        %v2538 = vunpack.c.l.b16 %v2481
        %v2539 = vunpack.c.l.b16 %v2484
        %v2540 = vunpack.c.l.b16 %v2488
        %v2541 = vunpack.c.l.b16 %v2491
        %v2542 = vunpack.c.l.b16 %v2495
        %v2543 = vunpack.c.l.b16 %v2498
        %v2544 = vunpack.c.l.b16 %v2502
        %v2545 = vunpack.c.l.b16 %v2505
        %v2546 = vunpack.c.l.b16 %v2509
        %v2547 = vunpack.c.l.b16 %v2512
        %v2548 = vunpack.c.l.b16 %v2516
        %v2549 = vunpack.c.l.b16 %v2519
        %v2550 = vunpack.c.l.b16 %v2523
        %v2551 = vunpack.c.l.b16 %v2526
        %v2552 = vunpack.c.l.b16 %v2530
        %v2553 = vunpack.c.l.b16 %v2533
        %v2554 = vpack.c.b16 %v2535, %v2534
        %v2555 = vpack.c.b16 %v2537, %v2536
        %v2556 = vpack.c.b16 %v2539, %v2538
        %v2557 = vpack.c.b16 %v2541, %v2540
        %v2558 = vpack.c.b16 %v2543, %v2542
        %v2559 = vpack.c.b16 %v2545, %v2544
        %v2560 = vpack.c.b16 %v2547, %v2546
        %v2561 = vpack.c.b16 %v2549, %v2548
        %v2562 = vpack.c.b16 %v2551, %v2550
        %v2563 = vpack.c.b16 %v2553, %v2552
        %2574 = vst [vmem:[#allocation4 + $0x40] sm:$0xff] %v2554
        %2575 = vst [vmem:[#allocation4 + $0x88] sm:$0xff] %v2555
        %2576 = vst [vmem:[#allocation4 + $0xd0] sm:$0xff] %v2556
        %2577 = vst [vmem:[#allocation4 + $0x118] sm:$0xff] %v2557
        %2578 = vst [vmem:[#allocation4 + $0x160] sm:$0xff] %v2558
        %2579 = vst [vmem:[#allocation4 + $0x1a8] sm:$0xff] %v2559
        %2580 = vst [vmem:[#allocation4 + $0x1f0] sm:$0xff] %v2560
        %2581 = vst [vmem:[#allocation4 + $0x238] sm:$0xff] %v2561
        %2582 = vst [vmem:[#allocation4 + $0x280] sm:$0xff] %v2562
        %2583 = vst [vmem:[#allocation4 + $0x2c8] sm:$0xff] %v2563
        %v2584 = vld [vmem:[#allocation4] sm:$0xff]
        %v2585 = vld [vmem:[#allocation4 + $0x8] sm:$0xff]
        %v2586 = vld [vmem:[#allocation4 + $0x10] sm:$0xff]
        %v2587 = vld [vmem:[#allocation4 + $0x18] sm:$0xff]
        %v2588 = vld [vmem:[#allocation4 + $0x20] sm:$0xff]
        %v2589 = vld [vmem:[#allocation4 + $0x28] sm:$0xff]
        %v2590 = vld [vmem:[#allocation4 + $0x30] sm:$0xff]
        %v2591 = vld [vmem:[#allocation4 + $0x38] sm:$0xff]
        %v2592 = vld [vmem:[#allocation4 + $0x40] sm:$0xff]
        %v2593 = vld [vmem:[#allocation4 + $0x48] sm:$0xff]
        %v2594 = vld [vmem:[#allocation4 + $0x50] sm:$0xff]
        %v2595 = vld [vmem:[#allocation4 + $0x58] sm:$0xff]
        %v2596 = vld [vmem:[#allocation4 + $0x60] sm:$0xff]
        %v2597 = vld [vmem:[#allocation4 + $0x68] sm:$0xff]
        %v2598 = vld [vmem:[#allocation4 + $0x70] sm:$0xff]
        %v2599 = vld [vmem:[#allocation4 + $0x78] sm:$0xff]
        %v2600 = vld [vmem:[#allocation4 + $0x80] sm:$0xff]
        %v2601 = vld [vmem:[#allocation4 + $0x88] sm:$0xff]
        %v2602 = vld [vmem:[#allocation4 + $0x90] sm:$0xff]
        %v2603 = vld [vmem:[#allocation4 + $0x98] sm:$0xff]
        %v2604 = vld [vmem:[#allocation4 + $0xa0] sm:$0xff]
        %v2605 = vld [vmem:[#allocation4 + $0xa8] sm:$0xff]
        %v2606 = vld [vmem:[#allocation4 + $0xb0] sm:$0xff]
        %v2607 = vld [vmem:[#allocation4 + $0xb8] sm:$0xff]
        %v2608 = vld [vmem:[#allocation4 + $0xc0] sm:$0xff]
        %v2609 = vld [vmem:[#allocation4 + $0xc8] sm:$0xff]
        %v2610 = vld [vmem:[#allocation4 + $0xd0] sm:$0xff]
        %v2611 = vld [vmem:[#allocation4 + $0xd8] sm:$0xff]
        %v2612 = vld [vmem:[#allocation4 + $0xe0] sm:$0xff]
        %v2613 = vld [vmem:[#allocation4 + $0xe8] sm:$0xff]
        %v2614 = vld [vmem:[#allocation4 + $0xf0] sm:$0xff]
        %v2615 = vld [vmem:[#allocation4 + $0xf8] sm:$0xff]
        %v2616 = vld [vmem:[#allocation4 + $0x100] sm:$0xff]
        %v2617 = vld [vmem:[#allocation4 + $0x108] sm:$0xff]
        %v2618 = vld [vmem:[#allocation4 + $0x110] sm:$0xff]
        %v2619 = vld [vmem:[#allocation4 + $0x118] sm:$0xff]
        %v2620 = vld [vmem:[#allocation4 + $0x120] sm:$0xff]
        %v2621 = vld [vmem:[#allocation4 + $0x128] sm:$0xff]
        %v2622 = vld [vmem:[#allocation4 + $0x130] sm:$0xff]
        %v2623 = vld [vmem:[#allocation4 + $0x138] sm:$0xff]
        %v2624 = vld [vmem:[#allocation4 + $0x140] sm:$0xff]
        %v2625 = vld [vmem:[#allocation4 + $0x148] sm:$0xff]
        %v2626 = vld [vmem:[#allocation4 + $0x150] sm:$0xff]
        %v2627 = vld [vmem:[#allocation4 + $0x158] sm:$0xff]
        %v2628 = vld [vmem:[#allocation4 + $0x160] sm:$0xff]
        %v2629 = vld [vmem:[#allocation4 + $0x168] sm:$0xff]
        %v2630 = vld [vmem:[#allocation4 + $0x170] sm:$0xff]
        %v2631 = vld [vmem:[#allocation4 + $0x178] sm:$0xff]
        %v2632 = vld [vmem:[#allocation4 + $0x180] sm:$0xff]
        %v2633 = vld [vmem:[#allocation4 + $0x188] sm:$0xff]
        %v2634 = vld [vmem:[#allocation4 + $0x190] sm:$0xff]
        %v2635 = vld [vmem:[#allocation4 + $0x198] sm:$0xff]
        %v2636 = vld [vmem:[#allocation4 + $0x1a0] sm:$0xff]
        %v2637 = vld [vmem:[#allocation4 + $0x1a8] sm:$0xff]
        %v2638 = vld [vmem:[#allocation4 + $0x1b0] sm:$0xff]
        %v2639 = vld [vmem:[#allocation4 + $0x1b8] sm:$0xff]
        %v2640 = vld [vmem:[#allocation4 + $0x1c0] sm:$0xff]
        %v2641 = vld [vmem:[#allocation4 + $0x1c8] sm:$0xff]
        %v2642 = vld [vmem:[#allocation4 + $0x1d0] sm:$0xff]
        %v2643 = vld [vmem:[#allocation4 + $0x1d8] sm:$0xff]
        %v2644 = vld [vmem:[#allocation4 + $0x1e0] sm:$0xff]
        %v2645 = vld [vmem:[#allocation4 + $0x1e8] sm:$0xff]
        %v2646 = vld [vmem:[#allocation4 + $0x1f0] sm:$0xff]
        %v2647 = vld [vmem:[#allocation4 + $0x1f8] sm:$0xff]
        %v2648 = vld [vmem:[#allocation4 + $0x200] sm:$0xff]
        %v2649 = vld [vmem:[#allocation4 + $0x208] sm:$0xff]
        %v2650 = vld [vmem:[#allocation4 + $0x210] sm:$0xff]
        %v2651 = vld [vmem:[#allocation4 + $0x218] sm:$0xff]
        %v2652 = vld [vmem:[#allocation4 + $0x220] sm:$0xff]
        %v2653 = vld [vmem:[#allocation4 + $0x228] sm:$0xff]
        %v2654 = vld [vmem:[#allocation4 + $0x230] sm:$0xff]
        %v2655 = vld [vmem:[#allocation4 + $0x238] sm:$0xff]
        %v2656 = vld [vmem:[#allocation4 + $0x240] sm:$0xff]
        %v2657 = vld [vmem:[#allocation4 + $0x248] sm:$0xff]
        %v2658 = vld [vmem:[#allocation4 + $0x250] sm:$0xff]
        %v2659 = vld [vmem:[#allocation4 + $0x258] sm:$0xff]
        %v2660 = vld [vmem:[#allocation4 + $0x260] sm:$0xff]
        %v2661 = vld [vmem:[#allocation4 + $0x268] sm:$0xff]
        %v2662 = vld [vmem:[#allocation4 + $0x270] sm:$0xff]
        %v2663 = vld [vmem:[#allocation4 + $0x278] sm:$0xff]
        %v2664 = vld [vmem:[#allocation4 + $0x280] sm:$0xff]
        %v2665 = vld [vmem:[#allocation4 + $0x288] sm:$0xff]
        %v2666 = vld [vmem:[#allocation4 + $0x290] sm:$0xff]
        %v2667 = vld [vmem:[#allocation4 + $0x298] sm:$0xff]
        %v2668 = vld [vmem:[#allocation4 + $0x2a0] sm:$0xff]
        %v2669 = vld [vmem:[#allocation4 + $0x2a8] sm:$0xff]
        %v2670 = vld [vmem:[#allocation4 + $0x2b0] sm:$0xff]
        %v2671 = vld [vmem:[#allocation4 + $0x2b8] sm:$0xff]
        %v2672 = vld [vmem:[#allocation4 + $0x2c0] sm:$0xff]
        %v2673 = vld [vmem:[#allocation4 + $0x2c8] sm:$0xff]
        %v2674 = vld [vmem:[#allocation8] sm:$0xf]
        %v2675 = vld [vmem:[#allocation8 + $0x4] sm:$0xf]
        %v2676 = vld [vmem:[#allocation8 + $0x8] sm:$0xf]
        %v2677 = vld [vmem:[#allocation8 + $0xc] sm:$0xf]
        %v2678 = vld [vmem:[#allocation8 + $0x10] sm:$0xf]
        %v2679 = vld [vmem:[#allocation8 + $0x14] sm:$0xf]
        %v2680 = vld [vmem:[#allocation8 + $0x18] sm:$0xf]
        %v2681 = vld [vmem:[#allocation8 + $0x1c] sm:$0xf]
        %v2682 = vld [vmem:[#allocation8 + $0x20] sm:$0xf]
        %v2683 = vld [vmem:[#allocation8 + $0x24] sm:$0xf]
        %v2684 = vld [vmem:[#allocation8 + $0x28] sm:$0xf]
        %v2685 = vld [vmem:[#allocation8 + $0x2c] sm:$0xf]
        %v2686 = vld [vmem:[#allocation8 + $0x30] sm:$0xf]
        %v2687 = vld [vmem:[#allocation8 + $0x34] sm:$0xf]
        %v2688 = vld [vmem:[#allocation8 + $0x38] sm:$0xf]
        %v2689 = vld [vmem:[#allocation8 + $0x3c] sm:$0xf]
        %v2690 = vld [vmem:[#allocation8 + $0x40] sm:$0xf]
        %v2691 = vld [vmem:[#allocation8 + $0x44] sm:$0xf]
        %v2692 = vld [vmem:[#allocation8 + $0x48] sm:$0xf]
        %v2693 = vld [vmem:[#allocation8 + $0x4c] sm:$0xf]
        %v2694 = vld [vmem:[#allocation8 + $0x50] sm:$0xf]
        %v2695 = vld [vmem:[#allocation8 + $0x54] sm:$0xf]
        %v2696 = vld [vmem:[#allocation8 + $0x58] sm:$0xf]
        %v2697 = vld [vmem:[#allocation8 + $0x5c] sm:$0xf]
        %v2698 = vld [vmem:[#allocation8 + $0x60] sm:$0xf]
        %v2699 = vld [vmem:[#allocation8 + $0x64] sm:$0xf]
        %v2700 = vld [vmem:[#allocation8 + $0x68] sm:$0xf]
        %v2701 = vld [vmem:[#allocation8 + $0x6c] sm:$0xf]
        %v2702 = vld [vmem:[#allocation8 + $0x70] sm:$0xf]
        %v2703 = vld [vmem:[#allocation8 + $0x74] sm:$0xf]
        %v2704 = vld [vmem:[#allocation8 + $0x78] sm:$0xf]
        %v2705 = vld [vmem:[#allocation8 + $0x7c] sm:$0xf]
        %v2706 = vld [vmem:[#allocation8 + $0x80] sm:$0xf]
        %v2707 = vld [vmem:[#allocation8 + $0x84] sm:$0xf]
        %v2708 = vld [vmem:[#allocation8 + $0x88] sm:$0xf]
        %v2709 = vld [vmem:[#allocation8 + $0x8c] sm:$0xf]
        %v2710 = vld [vmem:[#allocation8 + $0x90] sm:$0xf]
        %v2711 = vld [vmem:[#allocation8 + $0x94] sm:$0xf]
        %v2712 = vld [vmem:[#allocation8 + $0x98] sm:$0xf]
        %v2713 = vld [vmem:[#allocation8 + $0x9c] sm:$0xf]
        %v2714 = vld [vmem:[#allocation8 + $0xa0] sm:$0xf]
        %v2715 = vld [vmem:[#allocation8 + $0xa4] sm:$0xf]
        %v2716 = vld [vmem:[#allocation8 + $0xa8] sm:$0xf]
        %v2717 = vld [vmem:[#allocation8 + $0xac] sm:$0xf]
        %v2718 = vld [vmem:[#allocation8 + $0xb0] sm:$0xf]
        %v2719 = vld [vmem:[#allocation8 + $0xb4] sm:$0xf]
        %v2720 = vld [vmem:[#allocation8 + $0xb8] sm:$0xf]
        %v2721 = vld [vmem:[#allocation8 + $0xbc] sm:$0xf]
        %v2722 = vld [vmem:[#allocation8 + $0xc0] sm:$0xf]
        %v2723 = vld [vmem:[#allocation8 + $0xc4] sm:$0xf]
        %v2724 = vld [vmem:[#allocation8 + $0xc8] sm:$0xf]
        %v2725 = vld [vmem:[#allocation8 + $0xcc] sm:$0xf]
        %v2726 = vld [vmem:[#allocation8 + $0xd0] sm:$0xf]
        %v2727 = vld [vmem:[#allocation8 + $0xd4] sm:$0xf]
        %v2728 = vld [vmem:[#allocation8 + $0xd8] sm:$0xf]
        %v2729 = vld [vmem:[#allocation8 + $0xdc] sm:$0xf]
        %v2730 = vld [vmem:[#allocation8 + $0xe0] sm:$0xf]
        %v2731 = vld [vmem:[#allocation8 + $0xe4] sm:$0xf]
        %v2732 = vld [vmem:[#allocation8 + $0xe8] sm:$0xf]
        %v2733 = vld [vmem:[#allocation8 + $0xec] sm:$0xf]
        %v2734 = vld [vmem:[#allocation8 + $0xf0] sm:$0xf]
        %v2735 = vld [vmem:[#allocation8 + $0xf4] sm:$0xf]
        %v2736 = vld [vmem:[#allocation8 + $0xf8] sm:$0xf]
        %v2737 = vld [vmem:[#allocation8 + $0xfc] sm:$0xf]
        %v2738 = vld [vmem:[#allocation8 + $0x100] sm:$0xf]
        %v2739 = vld [vmem:[#allocation8 + $0x104] sm:$0xf]
        %v2740 = vld [vmem:[#allocation8 + $0x108] sm:$0xf]
        %v2741 = vld [vmem:[#allocation8 + $0x10c] sm:$0xf]
        %v2742 = vld [vmem:[#allocation8 + $0x110] sm:$0xf]
        %v2743 = vld [vmem:[#allocation8 + $0x114] sm:$0xf]
        %v2744 = vld [vmem:[#allocation8 + $0x118] sm:$0xf]
        %v2745 = vld [vmem:[#allocation8 + $0x11c] sm:$0xf]
        %v2746 = vld [vmem:[#allocation8 + $0x120] sm:$0xf]
        %v2747 = vld [vmem:[#allocation8 + $0x124] sm:$0xf]
        %v2748 = vld [vmem:[#allocation8 + $0x128] sm:$0xf]
        %v2749 = vld [vmem:[#allocation8 + $0x12c] sm:$0xf]
        %v2750 = vld [vmem:[#allocation8 + $0x130] sm:$0xf]
        %v2751 = vld [vmem:[#allocation8 + $0x134] sm:$0xf]
        %v2752 = vld [vmem:[#allocation8 + $0x138] sm:$0xf]
        %v2753 = vld [vmem:[#allocation8 + $0x13c] sm:$0xf]
        %v2754 = vld [vmem:[#allocation8 + $0x140] sm:$0xf]
        %v2755 = vld [vmem:[#allocation8 + $0x144] sm:$0xf]
        %v2756 = vld [vmem:[#allocation8 + $0x148] sm:$0xf]
        %v2757 = vld [vmem:[#allocation8 + $0x14c] sm:$0xf]
        %v2758 = vld [vmem:[#allocation8 + $0x150] sm:$0xf]
        %v2759 = vld [vmem:[#allocation8 + $0x154] sm:$0xf]
        %v2760 = vld [vmem:[#allocation8 + $0x158] sm:$0xf]
        %v2761 = vld [vmem:[#allocation8 + $0x15c] sm:$0xf]
        %v2762 = vld [vmem:[#allocation8 + $0x160] sm:$0xf]
        %v2763 = vld [vmem:[#allocation8 + $0x164] sm:$0xf]
        %v2764 = vld [vmem:[#allocation8 + $0x168] sm:$0xf]
        %v2765 = vld [vmem:[#allocation8 + $0x16c] sm:$0xf]
        %v2766 = vld [vmem:[#allocation8 + $0x170] sm:$0xf]
        %v2767 = vld [vmem:[#allocation8 + $0x174] sm:$0xf]
        %v2768 = vld [vmem:[#allocation8 + $0x178] sm:$0xf]
        %v2769 = vld [vmem:[#allocation8 + $0x17c] sm:$0xf]
        %v2770 = vld [vmem:[#allocation8 + $0x180] sm:$0xf]
        %v2771 = vld [vmem:[#allocation8 + $0x184] sm:$0xf]
        %v2772 = vld [vmem:[#allocation8 + $0x188] sm:$0xf]
        %v2773 = vld [vmem:[#allocation8 + $0x18c] sm:$0xf]
        %v2774 = vld [vmem:[#allocation8 + $0x190] sm:$0xf]
        %v2775 = vld [vmem:[#allocation8 + $0x194] sm:$0xf]
        %v2776 = vld [vmem:[#allocation8 + $0x198] sm:$0xf]
        %v2777 = vld [vmem:[#allocation8 + $0x19c] sm:$0xf]
        %v2778 = vld [vmem:[#allocation8 + $0x1a0] sm:$0xf]
        %v2779 = vld [vmem:[#allocation8 + $0x1a4] sm:$0xf]
        %v2780 = vld [vmem:[#allocation8 + $0x1a8] sm:$0xf]
        %v2781 = vld [vmem:[#allocation8 + $0x1ac] sm:$0xf]
        %v2782 = vld [vmem:[#allocation8 + $0x1b0] sm:$0xf]
        %v2783 = vld [vmem:[#allocation8 + $0x1b4] sm:$0xf]
        %v2784 = vld [vmem:[#allocation8 + $0x1b8] sm:$0xf]
        %v2785 = vld [vmem:[#allocation8 + $0x1bc] sm:$0xf]
        %v2786 = vld [vmem:[#allocation8 + $0x1c0] sm:$0xf]
        %v2787 = vld [vmem:[#allocation8 + $0x1c4] sm:$0xf]
        %v2788 = vld [vmem:[#allocation8 + $0x1c8] sm:$0xf]
        %v2789 = vld [vmem:[#allocation8 + $0x1cc] sm:$0xf]
        %v2790 = vld [vmem:[#allocation8 + $0x1d0] sm:$0xf]
        %v2791 = vld [vmem:[#allocation8 + $0x1d4] sm:$0xf]
        %v2792 = vld [vmem:[#allocation8 + $0x1d8] sm:$0xf]
        %v2793 = vld [vmem:[#allocation8 + $0x1dc] sm:$0xf]
        %v2794 = vld [vmem:[#allocation8 + $0x1e0] sm:$0xf]
        %v2795 = vld [vmem:[#allocation8 + $0x1e4] sm:$0xf]
        %v2796 = vld [vmem:[#allocation8 + $0x1e8] sm:$0xf]
        %v2797 = vld [vmem:[#allocation8 + $0x1ec] sm:$0xf]
        %v2798 = vld [vmem:[#allocation8 + $0x1f0] sm:$0xf]
        %v2799 = vld [vmem:[#allocation8 + $0x1f4] sm:$0xf]
        %v2800 = vld [vmem:[#allocation8 + $0x1f8] sm:$0xf]
        %v2801 = vld [vmem:[#allocation8 + $0x1fc] sm:$0xf]
        %v2802 = vld [vmem:[#allocation8 + $0x200] sm:$0xf]
        %v2803 = vld [vmem:[#allocation8 + $0x204] sm:$0xf]
        %v2804 = vld [vmem:[#allocation8 + $0x208] sm:$0xf]
        %v2805 = vld [vmem:[#allocation8 + $0x20c] sm:$0xf]
        %v2806 = vld [vmem:[#allocation8 + $0x210] sm:$0xf]
        %v2807 = vld [vmem:[#allocation8 + $0x214] sm:$0xf]
        %v2808 = vld [vmem:[#allocation8 + $0x218] sm:$0xf]
        %v2809 = vld [vmem:[#allocation8 + $0x21c] sm:$0xf]
        %v2810 = vld [vmem:[#allocation8 + $0x220] sm:$0xf]
        %v2811 = vld [vmem:[#allocation8 + $0x224] sm:$0xf]
        %v2812 = vld [vmem:[#allocation8 + $0x228] sm:$0xf]
        %v2813 = vld [vmem:[#allocation8 + $0x22c] sm:$0xf]
        %v2814 = vld [vmem:[#allocation8 + $0x230] sm:$0xf]
        %v2815 = vld [vmem:[#allocation8 + $0x234] sm:$0xf]
        %v2816 = vld [vmem:[#allocation8 + $0x238] sm:$0xf]
        %v2817 = vld [vmem:[#allocation8 + $0x23c] sm:$0xf]
        %v2962 = vunpack.c.l.b16 %v2674
        %v2963 = vunpack.c.l.b16 %v2675
        %v2964 = vunpack.c.l.b16 %v2676
        %v2965 = vunpack.c.l.b16 %v2677
        %v2966 = vunpack.c.l.b16 %v2678
        %v2967 = vunpack.c.l.b16 %v2679
        %v2968 = vunpack.c.l.b16 %v2680
        %v2969 = vunpack.c.l.b16 %v2681
        %v2970 = vunpack.c.l.b16 %v2682
        %v2971 = vunpack.c.l.b16 %v2683
        %v2972 = vunpack.c.l.b16 %v2684
        %v2973 = vunpack.c.l.b16 %v2685
        %v2974 = vunpack.c.l.b16 %v2686
        %v2975 = vunpack.c.l.b16 %v2687
        %v2976 = vunpack.c.l.b16 %v2688
        %v2977 = vunpack.c.l.b16 %v2689
        %v2978 = vunpack.c.l.b16 %v2690
        %v2979 = vunpack.c.l.b16 %v2691
        %v2980 = vunpack.c.l.b16 %v2692
        %v2981 = vunpack.c.l.b16 %v2693
        %v2982 = vunpack.c.l.b16 %v2694
        %v2983 = vunpack.c.l.b16 %v2695
        %v2984 = vunpack.c.l.b16 %v2696
        %v2985 = vunpack.c.l.b16 %v2697
        %v2986 = vunpack.c.l.b16 %v2698
        %v2987 = vunpack.c.l.b16 %v2699
        %v2988 = vunpack.c.l.b16 %v2700
        %v2989 = vunpack.c.l.b16 %v2701
        %v2990 = vunpack.c.l.b16 %v2702
        %v2991 = vunpack.c.l.b16 %v2703
        %v2992 = vunpack.c.l.b16 %v2704
        %v2993 = vunpack.c.l.b16 %v2705
        %v2994 = vunpack.c.l.b16 %v2706
        %v2995 = vunpack.c.l.b16 %v2707
        %v2996 = vunpack.c.l.b16 %v2708
        %v2997 = vunpack.c.l.b16 %v2709
        %v2998 = vunpack.c.l.b16 %v2710
        %v2999 = vunpack.c.l.b16 %v2711
        %v3000 = vunpack.c.l.b16 %v2712
        %v3001 = vunpack.c.l.b16 %v2713
        %v3002 = vunpack.c.l.b16 %v2714
        %v3003 = vunpack.c.l.b16 %v2715
        %v3004 = vunpack.c.l.b16 %v2716
        %v3005 = vunpack.c.l.b16 %v2717
        %v3006 = vunpack.c.l.b16 %v2718
        %v3007 = vunpack.c.l.b16 %v2719
        %v3008 = vunpack.c.l.b16 %v2720
        %v3009 = vunpack.c.l.b16 %v2721
        %v3010 = vunpack.c.l.b16 %v2722
        %v3011 = vunpack.c.l.b16 %v2723
        %v3012 = vunpack.c.l.b16 %v2724
        %v3013 = vunpack.c.l.b16 %v2725
        %v3014 = vunpack.c.l.b16 %v2726
        %v3015 = vunpack.c.l.b16 %v2727
        %v3016 = vunpack.c.l.b16 %v2728
        %v3017 = vunpack.c.l.b16 %v2729
        %v3018 = vunpack.c.l.b16 %v2730
        %v3019 = vunpack.c.l.b16 %v2731
        %v3020 = vunpack.c.l.b16 %v2732
        %v3021 = vunpack.c.l.b16 %v2733
        %v3022 = vunpack.c.l.b16 %v2734
        %v3023 = vunpack.c.l.b16 %v2735
        %v3024 = vunpack.c.l.b16 %v2736
        %v3025 = vunpack.c.l.b16 %v2737
        %v3026 = vunpack.c.l.b16 %v2738
        %v3027 = vunpack.c.l.b16 %v2739
        %v3028 = vunpack.c.l.b16 %v2740
        %v3029 = vunpack.c.l.b16 %v2741
        %v3030 = vunpack.c.l.b16 %v2742
        %v3031 = vunpack.c.l.b16 %v2743
        %v3032 = vunpack.c.l.b16 %v2744
        %v3033 = vunpack.c.l.b16 %v2745
        %v3034 = vunpack.c.l.b16 %v2746
        %v3035 = vunpack.c.l.b16 %v2747
        %v3036 = vunpack.c.l.b16 %v2748
        %v3037 = vunpack.c.l.b16 %v2749
        %v3038 = vunpack.c.l.b16 %v2750
        %v3039 = vunpack.c.l.b16 %v2751
        %v3040 = vunpack.c.l.b16 %v2752
        %v3041 = vunpack.c.l.b16 %v2753
        %v3042 = vunpack.c.l.b16 %v2754
        %v3043 = vunpack.c.l.b16 %v2755
        %v3044 = vunpack.c.l.b16 %v2756
        %v3045 = vunpack.c.l.b16 %v2757
        %v3046 = vunpack.c.l.b16 %v2758
        %v3047 = vunpack.c.l.b16 %v2759
        %v3048 = vunpack.c.l.b16 %v2760
        %v3049 = vunpack.c.l.b16 %v2761
        %v3050 = vunpack.c.l.b16 %v2762
        %v3051 = vunpack.c.l.b16 %v2763
        %v3052 = vunpack.c.l.b16 %v2764
        %v3053 = vunpack.c.l.b16 %v2765
        %v3054 = vunpack.c.l.b16 %v2766
        %v3055 = vunpack.c.l.b16 %v2767
        %v3056 = vunpack.c.l.b16 %v2768
        %v3057 = vunpack.c.l.b16 %v2769
        %v3058 = vunpack.c.l.b16 %v2770
        %v3059 = vunpack.c.l.b16 %v2771
        %v3060 = vunpack.c.l.b16 %v2772
        %v3061 = vunpack.c.l.b16 %v2773
        %v3062 = vunpack.c.l.b16 %v2774
        %v3063 = vunpack.c.l.b16 %v2775
        %v3064 = vunpack.c.l.b16 %v2776
        %v3065 = vunpack.c.l.b16 %v2777
        %v3066 = vunpack.c.l.b16 %v2778
        %v3067 = vunpack.c.l.b16 %v2779
        %v3068 = vunpack.c.l.b16 %v2780
        %v3069 = vunpack.c.l.b16 %v2781
        %v3070 = vunpack.c.l.b16 %v2782
        %v3071 = vunpack.c.l.b16 %v2783
        %v3072 = vunpack.c.l.b16 %v2784
        %v3073 = vunpack.c.l.b16 %v2785
        %v3074 = vunpack.c.l.b16 %v2786
        %v3075 = vunpack.c.l.b16 %v2787
        %v3076 = vunpack.c.l.b16 %v2788
        %v3077 = vunpack.c.l.b16 %v2789
        %v3078 = vunpack.c.l.b16 %v2790
        %v3079 = vunpack.c.l.b16 %v2791
        %v3080 = vunpack.c.l.b16 %v2792
        %v3081 = vunpack.c.l.b16 %v2793
        %v3082 = vunpack.c.l.b16 %v2794
        %v3083 = vunpack.c.l.b16 %v2795
        %v3084 = vunpack.c.l.b16 %v2796
        %v3085 = vunpack.c.l.b16 %v2797
        %v3086 = vunpack.c.l.b16 %v2798
        %v3087 = vunpack.c.l.b16 %v2799
        %v3088 = vunpack.c.l.b16 %v2800
        %v3089 = vunpack.c.l.b16 %v2801
        %v3090 = vunpack.c.l.b16 %v2802
        %v3091 = vunpack.c.l.b16 %v2803
        %v3092 = vunpack.c.l.b16 %v2804
        %v3093 = vunpack.c.l.b16 %v2805
        %v3094 = vunpack.c.l.b16 %v2806
        %v3095 = vunpack.c.l.b16 %v2807
        %v3096 = vunpack.c.l.b16 %v2808
        %v3097 = vunpack.c.l.b16 %v2809
        %v3098 = vunpack.c.l.b16 %v2810
        %v3099 = vunpack.c.l.b16 %v2811
        %v3100 = vunpack.c.l.b16 %v2812
        %v3101 = vunpack.c.l.b16 %v2813
        %v3102 = vunpack.c.l.b16 %v2814
        %v3103 = vunpack.c.l.b16 %v2815
        %v3104 = vunpack.c.l.b16 %v2816
        %v3105 = vunpack.c.l.b16 %v2817
        %v3106 = vpack.c.b16 %v2963, %v2962
        %v3107 = vpack.c.b16 %v2965, %v2964
        %v3108 = vpack.c.b16 %v2967, %v2966
        %v3109 = vpack.c.b16 %v2969, %v2968
        %v3110 = vpack.c.b16 %v2971, %v2970
        %v3111 = vpack.c.b16 %v2973, %v2972
        %v3112 = vpack.c.b16 %v2975, %v2974
        %v3113 = vpack.c.b16 %v2977, %v2976
        %v3114 = vpack.c.b16 %v2979, %v2978
        %v3115 = vpack.c.b16 %v2981, %v2980
        %v3116 = vpack.c.b16 %v2983, %v2982
        %v3117 = vpack.c.b16 %v2985, %v2984
        %v3118 = vpack.c.b16 %v2987, %v2986
        %v3119 = vpack.c.b16 %v2989, %v2988
        %v3120 = vpack.c.b16 %v2991, %v2990
        %v3121 = vpack.c.b16 %v2993, %v2992
        %v3122 = vpack.c.b16 %v2995, %v2994
        %v3123 = vpack.c.b16 %v2997, %v2996
        %v3124 = vpack.c.b16 %v2999, %v2998
        %v3125 = vpack.c.b16 %v3001, %v3000
        %v3126 = vpack.c.b16 %v3003, %v3002
        %v3127 = vpack.c.b16 %v3005, %v3004
        %v3128 = vpack.c.b16 %v3007, %v3006
        %v3129 = vpack.c.b16 %v3009, %v3008
        %v3130 = vpack.c.b16 %v3011, %v3010
        %v3131 = vpack.c.b16 %v3013, %v3012
        %v3132 = vpack.c.b16 %v3015, %v3014
        %v3133 = vpack.c.b16 %v3017, %v3016
        %v3134 = vpack.c.b16 %v3019, %v3018
        %v3135 = vpack.c.b16 %v3021, %v3020
        %v3136 = vpack.c.b16 %v3023, %v3022
        %v3137 = vpack.c.b16 %v3025, %v3024
        %v3138 = vpack.c.b16 %v3027, %v3026
        %v3139 = vpack.c.b16 %v3029, %v3028
        %v3140 = vpack.c.b16 %v3031, %v3030
        %v3141 = vpack.c.b16 %v3033, %v3032
        %v3142 = vpack.c.b16 %v3035, %v3034
        %v3143 = vpack.c.b16 %v3037, %v3036
        %v3144 = vpack.c.b16 %v3039, %v3038
        %v3145 = vpack.c.b16 %v3041, %v3040
        %v3146 = vpack.c.b16 %v3043, %v3042
        %v3147 = vpack.c.b16 %v3045, %v3044
        %v3148 = vpack.c.b16 %v3047, %v3046
        %v3149 = vpack.c.b16 %v3049, %v3048
        %v3150 = vpack.c.b16 %v3051, %v3050
        %v3151 = vpack.c.b16 %v3053, %v3052
        %v3152 = vpack.c.b16 %v3055, %v3054
        %v3153 = vpack.c.b16 %v3057, %v3056
        %v3154 = vpack.c.b16 %v3059, %v3058
        %v3155 = vpack.c.b16 %v3061, %v3060
        %v3156 = vpack.c.b16 %v3063, %v3062
        %v3157 = vpack.c.b16 %v3065, %v3064
        %v3158 = vpack.c.b16 %v3067, %v3066
        %v3159 = vpack.c.b16 %v3069, %v3068
        %v3160 = vpack.c.b16 %v3071, %v3070
        %v3161 = vpack.c.b16 %v3073, %v3072
        %v3162 = vpack.c.b16 %v3075, %v3074
        %v3163 = vpack.c.b16 %v3077, %v3076
        %v3164 = vpack.c.b16 %v3079, %v3078
        %v3165 = vpack.c.b16 %v3081, %v3080
        %v3166 = vpack.c.b16 %v3083, %v3082
        %v3167 = vpack.c.b16 %v3085, %v3084
        %v3168 = vpack.c.b16 %v3087, %v3086
        %v3169 = vpack.c.b16 %v3089, %v3088
        %v3170 = vpack.c.b16 %v3091, %v3090
        %v3171 = vpack.c.b16 %v3093, %v3092
        %v3172 = vpack.c.b16 %v3095, %v3094
        %v3173 = vpack.c.b16 %v3097, %v3096
        %v3174 = vpack.c.b16 %v3099, %v3098
        %v3175 = vpack.c.b16 %v3101, %v3100
        %v3176 = vpack.c.b16 %v3103, %v3102
        %v3177 = vpack.c.b16 %v3105, %v3104
        %3250 = vmatprep.subr.bf16.mxu0 0
        %3251 = vmatpush1.bf16.msra.mxu0 %v3106
        %3252 = vmatprep.subr.bf16.mxu0 0
        %3253 = vmatpush1.bf16.msra.mxu0 %v3107
        %3254 = vmatprep.subr.bf16.mxu0 0
        %3255 = vmatpush1.bf16.msra.mxu0 %v3108
        %3256 = vmatprep.subr.bf16.mxu0 0
        %3257 = vmatpush1.bf16.msra.mxu0 %v3109
        %3258 = vmatprep.subr.bf16.mxu0 0
        %3259 = vmatpush1.bf16.msra.mxu0 %v3110
        %3260 = vmatprep.subr.bf16.mxu0 0
        %3261 = vmatpush1.bf16.msra.mxu0 %v3111
        %3262 = vmatprep.subr.bf16.mxu0 0
        %3263 = vmatpush1.bf16.msra.mxu0 %v3112
        %3264 = vmatprep.subr.bf16.mxu0 0
        %3265 = vmatpush1.bf16.msra.mxu0 %v3113
        %3266 = vmatprep.subr.bf16.mxu0 0
        %3267 = vmatpush1.bf16.msra.mxu0 %v3114
        %3268 = vmatprep.subr.bf16.mxu0 0
        %3269 = vmatpush1.bf16.msra.mxu0 %v3115
        %3270 = vmatprep.subr.bf16.mxu0 0
        %3271 = vmatpush1.bf16.msra.mxu0 %v3116
        %3272 = vmatprep.subr.bf16.mxu0 0
        %3273 = vmatpush1.bf16.msra.mxu0 %v3117
        %3274 = vmatprep.subr.bf16.mxu0 0
        %3275 = vmatpush1.bf16.msra.mxu0 %v3118
        %3276 = vmatprep.subr.bf16.mxu0 0
        %3277 = vmatpush1.bf16.msra.mxu0 %v3119
        %3278 = vmatprep.subr.bf16.mxu0 0
        %3279 = vmatpush1.bf16.msra.mxu0 %v3120
        %3280 = vmatprep.subr.bf16.mxu0 0
        %3281 = vmatpush1.bf16.msra.mxu0 %v3121
        %3282 = vmatprep.mubr.bf16.mxu0 %v2585
        %3283 = vmatmul.mubr.bf16.gmra.mrb[0].mxu0 %v2584
        %v3284 = vpop.f32.mrb[0].mxu0
        %v3285 = vadd.f32 0.0, %v3284
        %v3286 = vpop.f32.mrb[0].mxu0
        %v3287 = vpop.f32.mrb[0].mxu0
        %v3288 = vadd.f32 0.0, %v3287
        %v3289 = vpop.f32.mrb[0].mxu0
        %3290 = vmatprep.mubr.bf16.mxu0 %v2594
        %3291 = vmatmul.mubr.bf16.gmra.mrb[0].mxu0 %v2593
        %v3292 = vpop.f32.mrb[0].mxu0
        %v3293 = vadd.f32 0.0, %v3292
        %v3294 = vpop.f32.mrb[0].mxu0
        %v3295 = vpop.f32.mrb[0].mxu0
        %v3296 = vadd.f32 0.0, %v3295
        %v3297 = vpop.f32.mrb[0].mxu0
        %3298 = vmatprep.mubr.bf16.mxu0 %v2603
        %3299 = vmatmul.mubr.bf16.gmra.mrb[0].mxu0 %v2602
        %v3300 = vpop.f32.mrb[0].mxu0
        %v3301 = vadd.f32 0.0, %v3300
        %v3302 = vpop.f32.mrb[0].mxu0
        %v3303 = vpop.f32.mrb[0].mxu0
        %v3304 = vadd.f32 0.0, %v3303
        %v3305 = vpop.f32.mrb[0].mxu0
        %3306 = vmatprep.mubr.bf16.mxu0 %v2612
        %3307 = vmatmul.mubr.bf16.gmra.mrb[0].mxu0 %v2611
        %v3308 = vpop.f32.mrb[0].mxu0
        %v3309 = vadd.f32 0.0, %v3308
        %v3310 = vpop.f32.mrb[0].mxu0
        %v3311 = vpop.f32.mrb[0].mxu0
        %v3312 = vadd.f32 0.0, %v3311
        %v3313 = vpop.f32.mrb[0].mxu0
        %3314 = vmatprep.mubr.bf16.mxu0 %v2621
        %3315 = vmatmul.mubr.bf16.gmra.mrb[0].mxu0 %v2620
        %v3316 = vpop.f32.mrb[0].mxu0
        %v3317 = vadd.f32 0.0, %v3316
        %v3318 = vpop.f32.mrb[0].mxu0
        %v3319 = vpop.f32.mrb[0].mxu0
        %v3320 = vadd.f32 0.0, %v3319
        %v3321 = vpop.f32.mrb[0].mxu0
        %3322 = vmatprep.mubr.bf16.mxu0 %v2630
        %3323 = vmatmul.mubr.bf16.gmra.mrb[0].mxu0 %v2629
        %v3324 = vpop.f32.mrb[0].mxu0
        %v3325 = vadd.f32 0.0, %v3324
        %v3326 = vpop.f32.mrb[0].mxu0
        %v3327 = vpop.f32.mrb[0].mxu0
        %v3328 = vadd.f32 0.0, %v3327
        %v3329 = vpop.f32.mrb[0].mxu0
        %3330 = vmatprep.mubr.bf16.mxu0 %v2639
        %3331 = vmatmul.mubr.bf16.gmra.mrb[0].mxu0 %v2638
        %v3332 = vpop.f32.mrb[0].mxu0
        %v3333 = vadd.f32 0.0, %v3332
        %v3334 = vpop.f32.mrb[0].mxu0
        %v3335 = vpop.f32.mrb[0].mxu0
        %v3336 = vadd.f32 0.0, %v3335
        %v3337 = vpop.f32.mrb[0].mxu0
        %3338 = vmatprep.mubr.bf16.mxu0 %v2648
        %3339 = vmatmul.mubr.bf16.gmra.mrb[0].mxu0 %v2647
        %v3340 = vpop.f32.mrb[0].mxu0
        %v3341 = vadd.f32 0.0, %v3340
        %v3342 = vpop.f32.mrb[0].mxu0
        %v3343 = vpop.f32.mrb[0].mxu0
        %v3344 = vadd.f32 0.0, %v3343
        %v3345 = vpop.f32.mrb[0].mxu0
        %3346 = vmatprep.mubr.bf16.mxu0 %v2657
        %3347 = vmatmul.mubr.bf16.gmra.mrb[0].mxu0 %v2656
        %v3348 = vpop.f32.mrb[0].mxu0
        %v3349 = vadd.f32 0.0, %v3348
        %v3350 = vpop.f32.mrb[0].mxu0
        %v3351 = vpop.f32.mrb[0].mxu0
        %v3352 = vadd.f32 0.0, %v3351
        %v3353 = vpop.f32.mrb[0].mxu0
        %3354 = vmatprep.mubr.bf16.mxu0 %v2666
        %3355 = vmatmul.mubr.bf16.gmra.mrb[0].mxu0 %v2665
        %v3356 = vpop.f32.mrb[0].mxu0
        %v3357 = vadd.f32 0.0, %v3356
        %v3358 = vpop.f32.mrb[0].mxu0
        %v3359 = vpop.f32.mrb[0].mxu0
        %v3360 = vadd.f32 0.0, %v3359
        %v3361 = vpop.f32.mrb[0].mxu0
        %3362 = vdwg.mxu0
        %3363 = vmatprep.subr.bf16.mxu0 0
        %3364 = vmatpush1.bf16.msra.mxu0 %v3122
        %3365 = vmatprep.subr.bf16.mxu0 0
        %3366 = vmatpush1.bf16.msra.mxu0 %v3123
        %3367 = vmatprep.subr.bf16.mxu0 0
        %3368 = vmatpush1.bf16.msra.mxu0 %v3124
        %3369 = vmatprep.subr.bf16.mxu0 0
        %3370 = vmatpush1.bf16.msra.mxu0 %v3125
        %3371 = vmatprep.subr.bf16.mxu0 0
        %3372 = vmatpush1.bf16.msra.mxu0 %v3126
        %3373 = vmatprep.subr.bf16.mxu0 0
        %3374 = vmatpush1.bf16.msra.mxu0 %v3127
        %3375 = vmatprep.subr.bf16.mxu0 0
        %3376 = vmatpush1.bf16.msra.mxu0 %v3128
        %3377 = vmatprep.subr.bf16.mxu0 0
        %3378 = vmatpush1.bf16.msra.mxu0 %v3129
        %3379 = vmatprep.subr.bf16.mxu0 0
        %3380 = vmatpush1.bf16.msra.mxu0 %v3130
        %3381 = vmatprep.subr.bf16.mxu0 0
        %3382 = vmatpush1.bf16.msra.mxu0 %v3131
        %3383 = vmatprep.subr.bf16.mxu0 0
        %3384 = vmatpush1.bf16.msra.mxu0 %v3132
        %3385 = vmatprep.subr.bf16.mxu0 0
        %3386 = vmatpush1.bf16.msra.mxu0 %v3133
        %3387 = vmatprep.subr.bf16.mxu0 0
        %3388 = vmatpush1.bf16.msra.mxu0 %v3134
        %3389 = vmatprep.subr.bf16.mxu0 0
        %3390 = vmatpush1.bf16.msra.mxu0 %v3135
        %3391 = vmatprep.subr.bf16.mxu0 0
        %3392 = vmatpush1.bf16.msra.mxu0 %v3136
        %3393 = vmatprep.subr.bf16.mxu0 0
        %3394 = vmatpush1.bf16.msra.mxu0 %v3137
        %3395 = vmatprep.mubr.bf16.mxu0 %v2587
        %3396 = vmatmul.mubr.bf16.gmra.mrb[0].mxu0 %v2586
        %v3397 = vpop.f32.mrb[0].mxu0
        %v3398 = vadd.f32 %v3285, %v3397
        %v3399 = vpop.f32.mrb[0].mxu0
        %v3400 = vpop.f32.mrb[0].mxu0
        %v3401 = vadd.f32 %v3288, %v3400
        %v3402 = vpop.f32.mrb[0].mxu0
        %3403 = vmatprep.mubr.bf16.mxu0 %v2596
        %3404 = vmatmul.mubr.bf16.gmra.mrb[0].mxu0 %v2595
        %v3405 = vpop.f32.mrb[0].mxu0
        %v3406 = vadd.f32 %v3293, %v3405
        %v3407 = vpop.f32.mrb[0].mxu0
        %v3408 = vpop.f32.mrb[0].mxu0
        %v3409 = vadd.f32 %v3296, %v3408
        %v3410 = vpop.f32.mrb[0].mxu0
        %3411 = vmatprep.mubr.bf16.mxu0 %v2605
        %3412 = vmatmul.mubr.bf16.gmra.mrb[0].mxu0 %v2604
        %v3413 = vpop.f32.mrb[0].mxu0
        %v3414 = vadd.f32 %v3301, %v3413
        %v3415 = vpop.f32.mrb[0].mxu0
        %v3416 = vpop.f32.mrb[0].mxu0
        %v3417 = vadd.f32 %v3304, %v3416
        %v3418 = vpop.f32.mrb[0].mxu0
        %3419 = vmatprep.mubr.bf16.mxu0 %v2614
        %3420 = vmatmul.mubr.bf16.gmra.mrb[0].mxu0 %v2613
        %v3421 = vpop.f32.mrb[0].mxu0
        %v3422 = vadd.f32 %v3309, %v3421
        %v3423 = vpop.f32.mrb[0].mxu0
        %v3424 = vpop.f32.mrb[0].mxu0
        %v3425 = vadd.f32 %v3312, %v3424
        %v3426 = vpop.f32.mrb[0].mxu0
        %3427 = vmatprep.mubr.bf16.mxu0 %v2623
        %3428 = vmatmul.mubr.bf16.gmra.mrb[0].mxu0 %v2622
        %v3429 = vpop.f32.mrb[0].mxu0
        %v3430 = vadd.f32 %v3317, %v3429
        %v3431 = vpop.f32.mrb[0].mxu0
        %v3432 = vpop.f32.mrb[0].mxu0
        %v3433 = vadd.f32 %v3320, %v3432
        %v3434 = vpop.f32.mrb[0].mxu0
        %3435 = vmatprep.mubr.bf16.mxu0 %v2632
        %3436 = vmatmul.mubr.bf16.gmra.mrb[0].mxu0 %v2631
        %v3437 = vpop.f32.mrb[0].mxu0
        %v3438 = vadd.f32 %v3325, %v3437
        %v3439 = vpop.f32.mrb[0].mxu0
        %v3440 = vpop.f32.mrb[0].mxu0
        %v3441 = vadd.f32 %v3328, %v3440
        %v3442 = vpop.f32.mrb[0].mxu0
        %3443 = vmatprep.mubr.bf16.mxu0 %v2641
        %3444 = vmatmul.mubr.bf16.gmra.mrb[0].mxu0 %v2640
        %v3445 = vpop.f32.mrb[0].mxu0
        %v3446 = vadd.f32 %v3333, %v3445
        %v3447 = vpop.f32.mrb[0].mxu0
        %v3448 = vpop.f32.mrb[0].mxu0
        %v3449 = vadd.f32 %v3336, %v3448
        %v3450 = vpop.f32.mrb[0].mxu0
        %3451 = vmatprep.mubr.bf16.mxu0 %v2650
        %3452 = vmatmul.mubr.bf16.gmra.mrb[0].mxu0 %v2649
        %v3453 = vpop.f32.mrb[0].mxu0
        %v3454 = vadd.f32 %v3341, %v3453
        %v3455 = vpop.f32.mrb[0].mxu0
        %v3456 = vpop.f32.mrb[0].mxu0
        %v3457 = vadd.f32 %v3344, %v3456
        %v3458 = vpop.f32.mrb[0].mxu0
        %3459 = vmatprep.mubr.bf16.mxu0 %v2659
        %3460 = vmatmul.mubr.bf16.gmra.mrb[0].mxu0 %v2658
        %v3461 = vpop.f32.mrb[0].mxu0
        %v3462 = vadd.f32 %v3349, %v3461
        %v3463 = vpop.f32.mrb[0].mxu0
        %v3464 = vpop.f32.mrb[0].mxu0
        %v3465 = vadd.f32 %v3352, %v3464
        %v3466 = vpop.f32.mrb[0].mxu0
        %3467 = vmatprep.mubr.bf16.mxu0 %v2668
        %3468 = vmatmul.mubr.bf16.gmra.mrb[0].mxu0 %v2667
        %v3469 = vpop.f32.mrb[0].mxu0
        %v3470 = vadd.f32 %v3357, %v3469
        %v3471 = vpop.f32.mrb[0].mxu0
        %v3472 = vpop.f32.mrb[0].mxu0
        %v3473 = vadd.f32 %v3360, %v3472
        %v3474 = vpop.f32.mrb[0].mxu0
        %3475 = vdwg.mxu0
        %3476 = vmatprep.subr.bf16.mxu0 0
        %3477 = vmatpush1.bf16.msra.mxu0 %v3138
        %3478 = vmatprep.subr.bf16.mxu0 0
        %3479 = vmatpush1.bf16.msra.mxu0 %v3139
        %3480 = vmatprep.subr.bf16.mxu0 0
        %3481 = vmatpush1.bf16.msra.mxu0 %v3140
        %3482 = vmatprep.subr.bf16.mxu0 0
        %3483 = vmatpush1.bf16.msra.mxu0 %v3141
        %3484 = vmatprep.subr.bf16.mxu0 0
        %3485 = vmatpush1.bf16.msra.mxu0 %v3142
        %3486 = vmatprep.subr.bf16.mxu0 0
        %3487 = vmatpush1.bf16.msra.mxu0 %v3143
        %3488 = vmatprep.subr.bf16.mxu0 0
        %3489 = vmatpush1.bf16.msra.mxu0 %v3144
        %3490 = vmatprep.subr.bf16.mxu0 0
        %3491 = vmatpush1.bf16.msra.mxu0 %v3145
        %3492 = vmatprep.subr.bf16.mxu0 0
        %3493 = vmatpush1.bf16.msra.mxu0 %v3146
        %3494 = vmatprep.subr.bf16.mxu0 0
        %3495 = vmatpush1.bf16.msra.mxu0 %v3147
        %3496 = vmatprep.subr.bf16.mxu0 0
        %3497 = vmatpush1.bf16.msra.mxu0 %v3148
        %3498 = vmatprep.subr.bf16.mxu0 0
        %3499 = vmatpush1.bf16.msra.mxu0 %v3149
        %3500 = vmatprep.subr.bf16.mxu0 0
        %3501 = vmatpush1.bf16.msra.mxu0 %v3150
        %3502 = vmatprep.subr.bf16.mxu0 0
        %3503 = vmatpush1.bf16.msra.mxu0 %v3151
        %3504 = vmatprep.subr.bf16.mxu0 0
        %3505 = vmatpush1.bf16.msra.mxu0 %v3152
        %3506 = vmatprep.subr.bf16.mxu0 0
        %3507 = vmatpush1.bf16.msra.mxu0 %v3153
        %3508 = vmatprep.mubr.bf16.mxu0 %v2589
        %3509 = vmatmul.mubr.bf16.gmra.mrb[0].mxu0 %v2588
        %v3510 = vpop.f32.mrb[0].mxu0
        %v3511 = vadd.f32 %v3398, %v3510
        %v3512 = vpop.f32.mrb[0].mxu0
        %v3513 = vpop.f32.mrb[0].mxu0
        %v3514 = vadd.f32 %v3401, %v3513
        %v3515 = vpop.f32.mrb[0].mxu0
        %3516 = vmatprep.mubr.bf16.mxu0 %v2598
        %3517 = vmatmul.mubr.bf16.gmra.mrb[0].mxu0 %v2597
        %v3518 = vpop.f32.mrb[0].mxu0
        %v3519 = vadd.f32 %v3406, %v3518
        %v3520 = vpop.f32.mrb[0].mxu0
        %v3521 = vpop.f32.mrb[0].mxu0
        %v3522 = vadd.f32 %v3409, %v3521
        %v3523 = vpop.f32.mrb[0].mxu0
        %3524 = vmatprep.mubr.bf16.mxu0 %v2607
        %3525 = vmatmul.mubr.bf16.gmra.mrb[0].mxu0 %v2606
        %v3526 = vpop.f32.mrb[0].mxu0
        %v3527 = vadd.f32 %v3414, %v3526
        %v3528 = vpop.f32.mrb[0].mxu0
        %v3529 = vpop.f32.mrb[0].mxu0
        %v3530 = vadd.f32 %v3417, %v3529
        %v3531 = vpop.f32.mrb[0].mxu0
        %3532 = vmatprep.mubr.bf16.mxu0 %v2616
        %3533 = vmatmul.mubr.bf16.gmra.mrb[0].mxu0 %v2615
        %v3534 = vpop.f32.mrb[0].mxu0
        %v3535 = vadd.f32 %v3422, %v3534
        %v3536 = vpop.f32.mrb[0].mxu0
        %v3537 = vpop.f32.mrb[0].mxu0
        %v3538 = vadd.f32 %v3425, %v3537
        %v3539 = vpop.f32.mrb[0].mxu0
        %3540 = vmatprep.mubr.bf16.mxu0 %v2625
        %3541 = vmatmul.mubr.bf16.gmra.mrb[0].mxu0 %v2624
        %v3542 = vpop.f32.mrb[0].mxu0
        %v3543 = vadd.f32 %v3430, %v3542
        %v3544 = vpop.f32.mrb[0].mxu0
        %v3545 = vpop.f32.mrb[0].mxu0
        %v3546 = vadd.f32 %v3433, %v3545
        %v3547 = vpop.f32.mrb[0].mxu0
        %3548 = vmatprep.mubr.bf16.mxu0 %v2634
        %3549 = vmatmul.mubr.bf16.gmra.mrb[0].mxu0 %v2633
        %v3550 = vpop.f32.mrb[0].mxu0
        %v3551 = vadd.f32 %v3438, %v3550
        %v3552 = vpop.f32.mrb[0].mxu0
        %v3553 = vpop.f32.mrb[0].mxu0
        %v3554 = vadd.f32 %v3441, %v3553
        %v3555 = vpop.f32.mrb[0].mxu0
        %3556 = vmatprep.mubr.bf16.mxu0 %v2643
        %3557 = vmatmul.mubr.bf16.gmra.mrb[0].mxu0 %v2642
        %v3558 = vpop.f32.mrb[0].mxu0
        %v3559 = vadd.f32 %v3446, %v3558
        %v3560 = vpop.f32.mrb[0].mxu0
        %v3561 = vpop.f32.mrb[0].mxu0
        %v3562 = vadd.f32 %v3449, %v3561
        %v3563 = vpop.f32.mrb[0].mxu0
        %3564 = vmatprep.mubr.bf16.mxu0 %v2652
        %3565 = vmatmul.mubr.bf16.gmra.mrb[0].mxu0 %v2651
        %v3566 = vpop.f32.mrb[0].mxu0
        %v3567 = vadd.f32 %v3454, %v3566
        %v3568 = vpop.f32.mrb[0].mxu0
        %v3569 = vpop.f32.mrb[0].mxu0
        %v3570 = vadd.f32 %v3457, %v3569
        %v3571 = vpop.f32.mrb[0].mxu0
        %3572 = vmatprep.mubr.bf16.mxu0 %v2661
        %3573 = vmatmul.mubr.bf16.gmra.mrb[0].mxu0 %v2660
        %v3574 = vpop.f32.mrb[0].mxu0
        %v3575 = vadd.f32 %v3462, %v3574
        %v3576 = vpop.f32.mrb[0].mxu0
        %v3577 = vpop.f32.mrb[0].mxu0
        %v3578 = vadd.f32 %v3465, %v3577
        %v3579 = vpop.f32.mrb[0].mxu0
        %3580 = vmatprep.mubr.bf16.mxu0 %v2670
        %3581 = vmatmul.mubr.bf16.gmra.mrb[0].mxu0 %v2669
        %v3582 = vpop.f32.mrb[0].mxu0
        %v3583 = vadd.f32 %v3470, %v3582
        %v3584 = vpop.f32.mrb[0].mxu0
        %v3585 = vpop.f32.mrb[0].mxu0
        %v3586 = vadd.f32 %v3473, %v3585
        %v3587 = vpop.f32.mrb[0].mxu0
        %3588 = vdwg.mxu0
        %3589 = vmatprep.subr.bf16.mxu0 0
        %3590 = vmatpush1.bf16.msra.mxu0 %v3154
        %3591 = vmatprep.subr.bf16.mxu0 0
        %3592 = vmatpush1.bf16.msra.mxu0 %v3155
        %3593 = vmatprep.subr.bf16.mxu0 0
        %3594 = vmatpush1.bf16.msra.mxu0 %v3156
        %3595 = vmatprep.subr.bf16.mxu0 0
        %3596 = vmatpush1.bf16.msra.mxu0 %v3157
        %3597 = vmatprep.subr.bf16.mxu0 0
        %3598 = vmatpush1.bf16.msra.mxu0 %v3158
        %3599 = vmatprep.subr.bf16.mxu0 0
        %3600 = vmatpush1.bf16.msra.mxu0 %v3159
        %3601 = vmatprep.subr.bf16.mxu0 0
        %3602 = vmatpush1.bf16.msra.mxu0 %v3160
        %3603 = vmatprep.subr.bf16.mxu0 0
        %3604 = vmatpush1.bf16.msra.mxu0 %v3161
        %3605 = vmatprep.subr.bf16.mxu0 0
        %3606 = vmatpush1.bf16.msra.mxu0 %v3162
        %3607 = vmatprep.subr.bf16.mxu0 0
        %3608 = vmatpush1.bf16.msra.mxu0 %v3163
        %3609 = vmatprep.subr.bf16.mxu0 0
        %3610 = vmatpush1.bf16.msra.mxu0 %v3164
        %3611 = vmatprep.subr.bf16.mxu0 0
        %3612 = vmatpush1.bf16.msra.mxu0 %v3165
        %3613 = vmatprep.subr.bf16.mxu0 0
        %3614 = vmatpush1.bf16.msra.mxu0 %v3166
        %3615 = vmatprep.subr.bf16.mxu0 0
        %3616 = vmatpush1.bf16.msra.mxu0 %v3167
        %3617 = vmatprep.subr.bf16.mxu0 0
        %3618 = vmatpush1.bf16.msra.mxu0 %v3168
        %3619 = vmatprep.subr.bf16.mxu0 0
        %3620 = vmatpush1.bf16.msra.mxu0 %v3169
        %3621 = vmatprep.mubr.bf16.mxu0 %v2591
        %3622 = vmatmul.mubr.bf16.gmra.mrb[0].mxu0 %v2590
        %v3623 = vpop.f32.mrb[0].mxu0
        %v3624 = vadd.f32 %v3511, %v3623
        %v3625 = vpop.f32.mrb[0].mxu0
        %v3626 = vpop.f32.mrb[0].mxu0
        %v3627 = vadd.f32 %v3514, %v3626
        %v3628 = vpop.f32.mrb[0].mxu0
        %3629 = vmatprep.mubr.bf16.mxu0 %v2600
        %3630 = vmatmul.mubr.bf16.gmra.mrb[0].mxu0 %v2599
        %v3631 = vpop.f32.mrb[0].mxu0
        %v3632 = vadd.f32 %v3519, %v3631
        %v3633 = vpop.f32.mrb[0].mxu0
        %v3634 = vpop.f32.mrb[0].mxu0
        %v3635 = vadd.f32 %v3522, %v3634
        %v3636 = vpop.f32.mrb[0].mxu0
        %3637 = vmatprep.mubr.bf16.mxu0 %v2609
        %3638 = vmatmul.mubr.bf16.gmra.mrb[0].mxu0 %v2608
        %v3639 = vpop.f32.mrb[0].mxu0
        %v3640 = vadd.f32 %v3527, %v3639
        %v3641 = vpop.f32.mrb[0].mxu0
        %v3642 = vpop.f32.mrb[0].mxu0
        %v3643 = vadd.f32 %v3530, %v3642
        %v3644 = vpop.f32.mrb[0].mxu0
        %3645 = vmatprep.mubr.bf16.mxu0 %v2618
        %3646 = vmatmul.mubr.bf16.gmra.mrb[0].mxu0 %v2617
        %v3647 = vpop.f32.mrb[0].mxu0
        %v3648 = vadd.f32 %v3535, %v3647
        %v3649 = vpop.f32.mrb[0].mxu0
        %v3650 = vpop.f32.mrb[0].mxu0
        %v3651 = vadd.f32 %v3538, %v3650
        %v3652 = vpop.f32.mrb[0].mxu0
        %3653 = vmatprep.mubr.bf16.mxu0 %v2627
        %3654 = vmatmul.mubr.bf16.gmra.mrb[0].mxu0 %v2626
        %v3655 = vpop.f32.mrb[0].mxu0
        %v3656 = vadd.f32 %v3543, %v3655
        %v3657 = vpop.f32.mrb[0].mxu0
        %v3658 = vpop.f32.mrb[0].mxu0
        %v3659 = vadd.f32 %v3546, %v3658
        %v3660 = vpop.f32.mrb[0].mxu0
        %3661 = vmatprep.mubr.bf16.mxu0 %v2636
        %3662 = vmatmul.mubr.bf16.gmra.mrb[0].mxu0 %v2635
        %v3663 = vpop.f32.mrb[0].mxu0
        %v3664 = vadd.f32 %v3551, %v3663
        %v3665 = vpop.f32.mrb[0].mxu0
        %v3666 = vpop.f32.mrb[0].mxu0
        %v3667 = vadd.f32 %v3554, %v3666
        %v3668 = vpop.f32.mrb[0].mxu0
        %3669 = vmatprep.mubr.bf16.mxu0 %v2645
        %3670 = vmatmul.mubr.bf16.gmra.mrb[0].mxu0 %v2644
        %v3671 = vpop.f32.mrb[0].mxu0
        %v3672 = vadd.f32 %v3559, %v3671
        %v3673 = vpop.f32.mrb[0].mxu0
        %v3674 = vpop.f32.mrb[0].mxu0
        %v3675 = vadd.f32 %v3562, %v3674
        %v3676 = vpop.f32.mrb[0].mxu0
        %3677 = vmatprep.mubr.bf16.mxu0 %v2654
        %3678 = vmatmul.mubr.bf16.gmra.mrb[0].mxu0 %v2653
        %v3679 = vpop.f32.mrb[0].mxu0
        %v3680 = vadd.f32 %v3567, %v3679
        %v3681 = vpop.f32.mrb[0].mxu0
        %v3682 = vpop.f32.mrb[0].mxu0
        %v3683 = vadd.f32 %v3570, %v3682
        %v3684 = vpop.f32.mrb[0].mxu0
        %3685 = vmatprep.mubr.bf16.mxu0 %v2663
        %3686 = vmatmul.mubr.bf16.gmra.mrb[0].mxu0 %v2662
        %v3687 = vpop.f32.mrb[0].mxu0
        %v3688 = vadd.f32 %v3575, %v3687
        %v3689 = vpop.f32.mrb[0].mxu0
        %v3690 = vpop.f32.mrb[0].mxu0
        %v3691 = vadd.f32 %v3578, %v3690
        %v3692 = vpop.f32.mrb[0].mxu0
        %3693 = vmatprep.mubr.bf16.mxu0 %v2672
        %3694 = vmatmul.mubr.bf16.gmra.mrb[0].mxu0 %v2671
        %v3695 = vpop.f32.mrb[0].mxu0
        %v3696 = vadd.f32 %v3583, %v3695
        %v3697 = vpop.f32.mrb[0].mxu0
        %v3698 = vpop.f32.mrb[0].mxu0
        %v3699 = vadd.f32 %v3586, %v3698
        %v3700 = vpop.f32.mrb[0].mxu0
        %3701 = vdwg.mxu0
        %3702 = vmatprep.subr.bf16.mxu0 0
        %3703 = vmatpush1.bf16.msra.mxu0 %v3170
        %3704 = vmatprep.subr.bf16.mxu0 0
        %3705 = vmatpush1.bf16.msra.mxu0 %v3171
        %3706 = vmatprep.subr.bf16.mxu0 0
        %3707 = vmatpush1.bf16.msra.mxu0 %v3172
        %3708 = vmatprep.subr.bf16.mxu0 0
        %3709 = vmatpush1.bf16.msra.mxu0 %v3173
        %3710 = vmatprep.subr.bf16.mxu0 0
        %3711 = vmatpush1.bf16.msra.mxu0 %v3174
        %3712 = vmatprep.subr.bf16.mxu0 0
        %3713 = vmatpush1.bf16.msra.mxu0 %v3175
        %3714 = vmatprep.subr.bf16.mxu0 0
        %3715 = vmatpush1.bf16.msra.mxu0 %v3176
        %3716 = vmatprep.subr.bf16.mxu0 0
        %3717 = vmatpush1.bf16.msra.mxu0 %v3177
        %3718 = vmatprep.subr.bf16.mxu0 0
        %3719 = vmatpush1.bf16.msra.mxu0 0
        %3720 = vmatprep.subr.bf16.mxu0 0
        %3721 = vmatpush1.bf16.msra.mxu0 0
        %3722 = vmatprep.subr.bf16.mxu0 0
        %3723 = vmatpush1.bf16.msra.mxu0 0
        %3724 = vmatprep.subr.bf16.mxu0 0
        %3725 = vmatpush1.bf16.msra.mxu0 0
        %3726 = vmatprep.subr.bf16.mxu0 0
        %3727 = vmatpush1.bf16.msra.mxu0 0
        %3728 = vmatprep.subr.bf16.mxu0 0
        %3729 = vmatpush1.bf16.msra.mxu0 0
        %3730 = vmatprep.subr.bf16.mxu0 0
        %3731 = vmatpush1.bf16.msra.mxu0 0
        %3732 = vmatprep.subr.bf16.mxu0 0
        %3733 = vmatpush1.bf16.msra.mxu0 0
        %3734 = vmatprep.mubr.bf16.mxu0 0
        %3735 = vmatmul.mubr.bf16.gmra.mrb[0].mxu0 %v2592
        %v3736 = vpop.f32.mrb[0].mxu0
        %v3737 = vadd.f32 %v3624, %v3736
        %v3738 = vpop.f32.mrb[0].mxu0
        %v3739 = vpop.f32.mrb[0].mxu0
        %v3740 = vadd.f32 %v3627, %v3739
        %v3741 = vpop.f32.mrb[0].mxu0
        %3742 = vmatprep.mubr.bf16.mxu0 0
        %3743 = vmatmul.mubr.bf16.gmra.mrb[0].mxu0 %v2601
        %v3744 = vpop.f32.mrb[0].mxu0
        %v3745 = vadd.f32 %v3632, %v3744
        %v3746 = vpop.f32.mrb[0].mxu0
        %v3747 = vpop.f32.mrb[0].mxu0
        %v3748 = vadd.f32 %v3635, %v3747
        %v3749 = vpop.f32.mrb[0].mxu0
        %3750 = vmatprep.mubr.bf16.mxu0 0
        %3751 = vmatmul.mubr.bf16.gmra.mrb[0].mxu0 %v2610
        %v3752 = vpop.f32.mrb[0].mxu0
        %v3753 = vadd.f32 %v3640, %v3752
        %v3754 = vpop.f32.mrb[0].mxu0
        %v3755 = vpop.f32.mrb[0].mxu0
        %v3756 = vadd.f32 %v3643, %v3755
        %v3757 = vpop.f32.mrb[0].mxu0
        %3758 = vmatprep.mubr.bf16.mxu0 0
        %3759 = vmatmul.mubr.bf16.gmra.mrb[0].mxu0 %v2619
        %v3760 = vpop.f32.mrb[0].mxu0
        %v3761 = vadd.f32 %v3648, %v3760
        %v3762 = vpop.f32.mrb[0].mxu0
        %v3763 = vpop.f32.mrb[0].mxu0
        %v3764 = vadd.f32 %v3651, %v3763
        %v3765 = vpop.f32.mrb[0].mxu0
        %3766 = vmatprep.mubr.bf16.mxu0 0
        %3767 = vmatmul.mubr.bf16.gmra.mrb[0].mxu0 %v2628
        %v3768 = vpop.f32.mrb[0].mxu0
        %v3769 = vadd.f32 %v3656, %v3768
        %v3770 = vpop.f32.mrb[0].mxu0
        %v3771 = vpop.f32.mrb[0].mxu0
        %v3772 = vadd.f32 %v3659, %v3771
        %v3773 = vpop.f32.mrb[0].mxu0
        %3774 = vmatprep.mubr.bf16.mxu0 0
        %3775 = vmatmul.mubr.bf16.gmra.mrb[0].mxu0 %v2637
        %v3776 = vpop.f32.mrb[0].mxu0
        %v3777 = vadd.f32 %v3664, %v3776
        %v3778 = vpop.f32.mrb[0].mxu0
        %v3779 = vpop.f32.mrb[0].mxu0
        %v3780 = vadd.f32 %v3667, %v3779
        %v3781 = vpop.f32.mrb[0].mxu0
        %3782 = vmatprep.mubr.bf16.mxu0 0
        %3783 = vmatmul.mubr.bf16.gmra.mrb[0].mxu0 %v2646
        %v3784 = vpop.f32.mrb[0].mxu0
        %v3785 = vadd.f32 %v3672, %v3784
        %v3786 = vpop.f32.mrb[0].mxu0
        %v3787 = vpop.f32.mrb[0].mxu0
        %v3788 = vadd.f32 %v3675, %v3787
        %v3789 = vpop.f32.mrb[0].mxu0
        %3790 = vmatprep.mubr.bf16.mxu0 0
        %3791 = vmatmul.mubr.bf16.gmra.mrb[0].mxu0 %v2655
        %v3792 = vpop.f32.mrb[0].mxu0
        %v3793 = vadd.f32 %v3680, %v3792
        %v3794 = vpop.f32.mrb[0].mxu0
        %v3795 = vpop.f32.mrb[0].mxu0
        %v3796 = vadd.f32 %v3683, %v3795
        %v3797 = vpop.f32.mrb[0].mxu0
        %3798 = vmatprep.mubr.bf16.mxu0 0
        %3799 = vmatmul.mubr.bf16.gmra.mrb[0].mxu0 %v2664
        %v3800 = vpop.f32.mrb[0].mxu0
        %v3801 = vadd.f32 %v3688, %v3800
        %v3802 = vpop.f32.mrb[0].mxu0
        %v3803 = vpop.f32.mrb[0].mxu0
        %v3804 = vadd.f32 %v3691, %v3803
        %v3805 = vpop.f32.mrb[0].mxu0
        %3806 = vmatprep.mubr.bf16.mxu0 0
        %3807 = vmatmul.mubr.bf16.gmra.mrb[0].mxu0 %v2673
        %v3808 = vpop.f32.mrb[0].mxu0
        %v3809 = vadd.f32 %v3696, %v3808
        %v3810 = vpop.f32.mrb[0].mxu0
        %v3811 = vpop.f32.mrb[0].mxu0
        %v3812 = vadd.f32 %v3699, %v3811
        %v3813 = vpop.f32.mrb[0].mxu0
        %3814 = vdwg.mxu0
        %v3815 = vld [vmem:[%s2] sm:$0x1]
        %v3816 = vld [vmem:[%s2 + $0x1] sm:$0x1]
        %v3817 = vlaneseq
        %v3818 = vshrl.u32 %v3817, 7
        %v3819 = vsub.s32 0, %v3818
        %v3820 = vrot.slane %v3815, %v3819
        %v3821 = vmul.f32 %v3737, %v3820
        %v3822 = vmul.f32 %v3740, %v3820
        %v3823 = vmul.f32 %v3745, %v3820
        %v3824 = vmul.f32 %v3748, %v3820
        %v3825 = vmul.f32 %v3753, %v3820
        %v3826 = vmul.f32 %v3756, %v3820
        %v3827 = vmul.f32 %v3761, %v3820
        %v3828 = vmul.f32 %v3764, %v3820
        %v3829 = vmul.f32 %v3769, %v3820
        %v3830 = vmul.f32 %v3772, %v3820
        %v3831 = vmul.f32 %v3777, %v3820
        %v3832 = vmul.f32 %v3780, %v3820
        %v3833 = vmul.f32 %v3785, %v3820
        %v3834 = vmul.f32 %v3788, %v3820
        %v3835 = vmul.f32 %v3793, %v3820
        %v3836 = vmul.f32 %v3796, %v3820
        %v3837 = vmul.f32 %v3801, %v3820
        %v3838 = vmul.f32 %v3804, %v3820
        %v3839 = vmul.f32 %v3809, %v3820
        %v3840 = vmul.f32 %v3812, %v3820
        %v3841 = vlaneseq
        %v3842 = vshrl.u32 %v3841, 7
        %v3843 = vsub.s32 0, %v3842
        %v3844 = vrot.slane %v3816, %v3843
        %v3845 = vadd.f32 %v3821, %v3844
        %v3846 = vadd.f32 %v3822, %v3844
        %v3847 = vadd.f32 %v3823, %v3844
        %v3848 = vadd.f32 %v3824, %v3844
        %v3849 = vadd.f32 %v3825, %v3844
        %v3850 = vadd.f32 %v3826, %v3844
        %v3851 = vadd.f32 %v3827, %v3844
        %v3852 = vadd.f32 %v3828, %v3844
        %v3853 = vadd.f32 %v3829, %v3844
        %v3854 = vadd.f32 %v3830, %v3844
        %v3855 = vadd.f32 %v3831, %v3844
        %v3856 = vadd.f32 %v3832, %v3844
        %v3857 = vadd.f32 %v3833, %v3844
        %v3858 = vadd.f32 %v3834, %v3844
        %v3859 = vadd.f32 %v3835, %v3844
        %v3860 = vadd.f32 %v3836, %v3844
        %v3861 = vadd.f32 %v3837, %v3844
        %v3862 = vadd.f32 %v3838, %v3844
        %v3863 = vadd.f32 %v3839, %v3844
        %v3864 = vadd.f32 %v3840, %v3844
        %v3865 = vmax.f32 %v3845, 0.0
        %v3866 = vmax.f32 %v3846, 0.0
        %v3867 = vmax.f32 %v3847, 0.0
        %v3868 = vmax.f32 %v3848, 0.0
        %v3869 = vmax.f32 %v3849, 0.0
        %v3870 = vmax.f32 %v3850, 0.0
        %v3871 = vmax.f32 %v3851, 0.0
        %v3872 = vmax.f32 %v3852, 0.0
        %v3873 = vmax.f32 %v3853, 0.0
        %v3874 = vmax.f32 %v3854, 0.0
        %v3875 = vmax.f32 %v3855, 0.0
        %v3876 = vmax.f32 %v3856, 0.0
        %v3877 = vmax.f32 %v3857, 0.0
        %v3878 = vmax.f32 %v3858, 0.0
        %v3879 = vmax.f32 %v3859, 0.0
        %v3880 = vmax.f32 %v3860, 0.0
        %v3881 = vmax.f32 %v3861, 0.0
        %v3882 = vmax.f32 %v3862, 0.0
        %v3883 = vmax.f32 %v3863, 0.0
        %v3884 = vmax.f32 %v3864, 0.0
        %v3885 = vld [vmem:[#allocation3] sm:$0x1]
        %v3886 = vsel %vm223, 0, %v3885
        %3887 = vst [vmem:[#allocation3] sm:$0x1] %v3886
        %v3888 = vld [vmem:[#allocation3 + $0xc] sm:$0x1]
        %v3889 = vsel %vm223, 0, %v3888
        %3890 = vst [vmem:[#allocation3 + $0xc] sm:$0x1] %v3889
        %v3891 = vld [vmem:[#allocation3 + $0x18] sm:$0x1]
        %v3892 = vsel %vm223, 0, %v3891
        %3893 = vst [vmem:[#allocation3 + $0x18] sm:$0x1] %v3892
        %v3894 = vld [vmem:[#allocation3 + $0x24] sm:$0x1]
        %v3895 = vsel %vm223, 0, %v3894
        %3896 = vst [vmem:[#allocation3 + $0x24] sm:$0x1] %v3895
        %v3897 = vld [vmem:[#allocation3 + $0x30] sm:$0x1]
        %v3898 = vsel %vm223, 0, %v3897
        %3899 = vst [vmem:[#allocation3 + $0x30] sm:$0x1] %v3898
        %v3900 = vld [vmem:[#allocation3 + $0x3c] sm:$0x1]
        %v3901 = vsel %vm223, 0, %v3900
        %3902 = vst [vmem:[#allocation3 + $0x3c] sm:$0x1] %v3901
        %v3903 = vld [vmem:[#allocation3 + $0x48] sm:$0x1]
        %v3904 = vsel %vm223, 0, %v3903
        %3905 = vst [vmem:[#allocation3 + $0x48] sm:$0x1] %v3904
        %v3906 = vld [vmem:[#allocation3 + $0x54] sm:$0x1]
        %v3907 = vsel %vm223, 0, %v3906
        %3908 = vst [vmem:[#allocation3 + $0x54] sm:$0x1] %v3907
        %v3909 = vld [vmem:[#allocation3 + $0x60] sm:$0x1]
        %v3910 = vsel %vm223, 0, %v3909
        %3911 = vst [vmem:[#allocation3 + $0x60] sm:$0x1] %v3910
        %v3912 = vld [vmem:[#allocation3 + $0x6c] sm:$0x1]
        %v3913 = vsel %vm223, 0, %v3912
        %3914 = vst [vmem:[#allocation3 + $0x6c] sm:$0x1] %v3913
        %v3915 = vld [vmem:[#allocation3 + $0x8] sm:$0x1]
        %v3916 = vsel %vm261, 0, %v3915
        %3917 = vst [vmem:[#allocation3 + $0x8] sm:$0x1] %v3916
        %v3918 = vld [vmem:[#allocation3 + $0x14] sm:$0x1]
        %v3919 = vsel %vm261, 0, %v3918
        %3920 = vst [vmem:[#allocation3 + $0x14] sm:$0x1] %v3919
        %v3921 = vld [vmem:[#allocation3 + $0x20] sm:$0x1]
        %v3922 = vsel %vm261, 0, %v3921
        %3923 = vst [vmem:[#allocation3 + $0x20] sm:$0x1] %v3922
        %v3924 = vld [vmem:[#allocation3 + $0x2c] sm:$0x1]
        %v3925 = vsel %vm261, 0, %v3924
        %3926 = vst [vmem:[#allocation3 + $0x2c] sm:$0x1] %v3925
        %v3927 = vld [vmem:[#allocation3 + $0x38] sm:$0x1]
        %v3928 = vsel %vm261, 0, %v3927
        %3929 = vst [vmem:[#allocation3 + $0x38] sm:$0x1] %v3928
        %v3930 = vld [vmem:[#allocation3 + $0x44] sm:$0x1]
        %v3931 = vsel %vm261, 0, %v3930
        %3932 = vst [vmem:[#allocation3 + $0x44] sm:$0x1] %v3931
        %v3933 = vld [vmem:[#allocation3 + $0x50] sm:$0x1]
        %v3934 = vsel %vm261, 0, %v3933
        %3935 = vst [vmem:[#allocation3 + $0x50] sm:$0x1] %v3934
        %v3936 = vld [vmem:[#allocation3 + $0x5c] sm:$0x1]
        %v3937 = vsel %vm261, 0, %v3936
        %3938 = vst [vmem:[#allocation3 + $0x5c] sm:$0x1] %v3937
        %v3939 = vld [vmem:[#allocation3 + $0x68] sm:$0x1]
        %v3940 = vsel %vm261, 0, %v3939
        %3941 = vst [vmem:[#allocation3 + $0x68] sm:$0x1] %v3940
        %v3942 = vld [vmem:[#allocation3 + $0x74] sm:$0x1]
        %v3943 = vsel %vm261, 0, %v3942
        %3944 = vst [vmem:[#allocation3 + $0x74] sm:$0x1] %v3943
        %v3945 = vpack.c.bf16 %v3866, %v3865
        %v3946 = vpack.c.bf16 %v3868, %v3867
        %v3947 = vpack.c.bf16 %v3870, %v3869
        %v3948 = vpack.c.bf16 %v3872, %v3871
        %v3949 = vpack.c.bf16 %v3874, %v3873
        %v3950 = vpack.c.bf16 %v3876, %v3875
        %v3951 = vpack.c.bf16 %v3878, %v3877
        %v3952 = vpack.c.bf16 %v3880, %v3879
        %v3953 = vpack.c.bf16 %v3882, %v3881
        %v3954 = vpack.c.bf16 %v3884, %v3883
        %v3965 = vunpack.c.l.b16 %v3945
        %v3966 = vunpack.c.h.b16 %v3945
        %v3967 = vunpack.c.l.b16 %v3946
        %v3968 = vunpack.c.h.b16 %v3946
        %v3969 = vunpack.c.l.b16 %v3947
        %v3970 = vunpack.c.h.b16 %v3947
        %v3971 = vunpack.c.l.b16 %v3948
        %v3972 = vunpack.c.h.b16 %v3948
        %v3973 = vunpack.c.l.b16 %v3949
        %v3974 = vunpack.c.h.b16 %v3949
        %v3975 = vunpack.c.l.b16 %v3950
        %v3976 = vunpack.c.h.b16 %v3950
        %v3977 = vunpack.c.l.b16 %v3951
        %v3978 = vunpack.c.h.b16 %v3951
        %v3979 = vunpack.c.l.b16 %v3952
        %v3980 = vunpack.c.h.b16 %v3952
        %v3981 = vunpack.c.l.b16 %v3953
        %v3982 = vunpack.c.h.b16 %v3953
        %v3983 = vunpack.c.l.b16 %v3954
        %v3984 = vunpack.c.h.b16 %v3954
        %v3985 = vpack.c.b16 %v3965, %v3965
        %v3986 = vpack.c.b16 %v3966, %v3966
        %v3987 = vpack.c.b16 %v3967, %v3967
        %v3988 = vpack.c.b16 %v3968, %v3968
        %v3989 = vpack.c.b16 %v3969, %v3969
        %v3990 = vpack.c.b16 %v3970, %v3970
        %v3991 = vpack.c.b16 %v3971, %v3971
        %v3992 = vpack.c.b16 %v3972, %v3972
        %v3993 = vpack.c.b16 %v3973, %v3973
        %v3994 = vpack.c.b16 %v3974, %v3974
        %v3995 = vpack.c.b16 %v3975, %v3975
        %v3996 = vpack.c.b16 %v3976, %v3976
        %v3997 = vpack.c.b16 %v3977, %v3977
        %v3998 = vpack.c.b16 %v3978, %v3978
        %v3999 = vpack.c.b16 %v3979, %v3979
        %v4000 = vpack.c.b16 %v3980, %v3980
        %v4001 = vpack.c.b16 %v3981, %v3981
        %v4002 = vpack.c.b16 %v3982, %v3982
        %v4003 = vpack.c.b16 %v3983, %v3983
        %v4004 = vpack.c.b16 %v3984, %v3984
        %v4006 = vshrl.u32 %v3985, 16
        %v4008 = vrot.slane %v4006, 7
        %v4009 = vshll.u32 %v3985, 16
        %v4011 = vor.u32 %v4008, %v4009
        %v4012 = vrot.slane %v4008, 4
        %v4014 = vshrl.u32 %v3986, 16
        %v4016 = vrot.slane %v4014, 7
        %v4017 = vshll.u32 %v3986, 16
        %v4019 = vor.u32 %v4016, %v4017
        %v4020 = vsel %vm365, %v4012, %v4019
        %v4021 = vrot.slane %v4016, 4
        %v4023 = vshrl.u32 %v3987, 16
        %v4025 = vrot.slane %v4023, 7
        %v4026 = vshll.u32 %v3987, 16
        %v4028 = vor.u32 %v4025, %v4026
        %v4029 = vrot.slane %v4025, 4
        %v4031 = vshrl.u32 %v3988, 16
        %v4033 = vrot.slane %v4031, 7
        %v4034 = vshll.u32 %v3988, 16
        %v4036 = vor.u32 %v4033, %v4034
        %v4037 = vsel %vm365, %v4029, %v4036
        %v4038 = vrot.slane %v4033, 4
        %v4040 = vshrl.u32 %v3989, 16
        %v4042 = vrot.slane %v4040, 7
        %v4043 = vshll.u32 %v3989, 16
        %v4045 = vor.u32 %v4042, %v4043
        %v4046 = vrot.slane %v4042, 4
        %v4048 = vshrl.u32 %v3990, 16
        %v4050 = vrot.slane %v4048, 7
        %v4051 = vshll.u32 %v3990, 16
        %v4053 = vor.u32 %v4050, %v4051
        %v4054 = vsel %vm365, %v4046, %v4053
        %v4055 = vrot.slane %v4050, 4
        %v4057 = vshrl.u32 %v3991, 16
        %v4059 = vrot.slane %v4057, 7
        %v4060 = vshll.u32 %v3991, 16
        %v4062 = vor.u32 %v4059, %v4060
        %v4063 = vrot.slane %v4059, 4
        %v4065 = vshrl.u32 %v3992, 16
        %v4067 = vrot.slane %v4065, 7
        %v4068 = vshll.u32 %v3992, 16
        %v4070 = vor.u32 %v4067, %v4068
        %v4071 = vsel %vm365, %v4063, %v4070
        %v4072 = vrot.slane %v4067, 4
        %v4074 = vshrl.u32 %v3993, 16
        %v4076 = vrot.slane %v4074, 7
        %v4077 = vshll.u32 %v3993, 16
        %v4079 = vor.u32 %v4076, %v4077
        %v4080 = vrot.slane %v4076, 4
        %v4082 = vshrl.u32 %v3994, 16
        %v4084 = vrot.slane %v4082, 7
        %v4085 = vshll.u32 %v3994, 16
        %v4087 = vor.u32 %v4084, %v4085
        %v4088 = vsel %vm365, %v4080, %v4087
        %v4089 = vrot.slane %v4084, 4
        %v4091 = vshrl.u32 %v3995, 16
        %v4093 = vrot.slane %v4091, 7
        %v4094 = vshll.u32 %v3995, 16
        %v4096 = vor.u32 %v4093, %v4094
        %v4097 = vrot.slane %v4093, 4
        %v4099 = vshrl.u32 %v3996, 16
        %v4101 = vrot.slane %v4099, 7
        %v4102 = vshll.u32 %v3996, 16
        %v4104 = vor.u32 %v4101, %v4102
        %v4105 = vsel %vm365, %v4097, %v4104
        %v4106 = vrot.slane %v4101, 4
        %v4108 = vshrl.u32 %v3997, 16
        %v4110 = vrot.slane %v4108, 7
        %v4111 = vshll.u32 %v3997, 16
        %v4113 = vor.u32 %v4110, %v4111
        %v4114 = vrot.slane %v4110, 4
        %v4116 = vshrl.u32 %v3998, 16
        %v4118 = vrot.slane %v4116, 7
        %v4119 = vshll.u32 %v3998, 16
        %v4121 = vor.u32 %v4118, %v4119
        %v4122 = vsel %vm365, %v4114, %v4121
        %v4123 = vrot.slane %v4118, 4
        %v4125 = vshrl.u32 %v3999, 16
        %v4127 = vrot.slane %v4125, 7
        %v4128 = vshll.u32 %v3999, 16
        %v4130 = vor.u32 %v4127, %v4128
        %v4131 = vrot.slane %v4127, 4
        %v4133 = vshrl.u32 %v4000, 16
        %v4135 = vrot.slane %v4133, 7
        %v4136 = vshll.u32 %v4000, 16
        %v4138 = vor.u32 %v4135, %v4136
        %v4139 = vsel %vm365, %v4131, %v4138
        %v4140 = vrot.slane %v4135, 4
        %v4142 = vshrl.u32 %v4001, 16
        %v4144 = vrot.slane %v4142, 7
        %v4145 = vshll.u32 %v4001, 16
        %v4147 = vor.u32 %v4144, %v4145
        %v4148 = vrot.slane %v4144, 4
        %v4150 = vshrl.u32 %v4002, 16
        %v4152 = vrot.slane %v4150, 7
        %v4153 = vshll.u32 %v4002, 16
        %v4155 = vor.u32 %v4152, %v4153
        %v4156 = vsel %vm365, %v4148, %v4155
        %v4157 = vrot.slane %v4152, 4
        %v4159 = vshrl.u32 %v4003, 16
        %v4161 = vrot.slane %v4159, 7
        %v4162 = vshll.u32 %v4003, 16
        %v4164 = vor.u32 %v4161, %v4162
        %v4165 = vrot.slane %v4161, 4
        %v4167 = vshrl.u32 %v4004, 16
        %v4169 = vrot.slane %v4167, 7
        %v4170 = vshll.u32 %v4004, 16
        %v4172 = vor.u32 %v4169, %v4170
        %v4173 = vsel %vm365, %v4165, %v4172
        %v4174 = vrot.slane %v4169, 4
        %v4205 = vld [vmem:[#allocation3] sm:$0xf]
        %v4206 = vsel %vm528, %v4011, %v4205
        %4207 = vst [vmem:[#allocation3] sm:$0xf] %v4206
        %4208 = vst [vmem:[#allocation3 + $0x4] sm:$0xf] %v4020
        %v4209 = vld [vmem:[#allocation3 + $0x8] sm:$0x1]
        %v4210 = vsel %vm223, %v4021, %v4209
        %4211 = vst [vmem:[#allocation3 + $0x8] sm:$0x1] %v4210
        %v4212 = vld [vmem:[#allocation3 + $0xc] sm:$0xf]
        %v4213 = vsel %vm528, %v4028, %v4212
        %4214 = vst [vmem:[#allocation3 + $0xc] sm:$0xf] %v4213
        %4215 = vst [vmem:[#allocation3 + $0x10] sm:$0xf] %v4037
        %v4216 = vld [vmem:[#allocation3 + $0x14] sm:$0x1]
        %v4217 = vsel %vm223, %v4038, %v4216
        %4218 = vst [vmem:[#allocation3 + $0x14] sm:$0x1] %v4217
        %v4219 = vld [vmem:[#allocation3 + $0x18] sm:$0xf]
        %v4220 = vsel %vm528, %v4045, %v4219
        %4221 = vst [vmem:[#allocation3 + $0x18] sm:$0xf] %v4220
        %4222 = vst [vmem:[#allocation3 + $0x1c] sm:$0xf] %v4054
        %v4223 = vld [vmem:[#allocation3 + $0x20] sm:$0x1]
        %v4224 = vsel %vm223, %v4055, %v4223
        %4225 = vst [vmem:[#allocation3 + $0x20] sm:$0x1] %v4224
        %v4226 = vld [vmem:[#allocation3 + $0x24] sm:$0xf]
        %v4227 = vsel %vm528, %v4062, %v4226
        %4228 = vst [vmem:[#allocation3 + $0x24] sm:$0xf] %v4227
        %4229 = vst [vmem:[#allocation3 + $0x28] sm:$0xf] %v4071
        %v4230 = vld [vmem:[#allocation3 + $0x2c] sm:$0x1]
        %v4231 = vsel %vm223, %v4072, %v4230
        %4232 = vst [vmem:[#allocation3 + $0x2c] sm:$0x1] %v4231
        %v4233 = vld [vmem:[#allocation3 + $0x30] sm:$0xf]
        %v4234 = vsel %vm528, %v4079, %v4233
        %4235 = vst [vmem:[#allocation3 + $0x30] sm:$0xf] %v4234
        %4236 = vst [vmem:[#allocation3 + $0x34] sm:$0xf] %v4088
        %v4237 = vld [vmem:[#allocation3 + $0x38] sm:$0x1]
        %v4238 = vsel %vm223, %v4089, %v4237
        %4239 = vst [vmem:[#allocation3 + $0x38] sm:$0x1] %v4238
        %v4240 = vld [vmem:[#allocation3 + $0x3c] sm:$0xf]
        %v4241 = vsel %vm528, %v4096, %v4240
        %4242 = vst [vmem:[#allocation3 + $0x3c] sm:$0xf] %v4241
        %4243 = vst [vmem:[#allocation3 + $0x40] sm:$0xf] %v4105
        %v4244 = vld [vmem:[#allocation3 + $0x44] sm:$0x1]
        %v4245 = vsel %vm223, %v4106, %v4244
        %4246 = vst [vmem:[#allocation3 + $0x44] sm:$0x1] %v4245
        %v4247 = vld [vmem:[#allocation3 + $0x48] sm:$0xf]
        %v4248 = vsel %vm528, %v4113, %v4247
        %4249 = vst [vmem:[#allocation3 + $0x48] sm:$0xf] %v4248
        %4250 = vst [vmem:[#allocation3 + $0x4c] sm:$0xf] %v4122
        %v4251 = vld [vmem:[#allocation3 + $0x50] sm:$0x1]
        %v4252 = vsel %vm223, %v4123, %v4251
        %4253 = vst [vmem:[#allocation3 + $0x50] sm:$0x1] %v4252
        %v4254 = vld [vmem:[#allocation3 + $0x54] sm:$0xf]
        %v4255 = vsel %vm528, %v4130, %v4254
        %4256 = vst [vmem:[#allocation3 + $0x54] sm:$0xf] %v4255
        %4257 = vst [vmem:[#allocation3 + $0x58] sm:$0xf] %v4139
        %v4258 = vld [vmem:[#allocation3 + $0x5c] sm:$0x1]
        %v4259 = vsel %vm223, %v4140, %v4258
        %4260 = vst [vmem:[#allocation3 + $0x5c] sm:$0x1] %v4259
        %v4261 = vld [vmem:[#allocation3 + $0x60] sm:$0xf]
        %v4262 = vsel %vm528, %v4147, %v4261
        %4263 = vst [vmem:[#allocation3 + $0x60] sm:$0xf] %v4262
        %4264 = vst [vmem:[#allocation3 + $0x64] sm:$0xf] %v4156
        %v4265 = vld [vmem:[#allocation3 + $0x68] sm:$0x1]
        %v4266 = vsel %vm223, %v4157, %v4265
        %4267 = vst [vmem:[#allocation3 + $0x68] sm:$0x1] %v4266
        %v4268 = vld [vmem:[#allocation3 + $0x6c] sm:$0xf]
        %v4269 = vsel %vm528, %v4164, %v4268
        %4270 = vst [vmem:[#allocation3 + $0x6c] sm:$0xf] %v4269
        %4271 = vst [vmem:[#allocation3 + $0x70] sm:$0xf] %v4173
        %v4272 = vld [vmem:[#allocation3 + $0x74] sm:$0x1]
        %v4273 = vsel %vm223, %v4174, %v4272
        %4274 = vst [vmem:[#allocation3 + $0x74] sm:$0x1] %v4273
        %p4275 = scmp.eq.s32.totalorder %s220, 0
        // Predicated region
        $region57: #{tpu_custom_call.1} parent=31 // pred_check
          %p4276 = pneg %p4275
        $region58: #{tpu_custom_call.1} parent=31 // pred_check_branch
          %4278 = sbr.rel (%p4276) target = $region60
        $region59: #{tpu_custom_call.1} parent=31 // pred_region
          %v4279 = vld [vmem:[#allocation3] sm:$0xf]
          %v4280 = vsel %vm528, 0, %v4279
          %4281 = vst [vmem:[#allocation3] sm:$0xf] %v4280
          %4282 = vst [vmem:[#allocation3 + $0x4] sm:$0xf] 0
          %v4283 = vld [vmem:[#allocation3 + $0x8] sm:$0x1]
          %v4284 = vsel %vm223, 0, %v4283
          %4285 = vst [vmem:[#allocation3 + $0x8] sm:$0x1] %v4284
        $region60: #{tpu_custom_call.1} parent=31 // pred_fallthru
          _
        %p4286 = scmp.eq.s32.totalorder %s696, 16
        // Predicated region
        $region61: #{tpu_custom_call.1} parent=31 // pred_check
          %p4287 = pneg %p4286
        $region62: #{tpu_custom_call.1} parent=31 // pred_check_branch
          %4289 = sbr.rel (%p4287) target = $region64
        $region63: #{tpu_custom_call.1} parent=31 // pred_region
          %s4290 = scalar_lea.vmem [#allocation3], 108
          %v4291 = vld [vmem:[%s4290] sm:$0xf]
          %v4292 = vsel %vm528, 0, %v4291
          %4293 = vst [vmem:[%s4290] sm:$0xf] %v4292
          %4294 = vst [vmem:[%s4290 + $0x4] sm:$0xf] 0
          %v4295 = vld [vmem:[%s4290 + $0x8] sm:$0x1]
          %v4296 = vsel %vm223, 0, %v4295
          %4297 = vst [vmem:[%s4290 + $0x8] sm:$0x1] %v4296
        $region64: #{tpu_custom_call.1} parent=31 // pred_fallthru
          _
        %v4298 = vld [vmem:[#allocation3] sm:$0xf]
        %v4299 = vld [vmem:[#allocation3 + $0x4] sm:$0xf]
        %v4300 = vld [vmem:[#allocation3 + $0xc] sm:$0xf]
        %v4301 = vld [vmem:[#allocation3 + $0x10] sm:$0xf]
        %v4302 = vld [vmem:[#allocation3 + $0x18] sm:$0xf]
        %v4303 = vld [vmem:[#allocation3 + $0x1c] sm:$0xf]
        %v4304 = vld [vmem:[#allocation3 + $0x24] sm:$0xf]
        %v4305 = vld [vmem:[#allocation3 + $0x28] sm:$0xf]
        %v4306 = vld [vmem:[#allocation3 + $0x30] sm:$0xf]
        %v4307 = vld [vmem:[#allocation3 + $0x34] sm:$0xf]
        %v4308 = vld [vmem:[#allocation3 + $0x3c] sm:$0xf]
        %v4309 = vld [vmem:[#allocation3 + $0x40] sm:$0xf]
        %v4310 = vld [vmem:[#allocation3 + $0x48] sm:$0xf]
        %v4311 = vld [vmem:[#allocation3 + $0x4c] sm:$0xf]
        %v4312 = vld [vmem:[#allocation3 + $0x54] sm:$0xf]
        %v4313 = vld [vmem:[#allocation3 + $0x58] sm:$0xf]
        %v4330 = vunpack.c.l.b16 %v4298
        %v4331 = vunpack.c.l.b16 %v4299
        %v4332 = vunpack.c.l.b16 %v4300
        %v4333 = vunpack.c.l.b16 %v4301
        %v4334 = vunpack.c.l.b16 %v4302
        %v4335 = vunpack.c.l.b16 %v4303
        %v4336 = vunpack.c.l.b16 %v4304
        %v4337 = vunpack.c.l.b16 %v4305
        %v4338 = vunpack.c.l.b16 %v4306
        %v4339 = vunpack.c.l.b16 %v4307
        %v4340 = vunpack.c.l.b16 %v4308
        %v4341 = vunpack.c.l.b16 %v4309
        %v4342 = vunpack.c.l.b16 %v4310
        %v4343 = vunpack.c.l.b16 %v4311
        %v4344 = vunpack.c.l.b16 %v4312
        %v4345 = vunpack.c.l.b16 %v4313
        %v4346 = vpack.c.b16 %v4331, %v4330
        %v4347 = vpack.c.b16 %v4333, %v4332
        %v4348 = vpack.c.b16 %v4335, %v4334
        %v4349 = vpack.c.b16 %v4337, %v4336
        %v4350 = vpack.c.b16 %v4339, %v4338
        %v4351 = vpack.c.b16 %v4341, %v4340
        %v4352 = vpack.c.b16 %v4343, %v4342
        %v4353 = vpack.c.b16 %v4345, %v4344
        %4362 = vst [vmem:[#allocation4] sm:$0xff] %v4346
        %4363 = vst [vmem:[#allocation4 + $0x48] sm:$0xff] %v4347
        %4364 = vst [vmem:[#allocation4 + $0x90] sm:$0xff] %v4348
        %4365 = vst [vmem:[#allocation4 + $0xd8] sm:$0xff] %v4349
        %4366 = vst [vmem:[#allocation4 + $0x120] sm:$0xff] %v4350
        %4367 = vst [vmem:[#allocation4 + $0x168] sm:$0xff] %v4351
        %4368 = vst [vmem:[#allocation4 + $0x1b0] sm:$0xff] %v4352
        %4369 = vst [vmem:[#allocation4 + $0x1f8] sm:$0xff] %v4353
        %v4370 = vld [vmem:[#allocation3] sm:$0xf]
        %v4371 = vld [vmem:[#allocation3 + $0x4] sm:$0xf]
        %v4372 = vld [vmem:[#allocation3 + $0x8] sm:$0x1]
        %v4373 = vld [vmem:[#allocation3 + $0xc] sm:$0xf]
        %v4374 = vld [vmem:[#allocation3 + $0x10] sm:$0xf]
        %v4375 = vld [vmem:[#allocation3 + $0x14] sm:$0x1]
        %v4376 = vld [vmem:[#allocation3 + $0x18] sm:$0xf]
        %v4377 = vld [vmem:[#allocation3 + $0x1c] sm:$0xf]
        %v4378 = vld [vmem:[#allocation3 + $0x20] sm:$0x1]
        %v4379 = vld [vmem:[#allocation3 + $0x24] sm:$0xf]
        %v4380 = vld [vmem:[#allocation3 + $0x28] sm:$0xf]
        %v4381 = vld [vmem:[#allocation3 + $0x2c] sm:$0x1]
        %v4382 = vld [vmem:[#allocation3 + $0x30] sm:$0xf]
        %v4383 = vld [vmem:[#allocation3 + $0x34] sm:$0xf]
        %v4384 = vld [vmem:[#allocation3 + $0x38] sm:$0x1]
        %v4385 = vld [vmem:[#allocation3 + $0x3c] sm:$0xf]
        %v4386 = vld [vmem:[#allocation3 + $0x40] sm:$0xf]
        %v4387 = vld [vmem:[#allocation3 + $0x44] sm:$0x1]
        %v4388 = vld [vmem:[#allocation3 + $0x48] sm:$0xf]
        %v4389 = vld [vmem:[#allocation3 + $0x4c] sm:$0xf]
        %v4390 = vld [vmem:[#allocation3 + $0x50] sm:$0x1]
        %v4391 = vld [vmem:[#allocation3 + $0x54] sm:$0xf]
        %v4392 = vld [vmem:[#allocation3 + $0x58] sm:$0xf]
        %v4393 = vld [vmem:[#allocation3 + $0x5c] sm:$0x1]
        %v4395 = vshrl.u32 %v4370, 16
        %v4397 = vrot.slane %v4395, 4
        %v4398 = vshll.u32 %v4370, 16
        %v4400 = vrot.slane %v4398, 5
        %v4401 = vor.u32 %v4397, %v4400
        %v4402 = vrot.slane %v4401, 4
        %v4404 = vshll.u32 %v4371, 16
        %v4406 = vrot.slane %v4404, 5
        %v4407 = vsel %vm930, %v4402, %v4406
        %v4408 = vshrl.u32 %v4371, 16
        %v4410 = vrot.slane %v4408, 4
        %v4411 = vor.u32 %v4410, %v4406
        %v4412 = vrot.slane %v4411, 4
        %v4414 = vshll.u32 %v4372, 16
        %v4416 = vrot.slane %v4414, 5
        %v4417 = vsel %vm930, %v4412, %v4416
        %v4419 = vshrl.u32 %v4373, 16
        %v4421 = vrot.slane %v4419, 4
        %v4422 = vshll.u32 %v4373, 16
        %v4424 = vrot.slane %v4422, 5
        %v4425 = vor.u32 %v4421, %v4424
        %v4426 = vrot.slane %v4425, 4
        %v4428 = vshll.u32 %v4374, 16
        %v4430 = vrot.slane %v4428, 5
        %v4431 = vsel %vm930, %v4426, %v4430
        %v4432 = vshrl.u32 %v4374, 16
        %v4434 = vrot.slane %v4432, 4
        %v4435 = vor.u32 %v4434, %v4430
        %v4436 = vrot.slane %v4435, 4
        %v4438 = vshll.u32 %v4375, 16
        %v4440 = vrot.slane %v4438, 5
        %v4441 = vsel %vm930, %v4436, %v4440
        %v4443 = vshrl.u32 %v4376, 16
        %v4445 = vrot.slane %v4443, 4
        %v4446 = vshll.u32 %v4376, 16
        %v4448 = vrot.slane %v4446, 5
        %v4449 = vor.u32 %v4445, %v4448
        %v4450 = vrot.slane %v4449, 4
        %v4452 = vshll.u32 %v4377, 16
        %v4454 = vrot.slane %v4452, 5
        %v4455 = vsel %vm930, %v4450, %v4454
        %v4456 = vshrl.u32 %v4377, 16
        %v4458 = vrot.slane %v4456, 4
        %v4459 = vor.u32 %v4458, %v4454
        %v4460 = vrot.slane %v4459, 4
        %v4462 = vshll.u32 %v4378, 16
        %v4464 = vrot.slane %v4462, 5
        %v4465 = vsel %vm930, %v4460, %v4464
        %v4467 = vshrl.u32 %v4379, 16
        %v4469 = vrot.slane %v4467, 4
        %v4470 = vshll.u32 %v4379, 16
        %v4472 = vrot.slane %v4470, 5
        %v4473 = vor.u32 %v4469, %v4472
        %v4474 = vrot.slane %v4473, 4
        %v4476 = vshll.u32 %v4380, 16
        %v4478 = vrot.slane %v4476, 5
        %v4479 = vsel %vm930, %v4474, %v4478
        %v4480 = vshrl.u32 %v4380, 16
        %v4482 = vrot.slane %v4480, 4
        %v4483 = vor.u32 %v4482, %v4478
        %v4484 = vrot.slane %v4483, 4
        %v4486 = vshll.u32 %v4381, 16
        %v4488 = vrot.slane %v4486, 5
        %v4489 = vsel %vm930, %v4484, %v4488
        %v4491 = vshrl.u32 %v4382, 16
        %v4493 = vrot.slane %v4491, 4
        %v4494 = vshll.u32 %v4382, 16
        %v4496 = vrot.slane %v4494, 5
        %v4497 = vor.u32 %v4493, %v4496
        %v4498 = vrot.slane %v4497, 4
        %v4500 = vshll.u32 %v4383, 16
        %v4502 = vrot.slane %v4500, 5
        %v4503 = vsel %vm930, %v4498, %v4502
        %v4504 = vshrl.u32 %v4383, 16
        %v4506 = vrot.slane %v4504, 4
        %v4507 = vor.u32 %v4506, %v4502
        %v4508 = vrot.slane %v4507, 4
        %v4510 = vshll.u32 %v4384, 16
        %v4512 = vrot.slane %v4510, 5
        %v4513 = vsel %vm930, %v4508, %v4512
        %v4515 = vshrl.u32 %v4385, 16
        %v4517 = vrot.slane %v4515, 4
        %v4518 = vshll.u32 %v4385, 16
        %v4520 = vrot.slane %v4518, 5
        %v4521 = vor.u32 %v4517, %v4520
        %v4522 = vrot.slane %v4521, 4
        %v4524 = vshll.u32 %v4386, 16
        %v4526 = vrot.slane %v4524, 5
        %v4527 = vsel %vm930, %v4522, %v4526
        %v4528 = vshrl.u32 %v4386, 16
        %v4530 = vrot.slane %v4528, 4
        %v4531 = vor.u32 %v4530, %v4526
        %v4532 = vrot.slane %v4531, 4
        %v4534 = vshll.u32 %v4387, 16
        %v4536 = vrot.slane %v4534, 5
        %v4537 = vsel %vm930, %v4532, %v4536
        %v4539 = vshrl.u32 %v4388, 16
        %v4541 = vrot.slane %v4539, 4
        %v4542 = vshll.u32 %v4388, 16
        %v4544 = vrot.slane %v4542, 5
        %v4545 = vor.u32 %v4541, %v4544
        %v4546 = vrot.slane %v4545, 4
        %v4548 = vshll.u32 %v4389, 16
        %v4550 = vrot.slane %v4548, 5
        %v4551 = vsel %vm930, %v4546, %v4550
        %v4552 = vshrl.u32 %v4389, 16
        %v4554 = vrot.slane %v4552, 4
        %v4555 = vor.u32 %v4554, %v4550
        %v4556 = vrot.slane %v4555, 4
        %v4558 = vshll.u32 %v4390, 16
        %v4560 = vrot.slane %v4558, 5
        %v4561 = vsel %vm930, %v4556, %v4560
        %v4563 = vshrl.u32 %v4391, 16
        %v4565 = vrot.slane %v4563, 4
        %v4566 = vshll.u32 %v4391, 16
        %v4568 = vrot.slane %v4566, 5
        %v4569 = vor.u32 %v4565, %v4568
        %v4570 = vrot.slane %v4569, 4
        %v4572 = vshll.u32 %v4392, 16
        %v4574 = vrot.slane %v4572, 5
        %v4575 = vsel %vm930, %v4570, %v4574
        %v4576 = vshrl.u32 %v4392, 16
        %v4578 = vrot.slane %v4576, 4
        %v4579 = vor.u32 %v4578, %v4574
        %v4580 = vrot.slane %v4579, 4
        %v4582 = vshll.u32 %v4393, 16
        %v4584 = vrot.slane %v4582, 5
        %v4585 = vsel %vm930, %v4580, %v4584
        %v4586 = vunpack.c.l.b16 %v4407
        %v4587 = vunpack.c.l.b16 %v4417
        %v4588 = vunpack.c.l.b16 %v4431
        %v4589 = vunpack.c.l.b16 %v4441
        %v4590 = vunpack.c.l.b16 %v4455
        %v4591 = vunpack.c.l.b16 %v4465
        %v4592 = vunpack.c.l.b16 %v4479
        %v4593 = vunpack.c.l.b16 %v4489
        %v4594 = vunpack.c.l.b16 %v4503
        %v4595 = vunpack.c.l.b16 %v4513
        %v4596 = vunpack.c.l.b16 %v4527
        %v4597 = vunpack.c.l.b16 %v4537
        %v4598 = vunpack.c.l.b16 %v4551
        %v4599 = vunpack.c.l.b16 %v4561
        %v4600 = vunpack.c.l.b16 %v4575
        %v4601 = vunpack.c.l.b16 %v4585
        %v4602 = vpack.c.b16 %v4587, %v4586
        %v4603 = vpack.c.b16 %v4589, %v4588
        %v4604 = vpack.c.b16 %v4591, %v4590
        %v4605 = vpack.c.b16 %v4593, %v4592
        %v4606 = vpack.c.b16 %v4595, %v4594
        %v4607 = vpack.c.b16 %v4597, %v4596
        %v4608 = vpack.c.b16 %v4599, %v4598
        %v4609 = vpack.c.b16 %v4601, %v4600
        %4618 = vst [vmem:[#allocation4 + $0x8] sm:$0xff] %v4602
        %4619 = vst [vmem:[#allocation4 + $0x50] sm:$0xff] %v4603
        %4620 = vst [vmem:[#allocation4 + $0x98] sm:$0xff] %v4604
        %4621 = vst [vmem:[#allocation4 + $0xe0] sm:$0xff] %v4605
        %4622 = vst [vmem:[#allocation4 + $0x128] sm:$0xff] %v4606
        %4623 = vst [vmem:[#allocation4 + $0x170] sm:$0xff] %v4607
        %4624 = vst [vmem:[#allocation4 + $0x1b8] sm:$0xff] %v4608
        %4625 = vst [vmem:[#allocation4 + $0x200] sm:$0xff] %v4609
        %v4626 = vld [vmem:[#allocation3] sm:$0xe]
        %v4627 = vld [vmem:[#allocation3 + $0x4] sm:$0xf]
        %v4628 = vld [vmem:[#allocation3 + $0x8] sm:$0x1]
        %v4629 = vld [vmem:[#allocation3 + $0xc] sm:$0xe]
        %v4630 = vld [vmem:[#allocation3 + $0x10] sm:$0xf]
        %v4631 = vld [vmem:[#allocation3 + $0x14] sm:$0x1]
        %v4632 = vld [vmem:[#allocation3 + $0x18] sm:$0xe]
        %v4633 = vld [vmem:[#allocation3 + $0x1c] sm:$0xf]
        %v4634 = vld [vmem:[#allocation3 + $0x20] sm:$0x1]
        %v4635 = vld [vmem:[#allocation3 + $0x24] sm:$0xe]
        %v4636 = vld [vmem:[#allocation3 + $0x28] sm:$0xf]
        %v4637 = vld [vmem:[#allocation3 + $0x2c] sm:$0x1]
        %v4638 = vld [vmem:[#allocation3 + $0x30] sm:$0xe]
        %v4639 = vld [vmem:[#allocation3 + $0x34] sm:$0xf]
        %v4640 = vld [vmem:[#allocation3 + $0x38] sm:$0x1]
        %v4641 = vld [vmem:[#allocation3 + $0x3c] sm:$0xe]
        %v4642 = vld [vmem:[#allocation3 + $0x40] sm:$0xf]
        %v4643 = vld [vmem:[#allocation3 + $0x44] sm:$0x1]
        %v4644 = vld [vmem:[#allocation3 + $0x48] sm:$0xe]
        %v4645 = vld [vmem:[#allocation3 + $0x4c] sm:$0xf]
        %v4646 = vld [vmem:[#allocation3 + $0x50] sm:$0x1]
        %v4647 = vld [vmem:[#allocation3 + $0x54] sm:$0xe]
        %v4648 = vld [vmem:[#allocation3 + $0x58] sm:$0xf]
        %v4649 = vld [vmem:[#allocation3 + $0x5c] sm:$0x1]
        %v4674 = vrot.slane %v4626, 5
        %v4675 = vrot.slane %v4674, 4
        %v4676 = vrot.slane %v4627, 5
        %v4677 = vsel %vm1283, %v4675, %v4676
        %v4678 = vrot.slane %v4676, 4
        %v4679 = vrot.slane %v4628, 5
        %v4680 = vsel %vm1283, %v4678, %v4679
        %v4681 = vrot.slane %v4629, 5
        %v4682 = vrot.slane %v4681, 4
        %v4683 = vrot.slane %v4630, 5
        %v4684 = vsel %vm1283, %v4682, %v4683
        %v4685 = vrot.slane %v4683, 4
        %v4686 = vrot.slane %v4631, 5
        %v4687 = vsel %vm1283, %v4685, %v4686
        %v4688 = vrot.slane %v4632, 5
        %v4689 = vrot.slane %v4688, 4
        %v4690 = vrot.slane %v4633, 5
        %v4691 = vsel %vm1283, %v4689, %v4690
        %v4692 = vrot.slane %v4690, 4
        %v4693 = vrot.slane %v4634, 5
        %v4694 = vsel %vm1283, %v4692, %v4693
        %v4695 = vrot.slane %v4635, 5
        %v4696 = vrot.slane %v4695, 4
        %v4697 = vrot.slane %v4636, 5
        %v4698 = vsel %vm1283, %v4696, %v4697
        %v4699 = vrot.slane %v4697, 4
        %v4700 = vrot.slane %v4637, 5
        %v4701 = vsel %vm1283, %v4699, %v4700
        %v4702 = vrot.slane %v4638, 5
        %v4703 = vrot.slane %v4702, 4
        %v4704 = vrot.slane %v4639, 5
        %v4705 = vsel %vm1283, %v4703, %v4704
        %v4706 = vrot.slane %v4704, 4
        %v4707 = vrot.slane %v4640, 5
        %v4708 = vsel %vm1283, %v4706, %v4707
        %v4709 = vrot.slane %v4641, 5
        %v4710 = vrot.slane %v4709, 4
        %v4711 = vrot.slane %v4642, 5
        %v4712 = vsel %vm1283, %v4710, %v4711
        %v4713 = vrot.slane %v4711, 4
        %v4714 = vrot.slane %v4643, 5
        %v4715 = vsel %vm1283, %v4713, %v4714
        %v4716 = vrot.slane %v4644, 5
        %v4717 = vrot.slane %v4716, 4
        %v4718 = vrot.slane %v4645, 5
        %v4719 = vsel %vm1283, %v4717, %v4718
        %v4720 = vrot.slane %v4718, 4
        %v4721 = vrot.slane %v4646, 5
        %v4722 = vsel %vm1283, %v4720, %v4721
        %v4723 = vrot.slane %v4647, 5
        %v4724 = vrot.slane %v4723, 4
        %v4725 = vrot.slane %v4648, 5
        %v4726 = vsel %vm1283, %v4724, %v4725
        %v4727 = vrot.slane %v4725, 4
        %v4728 = vrot.slane %v4649, 5
        %v4729 = vsel %vm1283, %v4727, %v4728
        %v4730 = vunpack.c.l.b16 %v4677
        %v4731 = vunpack.c.l.b16 %v4680
        %v4732 = vunpack.c.l.b16 %v4684
        %v4733 = vunpack.c.l.b16 %v4687
        %v4734 = vunpack.c.l.b16 %v4691
        %v4735 = vunpack.c.l.b16 %v4694
        %v4736 = vunpack.c.l.b16 %v4698
        %v4737 = vunpack.c.l.b16 %v4701
        %v4738 = vunpack.c.l.b16 %v4705
        %v4739 = vunpack.c.l.b16 %v4708
        %v4740 = vunpack.c.l.b16 %v4712
        %v4741 = vunpack.c.l.b16 %v4715
        %v4742 = vunpack.c.l.b16 %v4719
        %v4743 = vunpack.c.l.b16 %v4722
        %v4744 = vunpack.c.l.b16 %v4726
        %v4745 = vunpack.c.l.b16 %v4729
        %v4746 = vpack.c.b16 %v4731, %v4730
        %v4747 = vpack.c.b16 %v4733, %v4732
        %v4748 = vpack.c.b16 %v4735, %v4734
        %v4749 = vpack.c.b16 %v4737, %v4736
        %v4750 = vpack.c.b16 %v4739, %v4738
        %v4751 = vpack.c.b16 %v4741, %v4740
        %v4752 = vpack.c.b16 %v4743, %v4742
        %v4753 = vpack.c.b16 %v4745, %v4744
        %4762 = vst [vmem:[#allocation4 + $0x10] sm:$0xff] %v4746
        %4763 = vst [vmem:[#allocation4 + $0x58] sm:$0xff] %v4747
        %4764 = vst [vmem:[#allocation4 + $0xa0] sm:$0xff] %v4748
        %4765 = vst [vmem:[#allocation4 + $0xe8] sm:$0xff] %v4749
        %4766 = vst [vmem:[#allocation4 + $0x130] sm:$0xff] %v4750
        %4767 = vst [vmem:[#allocation4 + $0x178] sm:$0xff] %v4751
        %4768 = vst [vmem:[#allocation4 + $0x1c0] sm:$0xff] %v4752
        %4769 = vst [vmem:[#allocation4 + $0x208] sm:$0xff] %v4753
        %s4770 = scalar_lea.vmem [#allocation3], 12
        %v4771 = vld [vmem:[%s4770] sm:$0xf]
        %v4772 = vld [vmem:[%s4770 + $0x4] sm:$0xf]
        %v4773 = vld [vmem:[%s4770 + $0xc] sm:$0xf]
        %v4774 = vld [vmem:[%s4770 + $0x10] sm:$0xf]
        %v4775 = vld [vmem:[%s4770 + $0x18] sm:$0xf]
        %v4776 = vld [vmem:[%s4770 + $0x1c] sm:$0xf]
        %v4777 = vld [vmem:[%s4770 + $0x24] sm:$0xf]
        %v4778 = vld [vmem:[%s4770 + $0x28] sm:$0xf]
        %v4779 = vld [vmem:[%s4770 + $0x30] sm:$0xf]
        %v4780 = vld [vmem:[%s4770 + $0x34] sm:$0xf]
        %v4781 = vld [vmem:[%s4770 + $0x3c] sm:$0xf]
        %v4782 = vld [vmem:[%s4770 + $0x40] sm:$0xf]
        %v4783 = vld [vmem:[%s4770 + $0x48] sm:$0xf]
        %v4784 = vld [vmem:[%s4770 + $0x4c] sm:$0xf]
        %v4785 = vld [vmem:[%s4770 + $0x54] sm:$0xf]
        %v4786 = vld [vmem:[%s4770 + $0x58] sm:$0xf]
        %v4803 = vunpack.c.l.b16 %v4771
        %v4804 = vunpack.c.l.b16 %v4772
        %v4805 = vunpack.c.l.b16 %v4773
        %v4806 = vunpack.c.l.b16 %v4774
        %v4807 = vunpack.c.l.b16 %v4775
        %v4808 = vunpack.c.l.b16 %v4776
        %v4809 = vunpack.c.l.b16 %v4777
        %v4810 = vunpack.c.l.b16 %v4778
        %v4811 = vunpack.c.l.b16 %v4779
        %v4812 = vunpack.c.l.b16 %v4780
        %v4813 = vunpack.c.l.b16 %v4781
        %v4814 = vunpack.c.l.b16 %v4782
        %v4815 = vunpack.c.l.b16 %v4783
        %v4816 = vunpack.c.l.b16 %v4784
        %v4817 = vunpack.c.l.b16 %v4785
        %v4818 = vunpack.c.l.b16 %v4786
        %v4819 = vpack.c.b16 %v4804, %v4803
        %v4820 = vpack.c.b16 %v4806, %v4805
        %v4821 = vpack.c.b16 %v4808, %v4807
        %v4822 = vpack.c.b16 %v4810, %v4809
        %v4823 = vpack.c.b16 %v4812, %v4811
        %v4824 = vpack.c.b16 %v4814, %v4813
        %v4825 = vpack.c.b16 %v4816, %v4815
        %v4826 = vpack.c.b16 %v4818, %v4817
        %4835 = vst [vmem:[#allocation4 + $0x18] sm:$0xff] %v4819
        %4836 = vst [vmem:[#allocation4 + $0x60] sm:$0xff] %v4820
        %4837 = vst [vmem:[#allocation4 + $0xa8] sm:$0xff] %v4821
        %4838 = vst [vmem:[#allocation4 + $0xf0] sm:$0xff] %v4822
        %4839 = vst [vmem:[#allocation4 + $0x138] sm:$0xff] %v4823
        %4840 = vst [vmem:[#allocation4 + $0x180] sm:$0xff] %v4824
        %4841 = vst [vmem:[#allocation4 + $0x1c8] sm:$0xff] %v4825
        %4842 = vst [vmem:[#allocation4 + $0x210] sm:$0xff] %v4826
        %v4843 = vld [vmem:[%s4770] sm:$0xf]
        %v4844 = vld [vmem:[%s4770 + $0x4] sm:$0xf]
        %v4845 = vld [vmem:[%s4770 + $0x8] sm:$0x1]
        %v4846 = vld [vmem:[%s4770 + $0xc] sm:$0xf]
        %v4847 = vld [vmem:[%s4770 + $0x10] sm:$0xf]
        %v4848 = vld [vmem:[%s4770 + $0x14] sm:$0x1]
        %v4849 = vld [vmem:[%s4770 + $0x18] sm:$0xf]
        %v4850 = vld [vmem:[%s4770 + $0x1c] sm:$0xf]
        %v4851 = vld [vmem:[%s4770 + $0x20] sm:$0x1]
        %v4852 = vld [vmem:[%s4770 + $0x24] sm:$0xf]
        %v4853 = vld [vmem:[%s4770 + $0x28] sm:$0xf]
        %v4854 = vld [vmem:[%s4770 + $0x2c] sm:$0x1]
        %v4855 = vld [vmem:[%s4770 + $0x30] sm:$0xf]
        %v4856 = vld [vmem:[%s4770 + $0x34] sm:$0xf]
        %v4857 = vld [vmem:[%s4770 + $0x38] sm:$0x1]
        %v4858 = vld [vmem:[%s4770 + $0x3c] sm:$0xf]
        %v4859 = vld [vmem:[%s4770 + $0x40] sm:$0xf]
        %v4860 = vld [vmem:[%s4770 + $0x44] sm:$0x1]
        %v4861 = vld [vmem:[%s4770 + $0x48] sm:$0xf]
        %v4862 = vld [vmem:[%s4770 + $0x4c] sm:$0xf]
        %v4863 = vld [vmem:[%s4770 + $0x50] sm:$0x1]
        %v4864 = vld [vmem:[%s4770 + $0x54] sm:$0xf]
        %v4865 = vld [vmem:[%s4770 + $0x58] sm:$0xf]
        %v4866 = vld [vmem:[%s4770 + $0x5c] sm:$0x1]
        %v4868 = vshrl.u32 %v4843, 16
        %v4870 = vrot.slane %v4868, 4
        %v4871 = vshll.u32 %v4843, 16
        %v4873 = vrot.slane %v4871, 5
        %v4874 = vor.u32 %v4870, %v4873
        %v4875 = vrot.slane %v4874, 4
        %v4877 = vshll.u32 %v4844, 16
        %v4879 = vrot.slane %v4877, 5
        %v4880 = vsel %vm930, %v4875, %v4879
        %v4881 = vshrl.u32 %v4844, 16
        %v4883 = vrot.slane %v4881, 4
        %v4884 = vor.u32 %v4883, %v4879
        %v4885 = vrot.slane %v4884, 4
        %v4887 = vshll.u32 %v4845, 16
        %v4889 = vrot.slane %v4887, 5
        %v4890 = vsel %vm930, %v4885, %v4889
        %v4892 = vshrl.u32 %v4846, 16
        %v4894 = vrot.slane %v4892, 4
        %v4895 = vshll.u32 %v4846, 16
        %v4897 = vrot.slane %v4895, 5
        %v4898 = vor.u32 %v4894, %v4897
        %v4899 = vrot.slane %v4898, 4
        %v4901 = vshll.u32 %v4847, 16
        %v4903 = vrot.slane %v4901, 5
        %v4904 = vsel %vm930, %v4899, %v4903
        %v4905 = vshrl.u32 %v4847, 16
        %v4907 = vrot.slane %v4905, 4
        %v4908 = vor.u32 %v4907, %v4903
        %v4909 = vrot.slane %v4908, 4
        %v4911 = vshll.u32 %v4848, 16
        %v4913 = vrot.slane %v4911, 5
        %v4914 = vsel %vm930, %v4909, %v4913
        %v4916 = vshrl.u32 %v4849, 16
        %v4918 = vrot.slane %v4916, 4
        %v4919 = vshll.u32 %v4849, 16
        %v4921 = vrot.slane %v4919, 5
        %v4922 = vor.u32 %v4918, %v4921
        %v4923 = vrot.slane %v4922, 4
        %v4925 = vshll.u32 %v4850, 16
        %v4927 = vrot.slane %v4925, 5
        %v4928 = vsel %vm930, %v4923, %v4927
        %v4929 = vshrl.u32 %v4850, 16
        %v4931 = vrot.slane %v4929, 4
        %v4932 = vor.u32 %v4931, %v4927
        %v4933 = vrot.slane %v4932, 4
        %v4935 = vshll.u32 %v4851, 16
        %v4937 = vrot.slane %v4935, 5
        %v4938 = vsel %vm930, %v4933, %v4937
        %v4940 = vshrl.u32 %v4852, 16
        %v4942 = vrot.slane %v4940, 4
        %v4943 = vshll.u32 %v4852, 16
        %v4945 = vrot.slane %v4943, 5
        %v4946 = vor.u32 %v4942, %v4945
        %v4947 = vrot.slane %v4946, 4
        %v4949 = vshll.u32 %v4853, 16
        %v4951 = vrot.slane %v4949, 5
        %v4952 = vsel %vm930, %v4947, %v4951
        %v4953 = vshrl.u32 %v4853, 16
        %v4955 = vrot.slane %v4953, 4
        %v4956 = vor.u32 %v4955, %v4951
        %v4957 = vrot.slane %v4956, 4
        %v4959 = vshll.u32 %v4854, 16
        %v4961 = vrot.slane %v4959, 5
        %v4962 = vsel %vm930, %v4957, %v4961
        %v4964 = vshrl.u32 %v4855, 16
        %v4966 = vrot.slane %v4964, 4
        %v4967 = vshll.u32 %v4855, 16
        %v4969 = vrot.slane %v4967, 5
        %v4970 = vor.u32 %v4966, %v4969
        %v4971 = vrot.slane %v4970, 4
        %v4973 = vshll.u32 %v4856, 16
        %v4975 = vrot.slane %v4973, 5
        %v4976 = vsel %vm930, %v4971, %v4975
        %v4977 = vshrl.u32 %v4856, 16
        %v4979 = vrot.slane %v4977, 4
        %v4980 = vor.u32 %v4979, %v4975
        %v4981 = vrot.slane %v4980, 4
        %v4983 = vshll.u32 %v4857, 16
        %v4985 = vrot.slane %v4983, 5
        %v4986 = vsel %vm930, %v4981, %v4985
        %v4988 = vshrl.u32 %v4858, 16
        %v4990 = vrot.slane %v4988, 4
        %v4991 = vshll.u32 %v4858, 16
        %v4993 = vrot.slane %v4991, 5
        %v4994 = vor.u32 %v4990, %v4993
        %v4995 = vrot.slane %v4994, 4
        %v4997 = vshll.u32 %v4859, 16
        %v4999 = vrot.slane %v4997, 5
        %v5000 = vsel %vm930, %v4995, %v4999
        %v5001 = vshrl.u32 %v4859, 16
        %v5003 = vrot.slane %v5001, 4
        %v5004 = vor.u32 %v5003, %v4999
        %v5005 = vrot.slane %v5004, 4
        %v5007 = vshll.u32 %v4860, 16
        %v5009 = vrot.slane %v5007, 5
        %v5010 = vsel %vm930, %v5005, %v5009
        %v5012 = vshrl.u32 %v4861, 16
        %v5014 = vrot.slane %v5012, 4
        %v5015 = vshll.u32 %v4861, 16
        %v5017 = vrot.slane %v5015, 5
        %v5018 = vor.u32 %v5014, %v5017
        %v5019 = vrot.slane %v5018, 4
        %v5021 = vshll.u32 %v4862, 16
        %v5023 = vrot.slane %v5021, 5
        %v5024 = vsel %vm930, %v5019, %v5023
        %v5025 = vshrl.u32 %v4862, 16
        %v5027 = vrot.slane %v5025, 4
        %v5028 = vor.u32 %v5027, %v5023
        %v5029 = vrot.slane %v5028, 4
        %v5031 = vshll.u32 %v4863, 16
        %v5033 = vrot.slane %v5031, 5
        %v5034 = vsel %vm930, %v5029, %v5033
        %v5036 = vshrl.u32 %v4864, 16
        %v5038 = vrot.slane %v5036, 4
        %v5039 = vshll.u32 %v4864, 16
        %v5041 = vrot.slane %v5039, 5
        %v5042 = vor.u32 %v5038, %v5041
        %v5043 = vrot.slane %v5042, 4
        %v5045 = vshll.u32 %v4865, 16
        %v5047 = vrot.slane %v5045, 5
        %v5048 = vsel %vm930, %v5043, %v5047
        %v5049 = vshrl.u32 %v4865, 16
        %v5051 = vrot.slane %v5049, 4
        %v5052 = vor.u32 %v5051, %v5047
        %v5053 = vrot.slane %v5052, 4
        %v5055 = vshll.u32 %v4866, 16
        %v5057 = vrot.slane %v5055, 5
        %v5058 = vsel %vm930, %v5053, %v5057
        %v5059 = vunpack.c.l.b16 %v4880
        %v5060 = vunpack.c.l.b16 %v4890
        %v5061 = vunpack.c.l.b16 %v4904
        %v5062 = vunpack.c.l.b16 %v4914
        %v5063 = vunpack.c.l.b16 %v4928
        %v5064 = vunpack.c.l.b16 %v4938
        %v5065 = vunpack.c.l.b16 %v4952
        %v5066 = vunpack.c.l.b16 %v4962
        %v5067 = vunpack.c.l.b16 %v4976
        %v5068 = vunpack.c.l.b16 %v4986
        %v5069 = vunpack.c.l.b16 %v5000
        %v5070 = vunpack.c.l.b16 %v5010
        %v5071 = vunpack.c.l.b16 %v5024
        %v5072 = vunpack.c.l.b16 %v5034
        %v5073 = vunpack.c.l.b16 %v5048
        %v5074 = vunpack.c.l.b16 %v5058
        %v5075 = vpack.c.b16 %v5060, %v5059
        %v5076 = vpack.c.b16 %v5062, %v5061
        %v5077 = vpack.c.b16 %v5064, %v5063
        %v5078 = vpack.c.b16 %v5066, %v5065
        %v5079 = vpack.c.b16 %v5068, %v5067
        %v5080 = vpack.c.b16 %v5070, %v5069
        %v5081 = vpack.c.b16 %v5072, %v5071
        %v5082 = vpack.c.b16 %v5074, %v5073
        %5091 = vst [vmem:[#allocation4 + $0x20] sm:$0xff] %v5075
        %5092 = vst [vmem:[#allocation4 + $0x68] sm:$0xff] %v5076
        %5093 = vst [vmem:[#allocation4 + $0xb0] sm:$0xff] %v5077
        %5094 = vst [vmem:[#allocation4 + $0xf8] sm:$0xff] %v5078
        %5095 = vst [vmem:[#allocation4 + $0x140] sm:$0xff] %v5079
        %5096 = vst [vmem:[#allocation4 + $0x188] sm:$0xff] %v5080
        %5097 = vst [vmem:[#allocation4 + $0x1d0] sm:$0xff] %v5081
        %5098 = vst [vmem:[#allocation4 + $0x218] sm:$0xff] %v5082
        %v5099 = vld [vmem:[%s4770] sm:$0xe]
        %v5100 = vld [vmem:[%s4770 + $0x4] sm:$0xf]
        %v5101 = vld [vmem:[%s4770 + $0x8] sm:$0x1]
        %v5102 = vld [vmem:[%s4770 + $0xc] sm:$0xe]
        %v5103 = vld [vmem:[%s4770 + $0x10] sm:$0xf]
        %v5104 = vld [vmem:[%s4770 + $0x14] sm:$0x1]
        %v5105 = vld [vmem:[%s4770 + $0x18] sm:$0xe]
        %v5106 = vld [vmem:[%s4770 + $0x1c] sm:$0xf]
        %v5107 = vld [vmem:[%s4770 + $0x20] sm:$0x1]
        %v5108 = vld [vmem:[%s4770 + $0x24] sm:$0xe]
        %v5109 = vld [vmem:[%s4770 + $0x28] sm:$0xf]
        %v5110 = vld [vmem:[%s4770 + $0x2c] sm:$0x1]
        %v5111 = vld [vmem:[%s4770 + $0x30] sm:$0xe]
        %v5112 = vld [vmem:[%s4770 + $0x34] sm:$0xf]
        %v5113 = vld [vmem:[%s4770 + $0x38] sm:$0x1]
        %v5114 = vld [vmem:[%s4770 + $0x3c] sm:$0xe]
        %v5115 = vld [vmem:[%s4770 + $0x40] sm:$0xf]
        %v5116 = vld [vmem:[%s4770 + $0x44] sm:$0x1]
        %v5117 = vld [vmem:[%s4770 + $0x48] sm:$0xe]
        %v5118 = vld [vmem:[%s4770 + $0x4c] sm:$0xf]
        %v5119 = vld [vmem:[%s4770 + $0x50] sm:$0x1]
        %v5120 = vld [vmem:[%s4770 + $0x54] sm:$0xe]
        %v5121 = vld [vmem:[%s4770 + $0x58] sm:$0xf]
        %v5122 = vld [vmem:[%s4770 + $0x5c] sm:$0x1]
        %v5147 = vrot.slane %v5099, 5
        %v5148 = vrot.slane %v5147, 4
        %v5149 = vrot.slane %v5100, 5
        %v5150 = vsel %vm1283, %v5148, %v5149
        %v5151 = vrot.slane %v5149, 4
        %v5152 = vrot.slane %v5101, 5
        %v5153 = vsel %vm1283, %v5151, %v5152
        %v5154 = vrot.slane %v5102, 5
        %v5155 = vrot.slane %v5154, 4
        %v5156 = vrot.slane %v5103, 5
        %v5157 = vsel %vm1283, %v5155, %v5156
        %v5158 = vrot.slane %v5156, 4
        %v5159 = vrot.slane %v5104, 5
        %v5160 = vsel %vm1283, %v5158, %v5159
        %v5161 = vrot.slane %v5105, 5
        %v5162 = vrot.slane %v5161, 4
        %v5163 = vrot.slane %v5106, 5
        %v5164 = vsel %vm1283, %v5162, %v5163
        %v5165 = vrot.slane %v5163, 4
        %v5166 = vrot.slane %v5107, 5
        %v5167 = vsel %vm1283, %v5165, %v5166
        %v5168 = vrot.slane %v5108, 5
        %v5169 = vrot.slane %v5168, 4
        %v5170 = vrot.slane %v5109, 5
        %v5171 = vsel %vm1283, %v5169, %v5170
        %v5172 = vrot.slane %v5170, 4
        %v5173 = vrot.slane %v5110, 5
        %v5174 = vsel %vm1283, %v5172, %v5173
        %v5175 = vrot.slane %v5111, 5
        %v5176 = vrot.slane %v5175, 4
        %v5177 = vrot.slane %v5112, 5
        %v5178 = vsel %vm1283, %v5176, %v5177
        %v5179 = vrot.slane %v5177, 4
        %v5180 = vrot.slane %v5113, 5
        %v5181 = vsel %vm1283, %v5179, %v5180
        %v5182 = vrot.slane %v5114, 5
        %v5183 = vrot.slane %v5182, 4
        %v5184 = vrot.slane %v5115, 5
        %v5185 = vsel %vm1283, %v5183, %v5184
        %v5186 = vrot.slane %v5184, 4
        %v5187 = vrot.slane %v5116, 5
        %v5188 = vsel %vm1283, %v5186, %v5187
        %v5189 = vrot.slane %v5117, 5
        %v5190 = vrot.slane %v5189, 4
        %v5191 = vrot.slane %v5118, 5
        %v5192 = vsel %vm1283, %v5190, %v5191
        %v5193 = vrot.slane %v5191, 4
        %v5194 = vrot.slane %v5119, 5
        %v5195 = vsel %vm1283, %v5193, %v5194
        %v5196 = vrot.slane %v5120, 5
        %v5197 = vrot.slane %v5196, 4
        %v5198 = vrot.slane %v5121, 5
        %v5199 = vsel %vm1283, %v5197, %v5198
        %v5200 = vrot.slane %v5198, 4
        %v5201 = vrot.slane %v5122, 5
        %v5202 = vsel %vm1283, %v5200, %v5201
        %v5203 = vunpack.c.l.b16 %v5150
        %v5204 = vunpack.c.l.b16 %v5153
        %v5205 = vunpack.c.l.b16 %v5157
        %v5206 = vunpack.c.l.b16 %v5160
        %v5207 = vunpack.c.l.b16 %v5164
        %v5208 = vunpack.c.l.b16 %v5167
        %v5209 = vunpack.c.l.b16 %v5171
        %v5210 = vunpack.c.l.b16 %v5174
        %v5211 = vunpack.c.l.b16 %v5178
        %v5212 = vunpack.c.l.b16 %v5181
        %v5213 = vunpack.c.l.b16 %v5185
        %v5214 = vunpack.c.l.b16 %v5188
        %v5215 = vunpack.c.l.b16 %v5192
        %v5216 = vunpack.c.l.b16 %v5195
        %v5217 = vunpack.c.l.b16 %v5199
        %v5218 = vunpack.c.l.b16 %v5202
        %v5219 = vpack.c.b16 %v5204, %v5203
        %v5220 = vpack.c.b16 %v5206, %v5205
        %v5221 = vpack.c.b16 %v5208, %v5207
        %v5222 = vpack.c.b16 %v5210, %v5209
        %v5223 = vpack.c.b16 %v5212, %v5211
        %v5224 = vpack.c.b16 %v5214, %v5213
        %v5225 = vpack.c.b16 %v5216, %v5215
        %v5226 = vpack.c.b16 %v5218, %v5217
        %5235 = vst [vmem:[#allocation4 + $0x28] sm:$0xff] %v5219
        %5236 = vst [vmem:[#allocation4 + $0x70] sm:$0xff] %v5220
        %5237 = vst [vmem:[#allocation4 + $0xb8] sm:$0xff] %v5221
        %5238 = vst [vmem:[#allocation4 + $0x100] sm:$0xff] %v5222
        %5239 = vst [vmem:[#allocation4 + $0x148] sm:$0xff] %v5223
        %5240 = vst [vmem:[#allocation4 + $0x190] sm:$0xff] %v5224
        %5241 = vst [vmem:[#allocation4 + $0x1d8] sm:$0xff] %v5225
        %5242 = vst [vmem:[#allocation4 + $0x220] sm:$0xff] %v5226
        %s5243 = scalar_lea.vmem [#allocation3], 24
        %v5244 = vld [vmem:[%s5243] sm:$0xf]
        %v5245 = vld [vmem:[%s5243 + $0x4] sm:$0xf]
        %v5246 = vld [vmem:[%s5243 + $0xc] sm:$0xf]
        %v5247 = vld [vmem:[%s5243 + $0x10] sm:$0xf]
        %v5248 = vld [vmem:[%s5243 + $0x18] sm:$0xf]
        %v5249 = vld [vmem:[%s5243 + $0x1c] sm:$0xf]
        %v5250 = vld [vmem:[%s5243 + $0x24] sm:$0xf]
        %v5251 = vld [vmem:[%s5243 + $0x28] sm:$0xf]
        %v5252 = vld [vmem:[%s5243 + $0x30] sm:$0xf]
        %v5253 = vld [vmem:[%s5243 + $0x34] sm:$0xf]
        %v5254 = vld [vmem:[%s5243 + $0x3c] sm:$0xf]
        %v5255 = vld [vmem:[%s5243 + $0x40] sm:$0xf]
        %v5256 = vld [vmem:[%s5243 + $0x48] sm:$0xf]
        %v5257 = vld [vmem:[%s5243 + $0x4c] sm:$0xf]
        %v5258 = vld [vmem:[%s5243 + $0x54] sm:$0xf]
        %v5259 = vld [vmem:[%s5243 + $0x58] sm:$0xf]
        %v5276 = vunpack.c.l.b16 %v5244
        %v5277 = vunpack.c.l.b16 %v5245
        %v5278 = vunpack.c.l.b16 %v5246
        %v5279 = vunpack.c.l.b16 %v5247
        %v5280 = vunpack.c.l.b16 %v5248
        %v5281 = vunpack.c.l.b16 %v5249
        %v5282 = vunpack.c.l.b16 %v5250
        %v5283 = vunpack.c.l.b16 %v5251
        %v5284 = vunpack.c.l.b16 %v5252
        %v5285 = vunpack.c.l.b16 %v5253
        %v5286 = vunpack.c.l.b16 %v5254
        %v5287 = vunpack.c.l.b16 %v5255
        %v5288 = vunpack.c.l.b16 %v5256
        %v5289 = vunpack.c.l.b16 %v5257
        %v5290 = vunpack.c.l.b16 %v5258
        %v5291 = vunpack.c.l.b16 %v5259
        %v5292 = vpack.c.b16 %v5277, %v5276
        %v5293 = vpack.c.b16 %v5279, %v5278
        %v5294 = vpack.c.b16 %v5281, %v5280
        %v5295 = vpack.c.b16 %v5283, %v5282
        %v5296 = vpack.c.b16 %v5285, %v5284
        %v5297 = vpack.c.b16 %v5287, %v5286
        %v5298 = vpack.c.b16 %v5289, %v5288
        %v5299 = vpack.c.b16 %v5291, %v5290
        %5308 = vst [vmem:[#allocation4 + $0x30] sm:$0xff] %v5292
        %5309 = vst [vmem:[#allocation4 + $0x78] sm:$0xff] %v5293
        %5310 = vst [vmem:[#allocation4 + $0xc0] sm:$0xff] %v5294
        %5311 = vst [vmem:[#allocation4 + $0x108] sm:$0xff] %v5295
        %5312 = vst [vmem:[#allocation4 + $0x150] sm:$0xff] %v5296
        %5313 = vst [vmem:[#allocation4 + $0x198] sm:$0xff] %v5297
        %5314 = vst [vmem:[#allocation4 + $0x1e0] sm:$0xff] %v5298
        %5315 = vst [vmem:[#allocation4 + $0x228] sm:$0xff] %v5299
        %v5316 = vld [vmem:[%s5243] sm:$0xf]
        %v5317 = vld [vmem:[%s5243 + $0x4] sm:$0xf]
        %v5318 = vld [vmem:[%s5243 + $0x8] sm:$0x1]
        %v5319 = vld [vmem:[%s5243 + $0xc] sm:$0xf]
        %v5320 = vld [vmem:[%s5243 + $0x10] sm:$0xf]
        %v5321 = vld [vmem:[%s5243 + $0x14] sm:$0x1]
        %v5322 = vld [vmem:[%s5243 + $0x18] sm:$0xf]
        %v5323 = vld [vmem:[%s5243 + $0x1c] sm:$0xf]
        %v5324 = vld [vmem:[%s5243 + $0x20] sm:$0x1]
        %v5325 = vld [vmem:[%s5243 + $0x24] sm:$0xf]
        %v5326 = vld [vmem:[%s5243 + $0x28] sm:$0xf]
        %v5327 = vld [vmem:[%s5243 + $0x2c] sm:$0x1]
        %v5328 = vld [vmem:[%s5243 + $0x30] sm:$0xf]
        %v5329 = vld [vmem:[%s5243 + $0x34] sm:$0xf]
        %v5330 = vld [vmem:[%s5243 + $0x38] sm:$0x1]
        %v5331 = vld [vmem:[%s5243 + $0x3c] sm:$0xf]
        %v5332 = vld [vmem:[%s5243 + $0x40] sm:$0xf]
        %v5333 = vld [vmem:[%s5243 + $0x44] sm:$0x1]
        %v5334 = vld [vmem:[%s5243 + $0x48] sm:$0xf]
        %v5335 = vld [vmem:[%s5243 + $0x4c] sm:$0xf]
        %v5336 = vld [vmem:[%s5243 + $0x50] sm:$0x1]
        %v5337 = vld [vmem:[%s5243 + $0x54] sm:$0xf]
        %v5338 = vld [vmem:[%s5243 + $0x58] sm:$0xf]
        %v5339 = vld [vmem:[%s5243 + $0x5c] sm:$0x1]
        %v5341 = vshrl.u32 %v5316, 16
        %v5343 = vrot.slane %v5341, 4
        %v5344 = vshll.u32 %v5316, 16
        %v5346 = vrot.slane %v5344, 5
        %v5347 = vor.u32 %v5343, %v5346
        %v5348 = vrot.slane %v5347, 4
        %v5350 = vshll.u32 %v5317, 16
        %v5352 = vrot.slane %v5350, 5
        %v5353 = vsel %vm930, %v5348, %v5352
        %v5354 = vshrl.u32 %v5317, 16
        %v5356 = vrot.slane %v5354, 4
        %v5357 = vor.u32 %v5356, %v5352
        %v5358 = vrot.slane %v5357, 4
        %v5360 = vshll.u32 %v5318, 16
        %v5362 = vrot.slane %v5360, 5
        %v5363 = vsel %vm930, %v5358, %v5362
        %v5365 = vshrl.u32 %v5319, 16
        %v5367 = vrot.slane %v5365, 4
        %v5368 = vshll.u32 %v5319, 16
        %v5370 = vrot.slane %v5368, 5
        %v5371 = vor.u32 %v5367, %v5370
        %v5372 = vrot.slane %v5371, 4
        %v5374 = vshll.u32 %v5320, 16
        %v5376 = vrot.slane %v5374, 5
        %v5377 = vsel %vm930, %v5372, %v5376
        %v5378 = vshrl.u32 %v5320, 16
        %v5380 = vrot.slane %v5378, 4
        %v5381 = vor.u32 %v5380, %v5376
        %v5382 = vrot.slane %v5381, 4
        %v5384 = vshll.u32 %v5321, 16
        %v5386 = vrot.slane %v5384, 5
        %v5387 = vsel %vm930, %v5382, %v5386
        %v5389 = vshrl.u32 %v5322, 16
        %v5391 = vrot.slane %v5389, 4
        %v5392 = vshll.u32 %v5322, 16
        %v5394 = vrot.slane %v5392, 5
        %v5395 = vor.u32 %v5391, %v5394
        %v5396 = vrot.slane %v5395, 4
        %v5398 = vshll.u32 %v5323, 16
        %v5400 = vrot.slane %v5398, 5
        %v5401 = vsel %vm930, %v5396, %v5400
        %v5402 = vshrl.u32 %v5323, 16
        %v5404 = vrot.slane %v5402, 4
        %v5405 = vor.u32 %v5404, %v5400
        %v5406 = vrot.slane %v5405, 4
        %v5408 = vshll.u32 %v5324, 16
        %v5410 = vrot.slane %v5408, 5
        %v5411 = vsel %vm930, %v5406, %v5410
        %v5413 = vshrl.u32 %v5325, 16
        %v5415 = vrot.slane %v5413, 4
        %v5416 = vshll.u32 %v5325, 16
        %v5418 = vrot.slane %v5416, 5
        %v5419 = vor.u32 %v5415, %v5418
        %v5420 = vrot.slane %v5419, 4
        %v5422 = vshll.u32 %v5326, 16
        %v5424 = vrot.slane %v5422, 5
        %v5425 = vsel %vm930, %v5420, %v5424
        %v5426 = vshrl.u32 %v5326, 16
        %v5428 = vrot.slane %v5426, 4
        %v5429 = vor.u32 %v5428, %v5424
        %v5430 = vrot.slane %v5429, 4
        %v5432 = vshll.u32 %v5327, 16
        %v5434 = vrot.slane %v5432, 5
        %v5435 = vsel %vm930, %v5430, %v5434
        %v5437 = vshrl.u32 %v5328, 16
        %v5439 = vrot.slane %v5437, 4
        %v5440 = vshll.u32 %v5328, 16
        %v5442 = vrot.slane %v5440, 5
        %v5443 = vor.u32 %v5439, %v5442
        %v5444 = vrot.slane %v5443, 4
        %v5446 = vshll.u32 %v5329, 16
        %v5448 = vrot.slane %v5446, 5
        %v5449 = vsel %vm930, %v5444, %v5448
        %v5450 = vshrl.u32 %v5329, 16
        %v5452 = vrot.slane %v5450, 4
        %v5453 = vor.u32 %v5452, %v5448
        %v5454 = vrot.slane %v5453, 4
        %v5456 = vshll.u32 %v5330, 16
        %v5458 = vrot.slane %v5456, 5
        %v5459 = vsel %vm930, %v5454, %v5458
        %v5461 = vshrl.u32 %v5331, 16
        %v5463 = vrot.slane %v5461, 4
        %v5464 = vshll.u32 %v5331, 16
        %v5466 = vrot.slane %v5464, 5
        %v5467 = vor.u32 %v5463, %v5466
        %v5468 = vrot.slane %v5467, 4
        %v5470 = vshll.u32 %v5332, 16
        %v5472 = vrot.slane %v5470, 5
        %v5473 = vsel %vm930, %v5468, %v5472
        %v5474 = vshrl.u32 %v5332, 16
        %v5476 = vrot.slane %v5474, 4
        %v5477 = vor.u32 %v5476, %v5472
        %v5478 = vrot.slane %v5477, 4
        %v5480 = vshll.u32 %v5333, 16
        %v5482 = vrot.slane %v5480, 5
        %v5483 = vsel %vm930, %v5478, %v5482
        %v5485 = vshrl.u32 %v5334, 16
        %v5487 = vrot.slane %v5485, 4
        %v5488 = vshll.u32 %v5334, 16
        %v5490 = vrot.slane %v5488, 5
        %v5491 = vor.u32 %v5487, %v5490
        %v5492 = vrot.slane %v5491, 4
        %v5494 = vshll.u32 %v5335, 16
        %v5496 = vrot.slane %v5494, 5
        %v5497 = vsel %vm930, %v5492, %v5496
        %v5498 = vshrl.u32 %v5335, 16
        %v5500 = vrot.slane %v5498, 4
        %v5501 = vor.u32 %v5500, %v5496
        %v5502 = vrot.slane %v5501, 4
        %v5504 = vshll.u32 %v5336, 16
        %v5506 = vrot.slane %v5504, 5
        %v5507 = vsel %vm930, %v5502, %v5506
        %v5509 = vshrl.u32 %v5337, 16
        %v5511 = vrot.slane %v5509, 4
        %v5512 = vshll.u32 %v5337, 16
        %v5514 = vrot.slane %v5512, 5
        %v5515 = vor.u32 %v5511, %v5514
        %v5516 = vrot.slane %v5515, 4
        %v5518 = vshll.u32 %v5338, 16
        %v5520 = vrot.slane %v5518, 5
        %v5521 = vsel %vm930, %v5516, %v5520
        %v5522 = vshrl.u32 %v5338, 16
        %v5524 = vrot.slane %v5522, 4
        %v5525 = vor.u32 %v5524, %v5520
        %v5526 = vrot.slane %v5525, 4
        %v5528 = vshll.u32 %v5339, 16
        %v5530 = vrot.slane %v5528, 5
        %v5531 = vsel %vm930, %v5526, %v5530
        %v5532 = vunpack.c.l.b16 %v5353
        %v5533 = vunpack.c.l.b16 %v5363
        %v5534 = vunpack.c.l.b16 %v5377
        %v5535 = vunpack.c.l.b16 %v5387
        %v5536 = vunpack.c.l.b16 %v5401
        %v5537 = vunpack.c.l.b16 %v5411
        %v5538 = vunpack.c.l.b16 %v5425
        %v5539 = vunpack.c.l.b16 %v5435
        %v5540 = vunpack.c.l.b16 %v5449
        %v5541 = vunpack.c.l.b16 %v5459
        %v5542 = vunpack.c.l.b16 %v5473
        %v5543 = vunpack.c.l.b16 %v5483
        %v5544 = vunpack.c.l.b16 %v5497
        %v5545 = vunpack.c.l.b16 %v5507
        %v5546 = vunpack.c.l.b16 %v5521
        %v5547 = vunpack.c.l.b16 %v5531
        %v5548 = vpack.c.b16 %v5533, %v5532
        %v5549 = vpack.c.b16 %v5535, %v5534
        %v5550 = vpack.c.b16 %v5537, %v5536
        %v5551 = vpack.c.b16 %v5539, %v5538
        %v5552 = vpack.c.b16 %v5541, %v5540
        %v5553 = vpack.c.b16 %v5543, %v5542
        %v5554 = vpack.c.b16 %v5545, %v5544
        %v5555 = vpack.c.b16 %v5547, %v5546
        %5564 = vst [vmem:[#allocation4 + $0x38] sm:$0xff] %v5548
        %5565 = vst [vmem:[#allocation4 + $0x80] sm:$0xff] %v5549
        %5566 = vst [vmem:[#allocation4 + $0xc8] sm:$0xff] %v5550
        %5567 = vst [vmem:[#allocation4 + $0x110] sm:$0xff] %v5551
        %5568 = vst [vmem:[#allocation4 + $0x158] sm:$0xff] %v5552
        %5569 = vst [vmem:[#allocation4 + $0x1a0] sm:$0xff] %v5553
        %5570 = vst [vmem:[#allocation4 + $0x1e8] sm:$0xff] %v5554
        %5571 = vst [vmem:[#allocation4 + $0x230] sm:$0xff] %v5555
        %v5572 = vld [vmem:[%s5243] sm:$0xe]
        %v5573 = vld [vmem:[%s5243 + $0x4] sm:$0xf]
        %v5574 = vld [vmem:[%s5243 + $0x8] sm:$0x1]
        %v5575 = vld [vmem:[%s5243 + $0xc] sm:$0xe]
        %v5576 = vld [vmem:[%s5243 + $0x10] sm:$0xf]
        %v5577 = vld [vmem:[%s5243 + $0x14] sm:$0x1]
        %v5578 = vld [vmem:[%s5243 + $0x18] sm:$0xe]
        %v5579 = vld [vmem:[%s5243 + $0x1c] sm:$0xf]
        %v5580 = vld [vmem:[%s5243 + $0x20] sm:$0x1]
        %v5581 = vld [vmem:[%s5243 + $0x24] sm:$0xe]
        %v5582 = vld [vmem:[%s5243 + $0x28] sm:$0xf]
        %v5583 = vld [vmem:[%s5243 + $0x2c] sm:$0x1]
        %v5584 = vld [vmem:[%s5243 + $0x30] sm:$0xe]
        %v5585 = vld [vmem:[%s5243 + $0x34] sm:$0xf]
        %v5586 = vld [vmem:[%s5243 + $0x38] sm:$0x1]
        %v5587 = vld [vmem:[%s5243 + $0x3c] sm:$0xe]
        %v5588 = vld [vmem:[%s5243 + $0x40] sm:$0xf]
        %v5589 = vld [vmem:[%s5243 + $0x44] sm:$0x1]
        %v5590 = vld [vmem:[%s5243 + $0x48] sm:$0xe]
        %v5591 = vld [vmem:[%s5243 + $0x4c] sm:$0xf]
        %v5592 = vld [vmem:[%s5243 + $0x50] sm:$0x1]
        %v5593 = vld [vmem:[%s5243 + $0x54] sm:$0xe]
        %v5594 = vld [vmem:[%s5243 + $0x58] sm:$0xf]
        %v5595 = vld [vmem:[%s5243 + $0x5c] sm:$0x1]
        %v5620 = vrot.slane %v5572, 5
        %v5621 = vrot.slane %v5620, 4
        %v5622 = vrot.slane %v5573, 5
        %v5623 = vsel %vm1283, %v5621, %v5622
        %v5624 = vrot.slane %v5622, 4
        %v5625 = vrot.slane %v5574, 5
        %v5626 = vsel %vm1283, %v5624, %v5625
        %v5627 = vrot.slane %v5575, 5
        %v5628 = vrot.slane %v5627, 4
        %v5629 = vrot.slane %v5576, 5
        %v5630 = vsel %vm1283, %v5628, %v5629
        %v5631 = vrot.slane %v5629, 4
        %v5632 = vrot.slane %v5577, 5
        %v5633 = vsel %vm1283, %v5631, %v5632
        %v5634 = vrot.slane %v5578, 5
        %v5635 = vrot.slane %v5634, 4
        %v5636 = vrot.slane %v5579, 5
        %v5637 = vsel %vm1283, %v5635, %v5636
        %v5638 = vrot.slane %v5636, 4
        %v5639 = vrot.slane %v5580, 5
        %v5640 = vsel %vm1283, %v5638, %v5639
        %v5641 = vrot.slane %v5581, 5
        %v5642 = vrot.slane %v5641, 4
        %v5643 = vrot.slane %v5582, 5
        %v5644 = vsel %vm1283, %v5642, %v5643
        %v5645 = vrot.slane %v5643, 4
        %v5646 = vrot.slane %v5583, 5
        %v5647 = vsel %vm1283, %v5645, %v5646
        %v5648 = vrot.slane %v5584, 5
        %v5649 = vrot.slane %v5648, 4
        %v5650 = vrot.slane %v5585, 5
        %v5651 = vsel %vm1283, %v5649, %v5650
        %v5652 = vrot.slane %v5650, 4
        %v5653 = vrot.slane %v5586, 5
        %v5654 = vsel %vm1283, %v5652, %v5653
        %v5655 = vrot.slane %v5587, 5
        %v5656 = vrot.slane %v5655, 4
        %v5657 = vrot.slane %v5588, 5
        %v5658 = vsel %vm1283, %v5656, %v5657
        %v5659 = vrot.slane %v5657, 4
        %v5660 = vrot.slane %v5589, 5
        %v5661 = vsel %vm1283, %v5659, %v5660
        %v5662 = vrot.slane %v5590, 5
        %v5663 = vrot.slane %v5662, 4
        %v5664 = vrot.slane %v5591, 5
        %v5665 = vsel %vm1283, %v5663, %v5664
        %v5666 = vrot.slane %v5664, 4
        %v5667 = vrot.slane %v5592, 5
        %v5668 = vsel %vm1283, %v5666, %v5667
        %v5669 = vrot.slane %v5593, 5
        %v5670 = vrot.slane %v5669, 4
        %v5671 = vrot.slane %v5594, 5
        %v5672 = vsel %vm1283, %v5670, %v5671
        %v5673 = vrot.slane %v5671, 4
        %v5674 = vrot.slane %v5595, 5
        %v5675 = vsel %vm1283, %v5673, %v5674
        %v5676 = vunpack.c.l.b16 %v5623
        %v5677 = vunpack.c.l.b16 %v5626
        %v5678 = vunpack.c.l.b16 %v5630
        %v5679 = vunpack.c.l.b16 %v5633
        %v5680 = vunpack.c.l.b16 %v5637
        %v5681 = vunpack.c.l.b16 %v5640
        %v5682 = vunpack.c.l.b16 %v5644
        %v5683 = vunpack.c.l.b16 %v5647
        %v5684 = vunpack.c.l.b16 %v5651
        %v5685 = vunpack.c.l.b16 %v5654
        %v5686 = vunpack.c.l.b16 %v5658
        %v5687 = vunpack.c.l.b16 %v5661
        %v5688 = vunpack.c.l.b16 %v5665
        %v5689 = vunpack.c.l.b16 %v5668
        %v5690 = vunpack.c.l.b16 %v5672
        %v5691 = vunpack.c.l.b16 %v5675
        %v5692 = vpack.c.b16 %v5677, %v5676
        %v5693 = vpack.c.b16 %v5679, %v5678
        %v5694 = vpack.c.b16 %v5681, %v5680
        %v5695 = vpack.c.b16 %v5683, %v5682
        %v5696 = vpack.c.b16 %v5685, %v5684
        %v5697 = vpack.c.b16 %v5687, %v5686
        %v5698 = vpack.c.b16 %v5689, %v5688
        %v5699 = vpack.c.b16 %v5691, %v5690
        %5708 = vst [vmem:[#allocation4 + $0x40] sm:$0xff] %v5692
        %5709 = vst [vmem:[#allocation4 + $0x88] sm:$0xff] %v5693
        %5710 = vst [vmem:[#allocation4 + $0xd0] sm:$0xff] %v5694
        %5711 = vst [vmem:[#allocation4 + $0x118] sm:$0xff] %v5695
        %5712 = vst [vmem:[#allocation4 + $0x160] sm:$0xff] %v5696
        %5713 = vst [vmem:[#allocation4 + $0x1a8] sm:$0xff] %v5697
        %5714 = vst [vmem:[#allocation4 + $0x1f0] sm:$0xff] %v5698
        %5715 = vst [vmem:[#allocation4 + $0x238] sm:$0xff] %v5699
        %v5716 = vld [vmem:[#allocation4] sm:$0xff]
        %v5717 = vld [vmem:[#allocation4 + $0x8] sm:$0xff]
        %v5718 = vld [vmem:[#allocation4 + $0x10] sm:$0xff]
        %v5719 = vld [vmem:[#allocation4 + $0x18] sm:$0xff]
        %v5720 = vld [vmem:[#allocation4 + $0x20] sm:$0xff]
        %v5721 = vld [vmem:[#allocation4 + $0x28] sm:$0xff]
        %v5722 = vld [vmem:[#allocation4 + $0x30] sm:$0xff]
        %v5723 = vld [vmem:[#allocation4 + $0x38] sm:$0xff]
        %v5724 = vld [vmem:[#allocation4 + $0x40] sm:$0xff]
        %v5725 = vld [vmem:[#allocation4 + $0x48] sm:$0xff]
        %v5726 = vld [vmem:[#allocation4 + $0x50] sm:$0xff]
        %v5727 = vld [vmem:[#allocation4 + $0x58] sm:$0xff]
        %v5728 = vld [vmem:[#allocation4 + $0x60] sm:$0xff]
        %v5729 = vld [vmem:[#allocation4 + $0x68] sm:$0xff]
        %v5730 = vld [vmem:[#allocation4 + $0x70] sm:$0xff]
        %v5731 = vld [vmem:[#allocation4 + $0x78] sm:$0xff]
        %v5732 = vld [vmem:[#allocation4 + $0x80] sm:$0xff]
        %v5733 = vld [vmem:[#allocation4 + $0x88] sm:$0xff]
        %v5734 = vld [vmem:[#allocation4 + $0x90] sm:$0xff]
        %v5735 = vld [vmem:[#allocation4 + $0x98] sm:$0xff]
        %v5736 = vld [vmem:[#allocation4 + $0xa0] sm:$0xff]
        %v5737 = vld [vmem:[#allocation4 + $0xa8] sm:$0xff]
        %v5738 = vld [vmem:[#allocation4 + $0xb0] sm:$0xff]
        %v5739 = vld [vmem:[#allocation4 + $0xb8] sm:$0xff]
        %v5740 = vld [vmem:[#allocation4 + $0xc0] sm:$0xff]
        %v5741 = vld [vmem:[#allocation4 + $0xc8] sm:$0xff]
        %v5742 = vld [vmem:[#allocation4 + $0xd0] sm:$0xff]
        %v5743 = vld [vmem:[#allocation4 + $0xd8] sm:$0xff]
        %v5744 = vld [vmem:[#allocation4 + $0xe0] sm:$0xff]
        %v5745 = vld [vmem:[#allocation4 + $0xe8] sm:$0xff]
        %v5746 = vld [vmem:[#allocation4 + $0xf0] sm:$0xff]
        %v5747 = vld [vmem:[#allocation4 + $0xf8] sm:$0xff]
        %v5748 = vld [vmem:[#allocation4 + $0x100] sm:$0xff]
        %v5749 = vld [vmem:[#allocation4 + $0x108] sm:$0xff]
        %v5750 = vld [vmem:[#allocation4 + $0x110] sm:$0xff]
        %v5751 = vld [vmem:[#allocation4 + $0x118] sm:$0xff]
        %v5752 = vld [vmem:[#allocation4 + $0x120] sm:$0xff]
        %v5753 = vld [vmem:[#allocation4 + $0x128] sm:$0xff]
        %v5754 = vld [vmem:[#allocation4 + $0x130] sm:$0xff]
        %v5755 = vld [vmem:[#allocation4 + $0x138] sm:$0xff]
        %v5756 = vld [vmem:[#allocation4 + $0x140] sm:$0xff]
        %v5757 = vld [vmem:[#allocation4 + $0x148] sm:$0xff]
        %v5758 = vld [vmem:[#allocation4 + $0x150] sm:$0xff]
        %v5759 = vld [vmem:[#allocation4 + $0x158] sm:$0xff]
        %v5760 = vld [vmem:[#allocation4 + $0x160] sm:$0xff]
        %v5761 = vld [vmem:[#allocation4 + $0x168] sm:$0xff]
        %v5762 = vld [vmem:[#allocation4 + $0x170] sm:$0xff]
        %v5763 = vld [vmem:[#allocation4 + $0x178] sm:$0xff]
        %v5764 = vld [vmem:[#allocation4 + $0x180] sm:$0xff]
        %v5765 = vld [vmem:[#allocation4 + $0x188] sm:$0xff]
        %v5766 = vld [vmem:[#allocation4 + $0x190] sm:$0xff]
        %v5767 = vld [vmem:[#allocation4 + $0x198] sm:$0xff]
        %v5768 = vld [vmem:[#allocation4 + $0x1a0] sm:$0xff]
        %v5769 = vld [vmem:[#allocation4 + $0x1a8] sm:$0xff]
        %v5770 = vld [vmem:[#allocation4 + $0x1b0] sm:$0xff]
        %v5771 = vld [vmem:[#allocation4 + $0x1b8] sm:$0xff]
        %v5772 = vld [vmem:[#allocation4 + $0x1c0] sm:$0xff]
        %v5773 = vld [vmem:[#allocation4 + $0x1c8] sm:$0xff]
        %v5774 = vld [vmem:[#allocation4 + $0x1d0] sm:$0xff]
        %v5775 = vld [vmem:[#allocation4 + $0x1d8] sm:$0xff]
        %v5776 = vld [vmem:[#allocation4 + $0x1e0] sm:$0xff]
        %v5777 = vld [vmem:[#allocation4 + $0x1e8] sm:$0xff]
        %v5778 = vld [vmem:[#allocation4 + $0x1f0] sm:$0xff]
        %v5779 = vld [vmem:[#allocation4 + $0x1f8] sm:$0xff]
        %v5780 = vld [vmem:[#allocation4 + $0x200] sm:$0xff]
        %v5781 = vld [vmem:[#allocation4 + $0x208] sm:$0xff]
        %v5782 = vld [vmem:[#allocation4 + $0x210] sm:$0xff]
        %v5783 = vld [vmem:[#allocation4 + $0x218] sm:$0xff]
        %v5784 = vld [vmem:[#allocation4 + $0x220] sm:$0xff]
        %v5785 = vld [vmem:[#allocation4 + $0x228] sm:$0xff]
        %v5786 = vld [vmem:[#allocation4 + $0x230] sm:$0xff]
        %v5787 = vld [vmem:[#allocation4 + $0x238] sm:$0xff]
        %s5788 = scalar_lea.vmem [#allocation8], 576
        %v5789 = vld [vmem:[%s5788] sm:$0xf]
        %v5790 = vld [vmem:[%s5788 + $0x4] sm:$0xf]
        %v5791 = vld [vmem:[%s5788 + $0x8] sm:$0xf]
        %v5792 = vld [vmem:[%s5788 + $0xc] sm:$0xf]
        %v5793 = vld [vmem:[%s5788 + $0x10] sm:$0xf]
        %v5794 = vld [vmem:[%s5788 + $0x14] sm:$0xf]
        %v5795 = vld [vmem:[%s5788 + $0x18] sm:$0xf]
        %v5796 = vld [vmem:[%s5788 + $0x1c] sm:$0xf]
        %v5797 = vld [vmem:[%s5788 + $0x20] sm:$0xf]
        %v5798 = vld [vmem:[%s5788 + $0x24] sm:$0xf]
        %v5799 = vld [vmem:[%s5788 + $0x28] sm:$0xf]
        %v5800 = vld [vmem:[%s5788 + $0x2c] sm:$0xf]
        %v5801 = vld [vmem:[%s5788 + $0x30] sm:$0xf]
        %v5802 = vld [vmem:[%s5788 + $0x34] sm:$0xf]
        %v5803 = vld [vmem:[%s5788 + $0x38] sm:$0xf]
        %v5804 = vld [vmem:[%s5788 + $0x3c] sm:$0xf]
        %v5805 = vld [vmem:[%s5788 + $0x40] sm:$0xf]
        %v5806 = vld [vmem:[%s5788 + $0x44] sm:$0xf]
        %v5807 = vld [vmem:[%s5788 + $0x48] sm:$0xf]
        %v5808 = vld [vmem:[%s5788 + $0x4c] sm:$0xf]
        %v5809 = vld [vmem:[%s5788 + $0x50] sm:$0xf]
        %v5810 = vld [vmem:[%s5788 + $0x54] sm:$0xf]
        %v5811 = vld [vmem:[%s5788 + $0x58] sm:$0xf]
        %v5812 = vld [vmem:[%s5788 + $0x5c] sm:$0xf]
        %v5813 = vld [vmem:[%s5788 + $0x60] sm:$0xf]
        %v5814 = vld [vmem:[%s5788 + $0x64] sm:$0xf]
        %v5815 = vld [vmem:[%s5788 + $0x68] sm:$0xf]
        %v5816 = vld [vmem:[%s5788 + $0x6c] sm:$0xf]
        %v5817 = vld [vmem:[%s5788 + $0x70] sm:$0xf]
        %v5818 = vld [vmem:[%s5788 + $0x74] sm:$0xf]
        %v5819 = vld [vmem:[%s5788 + $0x78] sm:$0xf]
        %v5820 = vld [vmem:[%s5788 + $0x7c] sm:$0xf]
        %v5821 = vld [vmem:[%s5788 + $0x80] sm:$0xf]
        %v5822 = vld [vmem:[%s5788 + $0x84] sm:$0xf]
        %v5823 = vld [vmem:[%s5788 + $0x88] sm:$0xf]
        %v5824 = vld [vmem:[%s5788 + $0x8c] sm:$0xf]
        %v5825 = vld [vmem:[%s5788 + $0x90] sm:$0xf]
        %v5826 = vld [vmem:[%s5788 + $0x94] sm:$0xf]
        %v5827 = vld [vmem:[%s5788 + $0x98] sm:$0xf]
        %v5828 = vld [vmem:[%s5788 + $0x9c] sm:$0xf]
        %v5829 = vld [vmem:[%s5788 + $0xa0] sm:$0xf]
        %v5830 = vld [vmem:[%s5788 + $0xa4] sm:$0xf]
        %v5831 = vld [vmem:[%s5788 + $0xa8] sm:$0xf]
        %v5832 = vld [vmem:[%s5788 + $0xac] sm:$0xf]
        %v5833 = vld [vmem:[%s5788 + $0xb0] sm:$0xf]
        %v5834 = vld [vmem:[%s5788 + $0xb4] sm:$0xf]
        %v5835 = vld [vmem:[%s5788 + $0xb8] sm:$0xf]
        %v5836 = vld [vmem:[%s5788 + $0xbc] sm:$0xf]
        %v5837 = vld [vmem:[%s5788 + $0xc0] sm:$0xf]
        %v5838 = vld [vmem:[%s5788 + $0xc4] sm:$0xf]
        %v5839 = vld [vmem:[%s5788 + $0xc8] sm:$0xf]
        %v5840 = vld [vmem:[%s5788 + $0xcc] sm:$0xf]
        %v5841 = vld [vmem:[%s5788 + $0xd0] sm:$0xf]
        %v5842 = vld [vmem:[%s5788 + $0xd4] sm:$0xf]
        %v5843 = vld [vmem:[%s5788 + $0xd8] sm:$0xf]
        %v5844 = vld [vmem:[%s5788 + $0xdc] sm:$0xf]
        %v5845 = vld [vmem:[%s5788 + $0xe0] sm:$0xf]
        %v5846 = vld [vmem:[%s5788 + $0xe4] sm:$0xf]
        %v5847 = vld [vmem:[%s5788 + $0xe8] sm:$0xf]
        %v5848 = vld [vmem:[%s5788 + $0xec] sm:$0xf]
        %v5849 = vld [vmem:[%s5788 + $0xf0] sm:$0xf]
        %v5850 = vld [vmem:[%s5788 + $0xf4] sm:$0xf]
        %v5851 = vld [vmem:[%s5788 + $0xf8] sm:$0xf]
        %v5852 = vld [vmem:[%s5788 + $0xfc] sm:$0xf]
        %v5853 = vld [vmem:[%s5788 + $0x100] sm:$0xf]
        %v5854 = vld [vmem:[%s5788 + $0x104] sm:$0xf]
        %v5855 = vld [vmem:[%s5788 + $0x108] sm:$0xf]
        %v5856 = vld [vmem:[%s5788 + $0x10c] sm:$0xf]
        %v5857 = vld [vmem:[%s5788 + $0x110] sm:$0xf]
        %v5858 = vld [vmem:[%s5788 + $0x114] sm:$0xf]
        %v5859 = vld [vmem:[%s5788 + $0x118] sm:$0xf]
        %v5860 = vld [vmem:[%s5788 + $0x11c] sm:$0xf]
        %v5861 = vld [vmem:[%s5788 + $0x120] sm:$0xf]
        %v5862 = vld [vmem:[%s5788 + $0x124] sm:$0xf]
        %v5863 = vld [vmem:[%s5788 + $0x128] sm:$0xf]
        %v5864 = vld [vmem:[%s5788 + $0x12c] sm:$0xf]
        %v5865 = vld [vmem:[%s5788 + $0x130] sm:$0xf]
        %v5866 = vld [vmem:[%s5788 + $0x134] sm:$0xf]
        %v5867 = vld [vmem:[%s5788 + $0x138] sm:$0xf]
        %v5868 = vld [vmem:[%s5788 + $0x13c] sm:$0xf]
        %v5869 = vld [vmem:[%s5788 + $0x140] sm:$0xf]
        %v5870 = vld [vmem:[%s5788 + $0x144] sm:$0xf]
        %v5871 = vld [vmem:[%s5788 + $0x148] sm:$0xf]
        %v5872 = vld [vmem:[%s5788 + $0x14c] sm:$0xf]
        %v5873 = vld [vmem:[%s5788 + $0x150] sm:$0xf]
        %v5874 = vld [vmem:[%s5788 + $0x154] sm:$0xf]
        %v5875 = vld [vmem:[%s5788 + $0x158] sm:$0xf]
        %v5876 = vld [vmem:[%s5788 + $0x15c] sm:$0xf]
        %v5877 = vld [vmem:[%s5788 + $0x160] sm:$0xf]
        %v5878 = vld [vmem:[%s5788 + $0x164] sm:$0xf]
        %v5879 = vld [vmem:[%s5788 + $0x168] sm:$0xf]
        %v5880 = vld [vmem:[%s5788 + $0x16c] sm:$0xf]
        %v5881 = vld [vmem:[%s5788 + $0x170] sm:$0xf]
        %v5882 = vld [vmem:[%s5788 + $0x174] sm:$0xf]
        %v5883 = vld [vmem:[%s5788 + $0x178] sm:$0xf]
        %v5884 = vld [vmem:[%s5788 + $0x17c] sm:$0xf]
        %v5885 = vld [vmem:[%s5788 + $0x180] sm:$0xf]
        %v5886 = vld [vmem:[%s5788 + $0x184] sm:$0xf]
        %v5887 = vld [vmem:[%s5788 + $0x188] sm:$0xf]
        %v5888 = vld [vmem:[%s5788 + $0x18c] sm:$0xf]
        %v5889 = vld [vmem:[%s5788 + $0x190] sm:$0xf]
        %v5890 = vld [vmem:[%s5788 + $0x194] sm:$0xf]
        %v5891 = vld [vmem:[%s5788 + $0x198] sm:$0xf]
        %v5892 = vld [vmem:[%s5788 + $0x19c] sm:$0xf]
        %v5893 = vld [vmem:[%s5788 + $0x1a0] sm:$0xf]
        %v5894 = vld [vmem:[%s5788 + $0x1a4] sm:$0xf]
        %v5895 = vld [vmem:[%s5788 + $0x1a8] sm:$0xf]
        %v5896 = vld [vmem:[%s5788 + $0x1ac] sm:$0xf]
        %v5897 = vld [vmem:[%s5788 + $0x1b0] sm:$0xf]
        %v5898 = vld [vmem:[%s5788 + $0x1b4] sm:$0xf]
        %v5899 = vld [vmem:[%s5788 + $0x1b8] sm:$0xf]
        %v5900 = vld [vmem:[%s5788 + $0x1bc] sm:$0xf]
        %v5901 = vld [vmem:[%s5788 + $0x1c0] sm:$0xf]
        %v5902 = vld [vmem:[%s5788 + $0x1c4] sm:$0xf]
        %v5903 = vld [vmem:[%s5788 + $0x1c8] sm:$0xf]
        %v5904 = vld [vmem:[%s5788 + $0x1cc] sm:$0xf]
        %v5905 = vld [vmem:[%s5788 + $0x1d0] sm:$0xf]
        %v5906 = vld [vmem:[%s5788 + $0x1d4] sm:$0xf]
        %v5907 = vld [vmem:[%s5788 + $0x1d8] sm:$0xf]
        %v5908 = vld [vmem:[%s5788 + $0x1dc] sm:$0xf]
        %v5909 = vld [vmem:[%s5788 + $0x1e0] sm:$0xf]
        %v5910 = vld [vmem:[%s5788 + $0x1e4] sm:$0xf]
        %v5911 = vld [vmem:[%s5788 + $0x1e8] sm:$0xf]
        %v5912 = vld [vmem:[%s5788 + $0x1ec] sm:$0xf]
        %v5913 = vld [vmem:[%s5788 + $0x1f0] sm:$0xf]
        %v5914 = vld [vmem:[%s5788 + $0x1f4] sm:$0xf]
        %v5915 = vld [vmem:[%s5788 + $0x1f8] sm:$0xf]
        %v5916 = vld [vmem:[%s5788 + $0x1fc] sm:$0xf]
        %v5917 = vld [vmem:[%s5788 + $0x200] sm:$0xf]
        %v5918 = vld [vmem:[%s5788 + $0x204] sm:$0xf]
        %v5919 = vld [vmem:[%s5788 + $0x208] sm:$0xf]
        %v5920 = vld [vmem:[%s5788 + $0x20c] sm:$0xf]
        %v5921 = vld [vmem:[%s5788 + $0x210] sm:$0xf]
        %v5922 = vld [vmem:[%s5788 + $0x214] sm:$0xf]
        %v5923 = vld [vmem:[%s5788 + $0x218] sm:$0xf]
        %v5924 = vld [vmem:[%s5788 + $0x21c] sm:$0xf]
        %v5925 = vld [vmem:[%s5788 + $0x220] sm:$0xf]
        %v5926 = vld [vmem:[%s5788 + $0x224] sm:$0xf]
        %v5927 = vld [vmem:[%s5788 + $0x228] sm:$0xf]
        %v5928 = vld [vmem:[%s5788 + $0x22c] sm:$0xf]
        %v5929 = vld [vmem:[%s5788 + $0x230] sm:$0xf]
        %v5930 = vld [vmem:[%s5788 + $0x234] sm:$0xf]
        %v5931 = vld [vmem:[%s5788 + $0x238] sm:$0xf]
        %v5932 = vld [vmem:[%s5788 + $0x23c] sm:$0xf]
        %v6077 = vunpack.c.l.b16 %v5789
        %v6078 = vunpack.c.l.b16 %v5790
        %v6079 = vunpack.c.l.b16 %v5791
        %v6080 = vunpack.c.l.b16 %v5792
        %v6081 = vunpack.c.l.b16 %v5793
        %v6082 = vunpack.c.l.b16 %v5794
        %v6083 = vunpack.c.l.b16 %v5795
        %v6084 = vunpack.c.l.b16 %v5796
        %v6085 = vunpack.c.l.b16 %v5797
        %v6086 = vunpack.c.l.b16 %v5798
        %v6087 = vunpack.c.l.b16 %v5799
        %v6088 = vunpack.c.l.b16 %v5800
        %v6089 = vunpack.c.l.b16 %v5801
        %v6090 = vunpack.c.l.b16 %v5802
        %v6091 = vunpack.c.l.b16 %v5803
        %v6092 = vunpack.c.l.b16 %v5804
        %v6093 = vunpack.c.l.b16 %v5805
        %v6094 = vunpack.c.l.b16 %v5806
        %v6095 = vunpack.c.l.b16 %v5807
        %v6096 = vunpack.c.l.b16 %v5808
        %v6097 = vunpack.c.l.b16 %v5809
        %v6098 = vunpack.c.l.b16 %v5810
        %v6099 = vunpack.c.l.b16 %v5811
        %v6100 = vunpack.c.l.b16 %v5812
        %v6101 = vunpack.c.l.b16 %v5813
        %v6102 = vunpack.c.l.b16 %v5814
        %v6103 = vunpack.c.l.b16 %v5815
        %v6104 = vunpack.c.l.b16 %v5816
        %v6105 = vunpack.c.l.b16 %v5817
        %v6106 = vunpack.c.l.b16 %v5818
        %v6107 = vunpack.c.l.b16 %v5819
        %v6108 = vunpack.c.l.b16 %v5820
        %v6109 = vunpack.c.l.b16 %v5821
        %v6110 = vunpack.c.l.b16 %v5822
        %v6111 = vunpack.c.l.b16 %v5823
        %v6112 = vunpack.c.l.b16 %v5824
        %v6113 = vunpack.c.l.b16 %v5825
        %v6114 = vunpack.c.l.b16 %v5826
        %v6115 = vunpack.c.l.b16 %v5827
        %v6116 = vunpack.c.l.b16 %v5828
        %v6117 = vunpack.c.l.b16 %v5829
        %v6118 = vunpack.c.l.b16 %v5830
        %v6119 = vunpack.c.l.b16 %v5831
        %v6120 = vunpack.c.l.b16 %v5832
        %v6121 = vunpack.c.l.b16 %v5833
        %v6122 = vunpack.c.l.b16 %v5834
        %v6123 = vunpack.c.l.b16 %v5835
        %v6124 = vunpack.c.l.b16 %v5836
        %v6125 = vunpack.c.l.b16 %v5837
        %v6126 = vunpack.c.l.b16 %v5838
        %v6127 = vunpack.c.l.b16 %v5839
        %v6128 = vunpack.c.l.b16 %v5840
        %v6129 = vunpack.c.l.b16 %v5841
        %v6130 = vunpack.c.l.b16 %v5842
        %v6131 = vunpack.c.l.b16 %v5843
        %v6132 = vunpack.c.l.b16 %v5844
        %v6133 = vunpack.c.l.b16 %v5845
        %v6134 = vunpack.c.l.b16 %v5846
        %v6135 = vunpack.c.l.b16 %v5847
        %v6136 = vunpack.c.l.b16 %v5848
        %v6137 = vunpack.c.l.b16 %v5849
        %v6138 = vunpack.c.l.b16 %v5850
        %v6139 = vunpack.c.l.b16 %v5851
        %v6140 = vunpack.c.l.b16 %v5852
        %v6141 = vunpack.c.l.b16 %v5853
        %v6142 = vunpack.c.l.b16 %v5854
        %v6143 = vunpack.c.l.b16 %v5855
        %v6144 = vunpack.c.l.b16 %v5856
        %v6145 = vunpack.c.l.b16 %v5857
        %v6146 = vunpack.c.l.b16 %v5858
        %v6147 = vunpack.c.l.b16 %v5859
        %v6148 = vunpack.c.l.b16 %v5860
        %v6149 = vunpack.c.l.b16 %v5861
        %v6150 = vunpack.c.l.b16 %v5862
        %v6151 = vunpack.c.l.b16 %v5863
        %v6152 = vunpack.c.l.b16 %v5864
        %v6153 = vunpack.c.l.b16 %v5865
        %v6154 = vunpack.c.l.b16 %v5866
        %v6155 = vunpack.c.l.b16 %v5867
        %v6156 = vunpack.c.l.b16 %v5868
        %v6157 = vunpack.c.l.b16 %v5869
        %v6158 = vunpack.c.l.b16 %v5870
        %v6159 = vunpack.c.l.b16 %v5871
        %v6160 = vunpack.c.l.b16 %v5872
        %v6161 = vunpack.c.l.b16 %v5873
        %v6162 = vunpack.c.l.b16 %v5874
        %v6163 = vunpack.c.l.b16 %v5875
        %v6164 = vunpack.c.l.b16 %v5876
        %v6165 = vunpack.c.l.b16 %v5877
        %v6166 = vunpack.c.l.b16 %v5878
        %v6167 = vunpack.c.l.b16 %v5879
        %v6168 = vunpack.c.l.b16 %v5880
        %v6169 = vunpack.c.l.b16 %v5881
        %v6170 = vunpack.c.l.b16 %v5882
        %v6171 = vunpack.c.l.b16 %v5883
        %v6172 = vunpack.c.l.b16 %v5884
        %v6173 = vunpack.c.l.b16 %v5885
        %v6174 = vunpack.c.l.b16 %v5886
        %v6175 = vunpack.c.l.b16 %v5887
        %v6176 = vunpack.c.l.b16 %v5888
        %v6177 = vunpack.c.l.b16 %v5889
        %v6178 = vunpack.c.l.b16 %v5890
        %v6179 = vunpack.c.l.b16 %v5891
        %v6180 = vunpack.c.l.b16 %v5892
        %v6181 = vunpack.c.l.b16 %v5893
        %v6182 = vunpack.c.l.b16 %v5894
        %v6183 = vunpack.c.l.b16 %v5895
        %v6184 = vunpack.c.l.b16 %v5896
        %v6185 = vunpack.c.l.b16 %v5897
        %v6186 = vunpack.c.l.b16 %v5898
        %v6187 = vunpack.c.l.b16 %v5899
        %v6188 = vunpack.c.l.b16 %v5900
        %v6189 = vunpack.c.l.b16 %v5901
        %v6190 = vunpack.c.l.b16 %v5902
        %v6191 = vunpack.c.l.b16 %v5903
        %v6192 = vunpack.c.l.b16 %v5904
        %v6193 = vunpack.c.l.b16 %v5905
        %v6194 = vunpack.c.l.b16 %v5906
        %v6195 = vunpack.c.l.b16 %v5907
        %v6196 = vunpack.c.l.b16 %v5908
        %v6197 = vunpack.c.l.b16 %v5909
        %v6198 = vunpack.c.l.b16 %v5910
        %v6199 = vunpack.c.l.b16 %v5911
        %v6200 = vunpack.c.l.b16 %v5912
        %v6201 = vunpack.c.l.b16 %v5913
        %v6202 = vunpack.c.l.b16 %v5914
        %v6203 = vunpack.c.l.b16 %v5915
        %v6204 = vunpack.c.l.b16 %v5916
        %v6205 = vunpack.c.l.b16 %v5917
        %v6206 = vunpack.c.l.b16 %v5918
        %v6207 = vunpack.c.l.b16 %v5919
        %v6208 = vunpack.c.l.b16 %v5920
        %v6209 = vunpack.c.l.b16 %v5921
        %v6210 = vunpack.c.l.b16 %v5922
        %v6211 = vunpack.c.l.b16 %v5923
        %v6212 = vunpack.c.l.b16 %v5924
        %v6213 = vunpack.c.l.b16 %v5925
        %v6214 = vunpack.c.l.b16 %v5926
        %v6215 = vunpack.c.l.b16 %v5927
        %v6216 = vunpack.c.l.b16 %v5928
        %v6217 = vunpack.c.l.b16 %v5929
        %v6218 = vunpack.c.l.b16 %v5930
        %v6219 = vunpack.c.l.b16 %v5931
        %v6220 = vunpack.c.l.b16 %v5932
        %v6221 = vpack.c.b16 %v6078, %v6077
        %v6222 = vpack.c.b16 %v6080, %v6079
        %v6223 = vpack.c.b16 %v6082, %v6081
        %v6224 = vpack.c.b16 %v6084, %v6083
        %v6225 = vpack.c.b16 %v6086, %v6085
        %v6226 = vpack.c.b16 %v6088, %v6087
        %v6227 = vpack.c.b16 %v6090, %v6089
        %v6228 = vpack.c.b16 %v6092, %v6091
        %v6229 = vpack.c.b16 %v6094, %v6093
        %v6230 = vpack.c.b16 %v6096, %v6095
        %v6231 = vpack.c.b16 %v6098, %v6097
        %v6232 = vpack.c.b16 %v6100, %v6099
        %v6233 = vpack.c.b16 %v6102, %v6101
        %v6234 = vpack.c.b16 %v6104, %v6103
        %v6235 = vpack.c.b16 %v6106, %v6105
        %v6236 = vpack.c.b16 %v6108, %v6107
        %v6237 = vpack.c.b16 %v6110, %v6109
        %v6238 = vpack.c.b16 %v6112, %v6111
        %v6239 = vpack.c.b16 %v6114, %v6113
        %v6240 = vpack.c.b16 %v6116, %v6115
        %v6241 = vpack.c.b16 %v6118, %v6117
        %v6242 = vpack.c.b16 %v6120, %v6119
        %v6243 = vpack.c.b16 %v6122, %v6121
        %v6244 = vpack.c.b16 %v6124, %v6123
        %v6245 = vpack.c.b16 %v6126, %v6125
        %v6246 = vpack.c.b16 %v6128, %v6127
        %v6247 = vpack.c.b16 %v6130, %v6129
        %v6248 = vpack.c.b16 %v6132, %v6131
        %v6249 = vpack.c.b16 %v6134, %v6133
        %v6250 = vpack.c.b16 %v6136, %v6135
        %v6251 = vpack.c.b16 %v6138, %v6137
        %v6252 = vpack.c.b16 %v6140, %v6139
        %v6253 = vpack.c.b16 %v6142, %v6141
        %v6254 = vpack.c.b16 %v6144, %v6143
        %v6255 = vpack.c.b16 %v6146, %v6145
        %v6256 = vpack.c.b16 %v6148, %v6147
        %v6257 = vpack.c.b16 %v6150, %v6149
        %v6258 = vpack.c.b16 %v6152, %v6151
        %v6259 = vpack.c.b16 %v6154, %v6153
        %v6260 = vpack.c.b16 %v6156, %v6155
        %v6261 = vpack.c.b16 %v6158, %v6157
        %v6262 = vpack.c.b16 %v6160, %v6159
        %v6263 = vpack.c.b16 %v6162, %v6161
        %v6264 = vpack.c.b16 %v6164, %v6163
        %v6265 = vpack.c.b16 %v6166, %v6165
        %v6266 = vpack.c.b16 %v6168, %v6167
        %v6267 = vpack.c.b16 %v6170, %v6169
        %v6268 = vpack.c.b16 %v6172, %v6171
        %v6269 = vpack.c.b16 %v6174, %v6173
        %v6270 = vpack.c.b16 %v6176, %v6175
        %v6271 = vpack.c.b16 %v6178, %v6177
        %v6272 = vpack.c.b16 %v6180, %v6179
        %v6273 = vpack.c.b16 %v6182, %v6181
        %v6274 = vpack.c.b16 %v6184, %v6183
        %v6275 = vpack.c.b16 %v6186, %v6185
        %v6276 = vpack.c.b16 %v6188, %v6187
        %v6277 = vpack.c.b16 %v6190, %v6189
        %v6278 = vpack.c.b16 %v6192, %v6191
        %v6279 = vpack.c.b16 %v6194, %v6193
        %v6280 = vpack.c.b16 %v6196, %v6195
        %v6281 = vpack.c.b16 %v6198, %v6197
        %v6282 = vpack.c.b16 %v6200, %v6199
        %v6283 = vpack.c.b16 %v6202, %v6201
        %v6284 = vpack.c.b16 %v6204, %v6203
        %v6285 = vpack.c.b16 %v6206, %v6205
        %v6286 = vpack.c.b16 %v6208, %v6207
        %v6287 = vpack.c.b16 %v6210, %v6209
        %v6288 = vpack.c.b16 %v6212, %v6211
        %v6289 = vpack.c.b16 %v6214, %v6213
        %v6290 = vpack.c.b16 %v6216, %v6215
        %v6291 = vpack.c.b16 %v6218, %v6217
        %v6292 = vpack.c.b16 %v6220, %v6219
        %6365 = vmatprep.subr.bf16.mxu0 0
        %6366 = vmatpush1.bf16.msra.mxu0 %v6221
        %6367 = vmatprep.subr.bf16.mxu0 0
        %6368 = vmatpush1.bf16.msra.mxu0 %v6222
        %6369 = vmatprep.subr.bf16.mxu0 0
        %6370 = vmatpush1.bf16.msra.mxu0 %v6223
        %6371 = vmatprep.subr.bf16.mxu0 0
        %6372 = vmatpush1.bf16.msra.mxu0 %v6224
        %6373 = vmatprep.subr.bf16.mxu0 0
        %6374 = vmatpush1.bf16.msra.mxu0 %v6225
        %6375 = vmatprep.subr.bf16.mxu0 0
        %6376 = vmatpush1.bf16.msra.mxu0 %v6226
        %6377 = vmatprep.subr.bf16.mxu0 0
        %6378 = vmatpush1.bf16.msra.mxu0 %v6227
        %6379 = vmatprep.subr.bf16.mxu0 0
        %6380 = vmatpush1.bf16.msra.mxu0 %v6228
        %6381 = vmatprep.subr.bf16.mxu0 0
        %6382 = vmatpush1.bf16.msra.mxu0 %v6229
        %6383 = vmatprep.subr.bf16.mxu0 0
        %6384 = vmatpush1.bf16.msra.mxu0 %v6230
        %6385 = vmatprep.subr.bf16.mxu0 0
        %6386 = vmatpush1.bf16.msra.mxu0 %v6231
        %6387 = vmatprep.subr.bf16.mxu0 0
        %6388 = vmatpush1.bf16.msra.mxu0 %v6232
        %6389 = vmatprep.subr.bf16.mxu0 0
        %6390 = vmatpush1.bf16.msra.mxu0 %v6233
        %6391 = vmatprep.subr.bf16.mxu0 0
        %6392 = vmatpush1.bf16.msra.mxu0 %v6234
        %6393 = vmatprep.subr.bf16.mxu0 0
        %6394 = vmatpush1.bf16.msra.mxu0 %v6235
        %6395 = vmatprep.subr.bf16.mxu0 0
        %6396 = vmatpush1.bf16.msra.mxu0 %v6236
        %6397 = vmatprep.mubr.bf16.mxu0 %v5717
        %6398 = vmatmul.mubr.bf16.gmra.mrb[0].mxu0 %v5716
        %v6399 = vpop.f32.mrb[0].mxu0
        %v6400 = vadd.f32 0.0, %v6399
        %v6401 = vpop.f32.mrb[0].mxu0
        %v6402 = vpop.f32.mrb[0].mxu0
        %v6403 = vadd.f32 0.0, %v6402
        %v6404 = vpop.f32.mrb[0].mxu0
        %6405 = vmatprep.mubr.bf16.mxu0 %v5726
        %6406 = vmatmul.mubr.bf16.gmra.mrb[0].mxu0 %v5725
        %v6407 = vpop.f32.mrb[0].mxu0
        %v6408 = vadd.f32 0.0, %v6407
        %v6409 = vpop.f32.mrb[0].mxu0
        %v6410 = vpop.f32.mrb[0].mxu0
        %v6411 = vadd.f32 0.0, %v6410
        %v6412 = vpop.f32.mrb[0].mxu0
        %6413 = vmatprep.mubr.bf16.mxu0 %v5735
        %6414 = vmatmul.mubr.bf16.gmra.mrb[0].mxu0 %v5734
        %v6415 = vpop.f32.mrb[0].mxu0
        %v6416 = vadd.f32 0.0, %v6415
        %v6417 = vpop.f32.mrb[0].mxu0
        %v6418 = vpop.f32.mrb[0].mxu0
        %v6419 = vadd.f32 0.0, %v6418
        %v6420 = vpop.f32.mrb[0].mxu0
        %6421 = vmatprep.mubr.bf16.mxu0 %v5744
        %6422 = vmatmul.mubr.bf16.gmra.mrb[0].mxu0 %v5743
        %v6423 = vpop.f32.mrb[0].mxu0
        %v6424 = vadd.f32 0.0, %v6423
        %v6425 = vpop.f32.mrb[0].mxu0
        %v6426 = vpop.f32.mrb[0].mxu0
        %v6427 = vadd.f32 0.0, %v6426
        %v6428 = vpop.f32.mrb[0].mxu0
        %6429 = vmatprep.mubr.bf16.mxu0 %v5753
        %6430 = vmatmul.mubr.bf16.gmra.mrb[0].mxu0 %v5752
        %v6431 = vpop.f32.mrb[0].mxu0
        %v6432 = vadd.f32 0.0, %v6431
        %v6433 = vpop.f32.mrb[0].mxu0
        %v6434 = vpop.f32.mrb[0].mxu0
        %v6435 = vadd.f32 0.0, %v6434
        %v6436 = vpop.f32.mrb[0].mxu0
        %6437 = vmatprep.mubr.bf16.mxu0 %v5762
        %6438 = vmatmul.mubr.bf16.gmra.mrb[0].mxu0 %v5761
        %v6439 = vpop.f32.mrb[0].mxu0
        %v6440 = vadd.f32 0.0, %v6439
        %v6441 = vpop.f32.mrb[0].mxu0
        %v6442 = vpop.f32.mrb[0].mxu0
        %v6443 = vadd.f32 0.0, %v6442
        %v6444 = vpop.f32.mrb[0].mxu0
        %6445 = vmatprep.mubr.bf16.mxu0 %v5771
        %6446 = vmatmul.mubr.bf16.gmra.mrb[0].mxu0 %v5770
        %v6447 = vpop.f32.mrb[0].mxu0
        %v6448 = vadd.f32 0.0, %v6447
        %v6449 = vpop.f32.mrb[0].mxu0
        %v6450 = vpop.f32.mrb[0].mxu0
        %v6451 = vadd.f32 0.0, %v6450
        %v6452 = vpop.f32.mrb[0].mxu0
        %6453 = vmatprep.mubr.bf16.mxu0 %v5780
        %6454 = vmatmul.mubr.bf16.gmra.mrb[0].mxu0 %v5779
        %v6455 = vpop.f32.mrb[0].mxu0
        %v6456 = vadd.f32 0.0, %v6455
        %v6457 = vpop.f32.mrb[0].mxu0
        %v6458 = vpop.f32.mrb[0].mxu0
        %v6459 = vadd.f32 0.0, %v6458
        %v6460 = vpop.f32.mrb[0].mxu0
        %6461 = vdwg.mxu0
        %6462 = vmatprep.subr.bf16.mxu0 0
        %6463 = vmatpush1.bf16.msra.mxu0 %v6237
        %6464 = vmatprep.subr.bf16.mxu0 0
        %6465 = vmatpush1.bf16.msra.mxu0 %v6238
        %6466 = vmatprep.subr.bf16.mxu0 0
        %6467 = vmatpush1.bf16.msra.mxu0 %v6239
        %6468 = vmatprep.subr.bf16.mxu0 0
        %6469 = vmatpush1.bf16.msra.mxu0 %v6240
        %6470 = vmatprep.subr.bf16.mxu0 0
        %6471 = vmatpush1.bf16.msra.mxu0 %v6241
        %6472 = vmatprep.subr.bf16.mxu0 0
        %6473 = vmatpush1.bf16.msra.mxu0 %v6242
        %6474 = vmatprep.subr.bf16.mxu0 0
        %6475 = vmatpush1.bf16.msra.mxu0 %v6243
        %6476 = vmatprep.subr.bf16.mxu0 0
        %6477 = vmatpush1.bf16.msra.mxu0 %v6244
        %6478 = vmatprep.subr.bf16.mxu0 0
        %6479 = vmatpush1.bf16.msra.mxu0 %v6245
        %6480 = vmatprep.subr.bf16.mxu0 0
        %6481 = vmatpush1.bf16.msra.mxu0 %v6246
        %6482 = vmatprep.subr.bf16.mxu0 0
        %6483 = vmatpush1.bf16.msra.mxu0 %v6247
        %6484 = vmatprep.subr.bf16.mxu0 0
        %6485 = vmatpush1.bf16.msra.mxu0 %v6248
        %6486 = vmatprep.subr.bf16.mxu0 0
        %6487 = vmatpush1.bf16.msra.mxu0 %v6249
        %6488 = vmatprep.subr.bf16.mxu0 0
        %6489 = vmatpush1.bf16.msra.mxu0 %v6250
        %6490 = vmatprep.subr.bf16.mxu0 0
        %6491 = vmatpush1.bf16.msra.mxu0 %v6251
        %6492 = vmatprep.subr.bf16.mxu0 0
        %6493 = vmatpush1.bf16.msra.mxu0 %v6252
        %6494 = vmatprep.mubr.bf16.mxu0 %v5719
        %6495 = vmatmul.mubr.bf16.gmra.mrb[0].mxu0 %v5718
        %v6496 = vpop.f32.mrb[0].mxu0
        %v6497 = vadd.f32 %v6400, %v6496
        %v6498 = vpop.f32.mrb[0].mxu0
        %v6499 = vpop.f32.mrb[0].mxu0
        %v6500 = vadd.f32 %v6403, %v6499
        %v6501 = vpop.f32.mrb[0].mxu0
        %6502 = vmatprep.mubr.bf16.mxu0 %v5728
        %6503 = vmatmul.mubr.bf16.gmra.mrb[0].mxu0 %v5727
        %v6504 = vpop.f32.mrb[0].mxu0
        %v6505 = vadd.f32 %v6408, %v6504
        %v6506 = vpop.f32.mrb[0].mxu0
        %v6507 = vpop.f32.mrb[0].mxu0
        %v6508 = vadd.f32 %v6411, %v6507
        %v6509 = vpop.f32.mrb[0].mxu0
        %6510 = vmatprep.mubr.bf16.mxu0 %v5737
        %6511 = vmatmul.mubr.bf16.gmra.mrb[0].mxu0 %v5736
        %v6512 = vpop.f32.mrb[0].mxu0
        %v6513 = vadd.f32 %v6416, %v6512
        %v6514 = vpop.f32.mrb[0].mxu0
        %v6515 = vpop.f32.mrb[0].mxu0
        %v6516 = vadd.f32 %v6419, %v6515
        %v6517 = vpop.f32.mrb[0].mxu0
        %6518 = vmatprep.mubr.bf16.mxu0 %v5746
        %6519 = vmatmul.mubr.bf16.gmra.mrb[0].mxu0 %v5745
        %v6520 = vpop.f32.mrb[0].mxu0
        %v6521 = vadd.f32 %v6424, %v6520
        %v6522 = vpop.f32.mrb[0].mxu0
        %v6523 = vpop.f32.mrb[0].mxu0
        %v6524 = vadd.f32 %v6427, %v6523
        %v6525 = vpop.f32.mrb[0].mxu0
        %6526 = vmatprep.mubr.bf16.mxu0 %v5755
        %6527 = vmatmul.mubr.bf16.gmra.mrb[0].mxu0 %v5754
        %v6528 = vpop.f32.mrb[0].mxu0
        %v6529 = vadd.f32 %v6432, %v6528
        %v6530 = vpop.f32.mrb[0].mxu0
        %v6531 = vpop.f32.mrb[0].mxu0
        %v6532 = vadd.f32 %v6435, %v6531
        %v6533 = vpop.f32.mrb[0].mxu0
        %6534 = vmatprep.mubr.bf16.mxu0 %v5764
        %6535 = vmatmul.mubr.bf16.gmra.mrb[0].mxu0 %v5763
        %v6536 = vpop.f32.mrb[0].mxu0
        %v6537 = vadd.f32 %v6440, %v6536
        %v6538 = vpop.f32.mrb[0].mxu0
        %v6539 = vpop.f32.mrb[0].mxu0
        %v6540 = vadd.f32 %v6443, %v6539
        %v6541 = vpop.f32.mrb[0].mxu0
        %6542 = vmatprep.mubr.bf16.mxu0 %v5773
        %6543 = vmatmul.mubr.bf16.gmra.mrb[0].mxu0 %v5772
        %v6544 = vpop.f32.mrb[0].mxu0
        %v6545 = vadd.f32 %v6448, %v6544
        %v6546 = vpop.f32.mrb[0].mxu0
        %v6547 = vpop.f32.mrb[0].mxu0
        %v6548 = vadd.f32 %v6451, %v6547
        %v6549 = vpop.f32.mrb[0].mxu0
        %6550 = vmatprep.mubr.bf16.mxu0 %v5782
        %6551 = vmatmul.mubr.bf16.gmra.mrb[0].mxu0 %v5781
        %v6552 = vpop.f32.mrb[0].mxu0
        %v6553 = vadd.f32 %v6456, %v6552
        %v6554 = vpop.f32.mrb[0].mxu0
        %v6555 = vpop.f32.mrb[0].mxu0
        %v6556 = vadd.f32 %v6459, %v6555
        %v6557 = vpop.f32.mrb[0].mxu0
        %6558 = vdwg.mxu0
        %6559 = vmatprep.subr.bf16.mxu0 0
        %6560 = vmatpush1.bf16.msra.mxu0 %v6253
        %6561 = vmatprep.subr.bf16.mxu0 0
        %6562 = vmatpush1.bf16.msra.mxu0 %v6254
        %6563 = vmatprep.subr.bf16.mxu0 0
        %6564 = vmatpush1.bf16.msra.mxu0 %v6255
        %6565 = vmatprep.subr.bf16.mxu0 0
        %6566 = vmatpush1.bf16.msra.mxu0 %v6256
        %6567 = vmatprep.subr.bf16.mxu0 0
        %6568 = vmatpush1.bf16.msra.mxu0 %v6257
        %6569 = vmatprep.subr.bf16.mxu0 0
        %6570 = vmatpush1.bf16.msra.mxu0 %v6258
        %6571 = vmatprep.subr.bf16.mxu0 0
        %6572 = vmatpush1.bf16.msra.mxu0 %v6259
        %6573 = vmatprep.subr.bf16.mxu0 0
        %6574 = vmatpush1.bf16.msra.mxu0 %v6260
        %6575 = vmatprep.subr.bf16.mxu0 0
        %6576 = vmatpush1.bf16.msra.mxu0 %v6261
        %6577 = vmatprep.subr.bf16.mxu0 0
        %6578 = vmatpush1.bf16.msra.mxu0 %v6262
        %6579 = vmatprep.subr.bf16.mxu0 0
        %6580 = vmatpush1.bf16.msra.mxu0 %v6263
        %6581 = vmatprep.subr.bf16.mxu0 0
        %6582 = vmatpush1.bf16.msra.mxu0 %v6264
        %6583 = vmatprep.subr.bf16.mxu0 0
        %6584 = vmatpush1.bf16.msra.mxu0 %v6265
        %6585 = vmatprep.subr.bf16.mxu0 0
        %6586 = vmatpush1.bf16.msra.mxu0 %v6266
        %6587 = vmatprep.subr.bf16.mxu0 0
        %6588 = vmatpush1.bf16.msra.mxu0 %v6267
        %6589 = vmatprep.subr.bf16.mxu0 0
        %6590 = vmatpush1.bf16.msra.mxu0 %v6268
        %6591 = vmatprep.mubr.bf16.mxu0 %v5721
        %6592 = vmatmul.mubr.bf16.gmra.mrb[0].mxu0 %v5720
        %v6593 = vpop.f32.mrb[0].mxu0
        %v6594 = vadd.f32 %v6497, %v6593
        %v6595 = vpop.f32.mrb[0].mxu0
        %v6596 = vpop.f32.mrb[0].mxu0
        %v6597 = vadd.f32 %v6500, %v6596
        %v6598 = vpop.f32.mrb[0].mxu0
        %6599 = vmatprep.mubr.bf16.mxu0 %v5730
        %6600 = vmatmul.mubr.bf16.gmra.mrb[0].mxu0 %v5729
        %v6601 = vpop.f32.mrb[0].mxu0
        %v6602 = vadd.f32 %v6505, %v6601
        %v6603 = vpop.f32.mrb[0].mxu0
        %v6604 = vpop.f32.mrb[0].mxu0
        %v6605 = vadd.f32 %v6508, %v6604
        %v6606 = vpop.f32.mrb[0].mxu0
        %6607 = vmatprep.mubr.bf16.mxu0 %v5739
        %6608 = vmatmul.mubr.bf16.gmra.mrb[0].mxu0 %v5738
        %v6609 = vpop.f32.mrb[0].mxu0
        %v6610 = vadd.f32 %v6513, %v6609
        %v6611 = vpop.f32.mrb[0].mxu0
        %v6612 = vpop.f32.mrb[0].mxu0
        %v6613 = vadd.f32 %v6516, %v6612
        %v6614 = vpop.f32.mrb[0].mxu0
        %6615 = vmatprep.mubr.bf16.mxu0 %v5748
        %6616 = vmatmul.mubr.bf16.gmra.mrb[0].mxu0 %v5747
        %v6617 = vpop.f32.mrb[0].mxu0
        %v6618 = vadd.f32 %v6521, %v6617
        %v6619 = vpop.f32.mrb[0].mxu0
        %v6620 = vpop.f32.mrb[0].mxu0
        %v6621 = vadd.f32 %v6524, %v6620
        %v6622 = vpop.f32.mrb[0].mxu0
        %6623 = vmatprep.mubr.bf16.mxu0 %v5757
        %6624 = vmatmul.mubr.bf16.gmra.mrb[0].mxu0 %v5756
        %v6625 = vpop.f32.mrb[0].mxu0
        %v6626 = vadd.f32 %v6529, %v6625
        %v6627 = vpop.f32.mrb[0].mxu0
        %v6628 = vpop.f32.mrb[0].mxu0
        %v6629 = vadd.f32 %v6532, %v6628
        %v6630 = vpop.f32.mrb[0].mxu0
        %6631 = vmatprep.mubr.bf16.mxu0 %v5766
        %6632 = vmatmul.mubr.bf16.gmra.mrb[0].mxu0 %v5765
        %v6633 = vpop.f32.mrb[0].mxu0
        %v6634 = vadd.f32 %v6537, %v6633
        %v6635 = vpop.f32.mrb[0].mxu0
        %v6636 = vpop.f32.mrb[0].mxu0
        %v6637 = vadd.f32 %v6540, %v6636
        %v6638 = vpop.f32.mrb[0].mxu0
        %6639 = vmatprep.mubr.bf16.mxu0 %v5775
        %6640 = vmatmul.mubr.bf16.gmra.mrb[0].mxu0 %v5774
        %v6641 = vpop.f32.mrb[0].mxu0
        %v6642 = vadd.f32 %v6545, %v6641
        %v6643 = vpop.f32.mrb[0].mxu0
        %v6644 = vpop.f32.mrb[0].mxu0
        %v6645 = vadd.f32 %v6548, %v6644
        %v6646 = vpop.f32.mrb[0].mxu0
        %6647 = vmatprep.mubr.bf16.mxu0 %v5784
        %6648 = vmatmul.mubr.bf16.gmra.mrb[0].mxu0 %v5783
        %v6649 = vpop.f32.mrb[0].mxu0
        %v6650 = vadd.f32 %v6553, %v6649
        %v6651 = vpop.f32.mrb[0].mxu0
        %v6652 = vpop.f32.mrb[0].mxu0
        %v6653 = vadd.f32 %v6556, %v6652
        %v6654 = vpop.f32.mrb[0].mxu0
        %6655 = vdwg.mxu0
        %6656 = vmatprep.subr.bf16.mxu0 0
        %6657 = vmatpush1.bf16.msra.mxu0 %v6269
        %6658 = vmatprep.subr.bf16.mxu0 0
        %6659 = vmatpush1.bf16.msra.mxu0 %v6270
        %6660 = vmatprep.subr.bf16.mxu0 0
        %6661 = vmatpush1.bf16.msra.mxu0 %v6271
        %6662 = vmatprep.subr.bf16.mxu0 0
        %6663 = vmatpush1.bf16.msra.mxu0 %v6272
        %6664 = vmatprep.subr.bf16.mxu0 0
        %6665 = vmatpush1.bf16.msra.mxu0 %v6273
        %6666 = vmatprep.subr.bf16.mxu0 0
        %6667 = vmatpush1.bf16.msra.mxu0 %v6274
        %6668 = vmatprep.subr.bf16.mxu0 0
        %6669 = vmatpush1.bf16.msra.mxu0 %v6275
        %6670 = vmatprep.subr.bf16.mxu0 0
        %6671 = vmatpush1.bf16.msra.mxu0 %v6276
        %6672 = vmatprep.subr.bf16.mxu0 0
        %6673 = vmatpush1.bf16.msra.mxu0 %v6277
        %6674 = vmatprep.subr.bf16.mxu0 0
        %6675 = vmatpush1.bf16.msra.mxu0 %v6278
        %6676 = vmatprep.subr.bf16.mxu0 0
        %6677 = vmatpush1.bf16.msra.mxu0 %v6279
        %6678 = vmatprep.subr.bf16.mxu0 0
        %6679 = vmatpush1.bf16.msra.mxu0 %v6280
        %6680 = vmatprep.subr.bf16.mxu0 0
        %6681 = vmatpush1.bf16.msra.mxu0 %v6281
        %6682 = vmatprep.subr.bf16.mxu0 0
        %6683 = vmatpush1.bf16.msra.mxu0 %v6282
        %6684 = vmatprep.subr.bf16.mxu0 0
        %6685 = vmatpush1.bf16.msra.mxu0 %v6283
        %6686 = vmatprep.subr.bf16.mxu0 0
        %6687 = vmatpush1.bf16.msra.mxu0 %v6284
        %6688 = vmatprep.mubr.bf16.mxu0 %v5723
        %6689 = vmatmul.mubr.bf16.gmra.mrb[0].mxu0 %v5722
        %v6690 = vpop.f32.mrb[0].mxu0
        %v6691 = vadd.f32 %v6594, %v6690
        %v6692 = vpop.f32.mrb[0].mxu0
        %v6693 = vpop.f32.mrb[0].mxu0
        %v6694 = vadd.f32 %v6597, %v6693
        %v6695 = vpop.f32.mrb[0].mxu0
        %6696 = vmatprep.mubr.bf16.mxu0 %v5732
        %6697 = vmatmul.mubr.bf16.gmra.mrb[0].mxu0 %v5731
        %v6698 = vpop.f32.mrb[0].mxu0
        %v6699 = vadd.f32 %v6602, %v6698
        %v6700 = vpop.f32.mrb[0].mxu0
        %v6701 = vpop.f32.mrb[0].mxu0
        %v6702 = vadd.f32 %v6605, %v6701
        %v6703 = vpop.f32.mrb[0].mxu0
        %6704 = vmatprep.mubr.bf16.mxu0 %v5741
        %6705 = vmatmul.mubr.bf16.gmra.mrb[0].mxu0 %v5740
        %v6706 = vpop.f32.mrb[0].mxu0
        %v6707 = vadd.f32 %v6610, %v6706
        %v6708 = vpop.f32.mrb[0].mxu0
        %v6709 = vpop.f32.mrb[0].mxu0
        %v6710 = vadd.f32 %v6613, %v6709
        %v6711 = vpop.f32.mrb[0].mxu0
        %6712 = vmatprep.mubr.bf16.mxu0 %v5750
        %6713 = vmatmul.mubr.bf16.gmra.mrb[0].mxu0 %v5749
        %v6714 = vpop.f32.mrb[0].mxu0
        %v6715 = vadd.f32 %v6618, %v6714
        %v6716 = vpop.f32.mrb[0].mxu0
        %v6717 = vpop.f32.mrb[0].mxu0
        %v6718 = vadd.f32 %v6621, %v6717
        %v6719 = vpop.f32.mrb[0].mxu0
        %6720 = vmatprep.mubr.bf16.mxu0 %v5759
        %6721 = vmatmul.mubr.bf16.gmra.mrb[0].mxu0 %v5758
        %v6722 = vpop.f32.mrb[0].mxu0
        %v6723 = vadd.f32 %v6626, %v6722
        %v6724 = vpop.f32.mrb[0].mxu0
        %v6725 = vpop.f32.mrb[0].mxu0
        %v6726 = vadd.f32 %v6629, %v6725
        %v6727 = vpop.f32.mrb[0].mxu0
        %6728 = vmatprep.mubr.bf16.mxu0 %v5768
        %6729 = vmatmul.mubr.bf16.gmra.mrb[0].mxu0 %v5767
        %v6730 = vpop.f32.mrb[0].mxu0
        %v6731 = vadd.f32 %v6634, %v6730
        %v6732 = vpop.f32.mrb[0].mxu0
        %v6733 = vpop.f32.mrb[0].mxu0
        %v6734 = vadd.f32 %v6637, %v6733
        %v6735 = vpop.f32.mrb[0].mxu0
        %6736 = vmatprep.mubr.bf16.mxu0 %v5777
        %6737 = vmatmul.mubr.bf16.gmra.mrb[0].mxu0 %v5776
        %v6738 = vpop.f32.mrb[0].mxu0
        %v6739 = vadd.f32 %v6642, %v6738
        %v6740 = vpop.f32.mrb[0].mxu0
        %v6741 = vpop.f32.mrb[0].mxu0
        %v6742 = vadd.f32 %v6645, %v6741
        %v6743 = vpop.f32.mrb[0].mxu0
        %6744 = vmatprep.mubr.bf16.mxu0 %v5786
        %6745 = vmatmul.mubr.bf16.gmra.mrb[0].mxu0 %v5785
        %v6746 = vpop.f32.mrb[0].mxu0
        %v6747 = vadd.f32 %v6650, %v6746
        %v6748 = vpop.f32.mrb[0].mxu0
        %v6749 = vpop.f32.mrb[0].mxu0
        %v6750 = vadd.f32 %v6653, %v6749
        %v6751 = vpop.f32.mrb[0].mxu0
        %6752 = vdwg.mxu0
        %6753 = vmatprep.subr.bf16.mxu0 0
        %6754 = vmatpush1.bf16.msra.mxu0 %v6285
        %6755 = vmatprep.subr.bf16.mxu0 0
        %6756 = vmatpush1.bf16.msra.mxu0 %v6286
        %6757 = vmatprep.subr.bf16.mxu0 0
        %6758 = vmatpush1.bf16.msra.mxu0 %v6287
        %6759 = vmatprep.subr.bf16.mxu0 0
        %6760 = vmatpush1.bf16.msra.mxu0 %v6288
        %6761 = vmatprep.subr.bf16.mxu0 0
        %6762 = vmatpush1.bf16.msra.mxu0 %v6289
        %6763 = vmatprep.subr.bf16.mxu0 0
        %6764 = vmatpush1.bf16.msra.mxu0 %v6290
        %6765 = vmatprep.subr.bf16.mxu0 0
        %6766 = vmatpush1.bf16.msra.mxu0 %v6291
        %6767 = vmatprep.subr.bf16.mxu0 0
        %6768 = vmatpush1.bf16.msra.mxu0 %v6292
        %6769 = vmatprep.subr.bf16.mxu0 0
        %6770 = vmatpush1.bf16.msra.mxu0 0
        %6771 = vmatprep.subr.bf16.mxu0 0
        %6772 = vmatpush1.bf16.msra.mxu0 0
        %6773 = vmatprep.subr.bf16.mxu0 0
        %6774 = vmatpush1.bf16.msra.mxu0 0
        %6775 = vmatprep.subr.bf16.mxu0 0
        %6776 = vmatpush1.bf16.msra.mxu0 0
        %6777 = vmatprep.subr.bf16.mxu0 0
        %6778 = vmatpush1.bf16.msra.mxu0 0
        %6779 = vmatprep.subr.bf16.mxu0 0
        %6780 = vmatpush1.bf16.msra.mxu0 0
        %6781 = vmatprep.subr.bf16.mxu0 0
        %6782 = vmatpush1.bf16.msra.mxu0 0
        %6783 = vmatprep.subr.bf16.mxu0 0
        %6784 = vmatpush1.bf16.msra.mxu0 0
        %6785 = vmatprep.mubr.bf16.mxu0 0
        %6786 = vmatmul.mubr.bf16.gmra.mrb[0].mxu0 %v5724
        %v6787 = vpop.f32.mrb[0].mxu0
        %v6788 = vadd.f32 %v6691, %v6787
        %v6789 = vpop.f32.mrb[0].mxu0
        %v6790 = vpop.f32.mrb[0].mxu0
        %v6791 = vadd.f32 %v6694, %v6790
        %v6792 = vpop.f32.mrb[0].mxu0
        %6793 = vmatprep.mubr.bf16.mxu0 0
        %6794 = vmatmul.mubr.bf16.gmra.mrb[0].mxu0 %v5733
        %v6795 = vpop.f32.mrb[0].mxu0
        %v6796 = vadd.f32 %v6699, %v6795
        %v6797 = vpop.f32.mrb[0].mxu0
        %v6798 = vpop.f32.mrb[0].mxu0
        %v6799 = vadd.f32 %v6702, %v6798
        %v6800 = vpop.f32.mrb[0].mxu0
        %6801 = vmatprep.mubr.bf16.mxu0 0
        %6802 = vmatmul.mubr.bf16.gmra.mrb[0].mxu0 %v5742
        %v6803 = vpop.f32.mrb[0].mxu0
        %v6804 = vadd.f32 %v6707, %v6803
        %v6805 = vpop.f32.mrb[0].mxu0
        %v6806 = vpop.f32.mrb[0].mxu0
        %v6807 = vadd.f32 %v6710, %v6806
        %v6808 = vpop.f32.mrb[0].mxu0
        %6809 = vmatprep.mubr.bf16.mxu0 0
        %6810 = vmatmul.mubr.bf16.gmra.mrb[0].mxu0 %v5751
        %v6811 = vpop.f32.mrb[0].mxu0
        %v6812 = vadd.f32 %v6715, %v6811
        %v6813 = vpop.f32.mrb[0].mxu0
        %v6814 = vpop.f32.mrb[0].mxu0
        %v6815 = vadd.f32 %v6718, %v6814
        %v6816 = vpop.f32.mrb[0].mxu0
        %6817 = vmatprep.mubr.bf16.mxu0 0
        %6818 = vmatmul.mubr.bf16.gmra.mrb[0].mxu0 %v5760
        %v6819 = vpop.f32.mrb[0].mxu0
        %v6820 = vadd.f32 %v6723, %v6819
        %v6821 = vpop.f32.mrb[0].mxu0
        %v6822 = vpop.f32.mrb[0].mxu0
        %v6823 = vadd.f32 %v6726, %v6822
        %v6824 = vpop.f32.mrb[0].mxu0
        %6825 = vmatprep.mubr.bf16.mxu0 0
        %6826 = vmatmul.mubr.bf16.gmra.mrb[0].mxu0 %v5769
        %v6827 = vpop.f32.mrb[0].mxu0
        %v6828 = vadd.f32 %v6731, %v6827
        %v6829 = vpop.f32.mrb[0].mxu0
        %v6830 = vpop.f32.mrb[0].mxu0
        %v6831 = vadd.f32 %v6734, %v6830
        %v6832 = vpop.f32.mrb[0].mxu0
        %6833 = vmatprep.mubr.bf16.mxu0 0
        %6834 = vmatmul.mubr.bf16.gmra.mrb[0].mxu0 %v5778
        %v6835 = vpop.f32.mrb[0].mxu0
        %v6836 = vadd.f32 %v6739, %v6835
        %v6837 = vpop.f32.mrb[0].mxu0
        %v6838 = vpop.f32.mrb[0].mxu0
        %v6839 = vadd.f32 %v6742, %v6838
        %v6840 = vpop.f32.mrb[0].mxu0
        %6841 = vmatprep.mubr.bf16.mxu0 0
        %6842 = vmatmul.mubr.bf16.gmra.mrb[0].mxu0 %v5787
        %v6843 = vpop.f32.mrb[0].mxu0
        %v6844 = vadd.f32 %v6747, %v6843
        %v6845 = vpop.f32.mrb[0].mxu0
        %v6846 = vpop.f32.mrb[0].mxu0
        %v6847 = vadd.f32 %v6750, %v6846
        %v6848 = vpop.f32.mrb[0].mxu0
        %6849 = vdwg.mxu0
        %v6850 = vld [vmem:[%s2 + $0x2] sm:$0x1]
        %v6851 = vld [vmem:[%s2 + $0x3] sm:$0x1]
        %v6852 = vlaneseq
        %v6853 = vshrl.u32 %v6852, 7
        %v6854 = vsub.s32 0, %v6853
        %v6855 = vrot.slane %v6850, %v6854
        %v6856 = vmul.f32 %v6788, %v6855
        %v6857 = vmul.f32 %v6791, %v6855
        %v6858 = vmul.f32 %v6796, %v6855
        %v6859 = vmul.f32 %v6799, %v6855
        %v6860 = vmul.f32 %v6804, %v6855
        %v6861 = vmul.f32 %v6807, %v6855
        %v6862 = vmul.f32 %v6812, %v6855
        %v6863 = vmul.f32 %v6815, %v6855
        %v6864 = vmul.f32 %v6820, %v6855
        %v6865 = vmul.f32 %v6823, %v6855
        %v6866 = vmul.f32 %v6828, %v6855
        %v6867 = vmul.f32 %v6831, %v6855
        %v6868 = vmul.f32 %v6836, %v6855
        %v6869 = vmul.f32 %v6839, %v6855
        %v6870 = vmul.f32 %v6844, %v6855
        %v6871 = vmul.f32 %v6847, %v6855
        %v6872 = vlaneseq
        %v6873 = vshrl.u32 %v6872, 7
        %v6874 = vsub.s32 0, %v6873
        %v6875 = vrot.slane %v6851, %v6874
        %v6876 = vadd.f32 %v6856, %v6875
        %v6877 = vadd.f32 %v6857, %v6875
        %v6878 = vadd.f32 %v6858, %v6875
        %v6879 = vadd.f32 %v6859, %v6875
        %v6880 = vadd.f32 %v6860, %v6875
        %v6881 = vadd.f32 %v6861, %v6875
        %v6882 = vadd.f32 %v6862, %v6875
        %v6883 = vadd.f32 %v6863, %v6875
        %v6884 = vadd.f32 %v6864, %v6875
        %v6885 = vadd.f32 %v6865, %v6875
        %v6886 = vadd.f32 %v6866, %v6875
        %v6887 = vadd.f32 %v6867, %v6875
        %v6888 = vadd.f32 %v6868, %v6875
        %v6889 = vadd.f32 %v6869, %v6875
        %v6890 = vadd.f32 %v6870, %v6875
        %v6891 = vadd.f32 %v6871, %v6875
        %v6892 = vld [vmem:[%s299] sm:$0xff]
        %v6893 = vld [vmem:[%s299 + $0x8] sm:$0xff]
        %v6894 = vld [vmem:[%s299 + $0x10] sm:$0xff]
        %v6895 = vld [vmem:[%s299 + $0x18] sm:$0xff]
        %v6896 = vld [vmem:[%s299 + $0x20] sm:$0xff]
        %v6897 = vld [vmem:[%s299 + $0x28] sm:$0xff]
        %v6898 = vld [vmem:[%s299 + $0x30] sm:$0xff]
        %v6899 = vld [vmem:[%s299 + $0x38] sm:$0xff]
        %v6900 = vld [vmem:[%s299 + $0x40] sm:$0xff]
        %v6901 = vld [vmem:[%s299 + $0x48] sm:$0xff]
        %v6902 = vld [vmem:[%s299 + $0x50] sm:$0xff]
        %v6903 = vld [vmem:[%s299 + $0x58] sm:$0xff]
        %v6904 = vld [vmem:[%s299 + $0x60] sm:$0xff]
        %v6905 = vld [vmem:[%s299 + $0x68] sm:$0xff]
        %v6906 = vld [vmem:[%s299 + $0x70] sm:$0xff]
        %v6907 = vld [vmem:[%s299 + $0x78] sm:$0xff]
        %v6908 = vadd.f32 %v6876, %v6892
        %v6909 = vadd.f32 %v6877, %v6893
        %v6910 = vadd.f32 %v6878, %v6894
        %v6911 = vadd.f32 %v6879, %v6895
        %v6912 = vadd.f32 %v6880, %v6896
        %v6913 = vadd.f32 %v6881, %v6897
        %v6914 = vadd.f32 %v6882, %v6898
        %v6915 = vadd.f32 %v6883, %v6899
        %v6916 = vadd.f32 %v6884, %v6900
        %v6917 = vadd.f32 %v6885, %v6901
        %v6918 = vadd.f32 %v6886, %v6902
        %v6919 = vadd.f32 %v6887, %v6903
        %v6920 = vadd.f32 %v6888, %v6904
        %v6921 = vadd.f32 %v6889, %v6905
        %v6922 = vadd.f32 %v6890, %v6906
        %v6923 = vadd.f32 %v6891, %v6907
        %v6924 = vmax.f32 %v6908, 0.0
        %v6925 = vmax.f32 %v6909, 0.0
        %v6926 = vmax.f32 %v6910, 0.0
        %v6927 = vmax.f32 %v6911, 0.0
        %v6928 = vmax.f32 %v6912, 0.0
        %v6929 = vmax.f32 %v6913, 0.0
        %v6930 = vmax.f32 %v6914, 0.0
        %v6931 = vmax.f32 %v6915, 0.0
        %v6932 = vmax.f32 %v6916, 0.0
        %v6933 = vmax.f32 %v6917, 0.0
        %v6934 = vmax.f32 %v6918, 0.0
        %v6935 = vmax.f32 %v6919, 0.0
        %v6936 = vmax.f32 %v6920, 0.0
        %v6937 = vmax.f32 %v6921, 0.0
        %v6938 = vmax.f32 %v6922, 0.0
        %v6939 = vmax.f32 %v6923, 0.0
        %6940 = vst [vmem:[%s217] sm:$0xff] %v6924
        %6941 = vst [vmem:[%s217 + $0x8] sm:$0xff] %v6925
        %6942 = vst [vmem:[%s217 + $0x10] sm:$0xff] %v6926
        %6943 = vst [vmem:[%s217 + $0x18] sm:$0xff] %v6927
        %6944 = vst [vmem:[%s217 + $0x20] sm:$0xff] %v6928
        %6945 = vst [vmem:[%s217 + $0x28] sm:$0xff] %v6929
        %6946 = vst [vmem:[%s217 + $0x30] sm:$0xff] %v6930
        %6947 = vst [vmem:[%s217 + $0x38] sm:$0xff] %v6931
        %6948 = vst [vmem:[%s217 + $0x40] sm:$0xff] %v6932
        %6949 = vst [vmem:[%s217 + $0x48] sm:$0xff] %v6933
        %6950 = vst [vmem:[%s217 + $0x50] sm:$0xff] %v6934
        %6951 = vst [vmem:[%s217 + $0x58] sm:$0xff] %v6935
        %6952 = vst [vmem:[%s217 + $0x60] sm:$0xff] %v6936
        %6953 = vst [vmem:[%s217 + $0x68] sm:$0xff] %v6937
        %6954 = vst [vmem:[%s217 + $0x70] sm:$0xff] %v6938
        %6955 = vst [vmem:[%s217 + $0x78] sm:$0xff] %v6939
        %s6956 = sand.u32 %s111, 1
        %s6957 = scalar_lea.sflag [#allocation7], %s6956
        %s6958 = sand.u32 %s111, 1
        %s6959 = smul.addr %s6958, 128
        %s6960 = scalar_lea.vmem [#allocation10], %s6959
        // Predicated region
        $region65: #{tpu_custom_call.1} parent=31 // pred_check
          %p6961 = pneg %p121
        $region66: #{tpu_custom_call.1} parent=31 // pred_check_branch
          %6963 = sbr.rel (%p6961) target = $region68
        $region67: #{tpu_custom_call.1} parent=31 // pred_region
          %s6964 = smul.u32 8, %s26
          %s6966 = ssub.s32 2048, 2048
          %6967 = vsyncadd %s6957, %s6966
          %s6968 = smul.addr %s6964, 2
          %s6969 = smul.addr %s25, 32
          %s6970 = sadd.s32 %s6968, %s6969
          %s6971 = smul.addr %s6970, 128
          %s6972 = scalar_lea.hbm %s3, %s6971
          %s6973 = sshll.u32 %s6960, 4
          %s6974 = int_to_ptr.vmem [resolvable:$true] %s6973
          %6979 = dma.vmem_to_hbm [thread:$0]  %s6974, 2048, %s6972, %s6957, 128, 128, 8
        $region68: #{tpu_custom_call.1} parent=31 // pred_fallthru
          _
      $region32: #{tpu_custom_call.1} parent=5 // pred_fallthru
        _
      %p6980 = scmp.le.s32.totalorder 2, %s16
      // Predicated region
      $region69: #{tpu_custom_call.1} parent=5 // pred_check
        %p6981 = pneg %p6980
      $region70: #{tpu_custom_call.1} parent=5 // pred_check_branch
        %6983 = sbr.rel (%p6981) target = $region72
      $region71: #{tpu_custom_call.1} parent=5 // pred_region
        %s6984 = ssub.s32 %s16, 2
        // Predicated region
        $region73: #{tpu_custom_call.1} parent=71 // pred_check
          %p6985 = pneg %p127
        $region74: #{tpu_custom_call.1} parent=71 // pred_check_branch
          %6987 = sbr.rel (%p6985) target = $region76
        $region75: #{tpu_custom_call.1} parent=71 // pred_region
          %s6988 = sand.u32 %s112, 1
          %s6989 = scalar_lea.sflag [#allocation7], %s6988
          %s6990 = sand.u32 %s112, 1
          %s6991 = smul.addr %s6990, 128
          %s6992 = scalar_lea.vmem [#allocation10], %s6991
          %6993 = dma.done %s6989, 2048
        $region76: #{tpu_custom_call.1} parent=71 // pred_fallthru
          _
      $region72: #{tpu_custom_call.1} parent=5 // pred_fallthru
        _
    $region6: #{tpu_custom_call.1} parent=1 // loop_footer
      %s20 = sadd.s32 1, %s16
    $region7: #{tpu_custom_call.1} parent=1 // loop_footer_branch
      %15 = sbr.rel target = $region3
    $region8: #{tpu_custom_call.1} parent=1 // loop_exit
      _
    %6994 = vsyncpa [#allocation6], 1
    %s6995 = scalar_lea.sflag [#allocation6], 1
    %6996 = vsyncpa %s6995, 1
    %6997 = vsyncpa [#allocation9], 1
    %6998 = vsyncpa [#allocation7], 1
    %s6999 = scalar_lea.sflag [#allocation7], 1
    %7000 = vsyncpa %s6999, 1

</llo_original>
